<compile_context>
chip_gen: v7x
topology: tpu7x:2x2x1
jax: 0.10.0
libtpu: 0.0.40
codegen_flags: <defaults>
</compile_context>

<pallas_src>
import functools

import jax
import jax.numpy as jnp
from jax import lax
from jax.experimental import pallas as pl
from jax.experimental.pallas import tpu as pltpu


# ----------------------------- kernel ---------------------------------------


def sentiment_rnn_kernel(
    gi_r_ref, gi_z_ref, gi_n_ref,        # (Tc, Bt, H) f32 : x @ W_ih1 + b_ih1 (per gate)
    wh1_ref, bh1_ref,                    # (3, H, H) bf16, (3, 1, H) f32 : layer-1 hidden
    wi2_ref, bi2_ref,                    # (3, H, H) bf16, (3, 1, H) f32 : layer-2 input
    wh2_ref, bh2_ref,                    # (3, H, H) bf16, (3, 1, H) f32 : layer-2 hidden
    wfc_ref, bfc_ref,                    # (2, H, O) bf16, (1, O) f32    : fc split [max, avg]
    out_ref,                             # (Bt, O) f32
    h1_scr, h2_scr, max_scr, sum_scr,    # (Bt, H) f32 carries across time blocks
    *, time_chunk, seq_len):
  tb = pl.program_id(1)                  # time-block index (inner, "arbitrary" axis)

  @pl.when(tb == 0)
  def _init():
    h1_scr[...] = jnp.zeros_like(h1_scr)
    h2_scr[...] = jnp.zeros_like(h2_scr)
    max_scr[...] = jnp.full_like(max_scr, -jnp.inf)
    sum_scr[...] = jnp.zeros_like(sum_scr)

  # Hoist grid-invariant weight/bias loads out of the unrolled time loop.
  wh1_r, wh1_z, wh1_n = wh1_ref[0], wh1_ref[1], wh1_ref[2]
  bh1_r, bh1_z, bh1_n = bh1_ref[0], bh1_ref[1], bh1_ref[2]
  wi2_r, wi2_z, wi2_n = wi2_ref[0], wi2_ref[1], wi2_ref[2]
  bi2_r, bi2_z, bi2_n = bi2_ref[0], bi2_ref[1], bi2_ref[2]
  wh2_r, wh2_z, wh2_n = wh2_ref[0], wh2_ref[1], wh2_ref[2]
  bh2_r, bh2_z, bh2_n = bh2_ref[0], bh2_ref[1], bh2_ref[2]
  cdt = wh1_r.dtype                      # bf16 matmul operands, f32 accumulation

  def step(t, carry):
    h1, h2, mx, sm = carry               # all f32 (Bt, H)

    # ---- layer-1 GRU step (input projection hoisted to the wrapper) ----
    h1c = h1.astype(cdt)
    gh_r = jnp.dot(h1c, wh1_r, preferred_element_type=jnp.float32) + bh1_r
    gh_z = jnp.dot(h1c, wh1_z, preferred_element_type=jnp.float32) + bh1_z
    gh_n = jnp.dot(h1c, wh1_n, preferred_element_type=jnp.float32) + bh1_n
    r1 = jax.nn.sigmoid(gi_r_ref[t] + gh_r)
    z1 = jax.nn.sigmoid(gi_z_ref[t] + gh_z)
    n1 = jnp.tanh(gi_n_ref[t] + r1 * gh_n)       # b_hn stays inside r * (.)
    h1n = (1.0 - z1) * n1 + z1 * h1

    # ---- layer-2 GRU step (input = layer-1 output at this timestep) ----
    xc = h1n.astype(cdt)
    h2c = h2.astype(cdt)
    i_r = jnp.dot(xc, wi2_r, preferred_element_type=jnp.float32) + bi2_r
    i_z = jnp.dot(xc, wi2_z, preferred_element_type=jnp.float32) + bi2_z
    i_n = jnp.dot(xc, wi2_n, preferred_element_type=jnp.float32) + bi2_n
    g_r = jnp.dot(h2c, wh2_r, preferred_element_type=jnp.float32) + bh2_r
    g_z = jnp.dot(h2c, wh2_z, preferred_element_type=jnp.float32) + bh2_z
    g_n = jnp.dot(h2c, wh2_n, preferred_element_type=jnp.float32) + bh2_n
    r2 = jax.nn.sigmoid(i_r + g_r)
    z2 = jax.nn.sigmoid(i_z + g_z)
    n2 = jnp.tanh(i_n + r2 * g_n)
    h2n = (1.0 - z2) * n2 + z2 * h2

    # ---- running pooling of top-layer outputs over time ----
    return h1n, h2n, jnp.maximum(mx, h2n), sm + h2n

  carry0 = (h1_scr[...], h2_scr[...], max_scr[...], sum_scr[...])
  h1, h2, mx, sm = lax.fori_loop(0, time_chunk, step, carry0, unroll=True)
  h1_scr[...] = h1
  h2_scr[...] = h2
  max_scr[...] = mx
  sum_scr[...] = sm

  @pl.when(tb == pl.num_programs(1) - 1)
  def _epilogue():
    avg = sm * (1.0 / seq_len)                                  # mean over T
    logits = (jnp.dot(mx.astype(cdt), wfc_ref[0], preferred_element_type=jnp.float32)
              + jnp.dot(avg.astype(cdt), wfc_ref[1], preferred_element_type=jnp.float32)
              + bfc_ref[...])
    out_ref[...] = jax.nn.sigmoid(logits)                       # (Bt, out_dim)


# ----------------------------- wrapper ---------------------------------------


def _largest_divisor(n, cap):
  for c in range(min(cap, n), 0, -1):
    if n % c == 0:
      return c
  return 1


def _batch_tile(b_pad):
  """Largest multiple-of-8 divisor of b_pad, capped at 128 rows."""
  m = b_pad // 8
  for d in range(min(16, m), 0, -1):
    if m % d == 0:
      return 8 * d
  return 8


def _prepare_kernel_params(params, hidden_dim):
  """Per-gate (lane-dense) weight layout; bf16 matmul operands, f32 biases."""
  H = hidden_dim
  bf16, f32 = jnp.bfloat16, jnp.float32

  def split_w(w):      # (In, 3H) -> (3, In, H), gate order (r, z, n)
    return jnp.stack([w[:, 0:H], w[:, H:2 * H], w[:, 2 * H:3 * H]], axis=0)

  def split_b(b):      # (1, 3H) -> (3, 1, H)
    return jnp.stack([b[:, 0:H], b[:, H:2 * H], b[:, 2 * H:3 * H]], axis=0)

  return {
      "wh1": split_w(params["w_hh1"]).astype(bf16),
      "bh1": split_b(params["b_hh1"]).astype(f32),
      "wi2": split_w(params["w_ih2"]).astype(bf16),
      "bi2": split_b(params["b_ih2"]).astype(f32),
      "wh2": split_w(params["w_hh2"]).astype(bf16),
      "bh2": split_b(params["b_hh2"]).astype(f32),
      # fc weight pre-split for the [max, avg] concat: (2, H, out)
      "wfc": jnp.stack([params["w_fc"][0:H], params["w_fc"][H:2 * H]],
                       axis=0).astype(bf16),
      "bfc": params["b_fc"].astype(f32),
  }


def sentiment_rnn_forward(tokens, params, *, hidden_dim, output_dim=1):
  """tokens: (B, T) int32.  Returns sigmoid probabilities (B, output_dim)."""
  B, T = tokens.shape
  if T == 0:
    raise ValueError("Received an empty input sequence")
  H = hidden_dim
  E = params["embedding"].shape[1]

  # Pad batch to a multiple of 8 sublanes; padded rows are sliced away below.
  b_pad = ((B + 7) // 8) * 8
  if b_pad != B:
    tokens = jnp.pad(tokens, ((0, b_pad - B), (0, 0)))

  # Embedding gather + time-major transpose in bf16 (glue, plain JAX).
  x = jnp.take(params["embedding"].astype(jnp.bfloat16), tokens, axis=0)   # (Bp,T,E)
  x = jnp.transpose(x, (1, 0, 2))                                          # (T,Bp,E)

  # Hoisted layer-1 input projection: one big matmul instead of T tiny dots
  # on the serial recurrent path.  bf16 operands, f32 accumulation.
  gi1 = jnp.dot(x.reshape(T * b_pad, E), params["w_ih1"].astype(jnp.bfloat16),
                preferred_element_type=jnp.float32)
  gi1 = gi1.reshape(T, b_pad, 3 * H) + params["b_ih1"].astype(jnp.float32)
  gi_r, gi_z, gi_n = gi1[..., 0:H], gi1[..., H:2 * H], gi1[..., 2 * H:3 * H]

  kp = _prepare_kernel_params(params, H)

  time_chunk = _largest_divisor(T, 16)   # unrolled GRU steps per grid invocation
  bt = _batch_tile(b_pad)                # rows per batch tile (parallel axis)
  grid = (b_pad // bt, T // time_chunk)

  kernel = functools.partial(sentiment_rnn_kernel,
                             time_chunk=time_chunk, seq_len=T)
  gi_spec = pl.BlockSpec((time_chunk, bt, H), lambda b, i: (i, b, 0))

  def build_call(single_buffer_weights):
    def const_spec(arr):
      zeros = (0,) * arr.ndim
      if single_buffer_weights:
        return pl.BlockSpec(arr.shape, lambda b, i: zeros,
                            pipeline_mode=pl.Buffered(1))
      return pl.BlockSpec(arr.shape, lambda b, i: zeros)

    return pl.pallas_call(
        kernel,
        out_shape=jax.ShapeDtypeStruct((b_pad, output_dim), jnp.float32),
        grid_spec=pltpu.PrefetchScalarGridSpec(
            num_scalar_prefetch=0,
            grid=grid,
            in_specs=[
                gi_spec, gi_spec, gi_spec,
                const_spec(kp["wh1"]), const_spec(kp["bh1"]),
                const_spec(kp["wi2"]), const_spec(kp["bi2"]),
                const_spec(kp["wh2"]), const_spec(kp["bh2"]),
                const_spec(kp["wfc"]), const_spec(kp["bfc"]),
            ],
            out_specs=pl.BlockSpec((bt, output_dim), lambda b, i: (b, 0)),
            scratch_shapes=[pltpu.VMEM((bt, H), jnp.float32)] * 4,  # h1,h2,max,sum
        ),
        compiler_params=pltpu.CompilerParams(
            # batch tiles are independent (v7x dual-TC sharding); the time axis
            # carries the recurrence + final-block epilogue -> must be arbitrary.
            dimension_semantics=("parallel", "arbitrary"),
            # explicit budget, safe on every generation (<= v7x's 64 MiB VMEM).
            vmem_limit_bytes=32 * 1024 * 1024,
        ),
    )

  args = (gi_r, gi_z, gi_n,
          kp["wh1"], kp["bh1"], kp["wi2"], kp["bi2"],
          kp["wh2"], kp["bh2"], kp["wfc"], kp["bfc"])
  try:
    out = build_call(True)(*args)
  except Exception:
    # pl.Buffered(1) single-buffering of grid-invariant weights is a pure VMEM
    # footprint optimization; fall back to default double-buffering if this
    # JAX build rejects buffer_count=1.
    out = build_call(False)(*args)
  return out[:B]


# ----------------------------- reference (pure JAX) ---------------------------


def _gru_cell_ref(x, h, w_ih, w_hh, b_ih, b_hh, hidden_dim):
  """PyTorch-semantics GRU cell with the kernel's precision policy
  (bf16 matmul operands, f32 accumulation and gate math)."""
  cdt = jnp.bfloat16
  gi = jnp.dot(x.astype(cdt), w_ih.astype(cdt),
               preferred_element_type=jnp.float32) + b_ih
  gh = jnp.dot(h.astype(cdt), w_hh.astype(cdt),
               preferred_element_type=jnp.float32) + b_hh
  H = hidden_dim
  i_r, i_z, i_n = gi[:, 0:H], gi[:, H:2 * H], gi[:, 2 * H:3 * H]
  h_r, h_z, h_n = gh[:, 0:H], gh[:, H:2 * H], gh[:, 2 * H:3 * H]
  r = jax.nn.sigmoid(i_r + h_r)
  z = jax.nn.sigmoid(i_z + h_z)
  n = jnp.tanh(i_n + r * h_n)           # b_hn inside the r * (.) term
  return (1.0 - z) * n + z * h


def sentiment_rnn_reference(tokens, params, *, hidden_dim):
  x = jnp.take(params["embedding"], tokens, axis=0).astype(jnp.float32)   # (B,T,E)
  B, T, _ = x.shape

  def layer(xs, w_ih, w_hh, b_ih, b_hh):
    def step(h, x_t):
      h_new = _gru_cell_ref(x_t, h, w_ih, w_hh, b_ih, b_hh, hidden_dim)
      return h_new, h_new
    h0 = jnp.zeros((B, hidden_dim), jnp.float32)
    _, ys = lax.scan(step, h0, jnp.transpose(xs, (1, 0, 2)))
    return jnp.transpose(ys, (1, 0, 2))                                   # (B,T,H)

  out1 = layer(x, params["w_ih1"], params["w_hh1"], params["b_ih1"], params["b_hh1"])
  out2 = layer(out1, params["w_ih2"], params["w_hh2"], params["b_ih2"], params["b_hh2"])
  max_pool = jnp.max(out2, axis=1)
  avg_pool = jnp.mean(out2, axis=1)
  pooled = jnp.concatenate([max_pool, avg_pool], axis=1)
  logits = jnp.dot(pooled.astype(jnp.bfloat16), params["w_fc"].astype(jnp.bfloat16),
                   preferred_element_type=jnp.float32) + params["b_fc"]
  return jax.nn.sigmoid(logits)


# ----------------------------- params / main ----------------------------------


def init_params(key, vocab_size, embedding_dim, hidden_dim, output_dim):
  ks = jax.random.split(key, 12)
  s = 1.0 / jnp.sqrt(hidden_dim)

  def unif(k, shape, scale):
    return jax.random.uniform(k, shape, jnp.float32, -scale, scale)

  return {
      "embedding": jax.random.normal(ks[0], (vocab_size, embedding_dim), jnp.float32),
      # layer 1 (input = embedding_dim); stored transposed: (in, 3H)
      "w_ih1": unif(ks[1], (embedding_dim, 3 * hidden_dim), s),
      "w_hh1": unif(ks[2], (hidden_dim, 3 * hidden_dim), s),
      "b_ih1": unif(ks[3], (1, 3 * hidden_dim), s),
      "b_hh1": unif(ks[4], (1, 3 * hidden_dim), s),
      # layer 2 (input = hidden_dim)
      "w_ih2": unif(ks[5], (hidden_dim, 3 * hidden_dim), s),
      "w_hh2": unif(ks[6], (hidden_dim, 3 * hidden_dim), s),
      "b_ih2": unif(ks[7], (1, 3 * hidden_dim), s),
      "b_hh2": unif(ks[8], (1, 3 * hidden_dim), s),
      # fc: concat pooling -> (2H, output_dim), bias (1, output_dim)
      "w_fc": unif(ks[9], (2 * hidden_dim, output_dim), 1.0 / jnp.sqrt(2 * hidden_dim)),
      "b_fc": unif(ks[10], (1, output_dim), 1.0 / jnp.sqrt(2 * hidden_dim)),
  }


if __name__ == "__main__":
  VOCAB, E, H, OUT = 64, 32, 32, 1
  B, T = 2, 8

  key = jax.random.PRNGKey(0)
  k_param, k_tok = jax.random.split(key)
  params = init_params(k_param, VOCAB, E, H, OUT)
  tokens = jax.random.randint(k_tok, (B, T), 0, VOCAB, dtype=jnp.int32)

  out = sentiment_rnn_forward(tokens, params, hidden_dim=H, output_dim=OUT)
  out = jax.block_until_ready(out)

  ref = jax.block_until_ready(sentiment_rnn_reference(tokens, params, hidden_dim=H))
  assert out.shape == (B, OUT), out.shape
  assert jnp.allclose(out, ref, atol=1e-3, rtol=1e-3), (out, ref)

  print("KERNEL_OK")
</pallas_src>

<mosaic_0001>
module attributes {stable_mosaic.version = 11 : i64} {
  func.func @sentiment_rnn_kernel(%arg0: i32, %arg1: i32, %arg2: memref<8x8x32xf32, #tpu.memory_space<vmem>>, %arg3: memref<8x8x32xf32, #tpu.memory_space<vmem>>, %arg4: memref<8x8x32xf32, #tpu.memory_space<vmem>>, %arg5: memref<3x32x32xbf16, #tpu.memory_space<vmem>>, %arg6: memref<3x1x32xf32, #tpu.memory_space<vmem>>, %arg7: memref<3x32x32xbf16, #tpu.memory_space<vmem>>, %arg8: memref<3x1x32xf32, #tpu.memory_space<vmem>>, %arg9: memref<3x32x32xbf16, #tpu.memory_space<vmem>>, %arg10: memref<3x1x32xf32, #tpu.memory_space<vmem>>, %arg11: memref<2x32x1xbf16, #tpu.memory_space<vmem>>, %arg12: memref<1x1xf32, #tpu.memory_space<vmem>>, %arg13: memref<8x1xf32, #tpu.memory_space<vmem>>, %arg14: memref<8x32xf32, #tpu.memory_space<vmem>>, %arg15: memref<8x32xf32, #tpu.memory_space<vmem>>, %arg16: memref<8x32xf32, #tpu.memory_space<vmem>>, %arg17: memref<8x32xf32, #tpu.memory_space<vmem>>) attributes {dimension_semantics = [#tpu.dimension_semantics<parallel>, #tpu.dimension_semantics<arbitrary>], iteration_bounds = array<i64: 1, 1>, scalar_prefetch = 0 : i64, scratch_operands = 4 : i64, tpu.core_type = #tpu.core_type<tc>, window_params = [{transform_indices = @transform_0, window_bounds = array<i64: 8, 8, 32>}, {transform_indices = @transform_1, window_bounds = array<i64: 8, 8, 32>}, {transform_indices = @transform_2, window_bounds = array<i64: 8, 8, 32>}, {pipeline_mode = #tpu.pipeline_mode<synchronous>, transform_indices = @transform_3, window_bounds = array<i64: 3, 32, 32>}, {pipeline_mode = #tpu.pipeline_mode<synchronous>, transform_indices = @transform_4, window_bounds = array<i64: 3, 1, 32>}, {pipeline_mode = #tpu.pipeline_mode<synchronous>, transform_indices = @transform_5, window_bounds = array<i64: 3, 32, 32>}, {pipeline_mode = #tpu.pipeline_mode<synchronous>, transform_indices = @transform_6, window_bounds = array<i64: 3, 1, 32>}, {pipeline_mode = #tpu.pipeline_mode<synchronous>, transform_indices = @transform_7, window_bounds = array<i64: 3, 32, 32>}, {pipeline_mode = #tpu.pipeline_mode<synchronous>, transform_indices = @transform_8, window_bounds = array<i64: 3, 1, 32>}, {pipeline_mode = #tpu.pipeline_mode<synchronous>, transform_indices = @transform_9, window_bounds = array<i64: 2, 32, 1>}, {pipeline_mode = #tpu.pipeline_mode<synchronous>, transform_indices = @transform_10, window_bounds = array<i64: 1, 1>}, {transform_indices = @transform_11, window_bounds = array<i64: 8, 1>}]} {
    %c0_i32 = arith.constant 0 : i32
    %0 = arith.cmpi eq, %arg1, %c0_i32 : i32
    %1 = arith.extui %0 : i1 to i32
    %c0_i32_0 = arith.constant 0 : i32
    %2 = arith.cmpi ne, %1, %c0_i32_0 : i32
    scf.if %2 {
      %cst_238 = arith.constant 0.000000e+00 : f32
      %698 = vector.broadcast %cst_238 : f32 to vector<8x32xf32>
      %c0_239 = arith.constant 0 : index
      %c0_240 = arith.constant 0 : index
      %699 = vector.load %arg14[%c0_239, %c0_240] : memref<8x32xf32, #tpu.memory_space<vmem>>, vector<8x32xf32>
      tpu.vector_store %arg14[%c0_239, %c0_240], %698 {strides = array<i32>} : memref<8x32xf32, #tpu.memory_space<vmem>>, vector<8x32xf32>,
      %cst_241 = arith.constant 0.000000e+00 : f32
      %700 = vector.broadcast %cst_241 : f32 to vector<8x32xf32>
      %c0_242 = arith.constant 0 : index
      %c0_243 = arith.constant 0 : index
      %701 = vector.load %arg15[%c0_242, %c0_243] : memref<8x32xf32, #tpu.memory_space<vmem>>, vector<8x32xf32>
      tpu.vector_store %arg15[%c0_242, %c0_243], %700 {strides = array<i32>} : memref<8x32xf32, #tpu.memory_space<vmem>>, vector<8x32xf32>,
      %cst_244 = arith.constant 0xFF800000 : f32
      %702 = vector.broadcast %cst_244 : f32 to vector<8x32xf32>
      %c0_245 = arith.constant 0 : index
      %c0_246 = arith.constant 0 : index
      %703 = vector.load %arg16[%c0_245, %c0_246] : memref<8x32xf32, #tpu.memory_space<vmem>>, vector<8x32xf32>
      tpu.vector_store %arg16[%c0_245, %c0_246], %702 {strides = array<i32>} : memref<8x32xf32, #tpu.memory_space<vmem>>, vector<8x32xf32>,
      %cst_247 = arith.constant 0.000000e+00 : f32
      %704 = vector.broadcast %cst_247 : f32 to vector<8x32xf32>
      %c0_248 = arith.constant 0 : index
      %c0_249 = arith.constant 0 : index
      %705 = vector.load %arg17[%c0_248, %c0_249] : memref<8x32xf32, #tpu.memory_space<vmem>>, vector<8x32xf32>
      tpu.vector_store %arg17[%c0_248, %c0_249], %704 {strides = array<i32>} : memref<8x32xf32, #tpu.memory_space<vmem>>, vector<8x32xf32>,
    } else {
    }
    %c0 = arith.constant 0 : index
    %c0_1 = arith.constant 0 : index
    %c0_2 = arith.constant 0 : index
    %3 = vector.load %arg5[%c0, %c0_1, %c0_2] : memref<3x32x32xbf16, #tpu.memory_space<vmem>>, vector<1x32x32xbf16>
    %4 = vector.shape_cast %3 : vector<1x32x32xbf16> to vector<32x32xbf16>
    %c1 = arith.constant 1 : index
    %c0_3 = arith.constant 0 : index
    %c0_4 = arith.constant 0 : index
    %5 = vector.load %arg5[%c1, %c0_3, %c0_4] : memref<3x32x32xbf16, #tpu.memory_space<vmem>>, vector<1x32x32xbf16>
    %6 = vector.shape_cast %5 : vector<1x32x32xbf16> to vector<32x32xbf16>
    %c2 = arith.constant 2 : index
    %c0_5 = arith.constant 0 : index
    %c0_6 = arith.constant 0 : index
    %7 = vector.load %arg5[%c2, %c0_5, %c0_6] : memref<3x32x32xbf16, #tpu.memory_space<vmem>>, vector<1x32x32xbf16>
    %8 = vector.shape_cast %7 : vector<1x32x32xbf16> to vector<32x32xbf16>
    %c0_7 = arith.constant 0 : index
    %c0_8 = arith.constant 0 : index
    %c0_9 = arith.constant 0 : index
    %9 = vector.load %arg6[%c0_7, %c0_8, %c0_9] : memref<3x1x32xf32, #tpu.memory_space<vmem>>, vector<1x1x32xf32>
    %10 = vector.shape_cast %9 : vector<1x1x32xf32> to vector<1x32xf32>
    %c1_10 = arith.constant 1 : index
    %c0_11 = arith.constant 0 : index
    %c0_12 = arith.constant 0 : index
    %11 = vector.load %arg6[%c1_10, %c0_11, %c0_12] : memref<3x1x32xf32, #tpu.memory_space<vmem>>, vector<1x1x32xf32>
    %12 = vector.shape_cast %11 : vector<1x1x32xf32> to vector<1x32xf32>
    %c2_13 = arith.constant 2 : index
    %c0_14 = arith.constant 0 : index
    %c0_15 = arith.constant 0 : index
    %13 = vector.load %arg6[%c2_13, %c0_14, %c0_15] : memref<3x1x32xf32, #tpu.memory_space<vmem>>, vector<1x1x32xf32>
    %14 = vector.shape_cast %13 : vector<1x1x32xf32> to vector<1x32xf32>
    %c0_16 = arith.constant 0 : index
    %c0_17 = arith.constant 0 : index
    %c0_18 = arith.constant 0 : index
    %15 = vector.load %arg7[%c0_16, %c0_17, %c0_18] : memref<3x32x32xbf16, #tpu.memory_space<vmem>>, vector<1x32x32xbf16>
    %16 = vector.shape_cast %15 : vector<1x32x32xbf16> to vector<32x32xbf16>
    %c1_19 = arith.constant 1 : index
    %c0_20 = arith.constant 0 : index
    %c0_21 = arith.constant 0 : index
    %17 = vector.load %arg7[%c1_19, %c0_20, %c0_21] : memref<3x32x32xbf16, #tpu.memory_space<vmem>>, vector<1x32x32xbf16>
    %18 = vector.shape_cast %17 : vector<1x32x32xbf16> to vector<32x32xbf16>
    %c2_22 = arith.constant 2 : index
    %c0_23 = arith.constant 0 : index
    %c0_24 = arith.constant 0 : index
    %19 = vector.load %arg7[%c2_22, %c0_23, %c0_24] : memref<3x32x32xbf16, #tpu.memory_space<vmem>>, vector<1x32x32xbf16>
    %20 = vector.shape_cast %19 : vector<1x32x32xbf16> to vector<32x32xbf16>
    %c0_25 = arith.constant 0 : index
    %c0_26 = arith.constant 0 : index
    %c0_27 = arith.constant 0 : index
    %21 = vector.load %arg8[%c0_25, %c0_26, %c0_27] : memref<3x1x32xf32, #tpu.memory_space<vmem>>, vector<1x1x32xf32>
    %22 = vector.shape_cast %21 : vector<1x1x32xf32> to vector<1x32xf32>
    %c1_28 = arith.constant 1 : index
    %c0_29 = arith.constant 0 : index
    %c0_30 = arith.constant 0 : index
    %23 = vector.load %arg8[%c1_28, %c0_29, %c0_30] : memref<3x1x32xf32, #tpu.memory_space<vmem>>, vector<1x1x32xf32>
    %24 = vector.shape_cast %23 : vector<1x1x32xf32> to vector<1x32xf32>
    %c2_31 = arith.constant 2 : index
    %c0_32 = arith.constant 0 : index
    %c0_33 = arith.constant 0 : index
    %25 = vector.load %arg8[%c2_31, %c0_32, %c0_33] : memref<3x1x32xf32, #tpu.memory_space<vmem>>, vector<1x1x32xf32>
    %26 = vector.shape_cast %25 : vector<1x1x32xf32> to vector<1x32xf32>
    %c0_34 = arith.constant 0 : index
    %c0_35 = arith.constant 0 : index
    %c0_36 = arith.constant 0 : index
    %27 = vector.load %arg9[%c0_34, %c0_35, %c0_36] : memref<3x32x32xbf16, #tpu.memory_space<vmem>>, vector<1x32x32xbf16>
    %28 = vector.shape_cast %27 : vector<1x32x32xbf16> to vector<32x32xbf16>
    %c1_37 = arith.constant 1 : index
    %c0_38 = arith.constant 0 : index
    %c0_39 = arith.constant 0 : index
    %29 = vector.load %arg9[%c1_37, %c0_38, %c0_39] : memref<3x32x32xbf16, #tpu.memory_space<vmem>>, vector<1x32x32xbf16>
    %30 = vector.shape_cast %29 : vector<1x32x32xbf16> to vector<32x32xbf16>
    %c2_40 = arith.constant 2 : index
    %c0_41 = arith.constant 0 : index
    %c0_42 = arith.constant 0 : index
    %31 = vector.load %arg9[%c2_40, %c0_41, %c0_42] : memref<3x32x32xbf16, #tpu.memory_space<vmem>>, vector<1x32x32xbf16>
    %32 = vector.shape_cast %31 : vector<1x32x32xbf16> to vector<32x32xbf16>
    %c0_43 = arith.constant 0 : index
    %c0_44 = arith.constant 0 : index
    %c0_45 = arith.constant 0 : index
    %33 = vector.load %arg10[%c0_43, %c0_44, %c0_45] : memref<3x1x32xf32, #tpu.memory_space<vmem>>, vector<1x1x32xf32>
    %34 = vector.shape_cast %33 : vector<1x1x32xf32> to vector<1x32xf32>
    %c1_46 = arith.constant 1 : index
    %c0_47 = arith.constant 0 : index
    %c0_48 = arith.constant 0 : index
    %35 = vector.load %arg10[%c1_46, %c0_47, %c0_48] : memref<3x1x32xf32, #tpu.memory_space<vmem>>, vector<1x1x32xf32>
    %36 = vector.shape_cast %35 : vector<1x1x32xf32> to vector<1x32xf32>
    %c2_49 = arith.constant 2 : index
    %c0_50 = arith.constant 0 : index
    %c0_51 = arith.constant 0 : index
    %37 = vector.load %arg10[%c2_49, %c0_50, %c0_51] : memref<3x1x32xf32, #tpu.memory_space<vmem>>, vector<1x1x32xf32>
    %38 = vector.shape_cast %37 : vector<1x1x32xf32> to vector<1x32xf32>
    %c0_52 = arith.constant 0 : index
    %c0_53 = arith.constant 0 : index
    %39 = vector.load %arg14[%c0_52, %c0_53] : memref<8x32xf32, #tpu.memory_space<vmem>>, vector<8x32xf32>
    %c0_54 = arith.constant 0 : index
    %c0_55 = arith.constant 0 : index
    %40 = vector.load %arg15[%c0_54, %c0_55] : memref<8x32xf32, #tpu.memory_space<vmem>>, vector<8x32xf32>
    %c0_56 = arith.constant 0 : index
    %c0_57 = arith.constant 0 : index
    %41 = vector.load %arg16[%c0_56, %c0_57] : memref<8x32xf32, #tpu.memory_space<vmem>>, vector<8x32xf32>
    %c0_58 = arith.constant 0 : index
    %c0_59 = arith.constant 0 : index
    %42 = vector.load %arg17[%c0_58, %c0_59] : memref<8x32xf32, #tpu.memory_space<vmem>>, vector<8x32xf32>
    %c0_i32_60 = arith.constant 0 : i32
    %43 = arith.truncf %39 : vector<8x32xf32> to vector<8x32xbf16>
    %cst = arith.constant dense<0.000000e+00> : vector<8x32xf32>
    %44 = tpu.matmul %43, %4, %cst {dimension_numbers = #tpu.dot_dimension_numbers<[1], [0], [0], [1], [0, 0, 1, 1], [], []>} : vector<8x32xbf16>, vector<32x32xbf16>, vector<8x32xf32> -> vector<8x32xf32>
    %45 = vector.broadcast %10 : vector<1x32xf32> to vector<8x32xf32>
    %46 = arith.addf %44, %45 : vector<8x32xf32>
    %cst_61 = arith.constant dense<0.000000e+00> : vector<8x32xf32>
    %47 = tpu.matmul %43, %6, %cst_61 {dimension_numbers = #tpu.dot_dimension_numbers<[1], [0], [0], [1], [0, 0, 1, 1], [], []>} : vector<8x32xbf16>, vector<32x32xbf16>, vector<8x32xf32> -> vector<8x32xf32>
    %48 = vector.broadcast %12 : vector<1x32xf32> to vector<8x32xf32>
    %49 = arith.addf %47, %48 : vector<8x32xf32>
    %cst_62 = arith.constant dense<0.000000e+00> : vector<8x32xf32>
    %50 = tpu.matmul %43, %8, %cst_62 {dimension_numbers = #tpu.dot_dimension_numbers<[1], [0], [0], [1], [0, 0, 1, 1], [], []>} : vector<8x32xbf16>, vector<32x32xbf16>, vector<8x32xf32> -> vector<8x32xf32>
    %51 = vector.broadcast %14 : vector<1x32xf32> to vector<8x32xf32>
    %52 = arith.addf %50, %51 : vector<8x32xf32>
    %53 = arith.index_cast %c0_i32_60 : i32 to index
    %c0_63 = arith.constant 0 : index
    %c0_64 = arith.constant 0 : index
    %54 = vector.load %arg2[%53, %c0_63, %c0_64] : memref<8x8x32xf32, #tpu.memory_space<vmem>>, vector<1x8x32xf32>
    %55 = vector.shape_cast %54 : vector<1x8x32xf32> to vector<8x32xf32>
    %56 = arith.addf %55, %46 : vector<8x32xf32>
    %57 = arith.negf %56 : vector<8x32xf32>
    %58 = math.exp %57 : vector<8x32xf32>
    %cst_65 = arith.constant 1.000000e+00 : f32
    %59 = vector.broadcast %cst_65 : f32 to vector<8x32xf32>
    %60 = arith.addf %59, %58 : vector<8x32xf32>
    %61 = arith.divf %59, %60 : vector<8x32xf32>
    %62 = arith.index_cast %c0_i32_60 : i32 to index
    %c0_66 = arith.constant 0 : index
    %c0_67 = arith.constant 0 : index
    %63 = vector.load %arg3[%62, %c0_66, %c0_67] : memref<8x8x32xf32, #tpu.memory_space<vmem>>, vector<1x8x32xf32>
    %64 = vector.shape_cast %63 : vector<1x8x32xf32> to vector<8x32xf32>
    %65 = arith.addf %64, %49 : vector<8x32xf32>
    %66 = arith.negf %65 : vector<8x32xf32>
    %67 = math.exp %66 : vector<8x32xf32>
    %cst_68 = arith.constant 1.000000e+00 : f32
    %68 = vector.broadcast %cst_68 : f32 to vector<8x32xf32>
    %69 = arith.addf %68, %67 : vector<8x32xf32>
    %70 = arith.divf %68, %69 : vector<8x32xf32>
    %71 = arith.index_cast %c0_i32_60 : i32 to index
    %c0_69 = arith.constant 0 : index
    %c0_70 = arith.constant 0 : index
    %72 = vector.load %arg4[%71, %c0_69, %c0_70] : memref<8x8x32xf32, #tpu.memory_space<vmem>>, vector<1x8x32xf32>
    %73 = vector.shape_cast %72 : vector<1x8x32xf32> to vector<8x32xf32>
    %74 = arith.mulf %61, %52 : vector<8x32xf32>
    %75 = arith.addf %73, %74 : vector<8x32xf32>
    %76 = math.tanh %75 : vector<8x32xf32>
    %cst_71 = arith.constant 1.000000e+00 : f32
    %77 = vector.broadcast %cst_71 : f32 to vector<8x32xf32>
    %78 = arith.subf %77, %70 : vector<8x32xf32>
    %79 = arith.mulf %78, %76 : vector<8x32xf32>
    %80 = arith.mulf %70, %39 : vector<8x32xf32>
    %81 = arith.addf %79, %80 : vector<8x32xf32>
    %82 = arith.truncf %81 : vector<8x32xf32> to vector<8x32xbf16>
    %83 = arith.truncf %40 : vector<8x32xf32> to vector<8x32xbf16>
    %cst_72 = arith.constant dense<0.000000e+00> : vector<8x32xf32>
    %84 = tpu.matmul %82, %16, %cst_72 {dimension_numbers = #tpu.dot_dimension_numbers<[1], [0], [0], [1], [0, 0, 1, 1], [], []>} : vector<8x32xbf16>, vector<32x32xbf16>, vector<8x32xf32> -> vector<8x32xf32>
    %85 = vector.broadcast %22 : vector<1x32xf32> to vector<8x32xf32>
    %86 = arith.addf %84, %85 : vector<8x32xf32>
    %cst_73 = arith.constant dense<0.000000e+00> : vector<8x32xf32>
    %87 = tpu.matmul %82, %18, %cst_73 {dimension_numbers = #tpu.dot_dimension_numbers<[1], [0], [0], [1], [0, 0, 1, 1], [], []>} : vector<8x32xbf16>, vector<32x32xbf16>, vector<8x32xf32> -> vector<8x32xf32>
    %88 = vector.broadcast %24 : vector<1x32xf32> to vector<8x32xf32>
    %89 = arith.addf %87, %88 : vector<8x32xf32>
    %cst_74 = arith.constant dense<0.000000e+00> : vector<8x32xf32>
    %90 = tpu.matmul %82, %20, %cst_74 {dimension_numbers = #tpu.dot_dimension_numbers<[1], [0], [0], [1], [0, 0, 1, 1], [], []>} : vector<8x32xbf16>, vector<32x32xbf16>, vector<8x32xf32> -> vector<8x32xf32>
    %91 = vector.broadcast %26 : vector<1x32xf32> to vector<8x32xf32>
    %92 = arith.addf %90, %91 : vector<8x32xf32>
    %cst_75 = arith.constant dense<0.000000e+00> : vector<8x32xf32>
    %93 = tpu.matmul %83, %28, %cst_75 {dimension_numbers = #tpu.dot_dimension_numbers<[1], [0], [0], [1], [0, 0, 1, 1], [], []>} : vector<8x32xbf16>, vector<32x32xbf16>, vector<8x32xf32> -> vector<8x32xf32>
    %94 = vector.broadcast %34 : vector<1x32xf32> to vector<8x32xf32>
    %95 = arith.addf %93, %94 : vector<8x32xf32>
    %cst_76 = arith.constant dense<0.000000e+00> : vector<8x32xf32>
    %96 = tpu.matmul %83, %30, %cst_76 {dimension_numbers = #tpu.dot_dimension_numbers<[1], [0], [0], [1], [0, 0, 1, 1], [], []>} : vector<8x32xbf16>, vector<32x32xbf16>, vector<8x32xf32> -> vector<8x32xf32>
    %97 = vector.broadcast %36 : vector<1x32xf32> to vector<8x32xf32>
    %98 = arith.addf %96, %97 : vector<8x32xf32>
    %cst_77 = arith.constant dense<0.000000e+00> : vector<8x32xf32>
    %99 = tpu.matmul %83, %32, %cst_77 {dimension_numbers = #tpu.dot_dimension_numbers<[1], [0], [0], [1], [0, 0, 1, 1], [], []>} : vector<8x32xbf16>, vector<32x32xbf16>, vector<8x32xf32> -> vector<8x32xf32>
    %100 = vector.broadcast %38 : vector<1x32xf32> to vector<8x32xf32>
    %101 = arith.addf %99, %100 : vector<8x32xf32>
    %102 = arith.addf %86, %95 : vector<8x32xf32>
    %103 = arith.negf %102 : vector<8x32xf32>
    %104 = math.exp %103 : vector<8x32xf32>
    %cst_78 = arith.constant 1.000000e+00 : f32
    %105 = vector.broadcast %cst_78 : f32 to vector<8x32xf32>
    %106 = arith.addf %105, %104 : vector<8x32xf32>
    %107 = arith.divf %105, %106 : vector<8x32xf32>
    %108 = arith.addf %89, %98 : vector<8x32xf32>
    %109 = arith.negf %108 : vector<8x32xf32>
    %110 = math.exp %109 : vector<8x32xf32>
    %cst_79 = arith.constant 1.000000e+00 : f32
    %111 = vector.broadcast %cst_79 : f32 to vector<8x32xf32>
    %112 = arith.addf %111, %110 : vector<8x32xf32>
    %113 = arith.divf %111, %112 : vector<8x32xf32>
    %114 = arith.mulf %107, %101 : vector<8x32xf32>
    %115 = arith.addf %92, %114 : vector<8x32xf32>
    %116 = math.tanh %115 : vector<8x32xf32>
    %cst_80 = arith.constant 1.000000e+00 : f32
    %117 = vector.broadcast %cst_80 : f32 to vector<8x32xf32>
    %118 = arith.subf %117, %113 : vector<8x32xf32>
    %119 = arith.mulf %118, %116 : vector<8x32xf32>
    %120 = arith.mulf %113, %40 : vector<8x32xf32>
    %121 = arith.addf %119, %120 : vector<8x32xf32>
    %122 = arith.maximumf %41, %121 : vector<8x32xf32>
    %123 = arith.addf %42, %121 : vector<8x32xf32>
    %c1_i32 = arith.constant 1 : i32
    %124 = arith.truncf %81 : vector<8x32xf32> to vector<8x32xbf16>
    %cst_81 = arith.constant dense<0.000000e+00> : vector<8x32xf32>
    %125 = tpu.matmul %124, %4, %cst_81 {dimension_numbers = #tpu.dot_dimension_numbers<[1], [0], [0], [1], [0, 0, 1, 1], [], []>} : vector<8x32xbf16>, vector<32x32xbf16>, vector<8x32xf32> -> vector<8x32xf32>
    %126 = vector.broadcast %10 : vector<1x32xf32> to vector<8x32xf32>
    %127 = arith.addf %125, %126 : vector<8x32xf32>
    %cst_82 = arith.constant dense<0.000000e+00> : vector<8x32xf32>
    %128 = tpu.matmul %124, %6, %cst_82 {dimension_numbers = #tpu.dot_dimension_numbers<[1], [0], [0], [1], [0, 0, 1, 1], [], []>} : vector<8x32xbf16>, vector<32x32xbf16>, vector<8x32xf32> -> vector<8x32xf32>
    %129 = vector.broadcast %12 : vector<1x32xf32> to vector<8x32xf32>
    %130 = arith.addf %128, %129 : vector<8x32xf32>
    %cst_83 = arith.constant dense<0.000000e+00> : vector<8x32xf32>
    %131 = tpu.matmul %124, %8, %cst_83 {dimension_numbers = #tpu.dot_dimension_numbers<[1], [0], [0], [1], [0, 0, 1, 1], [], []>} : vector<8x32xbf16>, vector<32x32xbf16>, vector<8x32xf32> -> vector<8x32xf32>
    %132 = vector.broadcast %14 : vector<1x32xf32> to vector<8x32xf32>
    %133 = arith.addf %131, %132 : vector<8x32xf32>
    %134 = arith.index_cast %c1_i32 : i32 to index
    %c0_84 = arith.constant 0 : index
    %c0_85 = arith.constant 0 : index
    %135 = vector.load %arg2[%134, %c0_84, %c0_85] : memref<8x8x32xf32, #tpu.memory_space<vmem>>, vector<1x8x32xf32>
    %136 = vector.shape_cast %135 : vector<1x8x32xf32> to vector<8x32xf32>
    %137 = arith.addf %136, %127 : vector<8x32xf32>
    %138 = arith.negf %137 : vector<8x32xf32>
    %139 = math.exp %138 : vector<8x32xf32>
    %cst_86 = arith.constant 1.000000e+00 : f32
    %140 = vector.broadcast %cst_86 : f32 to vector<8x32xf32>
    %141 = arith.addf %140, %139 : vector<8x32xf32>
    %142 = arith.divf %140, %141 : vector<8x32xf32>
    %143 = arith.index_cast %c1_i32 : i32 to index
    %c0_87 = arith.constant 0 : index
    %c0_88 = arith.constant 0 : index
    %144 = vector.load %arg3[%143, %c0_87, %c0_88] : memref<8x8x32xf32, #tpu.memory_space<vmem>>, vector<1x8x32xf32>
    %145 = vector.shape_cast %144 : vector<1x8x32xf32> to vector<8x32xf32>
    %146 = arith.addf %145, %130 : vector<8x32xf32>
    %147 = arith.negf %146 : vector<8x32xf32>
    %148 = math.exp %147 : vector<8x32xf32>
    %cst_89 = arith.constant 1.000000e+00 : f32
    %149 = vector.broadcast %cst_89 : f32 to vector<8x32xf32>
    %150 = arith.addf %149, %148 : vector<8x32xf32>
    %151 = arith.divf %149, %150 : vector<8x32xf32>
    %152 = arith.index_cast %c1_i32 : i32 to index
    %c0_90 = arith.constant 0 : index
    %c0_91 = arith.constant 0 : index
    %153 = vector.load %arg4[%152, %c0_90, %c0_91] : memref<8x8x32xf32, #tpu.memory_space<vmem>>, vector<1x8x32xf32>
    %154 = vector.shape_cast %153 : vector<1x8x32xf32> to vector<8x32xf32>
    %155 = arith.mulf %142, %133 : vector<8x32xf32>
    %156 = arith.addf %154, %155 : vector<8x32xf32>
    %157 = math.tanh %156 : vector<8x32xf32>
    %cst_92 = arith.constant 1.000000e+00 : f32
    %158 = vector.broadcast %cst_92 : f32 to vector<8x32xf32>
    %159 = arith.subf %158, %151 : vector<8x32xf32>
    %160 = arith.mulf %159, %157 : vector<8x32xf32>
    %161 = arith.mulf %151, %81 : vector<8x32xf32>
    %162 = arith.addf %160, %161 : vector<8x32xf32>
    %163 = arith.truncf %162 : vector<8x32xf32> to vector<8x32xbf16>
    %164 = arith.truncf %121 : vector<8x32xf32> to vector<8x32xbf16>
    %cst_93 = arith.constant dense<0.000000e+00> : vector<8x32xf32>
    %165 = tpu.matmul %163, %16, %cst_93 {dimension_numbers = #tpu.dot_dimension_numbers<[1], [0], [0], [1], [0, 0, 1, 1], [], []>} : vector<8x32xbf16>, vector<32x32xbf16>, vector<8x32xf32> -> vector<8x32xf32>
    %166 = vector.broadcast %22 : vector<1x32xf32> to vector<8x32xf32>
    %167 = arith.addf %165, %166 : vector<8x32xf32>
    %cst_94 = arith.constant dense<0.000000e+00> : vector<8x32xf32>
    %168 = tpu.matmul %163, %18, %cst_94 {dimension_numbers = #tpu.dot_dimension_numbers<[1], [0], [0], [1], [0, 0, 1, 1], [], []>} : vector<8x32xbf16>, vector<32x32xbf16>, vector<8x32xf32> -> vector<8x32xf32>
    %169 = vector.broadcast %24 : vector<1x32xf32> to vector<8x32xf32>
    %170 = arith.addf %168, %169 : vector<8x32xf32>
    %cst_95 = arith.constant dense<0.000000e+00> : vector<8x32xf32>
    %171 = tpu.matmul %163, %20, %cst_95 {dimension_numbers = #tpu.dot_dimension_numbers<[1], [0], [0], [1], [0, 0, 1, 1], [], []>} : vector<8x32xbf16>, vector<32x32xbf16>, vector<8x32xf32> -> vector<8x32xf32>
    %172 = vector.broadcast %26 : vector<1x32xf32> to vector<8x32xf32>
    %173 = arith.addf %171, %172 : vector<8x32xf32>
    %cst_96 = arith.constant dense<0.000000e+00> : vector<8x32xf32>
    %174 = tpu.matmul %164, %28, %cst_96 {dimension_numbers = #tpu.dot_dimension_numbers<[1], [0], [0], [1], [0, 0, 1, 1], [], []>} : vector<8x32xbf16>, vector<32x32xbf16>, vector<8x32xf32> -> vector<8x32xf32>
    %175 = vector.broadcast %34 : vector<1x32xf32> to vector<8x32xf32>
    %176 = arith.addf %174, %175 : vector<8x32xf32>
    %cst_97 = arith.constant dense<0.000000e+00> : vector<8x32xf32>
    %177 = tpu.matmul %164, %30, %cst_97 {dimension_numbers = #tpu.dot_dimension_numbers<[1], [0], [0], [1], [0, 0, 1, 1], [], []>} : vector<8x32xbf16>, vector<32x32xbf16>, vector<8x32xf32> -> vector<8x32xf32>
    %178 = vector.broadcast %36 : vector<1x32xf32> to vector<8x32xf32>
    %179 = arith.addf %177, %178 : vector<8x32xf32>
    %cst_98 = arith.constant dense<0.000000e+00> : vector<8x32xf32>
    %180 = tpu.matmul %164, %32, %cst_98 {dimension_numbers = #tpu.dot_dimension_numbers<[1], [0], [0], [1], [0, 0, 1, 1], [], []>} : vector<8x32xbf16>, vector<32x32xbf16>, vector<8x32xf32> -> vector<8x32xf32>
    %181 = vector.broadcast %38 : vector<1x32xf32> to vector<8x32xf32>
    %182 = arith.addf %180, %181 : vector<8x32xf32>
    %183 = arith.addf %167, %176 : vector<8x32xf32>
    %184 = arith.negf %183 : vector<8x32xf32>
    %185 = math.exp %184 : vector<8x32xf32>
    %cst_99 = arith.constant 1.000000e+00 : f32
    %186 = vector.broadcast %cst_99 : f32 to vector<8x32xf32>
    %187 = arith.addf %186, %185 : vector<8x32xf32>
    %188 = arith.divf %186, %187 : vector<8x32xf32>
    %189 = arith.addf %170, %179 : vector<8x32xf32>
    %190 = arith.negf %189 : vector<8x32xf32>
    %191 = math.exp %190 : vector<8x32xf32>
    %cst_100 = arith.constant 1.000000e+00 : f32
    %192 = vector.broadcast %cst_100 : f32 to vector<8x32xf32>
    %193 = arith.addf %192, %191 : vector<8x32xf32>
    %194 = arith.divf %192, %193 : vector<8x32xf32>
    %195 = arith.mulf %188, %182 : vector<8x32xf32>
    %196 = arith.addf %173, %195 : vector<8x32xf32>
    %197 = math.tanh %196 : vector<8x32xf32>
    %cst_101 = arith.constant 1.000000e+00 : f32
    %198 = vector.broadcast %cst_101 : f32 to vector<8x32xf32>
    %199 = arith.subf %198, %194 : vector<8x32xf32>
    %200 = arith.mulf %199, %197 : vector<8x32xf32>
    %201 = arith.mulf %194, %121 : vector<8x32xf32>
    %202 = arith.addf %200, %201 : vector<8x32xf32>
    %203 = arith.maximumf %122, %202 : vector<8x32xf32>
    %204 = arith.addf %123, %202 : vector<8x32xf32>
    %c2_i32 = arith.constant 2 : i32
    %205 = arith.truncf %162 : vector<8x32xf32> to vector<8x32xbf16>
    %cst_102 = arith.constant dense<0.000000e+00> : vector<8x32xf32>
    %206 = tpu.matmul %205, %4, %cst_102 {dimension_numbers = #tpu.dot_dimension_numbers<[1], [0], [0], [1], [0, 0, 1, 1], [], []>} : vector<8x32xbf16>, vector<32x32xbf16>, vector<8x32xf32> -> vector<8x32xf32>
    %207 = vector.broadcast %10 : vector<1x32xf32> to vector<8x32xf32>
    %208 = arith.addf %206, %207 : vector<8x32xf32>
    %cst_103 = arith.constant dense<0.000000e+00> : vector<8x32xf32>
    %209 = tpu.matmul %205, %6, %cst_103 {dimension_numbers = #tpu.dot_dimension_numbers<[1], [0], [0], [1], [0, 0, 1, 1], [], []>} : vector<8x32xbf16>, vector<32x32xbf16>, vector<8x32xf32> -> vector<8x32xf32>
    %210 = vector.broadcast %12 : vector<1x32xf32> to vector<8x32xf32>
    %211 = arith.addf %209, %210 : vector<8x32xf32>
    %cst_104 = arith.constant dense<0.000000e+00> : vector<8x32xf32>
    %212 = tpu.matmul %205, %8, %cst_104 {dimension_numbers = #tpu.dot_dimension_numbers<[1], [0], [0], [1], [0, 0, 1, 1], [], []>} : vector<8x32xbf16>, vector<32x32xbf16>, vector<8x32xf32> -> vector<8x32xf32>
    %213 = vector.broadcast %14 : vector<1x32xf32> to vector<8x32xf32>
    %214 = arith.addf %212, %213 : vector<8x32xf32>
    %215 = arith.index_cast %c2_i32 : i32 to index
    %c0_105 = arith.constant 0 : index
    %c0_106 = arith.constant 0 : index
    %216 = vector.load %arg2[%215, %c0_105, %c0_106] : memref<8x8x32xf32, #tpu.memory_space<vmem>>, vector<1x8x32xf32>
    %217 = vector.shape_cast %216 : vector<1x8x32xf32> to vector<8x32xf32>
    %218 = arith.addf %217, %208 : vector<8x32xf32>
    %219 = arith.negf %218 : vector<8x32xf32>
    %220 = math.exp %219 : vector<8x32xf32>
    %cst_107 = arith.constant 1.000000e+00 : f32
    %221 = vector.broadcast %cst_107 : f32 to vector<8x32xf32>
    %222 = arith.addf %221, %220 : vector<8x32xf32>
    %223 = arith.divf %221, %222 : vector<8x32xf32>
    %224 = arith.index_cast %c2_i32 : i32 to index
    %c0_108 = arith.constant 0 : index
    %c0_109 = arith.constant 0 : index
    %225 = vector.load %arg3[%224, %c0_108, %c0_109] : memref<8x8x32xf32, #tpu.memory_space<vmem>>, vector<1x8x32xf32>
    %226 = vector.shape_cast %225 : vector<1x8x32xf32> to vector<8x32xf32>
    %227 = arith.addf %226, %211 : vector<8x32xf32>
    %228 = arith.negf %227 : vector<8x32xf32>
    %229 = math.exp %228 : vector<8x32xf32>
    %cst_110 = arith.constant 1.000000e+00 : f32
    %230 = vector.broadcast %cst_110 : f32 to vector<8x32xf32>
    %231 = arith.addf %230, %229 : vector<8x32xf32>
    %232 = arith.divf %230, %231 : vector<8x32xf32>
    %233 = arith.index_cast %c2_i32 : i32 to index
    %c0_111 = arith.constant 0 : index
    %c0_112 = arith.constant 0 : index
    %234 = vector.load %arg4[%233, %c0_111, %c0_112] : memref<8x8x32xf32, #tpu.memory_space<vmem>>, vector<1x8x32xf32>
    %235 = vector.shape_cast %234 : vector<1x8x32xf32> to vector<8x32xf32>
    %236 = arith.mulf %223, %214 : vector<8x32xf32>
    %237 = arith.addf %235, %236 : vector<8x32xf32>
    %238 = math.tanh %237 : vector<8x32xf32>
    %cst_113 = arith.constant 1.000000e+00 : f32
    %239 = vector.broadcast %cst_113 : f32 to vector<8x32xf32>
    %240 = arith.subf %239, %232 : vector<8x32xf32>
    %241 = arith.mulf %240, %238 : vector<8x32xf32>
    %242 = arith.mulf %232, %162 : vector<8x32xf32>
    %243 = arith.addf %241, %242 : vector<8x32xf32>
    %244 = arith.truncf %243 : vector<8x32xf32> to vector<8x32xbf16>
    %245 = arith.truncf %202 : vector<8x32xf32> to vector<8x32xbf16>
    %cst_114 = arith.constant dense<0.000000e+00> : vector<8x32xf32>
    %246 = tpu.matmul %244, %16, %cst_114 {dimension_numbers = #tpu.dot_dimension_numbers<[1], [0], [0], [1], [0, 0, 1, 1], [], []>} : vector<8x32xbf16>, vector<32x32xbf16>, vector<8x32xf32> -> vector<8x32xf32>
    %247 = vector.broadcast %22 : vector<1x32xf32> to vector<8x32xf32>
    %248 = arith.addf %246, %247 : vector<8x32xf32>
    %cst_115 = arith.constant dense<0.000000e+00> : vector<8x32xf32>
    %249 = tpu.matmul %244, %18, %cst_115 {dimension_numbers = #tpu.dot_dimension_numbers<[1], [0], [0], [1], [0, 0, 1, 1], [], []>} : vector<8x32xbf16>, vector<32x32xbf16>, vector<8x32xf32> -> vector<8x32xf32>
    %250 = vector.broadcast %24 : vector<1x32xf32> to vector<8x32xf32>
    %251 = arith.addf %249, %250 : vector<8x32xf32>
    %cst_116 = arith.constant dense<0.000000e+00> : vector<8x32xf32>
    %252 = tpu.matmul %244, %20, %cst_116 {dimension_numbers = #tpu.dot_dimension_numbers<[1], [0], [0], [1], [0, 0, 1, 1], [], []>} : vector<8x32xbf16>, vector<32x32xbf16>, vector<8x32xf32> -> vector<8x32xf32>
    %253 = vector.broadcast %26 : vector<1x32xf32> to vector<8x32xf32>
    %254 = arith.addf %252, %253 : vector<8x32xf32>
    %cst_117 = arith.constant dense<0.000000e+00> : vector<8x32xf32>
    %255 = tpu.matmul %245, %28, %cst_117 {dimension_numbers = #tpu.dot_dimension_numbers<[1], [0], [0], [1], [0, 0, 1, 1], [], []>} : vector<8x32xbf16>, vector<32x32xbf16>, vector<8x32xf32> -> vector<8x32xf32>
    %256 = vector.broadcast %34 : vector<1x32xf32> to vector<8x32xf32>
    %257 = arith.addf %255, %256 : vector<8x32xf32>
    %cst_118 = arith.constant dense<0.000000e+00> : vector<8x32xf32>
    %258 = tpu.matmul %245, %30, %cst_118 {dimension_numbers = #tpu.dot_dimension_numbers<[1], [0], [0], [1], [0, 0, 1, 1], [], []>} : vector<8x32xbf16>, vector<32x32xbf16>, vector<8x32xf32> -> vector<8x32xf32>
    %259 = vector.broadcast %36 : vector<1x32xf32> to vector<8x32xf32>
    %260 = arith.addf %258, %259 : vector<8x32xf32>
    %cst_119 = arith.constant dense<0.000000e+00> : vector<8x32xf32>
    %261 = tpu.matmul %245, %32, %cst_119 {dimension_numbers = #tpu.dot_dimension_numbers<[1], [0], [0], [1], [0, 0, 1, 1], [], []>} : vector<8x32xbf16>, vector<32x32xbf16>, vector<8x32xf32> -> vector<8x32xf32>
    %262 = vector.broadcast %38 : vector<1x32xf32> to vector<8x32xf32>
    %263 = arith.addf %261, %262 : vector<8x32xf32>
    %264 = arith.addf %248, %257 : vector<8x32xf32>
    %265 = arith.negf %264 : vector<8x32xf32>
    %266 = math.exp %265 : vector<8x32xf32>
    %cst_120 = arith.constant 1.000000e+00 : f32
    %267 = vector.broadcast %cst_120 : f32 to vector<8x32xf32>
    %268 = arith.addf %267, %266 : vector<8x32xf32>
    %269 = arith.divf %267, %268 : vector<8x32xf32>
    %270 = arith.addf %251, %260 : vector<8x32xf32>
    %271 = arith.negf %270 : vector<8x32xf32>
    %272 = math.exp %271 : vector<8x32xf32>
    %cst_121 = arith.constant 1.000000e+00 : f32
    %273 = vector.broadcast %cst_121 : f32 to vector<8x32xf32>
    %274 = arith.addf %273, %272 : vector<8x32xf32>
    %275 = arith.divf %273, %274 : vector<8x32xf32>
    %276 = arith.mulf %269, %263 : vector<8x32xf32>
    %277 = arith.addf %254, %276 : vector<8x32xf32>
    %278 = math.tanh %277 : vector<8x32xf32>
    %cst_122 = arith.constant 1.000000e+00 : f32
    %279 = vector.broadcast %cst_122 : f32 to vector<8x32xf32>
    %280 = arith.subf %279, %275 : vector<8x32xf32>
    %281 = arith.mulf %280, %278 : vector<8x32xf32>
    %282 = arith.mulf %275, %202 : vector<8x32xf32>
    %283 = arith.addf %281, %282 : vector<8x32xf32>
    %284 = arith.maximumf %203, %283 : vector<8x32xf32>
    %285 = arith.addf %204, %283 : vector<8x32xf32>
    %c3_i32 = arith.constant 3 : i32
    %286 = arith.truncf %243 : vector<8x32xf32> to vector<8x32xbf16>
    %cst_123 = arith.constant dense<0.000000e+00> : vector<8x32xf32>
    %287 = tpu.matmul %286, %4, %cst_123 {dimension_numbers = #tpu.dot_dimension_numbers<[1], [0], [0], [1], [0, 0, 1, 1], [], []>} : vector<8x32xbf16>, vector<32x32xbf16>, vector<8x32xf32> -> vector<8x32xf32>
    %288 = vector.broadcast %10 : vector<1x32xf32> to vector<8x32xf32>
    %289 = arith.addf %287, %288 : vector<8x32xf32>
    %cst_124 = arith.constant dense<0.000000e+00> : vector<8x32xf32>
    %290 = tpu.matmul %286, %6, %cst_124 {dimension_numbers = #tpu.dot_dimension_numbers<[1], [0], [0], [1], [0, 0, 1, 1], [], []>} : vector<8x32xbf16>, vector<32x32xbf16>, vector<8x32xf32> -> vector<8x32xf32>
    %291 = vector.broadcast %12 : vector<1x32xf32> to vector<8x32xf32>
    %292 = arith.addf %290, %291 : vector<8x32xf32>
    %cst_125 = arith.constant dense<0.000000e+00> : vector<8x32xf32>
    %293 = tpu.matmul %286, %8, %cst_125 {dimension_numbers = #tpu.dot_dimension_numbers<[1], [0], [0], [1], [0, 0, 1, 1], [], []>} : vector<8x32xbf16>, vector<32x32xbf16>, vector<8x32xf32> -> vector<8x32xf32>
    %294 = vector.broadcast %14 : vector<1x32xf32> to vector<8x32xf32>
    %295 = arith.addf %293, %294 : vector<8x32xf32>
    %296 = arith.index_cast %c3_i32 : i32 to index
    %c0_126 = arith.constant 0 : index
    %c0_127 = arith.constant 0 : index
    %297 = vector.load %arg2[%296, %c0_126, %c0_127] : memref<8x8x32xf32, #tpu.memory_space<vmem>>, vector<1x8x32xf32>
    %298 = vector.shape_cast %297 : vector<1x8x32xf32> to vector<8x32xf32>
    %299 = arith.addf %298, %289 : vector<8x32xf32>
    %300 = arith.negf %299 : vector<8x32xf32>
    %301 = math.exp %300 : vector<8x32xf32>
    %cst_128 = arith.constant 1.000000e+00 : f32
    %302 = vector.broadcast %cst_128 : f32 to vector<8x32xf32>
    %303 = arith.addf %302, %301 : vector<8x32xf32>
    %304 = arith.divf %302, %303 : vector<8x32xf32>
    %305 = arith.index_cast %c3_i32 : i32 to index
    %c0_129 = arith.constant 0 : index
    %c0_130 = arith.constant 0 : index
    %306 = vector.load %arg3[%305, %c0_129, %c0_130] : memref<8x8x32xf32, #tpu.memory_space<vmem>>, vector<1x8x32xf32>
    %307 = vector.shape_cast %306 : vector<1x8x32xf32> to vector<8x32xf32>
    %308 = arith.addf %307, %292 : vector<8x32xf32>
    %309 = arith.negf %308 : vector<8x32xf32>
    %310 = math.exp %309 : vector<8x32xf32>
    %cst_131 = arith.constant 1.000000e+00 : f32
    %311 = vector.broadcast %cst_131 : f32 to vector<8x32xf32>
    %312 = arith.addf %311, %310 : vector<8x32xf32>
    %313 = arith.divf %311, %312 : vector<8x32xf32>
    %314 = arith.index_cast %c3_i32 : i32 to index
    %c0_132 = arith.constant 0 : index
    %c0_133 = arith.constant 0 : index
    %315 = vector.load %arg4[%314, %c0_132, %c0_133] : memref<8x8x32xf32, #tpu.memory_space<vmem>>, vector<1x8x32xf32>
    %316 = vector.shape_cast %315 : vector<1x8x32xf32> to vector<8x32xf32>
    %317 = arith.mulf %304, %295 : vector<8x32xf32>
    %318 = arith.addf %316, %317 : vector<8x32xf32>
    %319 = math.tanh %318 : vector<8x32xf32>
    %cst_134 = arith.constant 1.000000e+00 : f32
    %320 = vector.broadcast %cst_134 : f32 to vector<8x32xf32>
    %321 = arith.subf %320, %313 : vector<8x32xf32>
    %322 = arith.mulf %321, %319 : vector<8x32xf32>
    %323 = arith.mulf %313, %243 : vector<8x32xf32>
    %324 = arith.addf %322, %323 : vector<8x32xf32>
    %325 = arith.truncf %324 : vector<8x32xf32> to vector<8x32xbf16>
    %326 = arith.truncf %283 : vector<8x32xf32> to vector<8x32xbf16>
    %cst_135 = arith.constant dense<0.000000e+00> : vector<8x32xf32>
    %327 = tpu.matmul %325, %16, %cst_135 {dimension_numbers = #tpu.dot_dimension_numbers<[1], [0], [0], [1], [0, 0, 1, 1], [], []>} : vector<8x32xbf16>, vector<32x32xbf16>, vector<8x32xf32> -> vector<8x32xf32>
    %328 = vector.broadcast %22 : vector<1x32xf32> to vector<8x32xf32>
    %329 = arith.addf %327, %328 : vector<8x32xf32>
    %cst_136 = arith.constant dense<0.000000e+00> : vector<8x32xf32>
    %330 = tpu.matmul %325, %18, %cst_136 {dimension_numbers = #tpu.dot_dimension_numbers<[1], [0], [0], [1], [0, 0, 1, 1], [], []>} : vector<8x32xbf16>, vector<32x32xbf16>, vector<8x32xf32> -> vector<8x32xf32>
    %331 = vector.broadcast %24 : vector<1x32xf32> to vector<8x32xf32>
    %332 = arith.addf %330, %331 : vector<8x32xf32>
    %cst_137 = arith.constant dense<0.000000e+00> : vector<8x32xf32>
    %333 = tpu.matmul %325, %20, %cst_137 {dimension_numbers = #tpu.dot_dimension_numbers<[1], [0], [0], [1], [0, 0, 1, 1], [], []>} : vector<8x32xbf16>, vector<32x32xbf16>, vector<8x32xf32> -> vector<8x32xf32>
    %334 = vector.broadcast %26 : vector<1x32xf32> to vector<8x32xf32>
    %335 = arith.addf %333, %334 : vector<8x32xf32>
    %cst_138 = arith.constant dense<0.000000e+00> : vector<8x32xf32>
    %336 = tpu.matmul %326, %28, %cst_138 {dimension_numbers = #tpu.dot_dimension_numbers<[1], [0], [0], [1], [0, 0, 1, 1], [], []>} : vector<8x32xbf16>, vector<32x32xbf16>, vector<8x32xf32> -> vector<8x32xf32>
    %337 = vector.broadcast %34 : vector<1x32xf32> to vector<8x32xf32>
    %338 = arith.addf %336, %337 : vector<8x32xf32>
    %cst_139 = arith.constant dense<0.000000e+00> : vector<8x32xf32>
    %339 = tpu.matmul %326, %30, %cst_139 {dimension_numbers = #tpu.dot_dimension_numbers<[1], [0], [0], [1], [0, 0, 1, 1], [], []>} : vector<8x32xbf16>, vector<32x32xbf16>, vector<8x32xf32> -> vector<8x32xf32>
    %340 = vector.broadcast %36 : vector<1x32xf32> to vector<8x32xf32>
    %341 = arith.addf %339, %340 : vector<8x32xf32>
    %cst_140 = arith.constant dense<0.000000e+00> : vector<8x32xf32>
    %342 = tpu.matmul %326, %32, %cst_140 {dimension_numbers = #tpu.dot_dimension_numbers<[1], [0], [0], [1], [0, 0, 1, 1], [], []>} : vector<8x32xbf16>, vector<32x32xbf16>, vector<8x32xf32> -> vector<8x32xf32>
    %343 = vector.broadcast %38 : vector<1x32xf32> to vector<8x32xf32>
    %344 = arith.addf %342, %343 : vector<8x32xf32>
    %345 = arith.addf %329, %338 : vector<8x32xf32>
    %346 = arith.negf %345 : vector<8x32xf32>
    %347 = math.exp %346 : vector<8x32xf32>
    %cst_141 = arith.constant 1.000000e+00 : f32
    %348 = vector.broadcast %cst_141 : f32 to vector<8x32xf32>
    %349 = arith.addf %348, %347 : vector<8x32xf32>
    %350 = arith.divf %348, %349 : vector<8x32xf32>
    %351 = arith.addf %332, %341 : vector<8x32xf32>
    %352 = arith.negf %351 : vector<8x32xf32>
    %353 = math.exp %352 : vector<8x32xf32>
    %cst_142 = arith.constant 1.000000e+00 : f32
    %354 = vector.broadcast %cst_142 : f32 to vector<8x32xf32>
    %355 = arith.addf %354, %353 : vector<8x32xf32>
    %356 = arith.divf %354, %355 : vector<8x32xf32>
    %357 = arith.mulf %350, %344 : vector<8x32xf32>
    %358 = arith.addf %335, %357 : vector<8x32xf32>
    %359 = math.tanh %358 : vector<8x32xf32>
    %cst_143 = arith.constant 1.000000e+00 : f32
    %360 = vector.broadcast %cst_143 : f32 to vector<8x32xf32>
    %361 = arith.subf %360, %356 : vector<8x32xf32>
    %362 = arith.mulf %361, %359 : vector<8x32xf32>
    %363 = arith.mulf %356, %283 : vector<8x32xf32>
    %364 = arith.addf %362, %363 : vector<8x32xf32>
    %365 = arith.maximumf %284, %364 : vector<8x32xf32>
    %366 = arith.addf %285, %364 : vector<8x32xf32>
    %c4_i32 = arith.constant 4 : i32
    %367 = arith.truncf %324 : vector<8x32xf32> to vector<8x32xbf16>
    %cst_144 = arith.constant dense<0.000000e+00> : vector<8x32xf32>
    %368 = tpu.matmul %367, %4, %cst_144 {dimension_numbers = #tpu.dot_dimension_numbers<[1], [0], [0], [1], [0, 0, 1, 1], [], []>} : vector<8x32xbf16>, vector<32x32xbf16>, vector<8x32xf32> -> vector<8x32xf32>
    %369 = vector.broadcast %10 : vector<1x32xf32> to vector<8x32xf32>
    %370 = arith.addf %368, %369 : vector<8x32xf32>
    %cst_145 = arith.constant dense<0.000000e+00> : vector<8x32xf32>
    %371 = tpu.matmul %367, %6, %cst_145 {dimension_numbers = #tpu.dot_dimension_numbers<[1], [0], [0], [1], [0, 0, 1, 1], [], []>} : vector<8x32xbf16>, vector<32x32xbf16>, vector<8x32xf32> -> vector<8x32xf32>
    %372 = vector.broadcast %12 : vector<1x32xf32> to vector<8x32xf32>
    %373 = arith.addf %371, %372 : vector<8x32xf32>
    %cst_146 = arith.constant dense<0.000000e+00> : vector<8x32xf32>
    %374 = tpu.matmul %367, %8, %cst_146 {dimension_numbers = #tpu.dot_dimension_numbers<[1], [0], [0], [1], [0, 0, 1, 1], [], []>} : vector<8x32xbf16>, vector<32x32xbf16>, vector<8x32xf32> -> vector<8x32xf32>
    %375 = vector.broadcast %14 : vector<1x32xf32> to vector<8x32xf32>
    %376 = arith.addf %374, %375 : vector<8x32xf32>
    %377 = arith.index_cast %c4_i32 : i32 to index
    %c0_147 = arith.constant 0 : index
    %c0_148 = arith.constant 0 : index
    %378 = vector.load %arg2[%377, %c0_147, %c0_148] : memref<8x8x32xf32, #tpu.memory_space<vmem>>, vector<1x8x32xf32>
    %379 = vector.shape_cast %378 : vector<1x8x32xf32> to vector<8x32xf32>
    %380 = arith.addf %379, %370 : vector<8x32xf32>
    %381 = arith.negf %380 : vector<8x32xf32>
    %382 = math.exp %381 : vector<8x32xf32>
    %cst_149 = arith.constant 1.000000e+00 : f32
    %383 = vector.broadcast %cst_149 : f32 to vector<8x32xf32>
    %384 = arith.addf %383, %382 : vector<8x32xf32>
    %385 = arith.divf %383, %384 : vector<8x32xf32>
    %386 = arith.index_cast %c4_i32 : i32 to index
    %c0_150 = arith.constant 0 : index
    %c0_151 = arith.constant 0 : index
    %387 = vector.load %arg3[%386, %c0_150, %c0_151] : memref<8x8x32xf32, #tpu.memory_space<vmem>>, vector<1x8x32xf32>
    %388 = vector.shape_cast %387 : vector<1x8x32xf32> to vector<8x32xf32>
    %389 = arith.addf %388, %373 : vector<8x32xf32>
    %390 = arith.negf %389 : vector<8x32xf32>
    %391 = math.exp %390 : vector<8x32xf32>
    %cst_152 = arith.constant 1.000000e+00 : f32
    %392 = vector.broadcast %cst_152 : f32 to vector<8x32xf32>
    %393 = arith.addf %392, %391 : vector<8x32xf32>
    %394 = arith.divf %392, %393 : vector<8x32xf32>
    %395 = arith.index_cast %c4_i32 : i32 to index
    %c0_153 = arith.constant 0 : index
    %c0_154 = arith.constant 0 : index
    %396 = vector.load %arg4[%395, %c0_153, %c0_154] : memref<8x8x32xf32, #tpu.memory_space<vmem>>, vector<1x8x32xf32>
    %397 = vector.shape_cast %396 : vector<1x8x32xf32> to vector<8x32xf32>
    %398 = arith.mulf %385, %376 : vector<8x32xf32>
    %399 = arith.addf %397, %398 : vector<8x32xf32>
    %400 = math.tanh %399 : vector<8x32xf32>
    %cst_155 = arith.constant 1.000000e+00 : f32
    %401 = vector.broadcast %cst_155 : f32 to vector<8x32xf32>
    %402 = arith.subf %401, %394 : vector<8x32xf32>
    %403 = arith.mulf %402, %400 : vector<8x32xf32>
    %404 = arith.mulf %394, %324 : vector<8x32xf32>
    %405 = arith.addf %403, %404 : vector<8x32xf32>
    %406 = arith.truncf %405 : vector<8x32xf32> to vector<8x32xbf16>
    %407 = arith.truncf %364 : vector<8x32xf32> to vector<8x32xbf16>
    %cst_156 = arith.constant dense<0.000000e+00> : vector<8x32xf32>
    %408 = tpu.matmul %406, %16, %cst_156 {dimension_numbers = #tpu.dot_dimension_numbers<[1], [0], [0], [1], [0, 0, 1, 1], [], []>} : vector<8x32xbf16>, vector<32x32xbf16>, vector<8x32xf32> -> vector<8x32xf32>
    %409 = vector.broadcast %22 : vector<1x32xf32> to vector<8x32xf32>
    %410 = arith.addf %408, %409 : vector<8x32xf32>
    %cst_157 = arith.constant dense<0.000000e+00> : vector<8x32xf32>
    %411 = tpu.matmul %406, %18, %cst_157 {dimension_numbers = #tpu.dot_dimension_numbers<[1], [0], [0], [1], [0, 0, 1, 1], [], []>} : vector<8x32xbf16>, vector<32x32xbf16>, vector<8x32xf32> -> vector<8x32xf32>
    %412 = vector.broadcast %24 : vector<1x32xf32> to vector<8x32xf32>
    %413 = arith.addf %411, %412 : vector<8x32xf32>
    %cst_158 = arith.constant dense<0.000000e+00> : vector<8x32xf32>
    %414 = tpu.matmul %406, %20, %cst_158 {dimension_numbers = #tpu.dot_dimension_numbers<[1], [0], [0], [1], [0, 0, 1, 1], [], []>} : vector<8x32xbf16>, vector<32x32xbf16>, vector<8x32xf32> -> vector<8x32xf32>
    %415 = vector.broadcast %26 : vector<1x32xf32> to vector<8x32xf32>
    %416 = arith.addf %414, %415 : vector<8x32xf32>
    %cst_159 = arith.constant dense<0.000000e+00> : vector<8x32xf32>
    %417 = tpu.matmul %407, %28, %cst_159 {dimension_numbers = #tpu.dot_dimension_numbers<[1], [0], [0], [1], [0, 0, 1, 1], [], []>} : vector<8x32xbf16>, vector<32x32xbf16>, vector<8x32xf32> -> vector<8x32xf32>
    %418 = vector.broadcast %34 : vector<1x32xf32> to vector<8x32xf32>
    %419 = arith.addf %417, %418 : vector<8x32xf32>
    %cst_160 = arith.constant dense<0.000000e+00> : vector<8x32xf32>
    %420 = tpu.matmul %407, %30, %cst_160 {dimension_numbers = #tpu.dot_dimension_numbers<[1], [0], [0], [1], [0, 0, 1, 1], [], []>} : vector<8x32xbf16>, vector<32x32xbf16>, vector<8x32xf32> -> vector<8x32xf32>
    %421 = vector.broadcast %36 : vector<1x32xf32> to vector<8x32xf32>
    %422 = arith.addf %420, %421 : vector<8x32xf32>
    %cst_161 = arith.constant dense<0.000000e+00> : vector<8x32xf32>
    %423 = tpu.matmul %407, %32, %cst_161 {dimension_numbers = #tpu.dot_dimension_numbers<[1], [0], [0], [1], [0, 0, 1, 1], [], []>} : vector<8x32xbf16>, vector<32x32xbf16>, vector<8x32xf32> -> vector<8x32xf32>
    %424 = vector.broadcast %38 : vector<1x32xf32> to vector<8x32xf32>
    %425 = arith.addf %423, %424 : vector<8x32xf32>
    %426 = arith.addf %410, %419 : vector<8x32xf32>
    %427 = arith.negf %426 : vector<8x32xf32>
    %428 = math.exp %427 : vector<8x32xf32>
    %cst_162 = arith.constant 1.000000e+00 : f32
    %429 = vector.broadcast %cst_162 : f32 to vector<8x32xf32>
    %430 = arith.addf %429, %428 : vector<8x32xf32>
    %431 = arith.divf %429, %430 : vector<8x32xf32>
    %432 = arith.addf %413, %422 : vector<8x32xf32>
    %433 = arith.negf %432 : vector<8x32xf32>
    %434 = math.exp %433 : vector<8x32xf32>
    %cst_163 = arith.constant 1.000000e+00 : f32
    %435 = vector.broadcast %cst_163 : f32 to vector<8x32xf32>
    %436 = arith.addf %435, %434 : vector<8x32xf32>
    %437 = arith.divf %435, %436 : vector<8x32xf32>
    %438 = arith.mulf %431, %425 : vector<8x32xf32>
    %439 = arith.addf %416, %438 : vector<8x32xf32>
    %440 = math.tanh %439 : vector<8x32xf32>
    %cst_164 = arith.constant 1.000000e+00 : f32
    %441 = vector.broadcast %cst_164 : f32 to vector<8x32xf32>
    %442 = arith.subf %441, %437 : vector<8x32xf32>
    %443 = arith.mulf %442, %440 : vector<8x32xf32>
    %444 = arith.mulf %437, %364 : vector<8x32xf32>
    %445 = arith.addf %443, %444 : vector<8x32xf32>
    %446 = arith.maximumf %365, %445 : vector<8x32xf32>
    %447 = arith.addf %366, %445 : vector<8x32xf32>
    %c5_i32 = arith.constant 5 : i32
    %448 = arith.truncf %405 : vector<8x32xf32> to vector<8x32xbf16>
    %cst_165 = arith.constant dense<0.000000e+00> : vector<8x32xf32>
    %449 = tpu.matmul %448, %4, %cst_165 {dimension_numbers = #tpu.dot_dimension_numbers<[1], [0], [0], [1], [0, 0, 1, 1], [], []>} : vector<8x32xbf16>, vector<32x32xbf16>, vector<8x32xf32> -> vector<8x32xf32>
    %450 = vector.broadcast %10 : vector<1x32xf32> to vector<8x32xf32>
    %451 = arith.addf %449, %450 : vector<8x32xf32>
    %cst_166 = arith.constant dense<0.000000e+00> : vector<8x32xf32>
    %452 = tpu.matmul %448, %6, %cst_166 {dimension_numbers = #tpu.dot_dimension_numbers<[1], [0], [0], [1], [0, 0, 1, 1], [], []>} : vector<8x32xbf16>, vector<32x32xbf16>, vector<8x32xf32> -> vector<8x32xf32>
    %453 = vector.broadcast %12 : vector<1x32xf32> to vector<8x32xf32>
    %454 = arith.addf %452, %453 : vector<8x32xf32>
    %cst_167 = arith.constant dense<0.000000e+00> : vector<8x32xf32>
    %455 = tpu.matmul %448, %8, %cst_167 {dimension_numbers = #tpu.dot_dimension_numbers<[1], [0], [0], [1], [0, 0, 1, 1], [], []>} : vector<8x32xbf16>, vector<32x32xbf16>, vector<8x32xf32> -> vector<8x32xf32>
    %456 = vector.broadcast %14 : vector<1x32xf32> to vector<8x32xf32>
    %457 = arith.addf %455, %456 : vector<8x32xf32>
    %458 = arith.index_cast %c5_i32 : i32 to index
    %c0_168 = arith.constant 0 : index
    %c0_169 = arith.constant 0 : index
    %459 = vector.load %arg2[%458, %c0_168, %c0_169] : memref<8x8x32xf32, #tpu.memory_space<vmem>>, vector<1x8x32xf32>
    %460 = vector.shape_cast %459 : vector<1x8x32xf32> to vector<8x32xf32>
    %461 = arith.addf %460, %451 : vector<8x32xf32>
    %462 = arith.negf %461 : vector<8x32xf32>
    %463 = math.exp %462 : vector<8x32xf32>
    %cst_170 = arith.constant 1.000000e+00 : f32
    %464 = vector.broadcast %cst_170 : f32 to vector<8x32xf32>
    %465 = arith.addf %464, %463 : vector<8x32xf32>
    %466 = arith.divf %464, %465 : vector<8x32xf32>
    %467 = arith.index_cast %c5_i32 : i32 to index
    %c0_171 = arith.constant 0 : index
    %c0_172 = arith.constant 0 : index
    %468 = vector.load %arg3[%467, %c0_171, %c0_172] : memref<8x8x32xf32, #tpu.memory_space<vmem>>, vector<1x8x32xf32>
    %469 = vector.shape_cast %468 : vector<1x8x32xf32> to vector<8x32xf32>
    %470 = arith.addf %469, %454 : vector<8x32xf32>
    %471 = arith.negf %470 : vector<8x32xf32>
    %472 = math.exp %471 : vector<8x32xf32>
    %cst_173 = arith.constant 1.000000e+00 : f32
    %473 = vector.broadcast %cst_173 : f32 to vector<8x32xf32>
    %474 = arith.addf %473, %472 : vector<8x32xf32>
    %475 = arith.divf %473, %474 : vector<8x32xf32>
    %476 = arith.index_cast %c5_i32 : i32 to index
    %c0_174 = arith.constant 0 : index
    %c0_175 = arith.constant 0 : index
    %477 = vector.load %arg4[%476, %c0_174, %c0_175] : memref<8x8x32xf32, #tpu.memory_space<vmem>>, vector<1x8x32xf32>
    %478 = vector.shape_cast %477 : vector<1x8x32xf32> to vector<8x32xf32>
    %479 = arith.mulf %466, %457 : vector<8x32xf32>
    %480 = arith.addf %478, %479 : vector<8x32xf32>
    %481 = math.tanh %480 : vector<8x32xf32>
    %cst_176 = arith.constant 1.000000e+00 : f32
    %482 = vector.broadcast %cst_176 : f32 to vector<8x32xf32>
    %483 = arith.subf %482, %475 : vector<8x32xf32>
    %484 = arith.mulf %483, %481 : vector<8x32xf32>
    %485 = arith.mulf %475, %405 : vector<8x32xf32>
    %486 = arith.addf %484, %485 : vector<8x32xf32>
    %487 = arith.truncf %486 : vector<8x32xf32> to vector<8x32xbf16>
    %488 = arith.truncf %445 : vector<8x32xf32> to vector<8x32xbf16>
    %cst_177 = arith.constant dense<0.000000e+00> : vector<8x32xf32>
    %489 = tpu.matmul %487, %16, %cst_177 {dimension_numbers = #tpu.dot_dimension_numbers<[1], [0], [0], [1], [0, 0, 1, 1], [], []>} : vector<8x32xbf16>, vector<32x32xbf16>, vector<8x32xf32> -> vector<8x32xf32>
    %490 = vector.broadcast %22 : vector<1x32xf32> to vector<8x32xf32>
    %491 = arith.addf %489, %490 : vector<8x32xf32>
    %cst_178 = arith.constant dense<0.000000e+00> : vector<8x32xf32>
    %492 = tpu.matmul %487, %18, %cst_178 {dimension_numbers = #tpu.dot_dimension_numbers<[1], [0], [0], [1], [0, 0, 1, 1], [], []>} : vector<8x32xbf16>, vector<32x32xbf16>, vector<8x32xf32> -> vector<8x32xf32>
    %493 = vector.broadcast %24 : vector<1x32xf32> to vector<8x32xf32>
    %494 = arith.addf %492, %493 : vector<8x32xf32>
    %cst_179 = arith.constant dense<0.000000e+00> : vector<8x32xf32>
    %495 = tpu.matmul %487, %20, %cst_179 {dimension_numbers = #tpu.dot_dimension_numbers<[1], [0], [0], [1], [0, 0, 1, 1], [], []>} : vector<8x32xbf16>, vector<32x32xbf16>, vector<8x32xf32> -> vector<8x32xf32>
    %496 = vector.broadcast %26 : vector<1x32xf32> to vector<8x32xf32>
    %497 = arith.addf %495, %496 : vector<8x32xf32>
    %cst_180 = arith.constant dense<0.000000e+00> : vector<8x32xf32>
    %498 = tpu.matmul %488, %28, %cst_180 {dimension_numbers = #tpu.dot_dimension_numbers<[1], [0], [0], [1], [0, 0, 1, 1], [], []>} : vector<8x32xbf16>, vector<32x32xbf16>, vector<8x32xf32> -> vector<8x32xf32>
    %499 = vector.broadcast %34 : vector<1x32xf32> to vector<8x32xf32>
    %500 = arith.addf %498, %499 : vector<8x32xf32>
    %cst_181 = arith.constant dense<0.000000e+00> : vector<8x32xf32>
    %501 = tpu.matmul %488, %30, %cst_181 {dimension_numbers = #tpu.dot_dimension_numbers<[1], [0], [0], [1], [0, 0, 1, 1], [], []>} : vector<8x32xbf16>, vector<32x32xbf16>, vector<8x32xf32> -> vector<8x32xf32>
    %502 = vector.broadcast %36 : vector<1x32xf32> to vector<8x32xf32>
    %503 = arith.addf %501, %502 : vector<8x32xf32>
    %cst_182 = arith.constant dense<0.000000e+00> : vector<8x32xf32>
    %504 = tpu.matmul %488, %32, %cst_182 {dimension_numbers = #tpu.dot_dimension_numbers<[1], [0], [0], [1], [0, 0, 1, 1], [], []>} : vector<8x32xbf16>, vector<32x32xbf16>, vector<8x32xf32> -> vector<8x32xf32>
    %505 = vector.broadcast %38 : vector<1x32xf32> to vector<8x32xf32>
    %506 = arith.addf %504, %505 : vector<8x32xf32>
    %507 = arith.addf %491, %500 : vector<8x32xf32>
    %508 = arith.negf %507 : vector<8x32xf32>
    %509 = math.exp %508 : vector<8x32xf32>
    %cst_183 = arith.constant 1.000000e+00 : f32
    %510 = vector.broadcast %cst_183 : f32 to vector<8x32xf32>
    %511 = arith.addf %510, %509 : vector<8x32xf32>
    %512 = arith.divf %510, %511 : vector<8x32xf32>
    %513 = arith.addf %494, %503 : vector<8x32xf32>
    %514 = arith.negf %513 : vector<8x32xf32>
    %515 = math.exp %514 : vector<8x32xf32>
    %cst_184 = arith.constant 1.000000e+00 : f32
    %516 = vector.broadcast %cst_184 : f32 to vector<8x32xf32>
    %517 = arith.addf %516, %515 : vector<8x32xf32>
    %518 = arith.divf %516, %517 : vector<8x32xf32>
    %519 = arith.mulf %512, %506 : vector<8x32xf32>
    %520 = arith.addf %497, %519 : vector<8x32xf32>
    %521 = math.tanh %520 : vector<8x32xf32>
    %cst_185 = arith.constant 1.000000e+00 : f32
    %522 = vector.broadcast %cst_185 : f32 to vector<8x32xf32>
    %523 = arith.subf %522, %518 : vector<8x32xf32>
    %524 = arith.mulf %523, %521 : vector<8x32xf32>
    %525 = arith.mulf %518, %445 : vector<8x32xf32>
    %526 = arith.addf %524, %525 : vector<8x32xf32>
    %527 = arith.maximumf %446, %526 : vector<8x32xf32>
    %528 = arith.addf %447, %526 : vector<8x32xf32>
    %c6_i32 = arith.constant 6 : i32
    %529 = arith.truncf %486 : vector<8x32xf32> to vector<8x32xbf16>
    %cst_186 = arith.constant dense<0.000000e+00> : vector<8x32xf32>
    %530 = tpu.matmul %529, %4, %cst_186 {dimension_numbers = #tpu.dot_dimension_numbers<[1], [0], [0], [1], [0, 0, 1, 1], [], []>} : vector<8x32xbf16>, vector<32x32xbf16>, vector<8x32xf32> -> vector<8x32xf32>
    %531 = vector.broadcast %10 : vector<1x32xf32> to vector<8x32xf32>
    %532 = arith.addf %530, %531 : vector<8x32xf32>
    %cst_187 = arith.constant dense<0.000000e+00> : vector<8x32xf32>
    %533 = tpu.matmul %529, %6, %cst_187 {dimension_numbers = #tpu.dot_dimension_numbers<[1], [0], [0], [1], [0, 0, 1, 1], [], []>} : vector<8x32xbf16>, vector<32x32xbf16>, vector<8x32xf32> -> vector<8x32xf32>
    %534 = vector.broadcast %12 : vector<1x32xf32> to vector<8x32xf32>
    %535 = arith.addf %533, %534 : vector<8x32xf32>
    %cst_188 = arith.constant dense<0.000000e+00> : vector<8x32xf32>
    %536 = tpu.matmul %529, %8, %cst_188 {dimension_numbers = #tpu.dot_dimension_numbers<[1], [0], [0], [1], [0, 0, 1, 1], [], []>} : vector<8x32xbf16>, vector<32x32xbf16>, vector<8x32xf32> -> vector<8x32xf32>
    %537 = vector.broadcast %14 : vector<1x32xf32> to vector<8x32xf32>
    %538 = arith.addf %536, %537 : vector<8x32xf32>
    %539 = arith.index_cast %c6_i32 : i32 to index
    %c0_189 = arith.constant 0 : index
    %c0_190 = arith.constant 0 : index
    %540 = vector.load %arg2[%539, %c0_189, %c0_190] : memref<8x8x32xf32, #tpu.memory_space<vmem>>, vector<1x8x32xf32>
    %541 = vector.shape_cast %540 : vector<1x8x32xf32> to vector<8x32xf32>
    %542 = arith.addf %541, %532 : vector<8x32xf32>
    %543 = arith.negf %542 : vector<8x32xf32>
    %544 = math.exp %543 : vector<8x32xf32>
    %cst_191 = arith.constant 1.000000e+00 : f32
    %545 = vector.broadcast %cst_191 : f32 to vector<8x32xf32>
    %546 = arith.addf %545, %544 : vector<8x32xf32>
    %547 = arith.divf %545, %546 : vector<8x32xf32>
    %548 = arith.index_cast %c6_i32 : i32 to index
    %c0_192 = arith.constant 0 : index
    %c0_193 = arith.constant 0 : index
    %549 = vector.load %arg3[%548, %c0_192, %c0_193] : memref<8x8x32xf32, #tpu.memory_space<vmem>>, vector<1x8x32xf32>
    %550 = vector.shape_cast %549 : vector<1x8x32xf32> to vector<8x32xf32>
    %551 = arith.addf %550, %535 : vector<8x32xf32>
    %552 = arith.negf %551 : vector<8x32xf32>
    %553 = math.exp %552 : vector<8x32xf32>
    %cst_194 = arith.constant 1.000000e+00 : f32
    %554 = vector.broadcast %cst_194 : f32 to vector<8x32xf32>
    %555 = arith.addf %554, %553 : vector<8x32xf32>
    %556 = arith.divf %554, %555 : vector<8x32xf32>
    %557 = arith.index_cast %c6_i32 : i32 to index
    %c0_195 = arith.constant 0 : index
    %c0_196 = arith.constant 0 : index
    %558 = vector.load %arg4[%557, %c0_195, %c0_196] : memref<8x8x32xf32, #tpu.memory_space<vmem>>, vector<1x8x32xf32>
    %559 = vector.shape_cast %558 : vector<1x8x32xf32> to vector<8x32xf32>
    %560 = arith.mulf %547, %538 : vector<8x32xf32>
    %561 = arith.addf %559, %560 : vector<8x32xf32>
    %562 = math.tanh %561 : vector<8x32xf32>
    %cst_197 = arith.constant 1.000000e+00 : f32
    %563 = vector.broadcast %cst_197 : f32 to vector<8x32xf32>
    %564 = arith.subf %563, %556 : vector<8x32xf32>
    %565 = arith.mulf %564, %562 : vector<8x32xf32>
    %566 = arith.mulf %556, %486 : vector<8x32xf32>
    %567 = arith.addf %565, %566 : vector<8x32xf32>
    %568 = arith.truncf %567 : vector<8x32xf32> to vector<8x32xbf16>
    %569 = arith.truncf %526 : vector<8x32xf32> to vector<8x32xbf16>
    %cst_198 = arith.constant dense<0.000000e+00> : vector<8x32xf32>
    %570 = tpu.matmul %568, %16, %cst_198 {dimension_numbers = #tpu.dot_dimension_numbers<[1], [0], [0], [1], [0, 0, 1, 1], [], []>} : vector<8x32xbf16>, vector<32x32xbf16>, vector<8x32xf32> -> vector<8x32xf32>
    %571 = vector.broadcast %22 : vector<1x32xf32> to vector<8x32xf32>
    %572 = arith.addf %570, %571 : vector<8x32xf32>
    %cst_199 = arith.constant dense<0.000000e+00> : vector<8x32xf32>
    %573 = tpu.matmul %568, %18, %cst_199 {dimension_numbers = #tpu.dot_dimension_numbers<[1], [0], [0], [1], [0, 0, 1, 1], [], []>} : vector<8x32xbf16>, vector<32x32xbf16>, vector<8x32xf32> -> vector<8x32xf32>
    %574 = vector.broadcast %24 : vector<1x32xf32> to vector<8x32xf32>
    %575 = arith.addf %573, %574 : vector<8x32xf32>
    %cst_200 = arith.constant dense<0.000000e+00> : vector<8x32xf32>
    %576 = tpu.matmul %568, %20, %cst_200 {dimension_numbers = #tpu.dot_dimension_numbers<[1], [0], [0], [1], [0, 0, 1, 1], [], []>} : vector<8x32xbf16>, vector<32x32xbf16>, vector<8x32xf32> -> vector<8x32xf32>
    %577 = vector.broadcast %26 : vector<1x32xf32> to vector<8x32xf32>
    %578 = arith.addf %576, %577 : vector<8x32xf32>
    %cst_201 = arith.constant dense<0.000000e+00> : vector<8x32xf32>
    %579 = tpu.matmul %569, %28, %cst_201 {dimension_numbers = #tpu.dot_dimension_numbers<[1], [0], [0], [1], [0, 0, 1, 1], [], []>} : vector<8x32xbf16>, vector<32x32xbf16>, vector<8x32xf32> -> vector<8x32xf32>
    %580 = vector.broadcast %34 : vector<1x32xf32> to vector<8x32xf32>
    %581 = arith.addf %579, %580 : vector<8x32xf32>
    %cst_202 = arith.constant dense<0.000000e+00> : vector<8x32xf32>
    %582 = tpu.matmul %569, %30, %cst_202 {dimension_numbers = #tpu.dot_dimension_numbers<[1], [0], [0], [1], [0, 0, 1, 1], [], []>} : vector<8x32xbf16>, vector<32x32xbf16>, vector<8x32xf32> -> vector<8x32xf32>
    %583 = vector.broadcast %36 : vector<1x32xf32> to vector<8x32xf32>
    %584 = arith.addf %582, %583 : vector<8x32xf32>
    %cst_203 = arith.constant dense<0.000000e+00> : vector<8x32xf32>
    %585 = tpu.matmul %569, %32, %cst_203 {dimension_numbers = #tpu.dot_dimension_numbers<[1], [0], [0], [1], [0, 0, 1, 1], [], []>} : vector<8x32xbf16>, vector<32x32xbf16>, vector<8x32xf32> -> vector<8x32xf32>
    %586 = vector.broadcast %38 : vector<1x32xf32> to vector<8x32xf32>
    %587 = arith.addf %585, %586 : vector<8x32xf32>
    %588 = arith.addf %572, %581 : vector<8x32xf32>
    %589 = arith.negf %588 : vector<8x32xf32>
    %590 = math.exp %589 : vector<8x32xf32>
    %cst_204 = arith.constant 1.000000e+00 : f32
    %591 = vector.broadcast %cst_204 : f32 to vector<8x32xf32>
    %592 = arith.addf %591, %590 : vector<8x32xf32>
    %593 = arith.divf %591, %592 : vector<8x32xf32>
    %594 = arith.addf %575, %584 : vector<8x32xf32>
    %595 = arith.negf %594 : vector<8x32xf32>
    %596 = math.exp %595 : vector<8x32xf32>
    %cst_205 = arith.constant 1.000000e+00 : f32
    %597 = vector.broadcast %cst_205 : f32 to vector<8x32xf32>
    %598 = arith.addf %597, %596 : vector<8x32xf32>
    %599 = arith.divf %597, %598 : vector<8x32xf32>
    %600 = arith.mulf %593, %587 : vector<8x32xf32>
    %601 = arith.addf %578, %600 : vector<8x32xf32>
    %602 = math.tanh %601 : vector<8x32xf32>
    %cst_206 = arith.constant 1.000000e+00 : f32
    %603 = vector.broadcast %cst_206 : f32 to vector<8x32xf32>
    %604 = arith.subf %603, %599 : vector<8x32xf32>
    %605 = arith.mulf %604, %602 : vector<8x32xf32>
    %606 = arith.mulf %599, %526 : vector<8x32xf32>
    %607 = arith.addf %605, %606 : vector<8x32xf32>
    %608 = arith.maximumf %527, %607 : vector<8x32xf32>
    %609 = arith.addf %528, %607 : vector<8x32xf32>
    %c7_i32 = arith.constant 7 : i32
    %610 = arith.truncf %567 : vector<8x32xf32> to vector<8x32xbf16>
    %cst_207 = arith.constant dense<0.000000e+00> : vector<8x32xf32>
    %611 = tpu.matmul %610, %4, %cst_207 {dimension_numbers = #tpu.dot_dimension_numbers<[1], [0], [0], [1], [0, 0, 1, 1], [], []>} : vector<8x32xbf16>, vector<32x32xbf16>, vector<8x32xf32> -> vector<8x32xf32>
    %612 = vector.broadcast %10 : vector<1x32xf32> to vector<8x32xf32>
    %613 = arith.addf %611, %612 : vector<8x32xf32>
    %cst_208 = arith.constant dense<0.000000e+00> : vector<8x32xf32>
    %614 = tpu.matmul %610, %6, %cst_208 {dimension_numbers = #tpu.dot_dimension_numbers<[1], [0], [0], [1], [0, 0, 1, 1], [], []>} : vector<8x32xbf16>, vector<32x32xbf16>, vector<8x32xf32> -> vector<8x32xf32>
    %615 = vector.broadcast %12 : vector<1x32xf32> to vector<8x32xf32>
    %616 = arith.addf %614, %615 : vector<8x32xf32>
    %cst_209 = arith.constant dense<0.000000e+00> : vector<8x32xf32>
    %617 = tpu.matmul %610, %8, %cst_209 {dimension_numbers = #tpu.dot_dimension_numbers<[1], [0], [0], [1], [0, 0, 1, 1], [], []>} : vector<8x32xbf16>, vector<32x32xbf16>, vector<8x32xf32> -> vector<8x32xf32>
    %618 = vector.broadcast %14 : vector<1x32xf32> to vector<8x32xf32>
    %619 = arith.addf %617, %618 : vector<8x32xf32>
    %620 = arith.index_cast %c7_i32 : i32 to index
    %c0_210 = arith.constant 0 : index
    %c0_211 = arith.constant 0 : index
    %621 = vector.load %arg2[%620, %c0_210, %c0_211] : memref<8x8x32xf32, #tpu.memory_space<vmem>>, vector<1x8x32xf32>
    %622 = vector.shape_cast %621 : vector<1x8x32xf32> to vector<8x32xf32>
    %623 = arith.addf %622, %613 : vector<8x32xf32>
    %624 = arith.negf %623 : vector<8x32xf32>
    %625 = math.exp %624 : vector<8x32xf32>
    %cst_212 = arith.constant 1.000000e+00 : f32
    %626 = vector.broadcast %cst_212 : f32 to vector<8x32xf32>
    %627 = arith.addf %626, %625 : vector<8x32xf32>
    %628 = arith.divf %626, %627 : vector<8x32xf32>
    %629 = arith.index_cast %c7_i32 : i32 to index
    %c0_213 = arith.constant 0 : index
    %c0_214 = arith.constant 0 : index
    %630 = vector.load %arg3[%629, %c0_213, %c0_214] : memref<8x8x32xf32, #tpu.memory_space<vmem>>, vector<1x8x32xf32>
    %631 = vector.shape_cast %630 : vector<1x8x32xf32> to vector<8x32xf32>
    %632 = arith.addf %631, %616 : vector<8x32xf32>
    %633 = arith.negf %632 : vector<8x32xf32>
    %634 = math.exp %633 : vector<8x32xf32>
    %cst_215 = arith.constant 1.000000e+00 : f32
    %635 = vector.broadcast %cst_215 : f32 to vector<8x32xf32>
    %636 = arith.addf %635, %634 : vector<8x32xf32>
    %637 = arith.divf %635, %636 : vector<8x32xf32>
    %638 = arith.index_cast %c7_i32 : i32 to index
    %c0_216 = arith.constant 0 : index
    %c0_217 = arith.constant 0 : index
    %639 = vector.load %arg4[%638, %c0_216, %c0_217] : memref<8x8x32xf32, #tpu.memory_space<vmem>>, vector<1x8x32xf32>
    %640 = vector.shape_cast %639 : vector<1x8x32xf32> to vector<8x32xf32>
    %641 = arith.mulf %628, %619 : vector<8x32xf32>
    %642 = arith.addf %640, %641 : vector<8x32xf32>
    %643 = math.tanh %642 : vector<8x32xf32>
    %cst_218 = arith.constant 1.000000e+00 : f32
    %644 = vector.broadcast %cst_218 : f32 to vector<8x32xf32>
    %645 = arith.subf %644, %637 : vector<8x32xf32>
    %646 = arith.mulf %645, %643 : vector<8x32xf32>
    %647 = arith.mulf %637, %567 : vector<8x32xf32>
    %648 = arith.addf %646, %647 : vector<8x32xf32>
    %649 = arith.truncf %648 : vector<8x32xf32> to vector<8x32xbf16>
    %650 = arith.truncf %607 : vector<8x32xf32> to vector<8x32xbf16>
    %cst_219 = arith.constant dense<0.000000e+00> : vector<8x32xf32>
    %651 = tpu.matmul %649, %16, %cst_219 {dimension_numbers = #tpu.dot_dimension_numbers<[1], [0], [0], [1], [0, 0, 1, 1], [], []>} : vector<8x32xbf16>, vector<32x32xbf16>, vector<8x32xf32> -> vector<8x32xf32>
    %652 = vector.broadcast %22 : vector<1x32xf32> to vector<8x32xf32>
    %653 = arith.addf %651, %652 : vector<8x32xf32>
    %cst_220 = arith.constant dense<0.000000e+00> : vector<8x32xf32>
    %654 = tpu.matmul %649, %18, %cst_220 {dimension_numbers = #tpu.dot_dimension_numbers<[1], [0], [0], [1], [0, 0, 1, 1], [], []>} : vector<8x32xbf16>, vector<32x32xbf16>, vector<8x32xf32> -> vector<8x32xf32>
    %655 = vector.broadcast %24 : vector<1x32xf32> to vector<8x32xf32>
    %656 = arith.addf %654, %655 : vector<8x32xf32>
    %cst_221 = arith.constant dense<0.000000e+00> : vector<8x32xf32>
    %657 = tpu.matmul %649, %20, %cst_221 {dimension_numbers = #tpu.dot_dimension_numbers<[1], [0], [0], [1], [0, 0, 1, 1], [], []>} : vector<8x32xbf16>, vector<32x32xbf16>, vector<8x32xf32> -> vector<8x32xf32>
    %658 = vector.broadcast %26 : vector<1x32xf32> to vector<8x32xf32>
    %659 = arith.addf %657, %658 : vector<8x32xf32>
    %cst_222 = arith.constant dense<0.000000e+00> : vector<8x32xf32>
    %660 = tpu.matmul %650, %28, %cst_222 {dimension_numbers = #tpu.dot_dimension_numbers<[1], [0], [0], [1], [0, 0, 1, 1], [], []>} : vector<8x32xbf16>, vector<32x32xbf16>, vector<8x32xf32> -> vector<8x32xf32>
    %661 = vector.broadcast %34 : vector<1x32xf32> to vector<8x32xf32>
    %662 = arith.addf %660, %661 : vector<8x32xf32>
    %cst_223 = arith.constant dense<0.000000e+00> : vector<8x32xf32>
    %663 = tpu.matmul %650, %30, %cst_223 {dimension_numbers = #tpu.dot_dimension_numbers<[1], [0], [0], [1], [0, 0, 1, 1], [], []>} : vector<8x32xbf16>, vector<32x32xbf16>, vector<8x32xf32> -> vector<8x32xf32>
    %664 = vector.broadcast %36 : vector<1x32xf32> to vector<8x32xf32>
    %665 = arith.addf %663, %664 : vector<8x32xf32>
    %cst_224 = arith.constant dense<0.000000e+00> : vector<8x32xf32>
    %666 = tpu.matmul %650, %32, %cst_224 {dimension_numbers = #tpu.dot_dimension_numbers<[1], [0], [0], [1], [0, 0, 1, 1], [], []>} : vector<8x32xbf16>, vector<32x32xbf16>, vector<8x32xf32> -> vector<8x32xf32>
    %667 = vector.broadcast %38 : vector<1x32xf32> to vector<8x32xf32>
    %668 = arith.addf %666, %667 : vector<8x32xf32>
    %669 = arith.addf %653, %662 : vector<8x32xf32>
    %670 = arith.negf %669 : vector<8x32xf32>
    %671 = math.exp %670 : vector<8x32xf32>
    %cst_225 = arith.constant 1.000000e+00 : f32
    %672 = vector.broadcast %cst_225 : f32 to vector<8x32xf32>
    %673 = arith.addf %672, %671 : vector<8x32xf32>
    %674 = arith.divf %672, %673 : vector<8x32xf32>
    %675 = arith.addf %656, %665 : vector<8x32xf32>
    %676 = arith.negf %675 : vector<8x32xf32>
    %677 = math.exp %676 : vector<8x32xf32>
    %cst_226 = arith.constant 1.000000e+00 : f32
    %678 = vector.broadcast %cst_226 : f32 to vector<8x32xf32>
    %679 = arith.addf %678, %677 : vector<8x32xf32>
    %680 = arith.divf %678, %679 : vector<8x32xf32>
    %681 = arith.mulf %674, %668 : vector<8x32xf32>
    %682 = arith.addf %659, %681 : vector<8x32xf32>
    %683 = math.tanh %682 : vector<8x32xf32>
    %cst_227 = arith.constant 1.000000e+00 : f32
    %684 = vector.broadcast %cst_227 : f32 to vector<8x32xf32>
    %685 = arith.subf %684, %680 : vector<8x32xf32>
    %686 = arith.mulf %685, %683 : vector<8x32xf32>
    %687 = arith.mulf %680, %607 : vector<8x32xf32>
    %688 = arith.addf %686, %687 : vector<8x32xf32>
    %689 = arith.maximumf %608, %688 : vector<8x32xf32>
    %690 = arith.addf %609, %688 : vector<8x32xf32>
    %c8_i32 = arith.constant 8 : i32
    %c0_228 = arith.constant 0 : index
    %c0_229 = arith.constant 0 : index
    %691 = vector.load %arg14[%c0_228, %c0_229] : memref<8x32xf32, #tpu.memory_space<vmem>>, vector<8x32xf32>
    tpu.vector_store %arg14[%c0_228, %c0_229], %648 {strides = array<i32>} : memref<8x32xf32, #tpu.memory_space<vmem>>, vector<8x32xf32>,
    %c0_230 = arith.constant 0 : index
    %c0_231 = arith.constant 0 : index
    %692 = vector.load %arg15[%c0_230, %c0_231] : memref<8x32xf32, #tpu.memory_space<vmem>>, vector<8x32xf32>
    tpu.vector_store %arg15[%c0_230, %c0_231], %688 {strides = array<i32>} : memref<8x32xf32, #tpu.memory_space<vmem>>, vector<8x32xf32>,
    %c0_232 = arith.constant 0 : index
    %c0_233 = arith.constant 0 : index
    %693 = vector.load %arg16[%c0_232, %c0_233] : memref<8x32xf32, #tpu.memory_space<vmem>>, vector<8x32xf32>
    tpu.vector_store %arg16[%c0_232, %c0_233], %689 {strides = array<i32>} : memref<8x32xf32, #tpu.memory_space<vmem>>, vector<8x32xf32>,
    %c0_234 = arith.constant 0 : index
    %c0_235 = arith.constant 0 : index
    %694 = vector.load %arg17[%c0_234, %c0_235] : memref<8x32xf32, #tpu.memory_space<vmem>>, vector<8x32xf32>
    tpu.vector_store %arg17[%c0_234, %c0_235], %690 {strides = array<i32>} : memref<8x32xf32, #tpu.memory_space<vmem>>, vector<8x32xf32>,
    %c0_i32_236 = arith.constant 0 : i32
    %695 = arith.cmpi eq, %arg1, %c0_i32_236 : i32
    %696 = arith.extui %695 : i1 to i32
    %c0_i32_237 = arith.constant 0 : i32
    %697 = arith.cmpi ne, %696, %c0_i32_237 : i32
    scf.if %697 {
      %cst_238 = arith.constant 1.250000e-01 : f32
      %698 = vector.broadcast %cst_238 : f32 to vector<8x32xf32>
      %699 = arith.mulf %690, %698 : vector<8x32xf32>
      %700 = arith.truncf %689 : vector<8x32xf32> to vector<8x32xbf16>
      %c0_239 = arith.constant 0 : index
      %c0_240 = arith.constant 0 : index
      %c0_241 = arith.constant 0 : index
      %701 = vector.load %arg11[%c0_239, %c0_240, %c0_241] : memref<2x32x1xbf16, #tpu.memory_space<vmem>>, vector<1x32x1xbf16>
      %702 = vector.shape_cast %701 : vector<1x32x1xbf16> to vector<32x1xbf16>
      %cst_242 = arith.constant dense<0.000000e+00> : vector<8x1xf32>
      %703 = tpu.matmul %700, %702, %cst_242 {dimension_numbers = #tpu.dot_dimension_numbers<[1], [0], [0], [1], [0, 0, 1, 1], [], []>} : vector<8x32xbf16>, vector<32x1xbf16>, vector<8x1xf32> -> vector<8x1xf32>
      %704 = arith.truncf %699 : vector<8x32xf32> to vector<8x32xbf16>
      %c1_243 = arith.constant 1 : index
      %c0_244 = arith.constant 0 : index
      %c0_245 = arith.constant 0 : index
      %705 = vector.load %arg11[%c1_243, %c0_244, %c0_245] : memref<2x32x1xbf16, #tpu.memory_space<vmem>>, vector<1x32x1xbf16>
      %706 = vector.shape_cast %705 : vector<1x32x1xbf16> to vector<32x1xbf16>
      %cst_246 = arith.constant dense<0.000000e+00> : vector<8x1xf32>
      %707 = tpu.matmul %704, %706, %cst_246 {dimension_numbers = #tpu.dot_dimension_numbers<[1], [0], [0], [1], [0, 0, 1, 1], [], []>} : vector<8x32xbf16>, vector<32x1xbf16>, vector<8x1xf32> -> vector<8x1xf32>
      %708 = arith.addf %703, %707 : vector<8x1xf32>
      %c0_247 = arith.constant 0 : index
      %c0_248 = arith.constant 0 : index
      %709 = vector.load %arg12[%c0_247, %c0_248] : memref<1x1xf32, #tpu.memory_space<vmem>>, vector<1x1xf32>
      %710 = vector.broadcast %709 : vector<1x1xf32> to vector<8x1xf32>
      %711 = arith.addf %708, %710 : vector<8x1xf32>
      %712 = arith.negf %711 : vector<8x1xf32>
      %713 = math.exp %712 : vector<8x1xf32>
      %cst_249 = arith.constant 1.000000e+00 : f32
      %714 = vector.broadcast %cst_249 : f32 to vector<8x1xf32>
      %715 = arith.addf %714, %713 : vector<8x1xf32>
      %716 = arith.divf %714, %715 : vector<8x1xf32>
      %c0_250 = arith.constant 0 : index
      %c0_251 = arith.constant 0 : index
      %717 = vector.load %arg13[%c0_250, %c0_251] : memref<8x1xf32, #tpu.memory_space<vmem>>, vector<8x1xf32>
      tpu.vector_store %arg13[%c0_250, %c0_251], %716 {strides = array<i32>} : memref<8x1xf32, #tpu.memory_space<vmem>>, vector<8x1xf32>,
    } else {
    }
    return
  }
  func.func @transform_0(%arg0: i32, %arg1: i32) -> (i32, i32, i32) {
    %c0_i32 = arith.constant 0 : i32
    %c0_i32_0 = arith.constant 0 : i32
    return %arg1, %arg0, %c0_i32 : i32, i32, i32
  }
  func.func @transform_1(%arg0: i32, %arg1: i32) -> (i32, i32, i32) {
    %c0_i32 = arith.constant 0 : i32
    %c0_i32_0 = arith.constant 0 : i32
    return %arg1, %arg0, %c0_i32 : i32, i32, i32
  }
  func.func @transform_2(%arg0: i32, %arg1: i32) -> (i32, i32, i32) {
    %c0_i32 = arith.constant 0 : i32
    %c0_i32_0 = arith.constant 0 : i32
    return %arg1, %arg0, %c0_i32 : i32, i32, i32
  }
  func.func @transform_3(%arg0: i32, %arg1: i32) -> (i32, i32, i32) {
    %c0_i32 = arith.constant 0 : i32
    %c0_i32_0 = arith.constant 0 : i32
    %c0_i32_1 = arith.constant 0 : i32
    %c0_i32_2 = arith.constant 0 : i32
    return %c0_i32, %c0_i32_0, %c0_i32_1 : i32, i32, i32
  }
  func.func @transform_4(%arg0: i32, %arg1: i32) -> (i32, i32, i32) {
    %c0_i32 = arith.constant 0 : i32
    %c0_i32_0 = arith.constant 0 : i32
    %c0_i32_1 = arith.constant 0 : i32
    %c0_i32_2 = arith.constant 0 : i32
    return %c0_i32, %c0_i32_0, %c0_i32_1 : i32, i32, i32
  }
  func.func @transform_5(%arg0: i32, %arg1: i32) -> (i32, i32, i32) {
    %c0_i32 = arith.constant 0 : i32
    %c0_i32_0 = arith.constant 0 : i32
    %c0_i32_1 = arith.constant 0 : i32
    %c0_i32_2 = arith.constant 0 : i32
    return %c0_i32, %c0_i32_0, %c0_i32_1 : i32, i32, i32
  }
  func.func @transform_6(%arg0: i32, %arg1: i32) -> (i32, i32, i32) {
    %c0_i32 = arith.constant 0 : i32
    %c0_i32_0 = arith.constant 0 : i32
    %c0_i32_1 = arith.constant 0 : i32
    %c0_i32_2 = arith.constant 0 : i32
    return %c0_i32, %c0_i32_0, %c0_i32_1 : i32, i32, i32
  }
  func.func @transform_7(%arg0: i32, %arg1: i32) -> (i32, i32, i32) {
    %c0_i32 = arith.constant 0 : i32
    %c0_i32_0 = arith.constant 0 : i32
    %c0_i32_1 = arith.constant 0 : i32
    %c0_i32_2 = arith.constant 0 : i32
    return %c0_i32, %c0_i32_0, %c0_i32_1 : i32, i32, i32
  }
  func.func @transform_8(%arg0: i32, %arg1: i32) -> (i32, i32, i32) {
    %c0_i32 = arith.constant 0 : i32
    %c0_i32_0 = arith.constant 0 : i32
    %c0_i32_1 = arith.constant 0 : i32
    %c0_i32_2 = arith.constant 0 : i32
    return %c0_i32, %c0_i32_0, %c0_i32_1 : i32, i32, i32
  }
  func.func @transform_9(%arg0: i32, %arg1: i32) -> (i32, i32, i32) {
    %c0_i32 = arith.constant 0 : i32
    %c0_i32_0 = arith.constant 0 : i32
    %c0_i32_1 = arith.constant 0 : i32
    %c0_i32_2 = arith.constant 0 : i32
    return %c0_i32, %c0_i32_0, %c0_i32_1 : i32, i32, i32
  }
  func.func @transform_10(%arg0: i32, %arg1: i32) -> (i32, i32) {
    %c0_i32 = arith.constant 0 : i32
    %c0_i32_0 = arith.constant 0 : i32
    %c0_i32_1 = arith.constant 0 : i32
    return %c0_i32, %c0_i32_0 : i32, i32
  }
  func.func @transform_11(%arg0: i32, %arg1: i32) -> (i32, i32) {
    %c0_i32 = arith.constant 0 : i32
    %c0_i32_0 = arith.constant 0 : i32
    return %arg0, %c0_i32 : i32, i32
  }
}

module attributes {stable_mosaic.version = 11 : i64} {
  func.func @sentiment_rnn_kernel(%arg0: i32, %arg1: i32, %arg2: memref<8x8x32xf32, #tpu.memory_space<vmem>>, %arg3: memref<8x8x32xf32, #tpu.memory_space<vmem>>, %arg4: memref<8x8x32xf32, #tpu.memory_space<vmem>>, %arg5: memref<3x32x32xbf16, #tpu.memory_space<vmem>>, %arg6: memref<3x1x32xf32, #tpu.memory_space<vmem>>, %arg7: memref<3x32x32xbf16, #tpu.memory_space<vmem>>, %arg8: memref<3x1x32xf32, #tpu.memory_space<vmem>>, %arg9: memref<3x32x32xbf16, #tpu.memory_space<vmem>>, %arg10: memref<3x1x32xf32, #tpu.memory_space<vmem>>, %arg11: memref<2x32x1xbf16, #tpu.memory_space<vmem>>, %arg12: memref<1x1xf32, #tpu.memory_space<vmem>>, %arg13: memref<8x1xf32, #tpu.memory_space<vmem>>, %arg14: memref<8x32xf32, #tpu.memory_space<vmem>>, %arg15: memref<8x32xf32, #tpu.memory_space<vmem>>, %arg16: memref<8x32xf32, #tpu.memory_space<vmem>>, %arg17: memref<8x32xf32, #tpu.memory_space<vmem>>) attributes {dimension_semantics = [#tpu.dimension_semantics<parallel>, #tpu.dimension_semantics<arbitrary>], iteration_bounds = array<i64: 1, 1>, scalar_prefetch = 0 : i64, scratch_operands = 4 : i64, tpu.core_type = #tpu.core_type<tc>, window_params = [{transform_indices = @transform_0, window_bounds = array<i64: 8, 8, 32>}, {transform_indices = @transform_1, window_bounds = array<i64: 8, 8, 32>}, {transform_indices = @transform_2, window_bounds = array<i64: 8, 8, 32>}, {pipeline_mode = #tpu.pipeline_mode<synchronous>, transform_indices = @transform_3, window_bounds = array<i64: 3, 32, 32>}, {pipeline_mode = #tpu.pipeline_mode<synchronous>, transform_indices = @transform_4, window_bounds = array<i64: 3, 1, 32>}, {pipeline_mode = #tpu.pipeline_mode<synchronous>, transform_indices = @transform_5, window_bounds = array<i64: 3, 32, 32>}, {pipeline_mode = #tpu.pipeline_mode<synchronous>, transform_indices = @transform_6, window_bounds = array<i64: 3, 1, 32>}, {pipeline_mode = #tpu.pipeline_mode<synchronous>, transform_indices = @transform_7, window_bounds = array<i64: 3, 32, 32>}, {pipeline_mode = #tpu.pipeline_mode<synchronous>, transform_indices = @transform_8, window_bounds = array<i64: 3, 1, 32>}, {pipeline_mode = #tpu.pipeline_mode<synchronous>, transform_indices = @transform_9, window_bounds = array<i64: 2, 32, 1>}, {pipeline_mode = #tpu.pipeline_mode<synchronous>, transform_indices = @transform_10, window_bounds = array<i64: 1, 1>}, {transform_indices = @transform_11, window_bounds = array<i64: 8, 1>}]} {
    %c0_i32 = arith.constant 0 : i32
    %0 = arith.cmpi eq, %arg1, %c0_i32 : i32
    %1 = arith.extui %0 : i1 to i32
    %c0_i32_0 = arith.constant 0 : i32
    %2 = arith.cmpi ne, %1, %c0_i32_0 : i32
    scf.if %2 {
      %cst_238 = arith.constant 0.000000e+00 : f32
      %698 = vector.broadcast %cst_238 : f32 to vector<8x32xf32>
      %c0_239 = arith.constant 0 : index
      %c0_240 = arith.constant 0 : index
      %699 = vector.load %arg14[%c0_239, %c0_240] : memref<8x32xf32, #tpu.memory_space<vmem>>, vector<8x32xf32>
      tpu.vector_store %arg14[%c0_239, %c0_240], %698 {strides = array<i32>} : memref<8x32xf32, #tpu.memory_space<vmem>>, vector<8x32xf32>,
      %cst_241 = arith.constant 0.000000e+00 : f32
      %700 = vector.broadcast %cst_241 : f32 to vector<8x32xf32>
      %c0_242 = arith.constant 0 : index
      %c0_243 = arith.constant 0 : index
      %701 = vector.load %arg15[%c0_242, %c0_243] : memref<8x32xf32, #tpu.memory_space<vmem>>, vector<8x32xf32>
      tpu.vector_store %arg15[%c0_242, %c0_243], %700 {strides = array<i32>} : memref<8x32xf32, #tpu.memory_space<vmem>>, vector<8x32xf32>,
      %cst_244 = arith.constant 0xFF800000 : f32
      %702 = vector.broadcast %cst_244 : f32 to vector<8x32xf32>
      %c0_245 = arith.constant 0 : index
      %c0_246 = arith.constant 0 : index
      %703 = vector.load %arg16[%c0_245, %c0_246] : memref<8x32xf32, #tpu.memory_space<vmem>>, vector<8x32xf32>
      tpu.vector_store %arg16[%c0_245, %c0_246], %702 {strides = array<i32>} : memref<8x32xf32, #tpu.memory_space<vmem>>, vector<8x32xf32>,
      %cst_247 = arith.constant 0.000000e+00 : f32
      %704 = vector.broadcast %cst_247 : f32 to vector<8x32xf32>
      %c0_248 = arith.constant 0 : index
      %c0_249 = arith.constant 0 : index
      %705 = vector.load %arg17[%c0_248, %c0_249] : memref<8x32xf32, #tpu.memory_space<vmem>>, vector<8x32xf32>
      tpu.vector_store %arg17[%c0_248, %c0_249], %704 {strides = array<i32>} : memref<8x32xf32, #tpu.memory_space<vmem>>, vector<8x32xf32>,
    } else {
    }
    %c0 = arith.constant 0 : index
    %c0_1 = arith.constant 0 : index
    %c0_2 = arith.constant 0 : index
    %3 = vector.load %arg5[%c0, %c0_1, %c0_2] : memref<3x32x32xbf16, #tpu.memory_space<vmem>>, vector<1x32x32xbf16>
    %4 = vector.shape_cast %3 : vector<1x32x32xbf16> to vector<32x32xbf16>
    %c1 = arith.constant 1 : index
    %c0_3 = arith.constant 0 : index
    %c0_4 = arith.constant 0 : index
    %5 = vector.load %arg5[%c1, %c0_3, %c0_4] : memref<3x32x32xbf16, #tpu.memory_space<vmem>>, vector<1x32x32xbf16>
    %6 = vector.shape_cast %5 : vector<1x32x32xbf16> to vector<32x32xbf16>
    %c2 = arith.constant 2 : index
    %c0_5 = arith.constant 0 : index
    %c0_6 = arith.constant 0 : index
    %7 = vector.load %arg5[%c2, %c0_5, %c0_6] : memref<3x32x32xbf16, #tpu.memory_space<vmem>>, vector<1x32x32xbf16>
    %8 = vector.shape_cast %7 : vector<1x32x32xbf16> to vector<32x32xbf16>
    %c0_7 = arith.constant 0 : index
    %c0_8 = arith.constant 0 : index
    %c0_9 = arith.constant 0 : index
    %9 = vector.load %arg6[%c0_7, %c0_8, %c0_9] : memref<3x1x32xf32, #tpu.memory_space<vmem>>, vector<1x1x32xf32>
    %10 = vector.shape_cast %9 : vector<1x1x32xf32> to vector<1x32xf32>
    %c1_10 = arith.constant 1 : index
    %c0_11 = arith.constant 0 : index
    %c0_12 = arith.constant 0 : index
    %11 = vector.load %arg6[%c1_10, %c0_11, %c0_12] : memref<3x1x32xf32, #tpu.memory_space<vmem>>, vector<1x1x32xf32>
    %12 = vector.shape_cast %11 : vector<1x1x32xf32> to vector<1x32xf32>
    %c2_13 = arith.constant 2 : index
    %c0_14 = arith.constant 0 : index
    %c0_15 = arith.constant 0 : index
    %13 = vector.load %arg6[%c2_13, %c0_14, %c0_15] : memref<3x1x32xf32, #tpu.memory_space<vmem>>, vector<1x1x32xf32>
    %14 = vector.shape_cast %13 : vector<1x1x32xf32> to vector<1x32xf32>
    %c0_16 = arith.constant 0 : index
    %c0_17 = arith.constant 0 : index
    %c0_18 = arith.constant 0 : index
    %15 = vector.load %arg7[%c0_16, %c0_17, %c0_18] : memref<3x32x32xbf16, #tpu.memory_space<vmem>>, vector<1x32x32xbf16>
    %16 = vector.shape_cast %15 : vector<1x32x32xbf16> to vector<32x32xbf16>
    %c1_19 = arith.constant 1 : index
    %c0_20 = arith.constant 0 : index
    %c0_21 = arith.constant 0 : index
    %17 = vector.load %arg7[%c1_19, %c0_20, %c0_21] : memref<3x32x32xbf16, #tpu.memory_space<vmem>>, vector<1x32x32xbf16>
    %18 = vector.shape_cast %17 : vector<1x32x32xbf16> to vector<32x32xbf16>
    %c2_22 = arith.constant 2 : index
    %c0_23 = arith.constant 0 : index
    %c0_24 = arith.constant 0 : index
    %19 = vector.load %arg7[%c2_22, %c0_23, %c0_24] : memref<3x32x32xbf16, #tpu.memory_space<vmem>>, vector<1x32x32xbf16>
    %20 = vector.shape_cast %19 : vector<1x32x32xbf16> to vector<32x32xbf16>
    %c0_25 = arith.constant 0 : index
    %c0_26 = arith.constant 0 : index
    %c0_27 = arith.constant 0 : index
    %21 = vector.load %arg8[%c0_25, %c0_26, %c0_27] : memref<3x1x32xf32, #tpu.memory_space<vmem>>, vector<1x1x32xf32>
    %22 = vector.shape_cast %21 : vector<1x1x32xf32> to vector<1x32xf32>
    %c1_28 = arith.constant 1 : index
    %c0_29 = arith.constant 0 : index
    %c0_30 = arith.constant 0 : index
    %23 = vector.load %arg8[%c1_28, %c0_29, %c0_30] : memref<3x1x32xf32, #tpu.memory_space<vmem>>, vector<1x1x32xf32>
    %24 = vector.shape_cast %23 : vector<1x1x32xf32> to vector<1x32xf32>
    %c2_31 = arith.constant 2 : index
    %c0_32 = arith.constant 0 : index
    %c0_33 = arith.constant 0 : index
    %25 = vector.load %arg8[%c2_31, %c0_32, %c0_33] : memref<3x1x32xf32, #tpu.memory_space<vmem>>, vector<1x1x32xf32>
    %26 = vector.shape_cast %25 : vector<1x1x32xf32> to vector<1x32xf32>
    %c0_34 = arith.constant 0 : index
    %c0_35 = arith.constant 0 : index
    %c0_36 = arith.constant 0 : index
    %27 = vector.load %arg9[%c0_34, %c0_35, %c0_36] : memref<3x32x32xbf16, #tpu.memory_space<vmem>>, vector<1x32x32xbf16>
    %28 = vector.shape_cast %27 : vector<1x32x32xbf16> to vector<32x32xbf16>
    %c1_37 = arith.constant 1 : index
    %c0_38 = arith.constant 0 : index
    %c0_39 = arith.constant 0 : index
    %29 = vector.load %arg9[%c1_37, %c0_38, %c0_39] : memref<3x32x32xbf16, #tpu.memory_space<vmem>>, vector<1x32x32xbf16>
    %30 = vector.shape_cast %29 : vector<1x32x32xbf16> to vector<32x32xbf16>
    %c2_40 = arith.constant 2 : index
    %c0_41 = arith.constant 0 : index
    %c0_42 = arith.constant 0 : index
    %31 = vector.load %arg9[%c2_40, %c0_41, %c0_42] : memref<3x32x32xbf16, #tpu.memory_space<vmem>>, vector<1x32x32xbf16>
    %32 = vector.shape_cast %31 : vector<1x32x32xbf16> to vector<32x32xbf16>
    %c0_43 = arith.constant 0 : index
    %c0_44 = arith.constant 0 : index
    %c0_45 = arith.constant 0 : index
    %33 = vector.load %arg10[%c0_43, %c0_44, %c0_45] : memref<3x1x32xf32, #tpu.memory_space<vmem>>, vector<1x1x32xf32>
    %34 = vector.shape_cast %33 : vector<1x1x32xf32> to vector<1x32xf32>
    %c1_46 = arith.constant 1 : index
    %c0_47 = arith.constant 0 : index
    %c0_48 = arith.constant 0 : index
    %35 = vector.load %arg10[%c1_46, %c0_47, %c0_48] : memref<3x1x32xf32, #tpu.memory_space<vmem>>, vector<1x1x32xf32>
    %36 = vector.shape_cast %35 : vector<1x1x32xf32> to vector<1x32xf32>
    %c2_49 = arith.constant 2 : index
    %c0_50 = arith.constant 0 : index
    %c0_51 = arith.constant 0 : index
    %37 = vector.load %arg10[%c2_49, %c0_50, %c0_51] : memref<3x1x32xf32, #tpu.memory_space<vmem>>, vector<1x1x32xf32>
    %38 = vector.shape_cast %37 : vector<1x1x32xf32> to vector<1x32xf32>
    %c0_52 = arith.constant 0 : index
    %c0_53 = arith.constant 0 : index
    %39 = vector.load %arg14[%c0_52, %c0_53] : memref<8x32xf32, #tpu.memory_space<vmem>>, vector<8x32xf32>
    %c0_54 = arith.constant 0 : index
    %c0_55 = arith.constant 0 : index
    %40 = vector.load %arg15[%c0_54, %c0_55] : memref<8x32xf32, #tpu.memory_space<vmem>>, vector<8x32xf32>
    %c0_56 = arith.constant 0 : index
    %c0_57 = arith.constant 0 : index
    %41 = vector.load %arg16[%c0_56, %c0_57] : memref<8x32xf32, #tpu.memory_space<vmem>>, vector<8x32xf32>
    %c0_58 = arith.constant 0 : index
    %c0_59 = arith.constant 0 : index
    %42 = vector.load %arg17[%c0_58, %c0_59] : memref<8x32xf32, #tpu.memory_space<vmem>>, vector<8x32xf32>
    %c0_i32_60 = arith.constant 0 : i32
    %43 = arith.truncf %39 : vector<8x32xf32> to vector<8x32xbf16>
    %cst = arith.constant dense<0.000000e+00> : vector<8x32xf32>
    %44 = tpu.matmul %43, %4, %cst {dimension_numbers = #tpu.dot_dimension_numbers<[1], [0], [0], [1], [0, 0, 1, 1], [], []>} : vector<8x32xbf16>, vector<32x32xbf16>, vector<8x32xf32> -> vector<8x32xf32>
    %45 = vector.broadcast %10 : vector<1x32xf32> to vector<8x32xf32>
    %46 = arith.addf %44, %45 : vector<8x32xf32>
    %cst_61 = arith.constant dense<0.000000e+00> : vector<8x32xf32>
    %47 = tpu.matmul %43, %6, %cst_61 {dimension_numbers = #tpu.dot_dimension_numbers<[1], [0], [0], [1], [0, 0, 1, 1], [], []>} : vector<8x32xbf16>, vector<32x32xbf16>, vector<8x32xf32> -> vector<8x32xf32>
    %48 = vector.broadcast %12 : vector<1x32xf32> to vector<8x32xf32>
    %49 = arith.addf %47, %48 : vector<8x32xf32>
    %cst_62 = arith.constant dense<0.000000e+00> : vector<8x32xf32>
    %50 = tpu.matmul %43, %8, %cst_62 {dimension_numbers = #tpu.dot_dimension_numbers<[1], [0], [0], [1], [0, 0, 1, 1], [], []>} : vector<8x32xbf16>, vector<32x32xbf16>, vector<8x32xf32> -> vector<8x32xf32>
    %51 = vector.broadcast %14 : vector<1x32xf32> to vector<8x32xf32>
    %52 = arith.addf %50, %51 : vector<8x32xf32>
    %53 = arith.index_cast %c0_i32_60 : i32 to index
    %c0_63 = arith.constant 0 : index
    %c0_64 = arith.constant 0 : index
    %54 = vector.load %arg2[%53, %c0_63, %c0_64] : memref<8x8x32xf32, #tpu.memory_space<vmem>>, vector<1x8x32xf32>
    %55 = vector.shape_cast %54 : vector<1x8x32xf32> to vector<8x32xf32>
    %56 = arith.addf %55, %46 : vector<8x32xf32>
    %57 = arith.negf %56 : vector<8x32xf32>
    %58 = math.exp %57 : vector<8x32xf32>
    %cst_65 = arith.constant 1.000000e+00 : f32
    %59 = vector.broadcast %cst_65 : f32 to vector<8x32xf32>
    %60 = arith.addf %59, %58 : vector<8x32xf32>
    %61 = arith.divf %59, %60 : vector<8x32xf32>
    %62 = arith.index_cast %c0_i32_60 : i32 to index
    %c0_66 = arith.constant 0 : index
    %c0_67 = arith.constant 0 : index
    %63 = vector.load %arg3[%62, %c0_66, %c0_67] : memref<8x8x32xf32, #tpu.memory_space<vmem>>, vector<1x8x32xf32>
    %64 = vector.shape_cast %63 : vector<1x8x32xf32> to vector<8x32xf32>
    %65 = arith.addf %64, %49 : vector<8x32xf32>
    %66 = arith.negf %65 : vector<8x32xf32>
    %67 = math.exp %66 : vector<8x32xf32>
    %cst_68 = arith.constant 1.000000e+00 : f32
    %68 = vector.broadcast %cst_68 : f32 to vector<8x32xf32>
    %69 = arith.addf %68, %67 : vector<8x32xf32>
    %70 = arith.divf %68, %69 : vector<8x32xf32>
    %71 = arith.index_cast %c0_i32_60 : i32 to index
    %c0_69 = arith.constant 0 : index
    %c0_70 = arith.constant 0 : index
    %72 = vector.load %arg4[%71, %c0_69, %c0_70] : memref<8x8x32xf32, #tpu.memory_space<vmem>>, vector<1x8x32xf32>
    %73 = vector.shape_cast %72 : vector<1x8x32xf32> to vector<8x32xf32>
    %74 = arith.mulf %61, %52 : vector<8x32xf32>
    %75 = arith.addf %73, %74 : vector<8x32xf32>
    %76 = math.tanh %75 : vector<8x32xf32>
    %cst_71 = arith.constant 1.000000e+00 : f32
    %77 = vector.broadcast %cst_71 : f32 to vector<8x32xf32>
    %78 = arith.subf %77, %70 : vector<8x32xf32>
    %79 = arith.mulf %78, %76 : vector<8x32xf32>
    %80 = arith.mulf %70, %39 : vector<8x32xf32>
    %81 = arith.addf %79, %80 : vector<8x32xf32>
    %82 = arith.truncf %81 : vector<8x32xf32> to vector<8x32xbf16>
    %83 = arith.truncf %40 : vector<8x32xf32> to vector<8x32xbf16>
    %cst_72 = arith.constant dense<0.000000e+00> : vector<8x32xf32>
    %84 = tpu.matmul %82, %16, %cst_72 {dimension_numbers = #tpu.dot_dimension_numbers<[1], [0], [0], [1], [0, 0, 1, 1], [], []>} : vector<8x32xbf16>, vector<32x32xbf16>, vector<8x32xf32> -> vector<8x32xf32>
    %85 = vector.broadcast %22 : vector<1x32xf32> to vector<8x32xf32>
    %86 = arith.addf %84, %85 : vector<8x32xf32>
    %cst_73 = arith.constant dense<0.000000e+00> : vector<8x32xf32>
    %87 = tpu.matmul %82, %18, %cst_73 {dimension_numbers = #tpu.dot_dimension_numbers<[1], [0], [0], [1], [0, 0, 1, 1], [], []>} : vector<8x32xbf16>, vector<32x32xbf16>, vector<8x32xf32> -> vector<8x32xf32>
    %88 = vector.broadcast %24 : vector<1x32xf32> to vector<8x32xf32>
    %89 = arith.addf %87, %88 : vector<8x32xf32>
    %cst_74 = arith.constant dense<0.000000e+00> : vector<8x32xf32>
    %90 = tpu.matmul %82, %20, %cst_74 {dimension_numbers = #tpu.dot_dimension_numbers<[1], [0], [0], [1], [0, 0, 1, 1], [], []>} : vector<8x32xbf16>, vector<32x32xbf16>, vector<8x32xf32> -> vector<8x32xf32>
    %91 = vector.broadcast %26 : vector<1x32xf32> to vector<8x32xf32>
    %92 = arith.addf %90, %91 : vector<8x32xf32>
    %cst_75 = arith.constant dense<0.000000e+00> : vector<8x32xf32>
    %93 = tpu.matmul %83, %28, %cst_75 {dimension_numbers = #tpu.dot_dimension_numbers<[1], [0], [0], [1], [0, 0, 1, 1], [], []>} : vector<8x32xbf16>, vector<32x32xbf16>, vector<8x32xf32> -> vector<8x32xf32>
    %94 = vector.broadcast %34 : vector<1x32xf32> to vector<8x32xf32>
    %95 = arith.addf %93, %94 : vector<8x32xf32>
    %cst_76 = arith.constant dense<0.000000e+00> : vector<8x32xf32>
    %96 = tpu.matmul %83, %30, %cst_76 {dimension_numbers = #tpu.dot_dimension_numbers<[1], [0], [0], [1], [0, 0, 1, 1], [], []>} : vector<8x32xbf16>, vector<32x32xbf16>, vector<8x32xf32> -> vector<8x32xf32>
    %97 = vector.broadcast %36 : vector<1x32xf32> to vector<8x32xf32>
    %98 = arith.addf %96, %97 : vector<8x32xf32>
    %cst_77 = arith.constant dense<0.000000e+00> : vector<8x32xf32>
    %99 = tpu.matmul %83, %32, %cst_77 {dimension_numbers = #tpu.dot_dimension_numbers<[1], [0], [0], [1], [0, 0, 1, 1], [], []>} : vector<8x32xbf16>, vector<32x32xbf16>, vector<8x32xf32> -> vector<8x32xf32>
    %100 = vector.broadcast %38 : vector<1x32xf32> to vector<8x32xf32>
    %101 = arith.addf %99, %100 : vector<8x32xf32>
    %102 = arith.addf %86, %95 : vector<8x32xf32>
    %103 = arith.negf %102 : vector<8x32xf32>
    %104 = math.exp %103 : vector<8x32xf32>
    %cst_78 = arith.constant 1.000000e+00 : f32
    %105 = vector.broadcast %cst_78 : f32 to vector<8x32xf32>
    %106 = arith.addf %105, %104 : vector<8x32xf32>
    %107 = arith.divf %105, %106 : vector<8x32xf32>
    %108 = arith.addf %89, %98 : vector<8x32xf32>
    %109 = arith.negf %108 : vector<8x32xf32>
    %110 = math.exp %109 : vector<8x32xf32>
    %cst_79 = arith.constant 1.000000e+00 : f32
    %111 = vector.broadcast %cst_79 : f32 to vector<8x32xf32>
    %112 = arith.addf %111, %110 : vector<8x32xf32>
    %113 = arith.divf %111, %112 : vector<8x32xf32>
    %114 = arith.mulf %107, %101 : vector<8x32xf32>
    %115 = arith.addf %92, %114 : vector<8x32xf32>
    %116 = math.tanh %115 : vector<8x32xf32>
    %cst_80 = arith.constant 1.000000e+00 : f32
    %117 = vector.broadcast %cst_80 : f32 to vector<8x32xf32>
    %118 = arith.subf %117, %113 : vector<8x32xf32>
    %119 = arith.mulf %118, %116 : vector<8x32xf32>
    %120 = arith.mulf %113, %40 : vector<8x32xf32>
    %121 = arith.addf %119, %120 : vector<8x32xf32>
    %122 = arith.maximumf %41, %121 : vector<8x32xf32>
    %123 = arith.addf %42, %121 : vector<8x32xf32>
    %c1_i32 = arith.constant 1 : i32
    %124 = arith.truncf %81 : vector<8x32xf32> to vector<8x32xbf16>
    %cst_81 = arith.constant dense<0.000000e+00> : vector<8x32xf32>
    %125 = tpu.matmul %124, %4, %cst_81 {dimension_numbers = #tpu.dot_dimension_numbers<[1], [0], [0], [1], [0, 0, 1, 1], [], []>} : vector<8x32xbf16>, vector<32x32xbf16>, vector<8x32xf32> -> vector<8x32xf32>
    %126 = vector.broadcast %10 : vector<1x32xf32> to vector<8x32xf32>
    %127 = arith.addf %125, %126 : vector<8x32xf32>
    %cst_82 = arith.constant dense<0.000000e+00> : vector<8x32xf32>
    %128 = tpu.matmul %124, %6, %cst_82 {dimension_numbers = #tpu.dot_dimension_numbers<[1], [0], [0], [1], [0, 0, 1, 1], [], []>} : vector<8x32xbf16>, vector<32x32xbf16>, vector<8x32xf32> -> vector<8x32xf32>
    %129 = vector.broadcast %12 : vector<1x32xf32> to vector<8x32xf32>
    %130 = arith.addf %128, %129 : vector<8x32xf32>
    %cst_83 = arith.constant dense<0.000000e+00> : vector<8x32xf32>
    %131 = tpu.matmul %124, %8, %cst_83 {dimension_numbers = #tpu.dot_dimension_numbers<[1], [0], [0], [1], [0, 0, 1, 1], [], []>} : vector<8x32xbf16>, vector<32x32xbf16>, vector<8x32xf32> -> vector<8x32xf32>
    %132 = vector.broadcast %14 : vector<1x32xf32> to vector<8x32xf32>
    %133 = arith.addf %131, %132 : vector<8x32xf32>
    %134 = arith.index_cast %c1_i32 : i32 to index
    %c0_84 = arith.constant 0 : index
    %c0_85 = arith.constant 0 : index
    %135 = vector.load %arg2[%134, %c0_84, %c0_85] : memref<8x8x32xf32, #tpu.memory_space<vmem>>, vector<1x8x32xf32>
    %136 = vector.shape_cast %135 : vector<1x8x32xf32> to vector<8x32xf32>
    %137 = arith.addf %136, %127 : vector<8x32xf32>
    %138 = arith.negf %137 : vector<8x32xf32>
    %139 = math.exp %138 : vector<8x32xf32>
    %cst_86 = arith.constant 1.000000e+00 : f32
    %140 = vector.broadcast %cst_86 : f32 to vector<8x32xf32>
    %141 = arith.addf %140, %139 : vector<8x32xf32>
    %142 = arith.divf %140, %141 : vector<8x32xf32>
    %143 = arith.index_cast %c1_i32 : i32 to index
    %c0_87 = arith.constant 0 : index
    %c0_88 = arith.constant 0 : index
    %144 = vector.load %arg3[%143, %c0_87, %c0_88] : memref<8x8x32xf32, #tpu.memory_space<vmem>>, vector<1x8x32xf32>
    %145 = vector.shape_cast %144 : vector<1x8x32xf32> to vector<8x32xf32>
    %146 = arith.addf %145, %130 : vector<8x32xf32>
    %147 = arith.negf %146 : vector<8x32xf32>
    %148 = math.exp %147 : vector<8x32xf32>
    %cst_89 = arith.constant 1.000000e+00 : f32
    %149 = vector.broadcast %cst_89 : f32 to vector<8x32xf32>
    %150 = arith.addf %149, %148 : vector<8x32xf32>
    %151 = arith.divf %149, %150 : vector<8x32xf32>
    %152 = arith.index_cast %c1_i32 : i32 to index
    %c0_90 = arith.constant 0 : index
    %c0_91 = arith.constant 0 : index
    %153 = vector.load %arg4[%152, %c0_90, %c0_91] : memref<8x8x32xf32, #tpu.memory_space<vmem>>, vector<1x8x32xf32>
    %154 = vector.shape_cast %153 : vector<1x8x32xf32> to vector<8x32xf32>
    %155 = arith.mulf %142, %133 : vector<8x32xf32>
    %156 = arith.addf %154, %155 : vector<8x32xf32>
    %157 = math.tanh %156 : vector<8x32xf32>
    %cst_92 = arith.constant 1.000000e+00 : f32
    %158 = vector.broadcast %cst_92 : f32 to vector<8x32xf32>
    %159 = arith.subf %158, %151 : vector<8x32xf32>
    %160 = arith.mulf %159, %157 : vector<8x32xf32>
    %161 = arith.mulf %151, %81 : vector<8x32xf32>
    %162 = arith.addf %160, %161 : vector<8x32xf32>
    %163 = arith.truncf %162 : vector<8x32xf32> to vector<8x32xbf16>
    %164 = arith.truncf %121 : vector<8x32xf32> to vector<8x32xbf16>
    %cst_93 = arith.constant dense<0.000000e+00> : vector<8x32xf32>
    %165 = tpu.matmul %163, %16, %cst_93 {dimension_numbers = #tpu.dot_dimension_numbers<[1], [0], [0], [1], [0, 0, 1, 1], [], []>} : vector<8x32xbf16>, vector<32x32xbf16>, vector<8x32xf32> -> vector<8x32xf32>
    %166 = vector.broadcast %22 : vector<1x32xf32> to vector<8x32xf32>
    %167 = arith.addf %165, %166 : vector<8x32xf32>
    %cst_94 = arith.constant dense<0.000000e+00> : vector<8x32xf32>
    %168 = tpu.matmul %163, %18, %cst_94 {dimension_numbers = #tpu.dot_dimension_numbers<[1], [0], [0], [1], [0, 0, 1, 1], [], []>} : vector<8x32xbf16>, vector<32x32xbf16>, vector<8x32xf32> -> vector<8x32xf32>
    %169 = vector.broadcast %24 : vector<1x32xf32> to vector<8x32xf32>
    %170 = arith.addf %168, %169 : vector<8x32xf32>
    %cst_95 = arith.constant dense<0.000000e+00> : vector<8x32xf32>
    %171 = tpu.matmul %163, %20, %cst_95 {dimension_numbers = #tpu.dot_dimension_numbers<[1], [0], [0], [1], [0, 0, 1, 1], [], []>} : vector<8x32xbf16>, vector<32x32xbf16>, vector<8x32xf32> -> vector<8x32xf32>
    %172 = vector.broadcast %26 : vector<1x32xf32> to vector<8x32xf32>
    %173 = arith.addf %171, %172 : vector<8x32xf32>
    %cst_96 = arith.constant dense<0.000000e+00> : vector<8x32xf32>
    %174 = tpu.matmul %164, %28, %cst_96 {dimension_numbers = #tpu.dot_dimension_numbers<[1], [0], [0], [1], [0, 0, 1, 1], [], []>} : vector<8x32xbf16>, vector<32x32xbf16>, vector<8x32xf32> -> vector<8x32xf32>
    %175 = vector.broadcast %34 : vector<1x32xf32> to vector<8x32xf32>
    %176 = arith.addf %174, %175 : vector<8x32xf32>
    %cst_97 = arith.constant dense<0.000000e+00> : vector<8x32xf32>
    %177 = tpu.matmul %164, %30, %cst_97 {dimension_numbers = #tpu.dot_dimension_numbers<[1], [0], [0], [1], [0, 0, 1, 1], [], []>} : vector<8x32xbf16>, vector<32x32xbf16>, vector<8x32xf32> -> vector<8x32xf32>
    %178 = vector.broadcast %36 : vector<1x32xf32> to vector<8x32xf32>
    %179 = arith.addf %177, %178 : vector<8x32xf32>
    %cst_98 = arith.constant dense<0.000000e+00> : vector<8x32xf32>
    %180 = tpu.matmul %164, %32, %cst_98 {dimension_numbers = #tpu.dot_dimension_numbers<[1], [0], [0], [1], [0, 0, 1, 1], [], []>} : vector<8x32xbf16>, vector<32x32xbf16>, vector<8x32xf32> -> vector<8x32xf32>
    %181 = vector.broadcast %38 : vector<1x32xf32> to vector<8x32xf32>
    %182 = arith.addf %180, %181 : vector<8x32xf32>
    %183 = arith.addf %167, %176 : vector<8x32xf32>
    %184 = arith.negf %183 : vector<8x32xf32>
    %185 = math.exp %184 : vector<8x32xf32>
    %cst_99 = arith.constant 1.000000e+00 : f32
    %186 = vector.broadcast %cst_99 : f32 to vector<8x32xf32>
    %187 = arith.addf %186, %185 : vector<8x32xf32>
    %188 = arith.divf %186, %187 : vector<8x32xf32>
    %189 = arith.addf %170, %179 : vector<8x32xf32>
    %190 = arith.negf %189 : vector<8x32xf32>
    %191 = math.exp %190 : vector<8x32xf32>
    %cst_100 = arith.constant 1.000000e+00 : f32
    %192 = vector.broadcast %cst_100 : f32 to vector<8x32xf32>
    %193 = arith.addf %192, %191 : vector<8x32xf32>
    %194 = arith.divf %192, %193 : vector<8x32xf32>
    %195 = arith.mulf %188, %182 : vector<8x32xf32>
    %196 = arith.addf %173, %195 : vector<8x32xf32>
    %197 = math.tanh %196 : vector<8x32xf32>
    %cst_101 = arith.constant 1.000000e+00 : f32
    %198 = vector.broadcast %cst_101 : f32 to vector<8x32xf32>
    %199 = arith.subf %198, %194 : vector<8x32xf32>
    %200 = arith.mulf %199, %197 : vector<8x32xf32>
    %201 = arith.mulf %194, %121 : vector<8x32xf32>
    %202 = arith.addf %200, %201 : vector<8x32xf32>
    %203 = arith.maximumf %122, %202 : vector<8x32xf32>
    %204 = arith.addf %123, %202 : vector<8x32xf32>
    %c2_i32 = arith.constant 2 : i32
    %205 = arith.truncf %162 : vector<8x32xf32> to vector<8x32xbf16>
    %cst_102 = arith.constant dense<0.000000e+00> : vector<8x32xf32>
    %206 = tpu.matmul %205, %4, %cst_102 {dimension_numbers = #tpu.dot_dimension_numbers<[1], [0], [0], [1], [0, 0, 1, 1], [], []>} : vector<8x32xbf16>, vector<32x32xbf16>, vector<8x32xf32> -> vector<8x32xf32>
    %207 = vector.broadcast %10 : vector<1x32xf32> to vector<8x32xf32>
    %208 = arith.addf %206, %207 : vector<8x32xf32>
    %cst_103 = arith.constant dense<0.000000e+00> : vector<8x32xf32>
    %209 = tpu.matmul %205, %6, %cst_103 {dimension_numbers = #tpu.dot_dimension_numbers<[1], [0], [0], [1], [0, 0, 1, 1], [], []>} : vector<8x32xbf16>, vector<32x32xbf16>, vector<8x32xf32> -> vector<8x32xf32>
    %210 = vector.broadcast %12 : vector<1x32xf32> to vector<8x32xf32>
    %211 = arith.addf %209, %210 : vector<8x32xf32>
    %cst_104 = arith.constant dense<0.000000e+00> : vector<8x32xf32>
    %212 = tpu.matmul %205, %8, %cst_104 {dimension_numbers = #tpu.dot_dimension_numbers<[1], [0], [0], [1], [0, 0, 1, 1], [], []>} : vector<8x32xbf16>, vector<32x32xbf16>, vector<8x32xf32> -> vector<8x32xf32>
    %213 = vector.broadcast %14 : vector<1x32xf32> to vector<8x32xf32>
    %214 = arith.addf %212, %213 : vector<8x32xf32>
    %215 = arith.index_cast %c2_i32 : i32 to index
    %c0_105 = arith.constant 0 : index
    %c0_106 = arith.constant 0 : index
    %216 = vector.load %arg2[%215, %c0_105, %c0_106] : memref<8x8x32xf32, #tpu.memory_space<vmem>>, vector<1x8x32xf32>
    %217 = vector.shape_cast %216 : vector<1x8x32xf32> to vector<8x32xf32>
    %218 = arith.addf %217, %208 : vector<8x32xf32>
    %219 = arith.negf %218 : vector<8x32xf32>
    %220 = math.exp %219 : vector<8x32xf32>
    %cst_107 = arith.constant 1.000000e+00 : f32
    %221 = vector.broadcast %cst_107 : f32 to vector<8x32xf32>
    %222 = arith.addf %221, %220 : vector<8x32xf32>
    %223 = arith.divf %221, %222 : vector<8x32xf32>
    %224 = arith.index_cast %c2_i32 : i32 to index
    %c0_108 = arith.constant 0 : index
    %c0_109 = arith.constant 0 : index
    %225 = vector.load %arg3[%224, %c0_108, %c0_109] : memref<8x8x32xf32, #tpu.memory_space<vmem>>, vector<1x8x32xf32>
    %226 = vector.shape_cast %225 : vector<1x8x32xf32> to vector<8x32xf32>
    %227 = arith.addf %226, %211 : vector<8x32xf32>
    %228 = arith.negf %227 : vector<8x32xf32>
    %229 = math.exp %228 : vector<8x32xf32>
    %cst_110 = arith.constant 1.000000e+00 : f32
    %230 = vector.broadcast %cst_110 : f32 to vector<8x32xf32>
    %231 = arith.addf %230, %229 : vector<8x32xf32>
    %232 = arith.divf %230, %231 : vector<8x32xf32>
    %233 = arith.index_cast %c2_i32 : i32 to index
    %c0_111 = arith.constant 0 : index
    %c0_112 = arith.constant 0 : index
    %234 = vector.load %arg4[%233, %c0_111, %c0_112] : memref<8x8x32xf32, #tpu.memory_space<vmem>>, vector<1x8x32xf32>
    %235 = vector.shape_cast %234 : vector<1x8x32xf32> to vector<8x32xf32>
    %236 = arith.mulf %223, %214 : vector<8x32xf32>
    %237 = arith.addf %235, %236 : vector<8x32xf32>
    %238 = math.tanh %237 : vector<8x32xf32>
    %cst_113 = arith.constant 1.000000e+00 : f32
    %239 = vector.broadcast %cst_113 : f32 to vector<8x32xf32>
    %240 = arith.subf %239, %232 : vector<8x32xf32>
    %241 = arith.mulf %240, %238 : vector<8x32xf32>
    %242 = arith.mulf %232, %162 : vector<8x32xf32>
    %243 = arith.addf %241, %242 : vector<8x32xf32>
    %244 = arith.truncf %243 : vector<8x32xf32> to vector<8x32xbf16>
    %245 = arith.truncf %202 : vector<8x32xf32> to vector<8x32xbf16>
    %cst_114 = arith.constant dense<0.000000e+00> : vector<8x32xf32>
    %246 = tpu.matmul %244, %16, %cst_114 {dimension_numbers = #tpu.dot_dimension_numbers<[1], [0], [0], [1], [0, 0, 1, 1], [], []>} : vector<8x32xbf16>, vector<32x32xbf16>, vector<8x32xf32> -> vector<8x32xf32>
    %247 = vector.broadcast %22 : vector<1x32xf32> to vector<8x32xf32>
    %248 = arith.addf %246, %247 : vector<8x32xf32>
    %cst_115 = arith.constant dense<0.000000e+00> : vector<8x32xf32>
    %249 = tpu.matmul %244, %18, %cst_115 {dimension_numbers = #tpu.dot_dimension_numbers<[1], [0], [0], [1], [0, 0, 1, 1], [], []>} : vector<8x32xbf16>, vector<32x32xbf16>, vector<8x32xf32> -> vector<8x32xf32>
    %250 = vector.broadcast %24 : vector<1x32xf32> to vector<8x32xf32>
    %251 = arith.addf %249, %250 : vector<8x32xf32>
    %cst_116 = arith.constant dense<0.000000e+00> : vector<8x32xf32>
    %252 = tpu.matmul %244, %20, %cst_116 {dimension_numbers = #tpu.dot_dimension_numbers<[1], [0], [0], [1], [0, 0, 1, 1], [], []>} : vector<8x32xbf16>, vector<32x32xbf16>, vector<8x32xf32> -> vector<8x32xf32>
    %253 = vector.broadcast %26 : vector<1x32xf32> to vector<8x32xf32>
    %254 = arith.addf %252, %253 : vector<8x32xf32>
    %cst_117 = arith.constant dense<0.000000e+00> : vector<8x32xf32>
    %255 = tpu.matmul %245, %28, %cst_117 {dimension_numbers = #tpu.dot_dimension_numbers<[1], [0], [0], [1], [0, 0, 1, 1], [], []>} : vector<8x32xbf16>, vector<32x32xbf16>, vector<8x32xf32> -> vector<8x32xf32>
    %256 = vector.broadcast %34 : vector<1x32xf32> to vector<8x32xf32>
    %257 = arith.addf %255, %256 : vector<8x32xf32>
    %cst_118 = arith.constant dense<0.000000e+00> : vector<8x32xf32>
    %258 = tpu.matmul %245, %30, %cst_118 {dimension_numbers = #tpu.dot_dimension_numbers<[1], [0], [0], [1], [0, 0, 1, 1], [], []>} : vector<8x32xbf16>, vector<32x32xbf16>, vector<8x32xf32> -> vector<8x32xf32>
    %259 = vector.broadcast %36 : vector<1x32xf32> to vector<8x32xf32>
    %260 = arith.addf %258, %259 : vector<8x32xf32>
    %cst_119 = arith.constant dense<0.000000e+00> : vector<8x32xf32>
    %261 = tpu.matmul %245, %32, %cst_119 {dimension_numbers = #tpu.dot_dimension_numbers<[1], [0], [0], [1], [0, 0, 1, 1], [], []>} : vector<8x32xbf16>, vector<32x32xbf16>, vector<8x32xf32> -> vector<8x32xf32>
    %262 = vector.broadcast %38 : vector<1x32xf32> to vector<8x32xf32>
    %263 = arith.addf %261, %262 : vector<8x32xf32>
    %264 = arith.addf %248, %257 : vector<8x32xf32>
    %265 = arith.negf %264 : vector<8x32xf32>
    %266 = math.exp %265 : vector<8x32xf32>
    %cst_120 = arith.constant 1.000000e+00 : f32
    %267 = vector.broadcast %cst_120 : f32 to vector<8x32xf32>
    %268 = arith.addf %267, %266 : vector<8x32xf32>
    %269 = arith.divf %267, %268 : vector<8x32xf32>
    %270 = arith.addf %251, %260 : vector<8x32xf32>
    %271 = arith.negf %270 : vector<8x32xf32>
    %272 = math.exp %271 : vector<8x32xf32>
    %cst_121 = arith.constant 1.000000e+00 : f32
    %273 = vector.broadcast %cst_121 : f32 to vector<8x32xf32>
    %274 = arith.addf %273, %272 : vector<8x32xf32>
    %275 = arith.divf %273, %274 : vector<8x32xf32>
    %276 = arith.mulf %269, %263 : vector<8x32xf32>
    %277 = arith.addf %254, %276 : vector<8x32xf32>
    %278 = math.tanh %277 : vector<8x32xf32>
    %cst_122 = arith.constant 1.000000e+00 : f32
    %279 = vector.broadcast %cst_122 : f32 to vector<8x32xf32>
    %280 = arith.subf %279, %275 : vector<8x32xf32>
    %281 = arith.mulf %280, %278 : vector<8x32xf32>
    %282 = arith.mulf %275, %202 : vector<8x32xf32>
    %283 = arith.addf %281, %282 : vector<8x32xf32>
    %284 = arith.maximumf %203, %283 : vector<8x32xf32>
    %285 = arith.addf %204, %283 : vector<8x32xf32>
    %c3_i32 = arith.constant 3 : i32
    %286 = arith.truncf %243 : vector<8x32xf32> to vector<8x32xbf16>
    %cst_123 = arith.constant dense<0.000000e+00> : vector<8x32xf32>
    %287 = tpu.matmul %286, %4, %cst_123 {dimension_numbers = #tpu.dot_dimension_numbers<[1], [0], [0], [1], [0, 0, 1, 1], [], []>} : vector<8x32xbf16>, vector<32x32xbf16>, vector<8x32xf32> -> vector<8x32xf32>
    %288 = vector.broadcast %10 : vector<1x32xf32> to vector<8x32xf32>
    %289 = arith.addf %287, %288 : vector<8x32xf32>
    %cst_124 = arith.constant dense<0.000000e+00> : vector<8x32xf32>
    %290 = tpu.matmul %286, %6, %cst_124 {dimension_numbers = #tpu.dot_dimension_numbers<[1], [0], [0], [1], [0, 0, 1, 1], [], []>} : vector<8x32xbf16>, vector<32x32xbf16>, vector<8x32xf32> -> vector<8x32xf32>
    %291 = vector.broadcast %12 : vector<1x32xf32> to vector<8x32xf32>
    %292 = arith.addf %290, %291 : vector<8x32xf32>
    %cst_125 = arith.constant dense<0.000000e+00> : vector<8x32xf32>
    %293 = tpu.matmul %286, %8, %cst_125 {dimension_numbers = #tpu.dot_dimension_numbers<[1], [0], [0], [1], [0, 0, 1, 1], [], []>} : vector<8x32xbf16>, vector<32x32xbf16>, vector<8x32xf32> -> vector<8x32xf32>
    %294 = vector.broadcast %14 : vector<1x32xf32> to vector<8x32xf32>
    %295 = arith.addf %293, %294 : vector<8x32xf32>
    %296 = arith.index_cast %c3_i32 : i32 to index
    %c0_126 = arith.constant 0 : index
    %c0_127 = arith.constant 0 : index
    %297 = vector.load %arg2[%296, %c0_126, %c0_127] : memref<8x8x32xf32, #tpu.memory_space<vmem>>, vector<1x8x32xf32>
    %298 = vector.shape_cast %297 : vector<1x8x32xf32> to vector<8x32xf32>
    %299 = arith.addf %298, %289 : vector<8x32xf32>
    %300 = arith.negf %299 : vector<8x32xf32>
    %301 = math.exp %300 : vector<8x32xf32>
    %cst_128 = arith.constant 1.000000e+00 : f32
    %302 = vector.broadcast %cst_128 : f32 to vector<8x32xf32>
    %303 = arith.addf %302, %301 : vector<8x32xf32>
    %304 = arith.divf %302, %303 : vector<8x32xf32>
    %305 = arith.index_cast %c3_i32 : i32 to index
    %c0_129 = arith.constant 0 : index
    %c0_130 = arith.constant 0 : index
    %306 = vector.load %arg3[%305, %c0_129, %c0_130] : memref<8x8x32xf32, #tpu.memory_space<vmem>>, vector<1x8x32xf32>
    %307 = vector.shape_cast %306 : vector<1x8x32xf32> to vector<8x32xf32>
    %308 = arith.addf %307, %292 : vector<8x32xf32>
    %309 = arith.negf %308 : vector<8x32xf32>
    %310 = math.exp %309 : vector<8x32xf32>
    %cst_131 = arith.constant 1.000000e+00 : f32
    %311 = vector.broadcast %cst_131 : f32 to vector<8x32xf32>
    %312 = arith.addf %311, %310 : vector<8x32xf32>
    %313 = arith.divf %311, %312 : vector<8x32xf32>
    %314 = arith.index_cast %c3_i32 : i32 to index
    %c0_132 = arith.constant 0 : index
    %c0_133 = arith.constant 0 : index
    %315 = vector.load %arg4[%314, %c0_132, %c0_133] : memref<8x8x32xf32, #tpu.memory_space<vmem>>, vector<1x8x32xf32>
    %316 = vector.shape_cast %315 : vector<1x8x32xf32> to vector<8x32xf32>
    %317 = arith.mulf %304, %295 : vector<8x32xf32>
    %318 = arith.addf %316, %317 : vector<8x32xf32>
    %319 = math.tanh %318 : vector<8x32xf32>
    %cst_134 = arith.constant 1.000000e+00 : f32
    %320 = vector.broadcast %cst_134 : f32 to vector<8x32xf32>
    %321 = arith.subf %320, %313 : vector<8x32xf32>
    %322 = arith.mulf %321, %319 : vector<8x32xf32>
    %323 = arith.mulf %313, %243 : vector<8x32xf32>
    %324 = arith.addf %322, %323 : vector<8x32xf32>
    %325 = arith.truncf %324 : vector<8x32xf32> to vector<8x32xbf16>
    %326 = arith.truncf %283 : vector<8x32xf32> to vector<8x32xbf16>
    %cst_135 = arith.constant dense<0.000000e+00> : vector<8x32xf32>
    %327 = tpu.matmul %325, %16, %cst_135 {dimension_numbers = #tpu.dot_dimension_numbers<[1], [0], [0], [1], [0, 0, 1, 1], [], []>} : vector<8x32xbf16>, vector<32x32xbf16>, vector<8x32xf32> -> vector<8x32xf32>
    %328 = vector.broadcast %22 : vector<1x32xf32> to vector<8x32xf32>
    %329 = arith.addf %327, %328 : vector<8x32xf32>
    %cst_136 = arith.constant dense<0.000000e+00> : vector<8x32xf32>
    %330 = tpu.matmul %325, %18, %cst_136 {dimension_numbers = #tpu.dot_dimension_numbers<[1], [0], [0], [1], [0, 0, 1, 1], [], []>} : vector<8x32xbf16>, vector<32x32xbf16>, vector<8x32xf32> -> vector<8x32xf32>
    %331 = vector.broadcast %24 : vector<1x32xf32> to vector<8x32xf32>
    %332 = arith.addf %330, %331 : vector<8x32xf32>
    %cst_137 = arith.constant dense<0.000000e+00> : vector<8x32xf32>
    %333 = tpu.matmul %325, %20, %cst_137 {dimension_numbers = #tpu.dot_dimension_numbers<[1], [0], [0], [1], [0, 0, 1, 1], [], []>} : vector<8x32xbf16>, vector<32x32xbf16>, vector<8x32xf32> -> vector<8x32xf32>
    %334 = vector.broadcast %26 : vector<1x32xf32> to vector<8x32xf32>
    %335 = arith.addf %333, %334 : vector<8x32xf32>
    %cst_138 = arith.constant dense<0.000000e+00> : vector<8x32xf32>
    %336 = tpu.matmul %326, %28, %cst_138 {dimension_numbers = #tpu.dot_dimension_numbers<[1], [0], [0], [1], [0, 0, 1, 1], [], []>} : vector<8x32xbf16>, vector<32x32xbf16>, vector<8x32xf32> -> vector<8x32xf32>
    %337 = vector.broadcast %34 : vector<1x32xf32> to vector<8x32xf32>
    %338 = arith.addf %336, %337 : vector<8x32xf32>
    %cst_139 = arith.constant dense<0.000000e+00> : vector<8x32xf32>
    %339 = tpu.matmul %326, %30, %cst_139 {dimension_numbers = #tpu.dot_dimension_numbers<[1], [0], [0], [1], [0, 0, 1, 1], [], []>} : vector<8x32xbf16>, vector<32x32xbf16>, vector<8x32xf32> -> vector<8x32xf32>
    %340 = vector.broadcast %36 : vector<1x32xf32> to vector<8x32xf32>
    %341 = arith.addf %339, %340 : vector<8x32xf32>
    %cst_140 = arith.constant dense<0.000000e+00> : vector<8x32xf32>
    %342 = tpu.matmul %326, %32, %cst_140 {dimension_numbers = #tpu.dot_dimension_numbers<[1], [0], [0], [1], [0, 0, 1, 1], [], []>} : vector<8x32xbf16>, vector<32x32xbf16>, vector<8x32xf32> -> vector<8x32xf32>
    %343 = vector.broadcast %38 : vector<1x32xf32> to vector<8x32xf32>
    %344 = arith.addf %342, %343 : vector<8x32xf32>
    %345 = arith.addf %329, %338 : vector<8x32xf32>
    %346 = arith.negf %345 : vector<8x32xf32>
    %347 = math.exp %346 : vector<8x32xf32>
    %cst_141 = arith.constant 1.000000e+00 : f32
    %348 = vector.broadcast %cst_141 : f32 to vector<8x32xf32>
    %349 = arith.addf %348, %347 : vector<8x32xf32>
    %350 = arith.divf %348, %349 : vector<8x32xf32>
    %351 = arith.addf %332, %341 : vector<8x32xf32>
    %352 = arith.negf %351 : vector<8x32xf32>
    %353 = math.exp %352 : vector<8x32xf32>
    %cst_142 = arith.constant 1.000000e+00 : f32
    %354 = vector.broadcast %cst_142 : f32 to vector<8x32xf32>
    %355 = arith.addf %354, %353 : vector<8x32xf32>
    %356 = arith.divf %354, %355 : vector<8x32xf32>
    %357 = arith.mulf %350, %344 : vector<8x32xf32>
    %358 = arith.addf %335, %357 : vector<8x32xf32>
    %359 = math.tanh %358 : vector<8x32xf32>
    %cst_143 = arith.constant 1.000000e+00 : f32
    %360 = vector.broadcast %cst_143 : f32 to vector<8x32xf32>
    %361 = arith.subf %360, %356 : vector<8x32xf32>
    %362 = arith.mulf %361, %359 : vector<8x32xf32>
    %363 = arith.mulf %356, %283 : vector<8x32xf32>
    %364 = arith.addf %362, %363 : vector<8x32xf32>
    %365 = arith.maximumf %284, %364 : vector<8x32xf32>
    %366 = arith.addf %285, %364 : vector<8x32xf32>
    %c4_i32 = arith.constant 4 : i32
    %367 = arith.truncf %324 : vector<8x32xf32> to vector<8x32xbf16>
    %cst_144 = arith.constant dense<0.000000e+00> : vector<8x32xf32>
    %368 = tpu.matmul %367, %4, %cst_144 {dimension_numbers = #tpu.dot_dimension_numbers<[1], [0], [0], [1], [0, 0, 1, 1], [], []>} : vector<8x32xbf16>, vector<32x32xbf16>, vector<8x32xf32> -> vector<8x32xf32>
    %369 = vector.broadcast %10 : vector<1x32xf32> to vector<8x32xf32>
    %370 = arith.addf %368, %369 : vector<8x32xf32>
    %cst_145 = arith.constant dense<0.000000e+00> : vector<8x32xf32>
    %371 = tpu.matmul %367, %6, %cst_145 {dimension_numbers = #tpu.dot_dimension_numbers<[1], [0], [0], [1], [0, 0, 1, 1], [], []>} : vector<8x32xbf16>, vector<32x32xbf16>, vector<8x32xf32> -> vector<8x32xf32>
    %372 = vector.broadcast %12 : vector<1x32xf32> to vector<8x32xf32>
    %373 = arith.addf %371, %372 : vector<8x32xf32>
    %cst_146 = arith.constant dense<0.000000e+00> : vector<8x32xf32>
    %374 = tpu.matmul %367, %8, %cst_146 {dimension_numbers = #tpu.dot_dimension_numbers<[1], [0], [0], [1], [0, 0, 1, 1], [], []>} : vector<8x32xbf16>, vector<32x32xbf16>, vector<8x32xf32> -> vector<8x32xf32>
    %375 = vector.broadcast %14 : vector<1x32xf32> to vector<8x32xf32>
    %376 = arith.addf %374, %375 : vector<8x32xf32>
    %377 = arith.index_cast %c4_i32 : i32 to index
    %c0_147 = arith.constant 0 : index
    %c0_148 = arith.constant 0 : index
    %378 = vector.load %arg2[%377, %c0_147, %c0_148] : memref<8x8x32xf32, #tpu.memory_space<vmem>>, vector<1x8x32xf32>
    %379 = vector.shape_cast %378 : vector<1x8x32xf32> to vector<8x32xf32>
    %380 = arith.addf %379, %370 : vector<8x32xf32>
    %381 = arith.negf %380 : vector<8x32xf32>
    %382 = math.exp %381 : vector<8x32xf32>
    %cst_149 = arith.constant 1.000000e+00 : f32
    %383 = vector.broadcast %cst_149 : f32 to vector<8x32xf32>
    %384 = arith.addf %383, %382 : vector<8x32xf32>
    %385 = arith.divf %383, %384 : vector<8x32xf32>
    %386 = arith.index_cast %c4_i32 : i32 to index
    %c0_150 = arith.constant 0 : index
    %c0_151 = arith.constant 0 : index
    %387 = vector.load %arg3[%386, %c0_150, %c0_151] : memref<8x8x32xf32, #tpu.memory_space<vmem>>, vector<1x8x32xf32>
    %388 = vector.shape_cast %387 : vector<1x8x32xf32> to vector<8x32xf32>
    %389 = arith.addf %388, %373 : vector<8x32xf32>
    %390 = arith.negf %389 : vector<8x32xf32>
    %391 = math.exp %390 : vector<8x32xf32>
    %cst_152 = arith.constant 1.000000e+00 : f32
    %392 = vector.broadcast %cst_152 : f32 to vector<8x32xf32>
    %393 = arith.addf %392, %391 : vector<8x32xf32>
    %394 = arith.divf %392, %393 : vector<8x32xf32>
    %395 = arith.index_cast %c4_i32 : i32 to index
    %c0_153 = arith.constant 0 : index
    %c0_154 = arith.constant 0 : index
    %396 = vector.load %arg4[%395, %c0_153, %c0_154] : memref<8x8x32xf32, #tpu.memory_space<vmem>>, vector<1x8x32xf32>
    %397 = vector.shape_cast %396 : vector<1x8x32xf32> to vector<8x32xf32>
    %398 = arith.mulf %385, %376 : vector<8x32xf32>
    %399 = arith.addf %397, %398 : vector<8x32xf32>
    %400 = math.tanh %399 : vector<8x32xf32>
    %cst_155 = arith.constant 1.000000e+00 : f32
    %401 = vector.broadcast %cst_155 : f32 to vector<8x32xf32>
    %402 = arith.subf %401, %394 : vector<8x32xf32>
    %403 = arith.mulf %402, %400 : vector<8x32xf32>
    %404 = arith.mulf %394, %324 : vector<8x32xf32>
    %405 = arith.addf %403, %404 : vector<8x32xf32>
    %406 = arith.truncf %405 : vector<8x32xf32> to vector<8x32xbf16>
    %407 = arith.truncf %364 : vector<8x32xf32> to vector<8x32xbf16>
    %cst_156 = arith.constant dense<0.000000e+00> : vector<8x32xf32>
    %408 = tpu.matmul %406, %16, %cst_156 {dimension_numbers = #tpu.dot_dimension_numbers<[1], [0], [0], [1], [0, 0, 1, 1], [], []>} : vector<8x32xbf16>, vector<32x32xbf16>, vector<8x32xf32> -> vector<8x32xf32>
    %409 = vector.broadcast %22 : vector<1x32xf32> to vector<8x32xf32>
    %410 = arith.addf %408, %409 : vector<8x32xf32>
    %cst_157 = arith.constant dense<0.000000e+00> : vector<8x32xf32>
    %411 = tpu.matmul %406, %18, %cst_157 {dimension_numbers = #tpu.dot_dimension_numbers<[1], [0], [0], [1], [0, 0, 1, 1], [], []>} : vector<8x32xbf16>, vector<32x32xbf16>, vector<8x32xf32> -> vector<8x32xf32>
    %412 = vector.broadcast %24 : vector<1x32xf32> to vector<8x32xf32>
    %413 = arith.addf %411, %412 : vector<8x32xf32>
    %cst_158 = arith.constant dense<0.000000e+00> : vector<8x32xf32>
    %414 = tpu.matmul %406, %20, %cst_158 {dimension_numbers = #tpu.dot_dimension_numbers<[1], [0], [0], [1], [0, 0, 1, 1], [], []>} : vector<8x32xbf16>, vector<32x32xbf16>, vector<8x32xf32> -> vector<8x32xf32>
    %415 = vector.broadcast %26 : vector<1x32xf32> to vector<8x32xf32>
    %416 = arith.addf %414, %415 : vector<8x32xf32>
    %cst_159 = arith.constant dense<0.000000e+00> : vector<8x32xf32>
    %417 = tpu.matmul %407, %28, %cst_159 {dimension_numbers = #tpu.dot_dimension_numbers<[1], [0], [0], [1], [0, 0, 1, 1], [], []>} : vector<8x32xbf16>, vector<32x32xbf16>, vector<8x32xf32> -> vector<8x32xf32>
    %418 = vector.broadcast %34 : vector<1x32xf32> to vector<8x32xf32>
    %419 = arith.addf %417, %418 : vector<8x32xf32>
    %cst_160 = arith.constant dense<0.000000e+00> : vector<8x32xf32>
    %420 = tpu.matmul %407, %30, %cst_160 {dimension_numbers = #tpu.dot_dimension_numbers<[1], [0], [0], [1], [0, 0, 1, 1], [], []>} : vector<8x32xbf16>, vector<32x32xbf16>, vector<8x32xf32> -> vector<8x32xf32>
    %421 = vector.broadcast %36 : vector<1x32xf32> to vector<8x32xf32>
    %422 = arith.addf %420, %421 : vector<8x32xf32>
    %cst_161 = arith.constant dense<0.000000e+00> : vector<8x32xf32>
    %423 = tpu.matmul %407, %32, %cst_161 {dimension_numbers = #tpu.dot_dimension_numbers<[1], [0], [0], [1], [0, 0, 1, 1], [], []>} : vector<8x32xbf16>, vector<32x32xbf16>, vector<8x32xf32> -> vector<8x32xf32>
    %424 = vector.broadcast %38 : vector<1x32xf32> to vector<8x32xf32>
    %425 = arith.addf %423, %424 : vector<8x32xf32>
    %426 = arith.addf %410, %419 : vector<8x32xf32>
    %427 = arith.negf %426 : vector<8x32xf32>
    %428 = math.exp %427 : vector<8x32xf32>
    %cst_162 = arith.constant 1.000000e+00 : f32
    %429 = vector.broadcast %cst_162 : f32 to vector<8x32xf32>
    %430 = arith.addf %429, %428 : vector<8x32xf32>
    %431 = arith.divf %429, %430 : vector<8x32xf32>
    %432 = arith.addf %413, %422 : vector<8x32xf32>
    %433 = arith.negf %432 : vector<8x32xf32>
    %434 = math.exp %433 : vector<8x32xf32>
    %cst_163 = arith.constant 1.000000e+00 : f32
    %435 = vector.broadcast %cst_163 : f32 to vector<8x32xf32>
    %436 = arith.addf %435, %434 : vector<8x32xf32>
    %437 = arith.divf %435, %436 : vector<8x32xf32>
    %438 = arith.mulf %431, %425 : vector<8x32xf32>
    %439 = arith.addf %416, %438 : vector<8x32xf32>
    %440 = math.tanh %439 : vector<8x32xf32>
    %cst_164 = arith.constant 1.000000e+00 : f32
    %441 = vector.broadcast %cst_164 : f32 to vector<8x32xf32>
    %442 = arith.subf %441, %437 : vector<8x32xf32>
    %443 = arith.mulf %442, %440 : vector<8x32xf32>
    %444 = arith.mulf %437, %364 : vector<8x32xf32>
    %445 = arith.addf %443, %444 : vector<8x32xf32>
    %446 = arith.maximumf %365, %445 : vector<8x32xf32>
    %447 = arith.addf %366, %445 : vector<8x32xf32>
    %c5_i32 = arith.constant 5 : i32
    %448 = arith.truncf %405 : vector<8x32xf32> to vector<8x32xbf16>
    %cst_165 = arith.constant dense<0.000000e+00> : vector<8x32xf32>
    %449 = tpu.matmul %448, %4, %cst_165 {dimension_numbers = #tpu.dot_dimension_numbers<[1], [0], [0], [1], [0, 0, 1, 1], [], []>} : vector<8x32xbf16>, vector<32x32xbf16>, vector<8x32xf32> -> vector<8x32xf32>
    %450 = vector.broadcast %10 : vector<1x32xf32> to vector<8x32xf32>
    %451 = arith.addf %449, %450 : vector<8x32xf32>
    %cst_166 = arith.constant dense<0.000000e+00> : vector<8x32xf32>
    %452 = tpu.matmul %448, %6, %cst_166 {dimension_numbers = #tpu.dot_dimension_numbers<[1], [0], [0], [1], [0, 0, 1, 1], [], []>} : vector<8x32xbf16>, vector<32x32xbf16>, vector<8x32xf32> -> vector<8x32xf32>
    %453 = vector.broadcast %12 : vector<1x32xf32> to vector<8x32xf32>
    %454 = arith.addf %452, %453 : vector<8x32xf32>
    %cst_167 = arith.constant dense<0.000000e+00> : vector<8x32xf32>
    %455 = tpu.matmul %448, %8, %cst_167 {dimension_numbers = #tpu.dot_dimension_numbers<[1], [0], [0], [1], [0, 0, 1, 1], [], []>} : vector<8x32xbf16>, vector<32x32xbf16>, vector<8x32xf32> -> vector<8x32xf32>
    %456 = vector.broadcast %14 : vector<1x32xf32> to vector<8x32xf32>
    %457 = arith.addf %455, %456 : vector<8x32xf32>
    %458 = arith.index_cast %c5_i32 : i32 to index
    %c0_168 = arith.constant 0 : index
    %c0_169 = arith.constant 0 : index
    %459 = vector.load %arg2[%458, %c0_168, %c0_169] : memref<8x8x32xf32, #tpu.memory_space<vmem>>, vector<1x8x32xf32>
    %460 = vector.shape_cast %459 : vector<1x8x32xf32> to vector<8x32xf32>
    %461 = arith.addf %460, %451 : vector<8x32xf32>
    %462 = arith.negf %461 : vector<8x32xf32>
    %463 = math.exp %462 : vector<8x32xf32>
    %cst_170 = arith.constant 1.000000e+00 : f32
    %464 = vector.broadcast %cst_170 : f32 to vector<8x32xf32>
    %465 = arith.addf %464, %463 : vector<8x32xf32>
    %466 = arith.divf %464, %465 : vector<8x32xf32>
    %467 = arith.index_cast %c5_i32 : i32 to index
    %c0_171 = arith.constant 0 : index
    %c0_172 = arith.constant 0 : index
    %468 = vector.load %arg3[%467, %c0_171, %c0_172] : memref<8x8x32xf32, #tpu.memory_space<vmem>>, vector<1x8x32xf32>
    %469 = vector.shape_cast %468 : vector<1x8x32xf32> to vector<8x32xf32>
    %470 = arith.addf %469, %454 : vector<8x32xf32>
    %471 = arith.negf %470 : vector<8x32xf32>
    %472 = math.exp %471 : vector<8x32xf32>
    %cst_173 = arith.constant 1.000000e+00 : f32
    %473 = vector.broadcast %cst_173 : f32 to vector<8x32xf32>
    %474 = arith.addf %473, %472 : vector<8x32xf32>
    %475 = arith.divf %473, %474 : vector<8x32xf32>
    %476 = arith.index_cast %c5_i32 : i32 to index
    %c0_174 = arith.constant 0 : index
    %c0_175 = arith.constant 0 : index
    %477 = vector.load %arg4[%476, %c0_174, %c0_175] : memref<8x8x32xf32, #tpu.memory_space<vmem>>, vector<1x8x32xf32>
    %478 = vector.shape_cast %477 : vector<1x8x32xf32> to vector<8x32xf32>
    %479 = arith.mulf %466, %457 : vector<8x32xf32>
    %480 = arith.addf %478, %479 : vector<8x32xf32>
    %481 = math.tanh %480 : vector<8x32xf32>
    %cst_176 = arith.constant 1.000000e+00 : f32
    %482 = vector.broadcast %cst_176 : f32 to vector<8x32xf32>
    %483 = arith.subf %482, %475 : vector<8x32xf32>
    %484 = arith.mulf %483, %481 : vector<8x32xf32>
    %485 = arith.mulf %475, %405 : vector<8x32xf32>
    %486 = arith.addf %484, %485 : vector<8x32xf32>
    %487 = arith.truncf %486 : vector<8x32xf32> to vector<8x32xbf16>
    %488 = arith.truncf %445 : vector<8x32xf32> to vector<8x32xbf16>
    %cst_177 = arith.constant dense<0.000000e+00> : vector<8x32xf32>
    %489 = tpu.matmul %487, %16, %cst_177 {dimension_numbers = #tpu.dot_dimension_numbers<[1], [0], [0], [1], [0, 0, 1, 1], [], []>} : vector<8x32xbf16>, vector<32x32xbf16>, vector<8x32xf32> -> vector<8x32xf32>
    %490 = vector.broadcast %22 : vector<1x32xf32> to vector<8x32xf32>
    %491 = arith.addf %489, %490 : vector<8x32xf32>
    %cst_178 = arith.constant dense<0.000000e+00> : vector<8x32xf32>
    %492 = tpu.matmul %487, %18, %cst_178 {dimension_numbers = #tpu.dot_dimension_numbers<[1], [0], [0], [1], [0, 0, 1, 1], [], []>} : vector<8x32xbf16>, vector<32x32xbf16>, vector<8x32xf32> -> vector<8x32xf32>
    %493 = vector.broadcast %24 : vector<1x32xf32> to vector<8x32xf32>
    %494 = arith.addf %492, %493 : vector<8x32xf32>
    %cst_179 = arith.constant dense<0.000000e+00> : vector<8x32xf32>
    %495 = tpu.matmul %487, %20, %cst_179 {dimension_numbers = #tpu.dot_dimension_numbers<[1], [0], [0], [1], [0, 0, 1, 1], [], []>} : vector<8x32xbf16>, vector<32x32xbf16>, vector<8x32xf32> -> vector<8x32xf32>
    %496 = vector.broadcast %26 : vector<1x32xf32> to vector<8x32xf32>
    %497 = arith.addf %495, %496 : vector<8x32xf32>
    %cst_180 = arith.constant dense<0.000000e+00> : vector<8x32xf32>
    %498 = tpu.matmul %488, %28, %cst_180 {dimension_numbers = #tpu.dot_dimension_numbers<[1], [0], [0], [1], [0, 0, 1, 1], [], []>} : vector<8x32xbf16>, vector<32x32xbf16>, vector<8x32xf32> -> vector<8x32xf32>
    %499 = vector.broadcast %34 : vector<1x32xf32> to vector<8x32xf32>
    %500 = arith.addf %498, %499 : vector<8x32xf32>
    %cst_181 = arith.constant dense<0.000000e+00> : vector<8x32xf32>
    %501 = tpu.matmul %488, %30, %cst_181 {dimension_numbers = #tpu.dot_dimension_numbers<[1], [0], [0], [1], [0, 0, 1, 1], [], []>} : vector<8x32xbf16>, vector<32x32xbf16>, vector<8x32xf32> -> vector<8x32xf32>
    %502 = vector.broadcast %36 : vector<1x32xf32> to vector<8x32xf32>
    %503 = arith.addf %501, %502 : vector<8x32xf32>
    %cst_182 = arith.constant dense<0.000000e+00> : vector<8x32xf32>
    %504 = tpu.matmul %488, %32, %cst_182 {dimension_numbers = #tpu.dot_dimension_numbers<[1], [0], [0], [1], [0, 0, 1, 1], [], []>} : vector<8x32xbf16>, vector<32x32xbf16>, vector<8x32xf32> -> vector<8x32xf32>
    %505 = vector.broadcast %38 : vector<1x32xf32> to vector<8x32xf32>
    %506 = arith.addf %504, %505 : vector<8x32xf32>
    %507 = arith.addf %491, %500 : vector<8x32xf32>
    %508 = arith.negf %507 : vector<8x32xf32>
    %509 = math.exp %508 : vector<8x32xf32>
    %cst_183 = arith.constant 1.000000e+00 : f32
    %510 = vector.broadcast %cst_183 : f32 to vector<8x32xf32>
    %511 = arith.addf %510, %509 : vector<8x32xf32>
    %512 = arith.divf %510, %511 : vector<8x32xf32>
    %513 = arith.addf %494, %503 : vector<8x32xf32>
    %514 = arith.negf %513 : vector<8x32xf32>
    %515 = math.exp %514 : vector<8x32xf32>
    %cst_184 = arith.constant 1.000000e+00 : f32
    %516 = vector.broadcast %cst_184 : f32 to vector<8x32xf32>
    %517 = arith.addf %516, %515 : vector<8x32xf32>
    %518 = arith.divf %516, %517 : vector<8x32xf32>
    %519 = arith.mulf %512, %506 : vector<8x32xf32>
    %520 = arith.addf %497, %519 : vector<8x32xf32>
    %521 = math.tanh %520 : vector<8x32xf32>
    %cst_185 = arith.constant 1.000000e+00 : f32
    %522 = vector.broadcast %cst_185 : f32 to vector<8x32xf32>
    %523 = arith.subf %522, %518 : vector<8x32xf32>
    %524 = arith.mulf %523, %521 : vector<8x32xf32>
    %525 = arith.mulf %518, %445 : vector<8x32xf32>
    %526 = arith.addf %524, %525 : vector<8x32xf32>
    %527 = arith.maximumf %446, %526 : vector<8x32xf32>
    %528 = arith.addf %447, %526 : vector<8x32xf32>
    %c6_i32 = arith.constant 6 : i32
    %529 = arith.truncf %486 : vector<8x32xf32> to vector<8x32xbf16>
    %cst_186 = arith.constant dense<0.000000e+00> : vector<8x32xf32>
    %530 = tpu.matmul %529, %4, %cst_186 {dimension_numbers = #tpu.dot_dimension_numbers<[1], [0], [0], [1], [0, 0, 1, 1], [], []>} : vector<8x32xbf16>, vector<32x32xbf16>, vector<8x32xf32> -> vector<8x32xf32>
    %531 = vector.broadcast %10 : vector<1x32xf32> to vector<8x32xf32>
    %532 = arith.addf %530, %531 : vector<8x32xf32>
    %cst_187 = arith.constant dense<0.000000e+00> : vector<8x32xf32>
    %533 = tpu.matmul %529, %6, %cst_187 {dimension_numbers = #tpu.dot_dimension_numbers<[1], [0], [0], [1], [0, 0, 1, 1], [], []>} : vector<8x32xbf16>, vector<32x32xbf16>, vector<8x32xf32> -> vector<8x32xf32>
    %534 = vector.broadcast %12 : vector<1x32xf32> to vector<8x32xf32>
    %535 = arith.addf %533, %534 : vector<8x32xf32>
    %cst_188 = arith.constant dense<0.000000e+00> : vector<8x32xf32>
    %536 = tpu.matmul %529, %8, %cst_188 {dimension_numbers = #tpu.dot_dimension_numbers<[1], [0], [0], [1], [0, 0, 1, 1], [], []>} : vector<8x32xbf16>, vector<32x32xbf16>, vector<8x32xf32> -> vector<8x32xf32>
    %537 = vector.broadcast %14 : vector<1x32xf32> to vector<8x32xf32>
    %538 = arith.addf %536, %537 : vector<8x32xf32>
    %539 = arith.index_cast %c6_i32 : i32 to index
    %c0_189 = arith.constant 0 : index
    %c0_190 = arith.constant 0 : index
    %540 = vector.load %arg2[%539, %c0_189, %c0_190] : memref<8x8x32xf32, #tpu.memory_space<vmem>>, vector<1x8x32xf32>
    %541 = vector.shape_cast %540 : vector<1x8x32xf32> to vector<8x32xf32>
    %542 = arith.addf %541, %532 : vector<8x32xf32>
    %543 = arith.negf %542 : vector<8x32xf32>
    %544 = math.exp %543 : vector<8x32xf32>
    %cst_191 = arith.constant 1.000000e+00 : f32
    %545 = vector.broadcast %cst_191 : f32 to vector<8x32xf32>
    %546 = arith.addf %545, %544 : vector<8x32xf32>
    %547 = arith.divf %545, %546 : vector<8x32xf32>
    %548 = arith.index_cast %c6_i32 : i32 to index
    %c0_192 = arith.constant 0 : index
    %c0_193 = arith.constant 0 : index
    %549 = vector.load %arg3[%548, %c0_192, %c0_193] : memref<8x8x32xf32, #tpu.memory_space<vmem>>, vector<1x8x32xf32>
    %550 = vector.shape_cast %549 : vector<1x8x32xf32> to vector<8x32xf32>
    %551 = arith.addf %550, %535 : vector<8x32xf32>
    %552 = arith.negf %551 : vector<8x32xf32>
    %553 = math.exp %552 : vector<8x32xf32>
    %cst_194 = arith.constant 1.000000e+00 : f32
    %554 = vector.broadcast %cst_194 : f32 to vector<8x32xf32>
    %555 = arith.addf %554, %553 : vector<8x32xf32>
    %556 = arith.divf %554, %555 : vector<8x32xf32>
    %557 = arith.index_cast %c6_i32 : i32 to index
    %c0_195 = arith.constant 0 : index
    %c0_196 = arith.constant 0 : index
    %558 = vector.load %arg4[%557, %c0_195, %c0_196] : memref<8x8x32xf32, #tpu.memory_space<vmem>>, vector<1x8x32xf32>
    %559 = vector.shape_cast %558 : vector<1x8x32xf32> to vector<8x32xf32>
    %560 = arith.mulf %547, %538 : vector<8x32xf32>
    %561 = arith.addf %559, %560 : vector<8x32xf32>
    %562 = math.tanh %561 : vector<8x32xf32>
    %cst_197 = arith.constant 1.000000e+00 : f32
    %563 = vector.broadcast %cst_197 : f32 to vector<8x32xf32>
    %564 = arith.subf %563, %556 : vector<8x32xf32>
    %565 = arith.mulf %564, %562 : vector<8x32xf32>
    %566 = arith.mulf %556, %486 : vector<8x32xf32>
    %567 = arith.addf %565, %566 : vector<8x32xf32>
    %568 = arith.truncf %567 : vector<8x32xf32> to vector<8x32xbf16>
    %569 = arith.truncf %526 : vector<8x32xf32> to vector<8x32xbf16>
    %cst_198 = arith.constant dense<0.000000e+00> : vector<8x32xf32>
    %570 = tpu.matmul %568, %16, %cst_198 {dimension_numbers = #tpu.dot_dimension_numbers<[1], [0], [0], [1], [0, 0, 1, 1], [], []>} : vector<8x32xbf16>, vector<32x32xbf16>, vector<8x32xf32> -> vector<8x32xf32>
    %571 = vector.broadcast %22 : vector<1x32xf32> to vector<8x32xf32>
    %572 = arith.addf %570, %571 : vector<8x32xf32>
    %cst_199 = arith.constant dense<0.000000e+00> : vector<8x32xf32>
    %573 = tpu.matmul %568, %18, %cst_199 {dimension_numbers = #tpu.dot_dimension_numbers<[1], [0], [0], [1], [0, 0, 1, 1], [], []>} : vector<8x32xbf16>, vector<32x32xbf16>, vector<8x32xf32> -> vector<8x32xf32>
    %574 = vector.broadcast %24 : vector<1x32xf32> to vector<8x32xf32>
    %575 = arith.addf %573, %574 : vector<8x32xf32>
    %cst_200 = arith.constant dense<0.000000e+00> : vector<8x32xf32>
    %576 = tpu.matmul %568, %20, %cst_200 {dimension_numbers = #tpu.dot_dimension_numbers<[1], [0], [0], [1], [0, 0, 1, 1], [], []>} : vector<8x32xbf16>, vector<32x32xbf16>, vector<8x32xf32> -> vector<8x32xf32>
    %577 = vector.broadcast %26 : vector<1x32xf32> to vector<8x32xf32>
    %578 = arith.addf %576, %577 : vector<8x32xf32>
    %cst_201 = arith.constant dense<0.000000e+00> : vector<8x32xf32>
    %579 = tpu.matmul %569, %28, %cst_201 {dimension_numbers = #tpu.dot_dimension_numbers<[1], [0], [0], [1], [0, 0, 1, 1], [], []>} : vector<8x32xbf16>, vector<32x32xbf16>, vector<8x32xf32> -> vector<8x32xf32>
    %580 = vector.broadcast %34 : vector<1x32xf32> to vector<8x32xf32>
    %581 = arith.addf %579, %580 : vector<8x32xf32>
    %cst_202 = arith.constant dense<0.000000e+00> : vector<8x32xf32>
    %582 = tpu.matmul %569, %30, %cst_202 {dimension_numbers = #tpu.dot_dimension_numbers<[1], [0], [0], [1], [0, 0, 1, 1], [], []>} : vector<8x32xbf16>, vector<32x32xbf16>, vector<8x32xf32> -> vector<8x32xf32>
    %583 = vector.broadcast %36 : vector<1x32xf32> to vector<8x32xf32>
    %584 = arith.addf %582, %583 : vector<8x32xf32>
    %cst_203 = arith.constant dense<0.000000e+00> : vector<8x32xf32>
    %585 = tpu.matmul %569, %32, %cst_203 {dimension_numbers = #tpu.dot_dimension_numbers<[1], [0], [0], [1], [0, 0, 1, 1], [], []>} : vector<8x32xbf16>, vector<32x32xbf16>, vector<8x32xf32> -> vector<8x32xf32>
    %586 = vector.broadcast %38 : vector<1x32xf32> to vector<8x32xf32>
    %587 = arith.addf %585, %586 : vector<8x32xf32>
    %588 = arith.addf %572, %581 : vector<8x32xf32>
    %589 = arith.negf %588 : vector<8x32xf32>
    %590 = math.exp %589 : vector<8x32xf32>
    %cst_204 = arith.constant 1.000000e+00 : f32
    %591 = vector.broadcast %cst_204 : f32 to vector<8x32xf32>
    %592 = arith.addf %591, %590 : vector<8x32xf32>
    %593 = arith.divf %591, %592 : vector<8x32xf32>
    %594 = arith.addf %575, %584 : vector<8x32xf32>
    %595 = arith.negf %594 : vector<8x32xf32>
    %596 = math.exp %595 : vector<8x32xf32>
    %cst_205 = arith.constant 1.000000e+00 : f32
    %597 = vector.broadcast %cst_205 : f32 to vector<8x32xf32>
    %598 = arith.addf %597, %596 : vector<8x32xf32>
    %599 = arith.divf %597, %598 : vector<8x32xf32>
    %600 = arith.mulf %593, %587 : vector<8x32xf32>
    %601 = arith.addf %578, %600 : vector<8x32xf32>
    %602 = math.tanh %601 : vector<8x32xf32>
    %cst_206 = arith.constant 1.000000e+00 : f32
    %603 = vector.broadcast %cst_206 : f32 to vector<8x32xf32>
    %604 = arith.subf %603, %599 : vector<8x32xf32>
    %605 = arith.mulf %604, %602 : vector<8x32xf32>
    %606 = arith.mulf %599, %526 : vector<8x32xf32>
    %607 = arith.addf %605, %606 : vector<8x32xf32>
    %608 = arith.maximumf %527, %607 : vector<8x32xf32>
    %609 = arith.addf %528, %607 : vector<8x32xf32>
    %c7_i32 = arith.constant 7 : i32
    %610 = arith.truncf %567 : vector<8x32xf32> to vector<8x32xbf16>
    %cst_207 = arith.constant dense<0.000000e+00> : vector<8x32xf32>
    %611 = tpu.matmul %610, %4, %cst_207 {dimension_numbers = #tpu.dot_dimension_numbers<[1], [0], [0], [1], [0, 0, 1, 1], [], []>} : vector<8x32xbf16>, vector<32x32xbf16>, vector<8x32xf32> -> vector<8x32xf32>
    %612 = vector.broadcast %10 : vector<1x32xf32> to vector<8x32xf32>
    %613 = arith.addf %611, %612 : vector<8x32xf32>
    %cst_208 = arith.constant dense<0.000000e+00> : vector<8x32xf32>
    %614 = tpu.matmul %610, %6, %cst_208 {dimension_numbers = #tpu.dot_dimension_numbers<[1], [0], [0], [1], [0, 0, 1, 1], [], []>} : vector<8x32xbf16>, vector<32x32xbf16>, vector<8x32xf32> -> vector<8x32xf32>
    %615 = vector.broadcast %12 : vector<1x32xf32> to vector<8x32xf32>
    %616 = arith.addf %614, %615 : vector<8x32xf32>
    %cst_209 = arith.constant dense<0.000000e+00> : vector<8x32xf32>
    %617 = tpu.matmul %610, %8, %cst_209 {dimension_numbers = #tpu.dot_dimension_numbers<[1], [0], [0], [1], [0, 0, 1, 1], [], []>} : vector<8x32xbf16>, vector<32x32xbf16>, vector<8x32xf32> -> vector<8x32xf32>
    %618 = vector.broadcast %14 : vector<1x32xf32> to vector<8x32xf32>
    %619 = arith.addf %617, %618 : vector<8x32xf32>
    %620 = arith.index_cast %c7_i32 : i32 to index
    %c0_210 = arith.constant 0 : index
    %c0_211 = arith.constant 0 : index
    %621 = vector.load %arg2[%620, %c0_210, %c0_211] : memref<8x8x32xf32, #tpu.memory_space<vmem>>, vector<1x8x32xf32>
    %622 = vector.shape_cast %621 : vector<1x8x32xf32> to vector<8x32xf32>
    %623 = arith.addf %622, %613 : vector<8x32xf32>
    %624 = arith.negf %623 : vector<8x32xf32>
    %625 = math.exp %624 : vector<8x32xf32>
    %cst_212 = arith.constant 1.000000e+00 : f32
    %626 = vector.broadcast %cst_212 : f32 to vector<8x32xf32>
    %627 = arith.addf %626, %625 : vector<8x32xf32>
    %628 = arith.divf %626, %627 : vector<8x32xf32>
    %629 = arith.index_cast %c7_i32 : i32 to index
    %c0_213 = arith.constant 0 : index
    %c0_214 = arith.constant 0 : index
    %630 = vector.load %arg3[%629, %c0_213, %c0_214] : memref<8x8x32xf32, #tpu.memory_space<vmem>>, vector<1x8x32xf32>
    %631 = vector.shape_cast %630 : vector<1x8x32xf32> to vector<8x32xf32>
    %632 = arith.addf %631, %616 : vector<8x32xf32>
    %633 = arith.negf %632 : vector<8x32xf32>
    %634 = math.exp %633 : vector<8x32xf32>
    %cst_215 = arith.constant 1.000000e+00 : f32
    %635 = vector.broadcast %cst_215 : f32 to vector<8x32xf32>
    %636 = arith.addf %635, %634 : vector<8x32xf32>
    %637 = arith.divf %635, %636 : vector<8x32xf32>
    %638 = arith.index_cast %c7_i32 : i32 to index
    %c0_216 = arith.constant 0 : index
    %c0_217 = arith.constant 0 : index
    %639 = vector.load %arg4[%638, %c0_216, %c0_217] : memref<8x8x32xf32, #tpu.memory_space<vmem>>, vector<1x8x32xf32>
    %640 = vector.shape_cast %639 : vector<1x8x32xf32> to vector<8x32xf32>
    %641 = arith.mulf %628, %619 : vector<8x32xf32>
    %642 = arith.addf %640, %641 : vector<8x32xf32>
    %643 = math.tanh %642 : vector<8x32xf32>
    %cst_218 = arith.constant 1.000000e+00 : f32
    %644 = vector.broadcast %cst_218 : f32 to vector<8x32xf32>
    %645 = arith.subf %644, %637 : vector<8x32xf32>
    %646 = arith.mulf %645, %643 : vector<8x32xf32>
    %647 = arith.mulf %637, %567 : vector<8x32xf32>
    %648 = arith.addf %646, %647 : vector<8x32xf32>
    %649 = arith.truncf %648 : vector<8x32xf32> to vector<8x32xbf16>
    %650 = arith.truncf %607 : vector<8x32xf32> to vector<8x32xbf16>
    %cst_219 = arith.constant dense<0.000000e+00> : vector<8x32xf32>
    %651 = tpu.matmul %649, %16, %cst_219 {dimension_numbers = #tpu.dot_dimension_numbers<[1], [0], [0], [1], [0, 0, 1, 1], [], []>} : vector<8x32xbf16>, vector<32x32xbf16>, vector<8x32xf32> -> vector<8x32xf32>
    %652 = vector.broadcast %22 : vector<1x32xf32> to vector<8x32xf32>
    %653 = arith.addf %651, %652 : vector<8x32xf32>
    %cst_220 = arith.constant dense<0.000000e+00> : vector<8x32xf32>
    %654 = tpu.matmul %649, %18, %cst_220 {dimension_numbers = #tpu.dot_dimension_numbers<[1], [0], [0], [1], [0, 0, 1, 1], [], []>} : vector<8x32xbf16>, vector<32x32xbf16>, vector<8x32xf32> -> vector<8x32xf32>
    %655 = vector.broadcast %24 : vector<1x32xf32> to vector<8x32xf32>
    %656 = arith.addf %654, %655 : vector<8x32xf32>
    %cst_221 = arith.constant dense<0.000000e+00> : vector<8x32xf32>
    %657 = tpu.matmul %649, %20, %cst_221 {dimension_numbers = #tpu.dot_dimension_numbers<[1], [0], [0], [1], [0, 0, 1, 1], [], []>} : vector<8x32xbf16>, vector<32x32xbf16>, vector<8x32xf32> -> vector<8x32xf32>
    %658 = vector.broadcast %26 : vector<1x32xf32> to vector<8x32xf32>
    %659 = arith.addf %657, %658 : vector<8x32xf32>
    %cst_222 = arith.constant dense<0.000000e+00> : vector<8x32xf32>
    %660 = tpu.matmul %650, %28, %cst_222 {dimension_numbers = #tpu.dot_dimension_numbers<[1], [0], [0], [1], [0, 0, 1, 1], [], []>} : vector<8x32xbf16>, vector<32x32xbf16>, vector<8x32xf32> -> vector<8x32xf32>
    %661 = vector.broadcast %34 : vector<1x32xf32> to vector<8x32xf32>
    %662 = arith.addf %660, %661 : vector<8x32xf32>
    %cst_223 = arith.constant dense<0.000000e+00> : vector<8x32xf32>
    %663 = tpu.matmul %650, %30, %cst_223 {dimension_numbers = #tpu.dot_dimension_numbers<[1], [0], [0], [1], [0, 0, 1, 1], [], []>} : vector<8x32xbf16>, vector<32x32xbf16>, vector<8x32xf32> -> vector<8x32xf32>
    %664 = vector.broadcast %36 : vector<1x32xf32> to vector<8x32xf32>
    %665 = arith.addf %663, %664 : vector<8x32xf32>
    %cst_224 = arith.constant dense<0.000000e+00> : vector<8x32xf32>
    %666 = tpu.matmul %650, %32, %cst_224 {dimension_numbers = #tpu.dot_dimension_numbers<[1], [0], [0], [1], [0, 0, 1, 1], [], []>} : vector<8x32xbf16>, vector<32x32xbf16>, vector<8x32xf32> -> vector<8x32xf32>
    %667 = vector.broadcast %38 : vector<1x32xf32> to vector<8x32xf32>
    %668 = arith.addf %666, %667 : vector<8x32xf32>
    %669 = arith.addf %653, %662 : vector<8x32xf32>
    %670 = arith.negf %669 : vector<8x32xf32>
    %671 = math.exp %670 : vector<8x32xf32>
    %cst_225 = arith.constant 1.000000e+00 : f32
    %672 = vector.broadcast %cst_225 : f32 to vector<8x32xf32>
    %673 = arith.addf %672, %671 : vector<8x32xf32>
    %674 = arith.divf %672, %673 : vector<8x32xf32>
    %675 = arith.addf %656, %665 : vector<8x32xf32>
    %676 = arith.negf %675 : vector<8x32xf32>
    %677 = math.exp %676 : vector<8x32xf32>
    %cst_226 = arith.constant 1.000000e+00 : f32
    %678 = vector.broadcast %cst_226 : f32 to vector<8x32xf32>
    %679 = arith.addf %678, %677 : vector<8x32xf32>
    %680 = arith.divf %678, %679 : vector<8x32xf32>
    %681 = arith.mulf %674, %668 : vector<8x32xf32>
    %682 = arith.addf %659, %681 : vector<8x32xf32>
    %683 = math.tanh %682 : vector<8x32xf32>
    %cst_227 = arith.constant 1.000000e+00 : f32
    %684 = vector.broadcast %cst_227 : f32 to vector<8x32xf32>
    %685 = arith.subf %684, %680 : vector<8x32xf32>
    %686 = arith.mulf %685, %683 : vector<8x32xf32>
    %687 = arith.mulf %680, %607 : vector<8x32xf32>
    %688 = arith.addf %686, %687 : vector<8x32xf32>
    %689 = arith.maximumf %608, %688 : vector<8x32xf32>
    %690 = arith.addf %609, %688 : vector<8x32xf32>
    %c8_i32 = arith.constant 8 : i32
    %c0_228 = arith.constant 0 : index
    %c0_229 = arith.constant 0 : index
    %691 = vector.load %arg14[%c0_228, %c0_229] : memref<8x32xf32, #tpu.memory_space<vmem>>, vector<8x32xf32>
    tpu.vector_store %arg14[%c0_228, %c0_229], %648 {strides = array<i32>} : memref<8x32xf32, #tpu.memory_space<vmem>>, vector<8x32xf32>,
    %c0_230 = arith.constant 0 : index
    %c0_231 = arith.constant 0 : index
    %692 = vector.load %arg15[%c0_230, %c0_231] : memref<8x32xf32, #tpu.memory_space<vmem>>, vector<8x32xf32>
    tpu.vector_store %arg15[%c0_230, %c0_231], %688 {strides = array<i32>} : memref<8x32xf32, #tpu.memory_space<vmem>>, vector<8x32xf32>,
    %c0_232 = arith.constant 0 : index
    %c0_233 = arith.constant 0 : index
    %693 = vector.load %arg16[%c0_232, %c0_233] : memref<8x32xf32, #tpu.memory_space<vmem>>, vector<8x32xf32>
    tpu.vector_store %arg16[%c0_232, %c0_233], %689 {strides = array<i32>} : memref<8x32xf32, #tpu.memory_space<vmem>>, vector<8x32xf32>,
    %c0_234 = arith.constant 0 : index
    %c0_235 = arith.constant 0 : index
    %694 = vector.load %arg17[%c0_234, %c0_235] : memref<8x32xf32, #tpu.memory_space<vmem>>, vector<8x32xf32>
    tpu.vector_store %arg17[%c0_234, %c0_235], %690 {strides = array<i32>} : memref<8x32xf32, #tpu.memory_space<vmem>>, vector<8x32xf32>,
    %c0_i32_236 = arith.constant 0 : i32
    %695 = arith.cmpi eq, %arg1, %c0_i32_236 : i32
    %696 = arith.extui %695 : i1 to i32
    %c0_i32_237 = arith.constant 0 : i32
    %697 = arith.cmpi ne, %696, %c0_i32_237 : i32
    scf.if %697 {
      %cst_238 = arith.constant 1.250000e-01 : f32
      %698 = vector.broadcast %cst_238 : f32 to vector<8x32xf32>
      %699 = arith.mulf %690, %698 : vector<8x32xf32>
      %700 = arith.truncf %689 : vector<8x32xf32> to vector<8x32xbf16>
      %c0_239 = arith.constant 0 : index
      %c0_240 = arith.constant 0 : index
      %c0_241 = arith.constant 0 : index
      %701 = vector.load %arg11[%c0_239, %c0_240, %c0_241] : memref<2x32x1xbf16, #tpu.memory_space<vmem>>, vector<1x32x1xbf16>
      %702 = vector.shape_cast %701 : vector<1x32x1xbf16> to vector<32x1xbf16>
      %cst_242 = arith.constant dense<0.000000e+00> : vector<8x1xf32>
      %703 = tpu.matmul %700, %702, %cst_242 {dimension_numbers = #tpu.dot_dimension_numbers<[1], [0], [0], [1], [0, 0, 1, 1], [], []>} : vector<8x32xbf16>, vector<32x1xbf16>, vector<8x1xf32> -> vector<8x1xf32>
      %704 = arith.truncf %699 : vector<8x32xf32> to vector<8x32xbf16>
      %c1_243 = arith.constant 1 : index
      %c0_244 = arith.constant 0 : index
      %c0_245 = arith.constant 0 : index
      %705 = vector.load %arg11[%c1_243, %c0_244, %c0_245] : memref<2x32x1xbf16, #tpu.memory_space<vmem>>, vector<1x32x1xbf16>
      %706 = vector.shape_cast %705 : vector<1x32x1xbf16> to vector<32x1xbf16>
      %cst_246 = arith.constant dense<0.000000e+00> : vector<8x1xf32>
      %707 = tpu.matmul %704, %706, %cst_246 {dimension_numbers = #tpu.dot_dimension_numbers<[1], [0], [0], [1], [0, 0, 1, 1], [], []>} : vector<8x32xbf16>, vector<32x1xbf16>, vector<8x1xf32> -> vector<8x1xf32>
      %708 = arith.addf %703, %707 : vector<8x1xf32>
      %c0_247 = arith.constant 0 : index
      %c0_248 = arith.constant 0 : index
      %709 = vector.load %arg12[%c0_247, %c0_248] : memref<1x1xf32, #tpu.memory_space<vmem>>, vector<1x1xf32>
      %710 = vector.broadcast %709 : vector<1x1xf32> to vector<8x1xf32>
      %711 = arith.addf %708, %710 : vector<8x1xf32>
      %712 = arith.negf %711 : vector<8x1xf32>
      %713 = math.exp %712 : vector<8x1xf32>
      %cst_249 = arith.constant 1.000000e+00 : f32
      %714 = vector.broadcast %cst_249 : f32 to vector<8x1xf32>
      %715 = arith.addf %714, %713 : vector<8x1xf32>
      %716 = arith.divf %714, %715 : vector<8x1xf32>
      %c0_250 = arith.constant 0 : index
      %c0_251 = arith.constant 0 : index
      %717 = vector.load %arg13[%c0_250, %c0_251] : memref<8x1xf32, #tpu.memory_space<vmem>>, vector<8x1xf32>
      tpu.vector_store %arg13[%c0_250, %c0_251], %716 {strides = array<i32>} : memref<8x1xf32, #tpu.memory_space<vmem>>, vector<8x1xf32>,
    } else {
    }
    return
  }
  func.func @transform_0(%arg0: i32, %arg1: i32) -> (i32, i32, i32) {
    %c0_i32 = arith.constant 0 : i32
    %c0_i32_0 = arith.constant 0 : i32
    return %arg1, %arg0, %c0_i32 : i32, i32, i32
  }
  func.func @transform_1(%arg0: i32, %arg1: i32) -> (i32, i32, i32) {
    %c0_i32 = arith.constant 0 : i32
    %c0_i32_0 = arith.constant 0 : i32
    return %arg1, %arg0, %c0_i32 : i32, i32, i32
  }
  func.func @transform_2(%arg0: i32, %arg1: i32) -> (i32, i32, i32) {
    %c0_i32 = arith.constant 0 : i32
    %c0_i32_0 = arith.constant 0 : i32
    return %arg1, %arg0, %c0_i32 : i32, i32, i32
  }
  func.func @transform_3(%arg0: i32, %arg1: i32) -> (i32, i32, i32) {
    %c0_i32 = arith.constant 0 : i32
    %c0_i32_0 = arith.constant 0 : i32
    %c0_i32_1 = arith.constant 0 : i32
    %c0_i32_2 = arith.constant 0 : i32
    return %c0_i32, %c0_i32_0, %c0_i32_1 : i32, i32, i32
  }
  func.func @transform_4(%arg0: i32, %arg1: i32) -> (i32, i32, i32) {
    %c0_i32 = arith.constant 0 : i32
    %c0_i32_0 = arith.constant 0 : i32
    %c0_i32_1 = arith.constant 0 : i32
    %c0_i32_2 = arith.constant 0 : i32
    return %c0_i32, %c0_i32_0, %c0_i32_1 : i32, i32, i32
  }
  func.func @transform_5(%arg0: i32, %arg1: i32) -> (i32, i32, i32) {
    %c0_i32 = arith.constant 0 : i32
    %c0_i32_0 = arith.constant 0 : i32
    %c0_i32_1 = arith.constant 0 : i32
    %c0_i32_2 = arith.constant 0 : i32
    return %c0_i32, %c0_i32_0, %c0_i32_1 : i32, i32, i32
  }
  func.func @transform_6(%arg0: i32, %arg1: i32) -> (i32, i32, i32) {
    %c0_i32 = arith.constant 0 : i32
    %c0_i32_0 = arith.constant 0 : i32
    %c0_i32_1 = arith.constant 0 : i32
    %c0_i32_2 = arith.constant 0 : i32
    return %c0_i32, %c0_i32_0, %c0_i32_1 : i32, i32, i32
  }
  func.func @transform_7(%arg0: i32, %arg1: i32) -> (i32, i32, i32) {
    %c0_i32 = arith.constant 0 : i32
    %c0_i32_0 = arith.constant 0 : i32
    %c0_i32_1 = arith.constant 0 : i32
    %c0_i32_2 = arith.constant 0 : i32
    return %c0_i32, %c0_i32_0, %c0_i32_1 : i32, i32, i32
  }
  func.func @transform_8(%arg0: i32, %arg1: i32) -> (i32, i32, i32) {
    %c0_i32 = arith.constant 0 : i32
    %c0_i32_0 = arith.constant 0 : i32
    %c0_i32_1 = arith.constant 0 : i32
    %c0_i32_2 = arith.constant 0 : i32
    return %c0_i32, %c0_i32_0, %c0_i32_1 : i32, i32, i32
  }
  func.func @transform_9(%arg0: i32, %arg1: i32) -> (i32, i32, i32) {
    %c0_i32 = arith.constant 0 : i32
    %c0_i32_0 = arith.constant 0 : i32
    %c0_i32_1 = arith.constant 0 : i32
    %c0_i32_2 = arith.constant 0 : i32
    return %c0_i32, %c0_i32_0, %c0_i32_1 : i32, i32, i32
  }
  func.func @transform_10(%arg0: i32, %arg1: i32) -> (i32, i32) {
    %c0_i32 = arith.constant 0 : i32
    %c0_i32_0 = arith.constant 0 : i32
    %c0_i32_1 = arith.constant 0 : i32
    return %c0_i32, %c0_i32_0 : i32, i32
  }
  func.func @transform_11(%arg0: i32, %arg1: i32) -> (i32, i32) {
    %c0_i32 = arith.constant 0 : i32
    %c0_i32_0 = arith.constant 0 : i32
    return %arg0, %c0_i32 : i32, i32
  }
}

</mosaic_0001>

<llo_original>
// kernel: tpu_custom_call.1
$region0: #{tpu_custom_call.1}
  #allocation0 [shape = 'u32[]', space=smem, size = 0x4, offset = 0x4, fixed_abs, tag = 'smem constant byte address 0x4 - core index']
  #allocation1 [shape = 'u32[144,128]{1,0:T(1,128)}', space=vmem, size = 0x12000, scoped, tag = 'internal scratch']
  #allocation2 [shape = 'f32[8,32]{1,0:T(8,128)}', space=vmem, size = 0x1000, scoped, tag = 'scratch operand']
  #allocation3 [shape = 'f32[8,32]{1,0:T(8,128)}', space=vmem, size = 0x1000, scoped, tag = 'scratch operand']
  #allocation4 [shape = 'f32[8,32]{1,0:T(8,128)}', space=vmem, size = 0x1000, scoped, tag = 'scratch operand']
  #allocation5 [shape = 'f32[8,32]{1,0:T(8,128)}', space=vmem, size = 0x1000, scoped, tag = 'scratch operand']
  #allocation6 [shape = 'f32[1,1]{1,0:T(1,128)S(1)}', space=vmem, size = 0x200, scoped, tag = 'scoped memory for tpu_custom_call.1']
  %s0 = inlined_call_operand.hbm [shape: f32[8,8,32], index: 0, kind: input, shape index: {}]
  %s1 = inlined_call_operand.hbm [shape: f32[8,8,32], index: 1, kind: input, shape index: {}]
  %s2 = inlined_call_operand.hbm [shape: f32[8,8,32], index: 2, kind: input, shape index: {}]
  %s3 = inlined_call_operand.vmem [shape: bf16[3,32,32], index: 3, kind: input, shape index: {}]
  %s4 = inlined_call_operand.vmem [shape: f32[3,1,32], index: 4, kind: input, shape index: {}]
  %s5 = inlined_call_operand.hbm [shape: bf16[3,32,32], index: 5, kind: input, shape index: {}]
  %s6 = inlined_call_operand.vmem [shape: f32[3,1,32], index: 6, kind: input, shape index: {}]
  %s7 = inlined_call_operand.hbm [shape: bf16[3,32,32], index: 7, kind: input, shape index: {}]
  %s8 = inlined_call_operand.vmem [shape: f32[3,1,32], index: 8, kind: input, shape index: {}]
  %s9 = inlined_call_operand.vmem [shape: bf16[2,32,1], index: 9, kind: input, shape index: {}]
  %s10 = inlined_call_operand.<no memory space> [shape: f32[1,1], index: 10, kind: input, shape index: {}]
  %s11 = inlined_call_operand.vmem [shape: f32[8,1], index: 11, kind: output, shape index: {}]
  %s12 = sld [smem:[#allocation0]]
  $region82: #{tpu_custom_call.1} parent=0
    _
  %s14 = ssub.s32 1, %s12
  %s15 = scalar_select 0, %s14, %s12
  %v16 = vstv %s10
  %17 = vst [vmem:[#allocation6] sm:$0x1] %v16
  $region1: #{tpu_custom_call.1} parent=0
    #allocation7 [shape = 'u8[32768]{0}', space=vmem, size = 0x8000, scoped, tag = 'input window, operand 0, single buffered']
    #allocation8 [shape = 's32[1]{0}', space=sflag, size = 0x4, scoped, tag = 'scoped memory for tpu_custom_call.1']
    #allocation9 [shape = 'u8[32768]{0}', space=vmem, size = 0x8000, scoped, tag = 'input window, operand 1, single buffered']
    #allocation10 [shape = 's32[1]{0}', space=sflag, size = 0x4, scoped, tag = 'scoped memory for tpu_custom_call.1']
    #allocation11 [shape = 'u8[32768]{0}', space=vmem, size = 0x8000, scoped, tag = 'input window, operand 2, single buffered']
    #allocation12 [shape = 'u8[24576]{0}', space=vmem, size = 0x6000, scoped, tag = 'input window, operand 5, single buffered']
    #allocation13 [shape = 's32[1]{0}', space=sflag, size = 0x4, scoped, tag = 'scoped memory for tpu_custom_call.1']
    #allocation14 [shape = 'u8[24576]{0}', space=vmem, size = 0x6000, scoped, tag = 'input window, operand 7, single buffered']
    %18 = vsyncpa [#allocation8], 0
    %19 = vsyncpa [#allocation10], 0
    %20 = vsyncpa [#allocation13], 0
    // Predicated region
    $region2: #{tpu_custom_call.1} parent=1 // pred_check
      _
    $region3: #{tpu_custom_call.1} parent=1 // pred_check_branch
      %22 = sbr.rel (0) target = $region5
    $region4: #{tpu_custom_call.1} parent=1 // pred_region
      %s24 = ssub.s32 1024, 1024
      %25 = vsyncadd [#allocation8], %s24
      %s26 = sshll.u32 [#allocation7], 4
      %s27 = int_to_ptr.vmem [resolvable:$true] %s26
      %32 = dma.hbm_to_vmem [thread:$0]  %s0, 1024, %s27, [#allocation8], 128, 128, 8
    $region5: #{tpu_custom_call.1} parent=1 // pred_fallthru
      _
    // Predicated region
    $region6: #{tpu_custom_call.1} parent=1 // pred_check
      _
    $region7: #{tpu_custom_call.1} parent=1 // pred_check_branch
      %34 = sbr.rel (0) target = $region9
    $region8: #{tpu_custom_call.1} parent=1 // pred_region
      %s36 = ssub.s32 1024, 1024
      %37 = vsyncadd [#allocation10], %s36
      %s38 = sshll.u32 [#allocation9], 4
      %s39 = int_to_ptr.vmem [resolvable:$true] %s38
      %44 = dma.hbm_to_vmem [thread:$0]  %s1, 1024, %s39, [#allocation10], 128, 128, 8
    $region9: #{tpu_custom_call.1} parent=1 // pred_fallthru
      _
    // Predicated region
    $region10: #{tpu_custom_call.1} parent=1 // pred_check
      _
    $region11: #{tpu_custom_call.1} parent=1 // pred_check_branch
      %46 = sbr.rel (0) target = $region13
    $region12: #{tpu_custom_call.1} parent=1 // pred_region
      %s48 = ssub.s32 1024, 1024
      %49 = vsyncadd [#allocation10], %s48
      %s50 = sshll.u32 [#allocation11], 4
      %s51 = int_to_ptr.vmem [resolvable:$true] %s50
      %56 = dma.hbm_to_vmem [thread:$0]  %s2, 1024, %s51, [#allocation10], 128, 128, 8
    $region13: #{tpu_custom_call.1} parent=1 // pred_fallthru
      _
    // Predicated region
    $region14: #{tpu_custom_call.1} parent=1 // pred_check
      _
    $region15: #{tpu_custom_call.1} parent=1 // pred_check_branch
      %58 = sbr.rel (0) target = $region17
    $region16: #{tpu_custom_call.1} parent=1 // pred_region
      _
    $region17: #{tpu_custom_call.1} parent=1 // pred_fallthru
      _
    // Predicated region
    $region18: #{tpu_custom_call.1} parent=1 // pred_check
      _
    $region19: #{tpu_custom_call.1} parent=1 // pred_check_branch
      %60 = sbr.rel (0) target = $region21
    $region20: #{tpu_custom_call.1} parent=1 // pred_region
      _
    $region21: #{tpu_custom_call.1} parent=1 // pred_fallthru
      _
    // Predicated region
    $region22: #{tpu_custom_call.1} parent=1 // pred_check
      _
    $region23: #{tpu_custom_call.1} parent=1 // pred_check_branch
      %62 = sbr.rel (0) target = $region25
    $region24: #{tpu_custom_call.1} parent=1 // pred_region
      %s64 = ssub.s32 768, 768
      %65 = vsyncadd [#allocation13], %s64
      %s66 = sshll.u32 [#allocation12], 4
      %s67 = int_to_ptr.vmem [resolvable:$true] %s66
      %72 = dma.hbm_to_vmem [thread:$0]  %s5, 768, %s67, [#allocation13], 64, 64, 4
    $region25: #{tpu_custom_call.1} parent=1 // pred_fallthru
      _
    // Predicated region
    $region26: #{tpu_custom_call.1} parent=1 // pred_check
      _
    $region27: #{tpu_custom_call.1} parent=1 // pred_check_branch
      %74 = sbr.rel (0) target = $region29
    $region28: #{tpu_custom_call.1} parent=1 // pred_region
      _
    $region29: #{tpu_custom_call.1} parent=1 // pred_fallthru
      _
    // Predicated region
    $region30: #{tpu_custom_call.1} parent=1 // pred_check
      _
    $region31: #{tpu_custom_call.1} parent=1 // pred_check_branch
      %76 = sbr.rel (0) target = $region33
    $region32: #{tpu_custom_call.1} parent=1 // pred_region
      %s78 = ssub.s32 768, 768
      %79 = vsyncadd [#allocation13], %s78
      %s80 = sshll.u32 [#allocation14], 4
      %s81 = int_to_ptr.vmem [resolvable:$true] %s80
      %86 = dma.hbm_to_vmem [thread:$0]  %s7, 768, %s81, [#allocation13], 64, 64, 4
    $region33: #{tpu_custom_call.1} parent=1 // pred_fallthru
      _
    // Predicated region
    $region34: #{tpu_custom_call.1} parent=1 // pred_check
      _
    $region35: #{tpu_custom_call.1} parent=1 // pred_check_branch
      %88 = sbr.rel (0) target = $region37
    $region36: #{tpu_custom_call.1} parent=1 // pred_region
      _
    $region37: #{tpu_custom_call.1} parent=1 // pred_fallthru
      _
    // Predicated region
    $region38: #{tpu_custom_call.1} parent=1 // pred_check
      _
    $region39: #{tpu_custom_call.1} parent=1 // pred_check_branch
      %90 = sbr.rel (0) target = $region41
    $region40: #{tpu_custom_call.1} parent=1 // pred_region
      _
    $region41: #{tpu_custom_call.1} parent=1 // pred_fallthru
      _
    // Predicated region
    $region42: #{tpu_custom_call.1} parent=1 // pred_check
      _
    $region43: #{tpu_custom_call.1} parent=1 // pred_check_branch
      %92 = sbr.rel (0) target = $region45
    $region44: #{tpu_custom_call.1} parent=1 // pred_region
      _
    $region45: #{tpu_custom_call.1} parent=1 // pred_fallthru
      _
    // Predicated region
    $region46: #{tpu_custom_call.1} parent=1 // pred_check
      _
    $region47: #{tpu_custom_call.1} parent=1 // pred_check_branch
      %94 = sbr.rel (0) target = $region49
    $region48: #{tpu_custom_call.1} parent=1 // pred_region
      %95 = dma.done [#allocation8], 1024
    $region49: #{tpu_custom_call.1} parent=1 // pred_fallthru
      _
    // Predicated region
    $region50: #{tpu_custom_call.1} parent=1 // pred_check
      _
    $region51: #{tpu_custom_call.1} parent=1 // pred_check_branch
      %97 = sbr.rel (0) target = $region53
    $region52: #{tpu_custom_call.1} parent=1 // pred_region
      %98 = dma.done [#allocation10], 1024
    $region53: #{tpu_custom_call.1} parent=1 // pred_fallthru
      _
    // Predicated region
    $region54: #{tpu_custom_call.1} parent=1 // pred_check
      _
    $region55: #{tpu_custom_call.1} parent=1 // pred_check_branch
      %100 = sbr.rel (0) target = $region57
    $region56: #{tpu_custom_call.1} parent=1 // pred_region
      %101 = dma.done [#allocation10], 1024
    $region57: #{tpu_custom_call.1} parent=1 // pred_fallthru
      _
    // Predicated region
    $region58: #{tpu_custom_call.1} parent=1 // pred_check
      _
    $region59: #{tpu_custom_call.1} parent=1 // pred_check_branch
      %103 = sbr.rel (0) target = $region61
    $region60: #{tpu_custom_call.1} parent=1 // pred_region
      %104 = dma.done [#allocation13], 768
    $region61: #{tpu_custom_call.1} parent=1 // pred_fallthru
      _
    // Predicated region
    $region62: #{tpu_custom_call.1} parent=1 // pred_check
      _
    $region63: #{tpu_custom_call.1} parent=1 // pred_check_branch
      %106 = sbr.rel (0) target = $region65
    $region64: #{tpu_custom_call.1} parent=1 // pred_region
      %107 = dma.done [#allocation13], 768
    $region65: #{tpu_custom_call.1} parent=1 // pred_fallthru
      _
    %p109 = scmp.eq.s32.totalorder 0, 0
    // Predicated region
    $region66: #{tpu_custom_call.1} parent=1 // pred_check
      %p110 = pneg %p109
    $region67: #{tpu_custom_call.1} parent=1 // pred_check_branch
      %112 = sbr.rel (%p110) target = $region69
    $region68: #{tpu_custom_call.1} parent=1 // pred_region
      %vm113 = vcmask 261120
      %114 = vst.msk [vmem:[#allocation2] sm:$0xff] %vm113, 0.0
      %115 = vst.msk [vmem:[#allocation3] sm:$0xff] %vm113, 0.0
      %116 = vst.msk [vmem:[#allocation4] sm:$0xff] %vm113, -inf
      %117 = vst.msk [vmem:[#allocation5] sm:$0xff] %vm113, 0.0
    $region69: #{tpu_custom_call.1} parent=1 // pred_fallthru
      _
    %v118 = vld [vmem:[%s3] sm:$0xf]
    %v119 = vld [vmem:[%s3 + $0x4] sm:$0xf]
    %v120 = vld [vmem:[%s3 + $0x8] sm:$0xf]
    %v121 = vld [vmem:[%s3 + $0xc] sm:$0xf]
    %s122 = scalar_lea.vmem %s3, 16
    %v123 = vld [vmem:[%s122] sm:$0xf]
    %v124 = vld [vmem:[%s122 + $0x4] sm:$0xf]
    %v125 = vld [vmem:[%s122 + $0x8] sm:$0xf]
    %v126 = vld [vmem:[%s122 + $0xc] sm:$0xf]
    %s127 = scalar_lea.vmem %s3, 32
    %v128 = vld [vmem:[%s127] sm:$0xf]
    %v129 = vld [vmem:[%s127 + $0x4] sm:$0xf]
    %v130 = vld [vmem:[%s127 + $0x8] sm:$0xf]
    %v131 = vld [vmem:[%s127 + $0xc] sm:$0xf]
    %v132 = vld [vmem:[%s4] sm:$0x1]
    %s133 = scalar_lea.vmem %s4, 1
    %v134 = vld [vmem:[%s133] sm:$0x1]
    %s135 = scalar_lea.vmem %s4, 2
    %v136 = vld [vmem:[%s135] sm:$0x1]
    %v137 = vld [vmem:[#allocation12] sm:$0xf]
    %v138 = vld [vmem:[#allocation12 + $0x4] sm:$0xf]
    %v139 = vld [vmem:[#allocation12 + $0x8] sm:$0xf]
    %v140 = vld [vmem:[#allocation12 + $0xc] sm:$0xf]
    %s141 = scalar_lea.vmem [#allocation12], 16
    %v142 = vld [vmem:[%s141] sm:$0xf]
    %v143 = vld [vmem:[%s141 + $0x4] sm:$0xf]
    %v144 = vld [vmem:[%s141 + $0x8] sm:$0xf]
    %v145 = vld [vmem:[%s141 + $0xc] sm:$0xf]
    %s146 = scalar_lea.vmem [#allocation12], 32
    %v147 = vld [vmem:[%s146] sm:$0xf]
    %v148 = vld [vmem:[%s146 + $0x4] sm:$0xf]
    %v149 = vld [vmem:[%s146 + $0x8] sm:$0xf]
    %v150 = vld [vmem:[%s146 + $0xc] sm:$0xf]
    %v151 = vld [vmem:[%s6] sm:$0x1]
    %s152 = scalar_lea.vmem %s6, 1
    %v153 = vld [vmem:[%s152] sm:$0x1]
    %s154 = scalar_lea.vmem %s6, 2
    %v155 = vld [vmem:[%s154] sm:$0x1]
    %v156 = vld [vmem:[#allocation14] sm:$0xf]
    %v157 = vld [vmem:[#allocation14 + $0x4] sm:$0xf]
    %v158 = vld [vmem:[#allocation14 + $0x8] sm:$0xf]
    %v159 = vld [vmem:[#allocation14 + $0xc] sm:$0xf]
    %s160 = scalar_lea.vmem [#allocation14], 16
    %v161 = vld [vmem:[%s160] sm:$0xf]
    %v162 = vld [vmem:[%s160 + $0x4] sm:$0xf]
    %v163 = vld [vmem:[%s160 + $0x8] sm:$0xf]
    %v164 = vld [vmem:[%s160 + $0xc] sm:$0xf]
    %s165 = scalar_lea.vmem [#allocation14], 32
    %v166 = vld [vmem:[%s165] sm:$0xf]
    %v167 = vld [vmem:[%s165 + $0x4] sm:$0xf]
    %v168 = vld [vmem:[%s165 + $0x8] sm:$0xf]
    %v169 = vld [vmem:[%s165 + $0xc] sm:$0xf]
    %v170 = vld [vmem:[%s8] sm:$0x1]
    %s171 = scalar_lea.vmem %s8, 1
    %v172 = vld [vmem:[%s171] sm:$0x1]
    %s173 = scalar_lea.vmem %s8, 2
    %v174 = vld [vmem:[%s173] sm:$0x1]
    %v175 = vld [vmem:[#allocation2] sm:$0xff]
    %v176 = vld [vmem:[#allocation3] sm:$0xff]
    %v177 = vld [vmem:[#allocation4] sm:$0xff]
    %v178 = vld [vmem:[#allocation5] sm:$0xff]
    %v179 = vpack.c.bf16 %v175, %v175
    %v181 = vlaneseq
    %v182 = vshrl.u32 %v181, 7
    %v183 = vsub.s32 0, %v182
    %v184 = vrot.slane %v132, %v183
    %v190 = vunpack.c.l.b16 %v118
    %v191 = vunpack.c.l.b16 %v119
    %v192 = vunpack.c.l.b16 %v120
    %v193 = vunpack.c.l.b16 %v121
    %v194 = vpack.c.b16 %v191, %v190
    %v195 = vpack.c.b16 %v193, %v192
    %vm198 = vcmask 261120
    %v200 = vsel %vm198, %v179, 0
    %202 = vmatprep.subr.bf16.mxu0 0
    %203 = vmatpush1.bf16.msra.mxu0 %v194
    %204 = vmatprep.subr.bf16.mxu0 0
    %205 = vmatpush1.bf16.msra.mxu0 %v195
    %206 = vmatprep.subr.bf16.mxu0 0
    %207 = vmatpush1.bf16.msra.mxu0 0
    %208 = vmatprep.subr.bf16.mxu0 0
    %209 = vmatpush1.bf16.msra.mxu0 0
    %210 = vmatprep.subr.bf16.mxu0 0
    %211 = vmatpush1.bf16.msra.mxu0 0
    %212 = vmatprep.subr.bf16.mxu0 0
    %213 = vmatpush1.bf16.msra.mxu0 0
    %214 = vmatprep.subr.bf16.mxu0 0
    %215 = vmatpush1.bf16.msra.mxu0 0
    %216 = vmatprep.subr.bf16.mxu0 0
    %217 = vmatpush1.bf16.msra.mxu0 0
    %218 = vmatprep.subr.bf16.mxu0 0
    %219 = vmatpush1.bf16.msra.mxu0 0
    %220 = vmatprep.subr.bf16.mxu0 0
    %221 = vmatpush1.bf16.msra.mxu0 0
    %222 = vmatprep.subr.bf16.mxu0 0
    %223 = vmatpush1.bf16.msra.mxu0 0
    %224 = vmatprep.subr.bf16.mxu0 0
    %225 = vmatpush1.bf16.msra.mxu0 0
    %226 = vmatprep.subr.bf16.mxu0 0
    %227 = vmatpush1.bf16.msra.mxu0 0
    %228 = vmatprep.subr.bf16.mxu0 0
    %229 = vmatpush1.bf16.msra.mxu0 0
    %230 = vmatprep.subr.bf16.mxu0 0
    %231 = vmatpush1.bf16.msra.mxu0 0
    %232 = vmatprep.subr.bf16.mxu0 0
    %233 = vmatpush1.bf16.msra.mxu0 0
    %234 = vmatprep.mubr.bf16.mxu0 0
    %235 = vmatmul.mubr.bf16.gmra.mrb[0].mxu0 %v200
    %v236 = vpop.f32.mrb[0].mxu0
    %v237 = vadd.f32 %v184, %v236
    %v238 = vpop.f32.mrb[0].mxu0
    %v239 = vpop.f32.mrb[0].mxu0
    %v240 = vpop.f32.mrb[0].mxu0
    %241 = vdwg.mxu0
    %v243 = vlaneseq
    %v244 = vshrl.u32 %v243, 7
    %v245 = vsub.s32 0, %v244
    %v246 = vrot.slane %v134, %v245
    %v252 = vunpack.c.l.b16 %v123
    %v253 = vunpack.c.l.b16 %v124
    %v254 = vunpack.c.l.b16 %v125
    %v255 = vunpack.c.l.b16 %v126
    %v256 = vpack.c.b16 %v253, %v252
    %v257 = vpack.c.b16 %v255, %v254
    %260 = vmatprep.subr.bf16.mxu0 0
    %261 = vmatpush1.bf16.msra.mxu0 %v256
    %262 = vmatprep.subr.bf16.mxu0 0
    %263 = vmatpush1.bf16.msra.mxu0 %v257
    %264 = vmatprep.subr.bf16.mxu0 0
    %265 = vmatpush1.bf16.msra.mxu0 0
    %266 = vmatprep.subr.bf16.mxu0 0
    %267 = vmatpush1.bf16.msra.mxu0 0
    %268 = vmatprep.subr.bf16.mxu0 0
    %269 = vmatpush1.bf16.msra.mxu0 0
    %270 = vmatprep.subr.bf16.mxu0 0
    %271 = vmatpush1.bf16.msra.mxu0 0
    %272 = vmatprep.subr.bf16.mxu0 0
    %273 = vmatpush1.bf16.msra.mxu0 0
    %274 = vmatprep.subr.bf16.mxu0 0
    %275 = vmatpush1.bf16.msra.mxu0 0
    %276 = vmatprep.subr.bf16.mxu0 0
    %277 = vmatpush1.bf16.msra.mxu0 0
    %278 = vmatprep.subr.bf16.mxu0 0
    %279 = vmatpush1.bf16.msra.mxu0 0
    %280 = vmatprep.subr.bf16.mxu0 0
    %281 = vmatpush1.bf16.msra.mxu0 0
    %282 = vmatprep.subr.bf16.mxu0 0
    %283 = vmatpush1.bf16.msra.mxu0 0
    %284 = vmatprep.subr.bf16.mxu0 0
    %285 = vmatpush1.bf16.msra.mxu0 0
    %286 = vmatprep.subr.bf16.mxu0 0
    %287 = vmatpush1.bf16.msra.mxu0 0
    %288 = vmatprep.subr.bf16.mxu0 0
    %289 = vmatpush1.bf16.msra.mxu0 0
    %290 = vmatprep.subr.bf16.mxu0 0
    %291 = vmatpush1.bf16.msra.mxu0 0
    %292 = vmatprep.mubr.bf16.mxu0 0
    %293 = vmatmul.mubr.bf16.gmra.mrb[0].mxu0 %v200
    %v294 = vpop.f32.mrb[0].mxu0
    %v295 = vadd.f32 %v246, %v294
    %v296 = vpop.f32.mrb[0].mxu0
    %v297 = vpop.f32.mrb[0].mxu0
    %v298 = vpop.f32.mrb[0].mxu0
    %299 = vdwg.mxu0
    %v301 = vlaneseq
    %v302 = vshrl.u32 %v301, 7
    %v303 = vsub.s32 0, %v302
    %v304 = vrot.slane %v136, %v303
    %v310 = vunpack.c.l.b16 %v128
    %v311 = vunpack.c.l.b16 %v129
    %v312 = vunpack.c.l.b16 %v130
    %v313 = vunpack.c.l.b16 %v131
    %v314 = vpack.c.b16 %v311, %v310
    %v315 = vpack.c.b16 %v313, %v312
    %318 = vmatprep.subr.bf16.mxu0 0
    %319 = vmatpush1.bf16.msra.mxu0 %v314
    %320 = vmatprep.subr.bf16.mxu0 0
    %321 = vmatpush1.bf16.msra.mxu0 %v315
    %322 = vmatprep.subr.bf16.mxu0 0
    %323 = vmatpush1.bf16.msra.mxu0 0
    %324 = vmatprep.subr.bf16.mxu0 0
    %325 = vmatpush1.bf16.msra.mxu0 0
    %326 = vmatprep.subr.bf16.mxu0 0
    %327 = vmatpush1.bf16.msra.mxu0 0
    %328 = vmatprep.subr.bf16.mxu0 0
    %329 = vmatpush1.bf16.msra.mxu0 0
    %330 = vmatprep.subr.bf16.mxu0 0
    %331 = vmatpush1.bf16.msra.mxu0 0
    %332 = vmatprep.subr.bf16.mxu0 0
    %333 = vmatpush1.bf16.msra.mxu0 0
    %334 = vmatprep.subr.bf16.mxu0 0
    %335 = vmatpush1.bf16.msra.mxu0 0
    %336 = vmatprep.subr.bf16.mxu0 0
    %337 = vmatpush1.bf16.msra.mxu0 0
    %338 = vmatprep.subr.bf16.mxu0 0
    %339 = vmatpush1.bf16.msra.mxu0 0
    %340 = vmatprep.subr.bf16.mxu0 0
    %341 = vmatpush1.bf16.msra.mxu0 0
    %342 = vmatprep.subr.bf16.mxu0 0
    %343 = vmatpush1.bf16.msra.mxu0 0
    %344 = vmatprep.subr.bf16.mxu0 0
    %345 = vmatpush1.bf16.msra.mxu0 0
    %346 = vmatprep.subr.bf16.mxu0 0
    %347 = vmatpush1.bf16.msra.mxu0 0
    %348 = vmatprep.subr.bf16.mxu0 0
    %349 = vmatpush1.bf16.msra.mxu0 0
    %350 = vmatprep.mubr.bf16.mxu0 0
    %351 = vmatmul.mubr.bf16.gmra.mrb[0].mxu0 %v200
    %v352 = vpop.f32.mrb[0].mxu0
    %v353 = vadd.f32 %v304, %v352
    %v354 = vpop.f32.mrb[0].mxu0
    %v355 = vpop.f32.mrb[0].mxu0
    %v356 = vpop.f32.mrb[0].mxu0
    %357 = vdwg.mxu0
    %v358 = vld [vmem:[#allocation7] sm:$0xff]
    %v359 = vadd.f32 %v358, %v237
    %v360 = vxor.u32 %v359, 2147483648
    %v361 = vmul.f32 %v360, 1.442695
    %v362 = vpow.pop %v361
    %v363 = vadd.f32 %v362, 1.0
    %v364 = vrcp.pop %v363
    %v365 = vmul.f32 1.0, %v364
    %v366 = vld [vmem:[#allocation9] sm:$0xff]
    %v367 = vadd.f32 %v366, %v295
    %v368 = vxor.u32 %v367, 2147483648
    %v369 = vmul.f32 %v368, 1.442695
    %v370 = vpow.pop %v369
    %v371 = vadd.f32 %v370, 1.0
    %v372 = vrcp.pop %v371
    %v373 = vmul.f32 1.0, %v372
    %v374 = vld [vmem:[#allocation11] sm:$0xff]
    %v375 = vmul.f32 %v365, %v353
    %v376 = vadd.f32 %v374, %v375
    %v377 = vtanh.pop %v376
    %v378 = vsub.f32 1.0, %v373
    %v379 = vmul.f32 %v378, %v377
    %v380 = vmul.f32 %v373, %v175
    %v381 = vadd.f32 %v379, %v380
    %v382 = vpack.c.bf16 %v381, %v381
    %v383 = vpack.c.bf16 %v176, %v176
    %v385 = vlaneseq
    %v386 = vshrl.u32 %v385, 7
    %v387 = vsub.s32 0, %v386
    %v388 = vrot.slane %v151, %v387
    %v394 = vunpack.c.l.b16 %v137
    %v395 = vunpack.c.l.b16 %v138
    %v396 = vunpack.c.l.b16 %v139
    %v397 = vunpack.c.l.b16 %v140
    %v398 = vpack.c.b16 %v395, %v394
    %v399 = vpack.c.b16 %v397, %v396
    %v403 = vsel %vm198, %v382, 0
    %405 = vmatprep.subr.bf16.mxu0 0
    %406 = vmatpush1.bf16.msra.mxu0 %v398
    %407 = vmatprep.subr.bf16.mxu0 0
    %408 = vmatpush1.bf16.msra.mxu0 %v399
    %409 = vmatprep.subr.bf16.mxu0 0
    %410 = vmatpush1.bf16.msra.mxu0 0
    %411 = vmatprep.subr.bf16.mxu0 0
    %412 = vmatpush1.bf16.msra.mxu0 0
    %413 = vmatprep.subr.bf16.mxu0 0
    %414 = vmatpush1.bf16.msra.mxu0 0
    %415 = vmatprep.subr.bf16.mxu0 0
    %416 = vmatpush1.bf16.msra.mxu0 0
    %417 = vmatprep.subr.bf16.mxu0 0
    %418 = vmatpush1.bf16.msra.mxu0 0
    %419 = vmatprep.subr.bf16.mxu0 0
    %420 = vmatpush1.bf16.msra.mxu0 0
    %421 = vmatprep.subr.bf16.mxu0 0
    %422 = vmatpush1.bf16.msra.mxu0 0
    %423 = vmatprep.subr.bf16.mxu0 0
    %424 = vmatpush1.bf16.msra.mxu0 0
    %425 = vmatprep.subr.bf16.mxu0 0
    %426 = vmatpush1.bf16.msra.mxu0 0
    %427 = vmatprep.subr.bf16.mxu0 0
    %428 = vmatpush1.bf16.msra.mxu0 0
    %429 = vmatprep.subr.bf16.mxu0 0
    %430 = vmatpush1.bf16.msra.mxu0 0
    %431 = vmatprep.subr.bf16.mxu0 0
    %432 = vmatpush1.bf16.msra.mxu0 0
    %433 = vmatprep.subr.bf16.mxu0 0
    %434 = vmatpush1.bf16.msra.mxu0 0
    %435 = vmatprep.subr.bf16.mxu0 0
    %436 = vmatpush1.bf16.msra.mxu0 0
    %437 = vmatprep.mubr.bf16.mxu0 0
    %438 = vmatmul.mubr.bf16.gmra.mrb[0].mxu0 %v403
    %v439 = vpop.f32.mrb[0].mxu0
    %v440 = vadd.f32 %v388, %v439
    %v441 = vpop.f32.mrb[0].mxu0
    %v442 = vpop.f32.mrb[0].mxu0
    %v443 = vpop.f32.mrb[0].mxu0
    %444 = vdwg.mxu0
    %v446 = vlaneseq
    %v447 = vshrl.u32 %v446, 7
    %v448 = vsub.s32 0, %v447
    %v449 = vrot.slane %v153, %v448
    %v455 = vunpack.c.l.b16 %v142
    %v456 = vunpack.c.l.b16 %v143
    %v457 = vunpack.c.l.b16 %v144
    %v458 = vunpack.c.l.b16 %v145
    %v459 = vpack.c.b16 %v456, %v455
    %v460 = vpack.c.b16 %v458, %v457
    %463 = vmatprep.subr.bf16.mxu0 0
    %464 = vmatpush1.bf16.msra.mxu0 %v459
    %465 = vmatprep.subr.bf16.mxu0 0
    %466 = vmatpush1.bf16.msra.mxu0 %v460
    %467 = vmatprep.subr.bf16.mxu0 0
    %468 = vmatpush1.bf16.msra.mxu0 0
    %469 = vmatprep.subr.bf16.mxu0 0
    %470 = vmatpush1.bf16.msra.mxu0 0
    %471 = vmatprep.subr.bf16.mxu0 0
    %472 = vmatpush1.bf16.msra.mxu0 0
    %473 = vmatprep.subr.bf16.mxu0 0
    %474 = vmatpush1.bf16.msra.mxu0 0
    %475 = vmatprep.subr.bf16.mxu0 0
    %476 = vmatpush1.bf16.msra.mxu0 0
    %477 = vmatprep.subr.bf16.mxu0 0
    %478 = vmatpush1.bf16.msra.mxu0 0
    %479 = vmatprep.subr.bf16.mxu0 0
    %480 = vmatpush1.bf16.msra.mxu0 0
    %481 = vmatprep.subr.bf16.mxu0 0
    %482 = vmatpush1.bf16.msra.mxu0 0
    %483 = vmatprep.subr.bf16.mxu0 0
    %484 = vmatpush1.bf16.msra.mxu0 0
    %485 = vmatprep.subr.bf16.mxu0 0
    %486 = vmatpush1.bf16.msra.mxu0 0
    %487 = vmatprep.subr.bf16.mxu0 0
    %488 = vmatpush1.bf16.msra.mxu0 0
    %489 = vmatprep.subr.bf16.mxu0 0
    %490 = vmatpush1.bf16.msra.mxu0 0
    %491 = vmatprep.subr.bf16.mxu0 0
    %492 = vmatpush1.bf16.msra.mxu0 0
    %493 = vmatprep.subr.bf16.mxu0 0
    %494 = vmatpush1.bf16.msra.mxu0 0
    %495 = vmatprep.mubr.bf16.mxu0 0
    %496 = vmatmul.mubr.bf16.gmra.mrb[0].mxu0 %v403
    %v497 = vpop.f32.mrb[0].mxu0
    %v498 = vadd.f32 %v449, %v497
    %v499 = vpop.f32.mrb[0].mxu0
    %v500 = vpop.f32.mrb[0].mxu0
    %v501 = vpop.f32.mrb[0].mxu0
    %502 = vdwg.mxu0
    %v504 = vlaneseq
    %v505 = vshrl.u32 %v504, 7
    %v506 = vsub.s32 0, %v505
    %v507 = vrot.slane %v155, %v506
    %v513 = vunpack.c.l.b16 %v147
    %v514 = vunpack.c.l.b16 %v148
    %v515 = vunpack.c.l.b16 %v149
    %v516 = vunpack.c.l.b16 %v150
    %v517 = vpack.c.b16 %v514, %v513
    %v518 = vpack.c.b16 %v516, %v515
    %521 = vmatprep.subr.bf16.mxu0 0
    %522 = vmatpush1.bf16.msra.mxu0 %v517
    %523 = vmatprep.subr.bf16.mxu0 0
    %524 = vmatpush1.bf16.msra.mxu0 %v518
    %525 = vmatprep.subr.bf16.mxu0 0
    %526 = vmatpush1.bf16.msra.mxu0 0
    %527 = vmatprep.subr.bf16.mxu0 0
    %528 = vmatpush1.bf16.msra.mxu0 0
    %529 = vmatprep.subr.bf16.mxu0 0
    %530 = vmatpush1.bf16.msra.mxu0 0
    %531 = vmatprep.subr.bf16.mxu0 0
    %532 = vmatpush1.bf16.msra.mxu0 0
    %533 = vmatprep.subr.bf16.mxu0 0
    %534 = vmatpush1.bf16.msra.mxu0 0
    %535 = vmatprep.subr.bf16.mxu0 0
    %536 = vmatpush1.bf16.msra.mxu0 0
    %537 = vmatprep.subr.bf16.mxu0 0
    %538 = vmatpush1.bf16.msra.mxu0 0
    %539 = vmatprep.subr.bf16.mxu0 0
    %540 = vmatpush1.bf16.msra.mxu0 0
    %541 = vmatprep.subr.bf16.mxu0 0
    %542 = vmatpush1.bf16.msra.mxu0 0
    %543 = vmatprep.subr.bf16.mxu0 0
    %544 = vmatpush1.bf16.msra.mxu0 0
    %545 = vmatprep.subr.bf16.mxu0 0
    %546 = vmatpush1.bf16.msra.mxu0 0
    %547 = vmatprep.subr.bf16.mxu0 0
    %548 = vmatpush1.bf16.msra.mxu0 0
    %549 = vmatprep.subr.bf16.mxu0 0
    %550 = vmatpush1.bf16.msra.mxu0 0
    %551 = vmatprep.subr.bf16.mxu0 0
    %552 = vmatpush1.bf16.msra.mxu0 0
    %553 = vmatprep.mubr.bf16.mxu0 0
    %554 = vmatmul.mubr.bf16.gmra.mrb[0].mxu0 %v403
    %v555 = vpop.f32.mrb[0].mxu0
    %v556 = vadd.f32 %v507, %v555
    %v557 = vpop.f32.mrb[0].mxu0
    %v558 = vpop.f32.mrb[0].mxu0
    %v559 = vpop.f32.mrb[0].mxu0
    %560 = vdwg.mxu0
    %v562 = vlaneseq
    %v563 = vshrl.u32 %v562, 7
    %v564 = vsub.s32 0, %v563
    %v565 = vrot.slane %v170, %v564
    %v571 = vunpack.c.l.b16 %v156
    %v572 = vunpack.c.l.b16 %v157
    %v573 = vunpack.c.l.b16 %v158
    %v574 = vunpack.c.l.b16 %v159
    %v575 = vpack.c.b16 %v572, %v571
    %v576 = vpack.c.b16 %v574, %v573
    %v580 = vsel %vm198, %v383, 0
    %582 = vmatprep.subr.bf16.mxu0 0
    %583 = vmatpush1.bf16.msra.mxu0 %v575
    %584 = vmatprep.subr.bf16.mxu0 0
    %585 = vmatpush1.bf16.msra.mxu0 %v576
    %586 = vmatprep.subr.bf16.mxu0 0
    %587 = vmatpush1.bf16.msra.mxu0 0
    %588 = vmatprep.subr.bf16.mxu0 0
    %589 = vmatpush1.bf16.msra.mxu0 0
    %590 = vmatprep.subr.bf16.mxu0 0
    %591 = vmatpush1.bf16.msra.mxu0 0
    %592 = vmatprep.subr.bf16.mxu0 0
    %593 = vmatpush1.bf16.msra.mxu0 0
    %594 = vmatprep.subr.bf16.mxu0 0
    %595 = vmatpush1.bf16.msra.mxu0 0
    %596 = vmatprep.subr.bf16.mxu0 0
    %597 = vmatpush1.bf16.msra.mxu0 0
    %598 = vmatprep.subr.bf16.mxu0 0
    %599 = vmatpush1.bf16.msra.mxu0 0
    %600 = vmatprep.subr.bf16.mxu0 0
    %601 = vmatpush1.bf16.msra.mxu0 0
    %602 = vmatprep.subr.bf16.mxu0 0
    %603 = vmatpush1.bf16.msra.mxu0 0
    %604 = vmatprep.subr.bf16.mxu0 0
    %605 = vmatpush1.bf16.msra.mxu0 0
    %606 = vmatprep.subr.bf16.mxu0 0
    %607 = vmatpush1.bf16.msra.mxu0 0
    %608 = vmatprep.subr.bf16.mxu0 0
    %609 = vmatpush1.bf16.msra.mxu0 0
    %610 = vmatprep.subr.bf16.mxu0 0
    %611 = vmatpush1.bf16.msra.mxu0 0
    %612 = vmatprep.subr.bf16.mxu0 0
    %613 = vmatpush1.bf16.msra.mxu0 0
    %614 = vmatprep.mubr.bf16.mxu0 0
    %615 = vmatmul.mubr.bf16.gmra.mrb[0].mxu0 %v580
    %v616 = vpop.f32.mrb[0].mxu0
    %v617 = vadd.f32 %v565, %v616
    %v618 = vpop.f32.mrb[0].mxu0
    %v619 = vpop.f32.mrb[0].mxu0
    %v620 = vpop.f32.mrb[0].mxu0
    %621 = vdwg.mxu0
    %v623 = vlaneseq
    %v624 = vshrl.u32 %v623, 7
    %v625 = vsub.s32 0, %v624
    %v626 = vrot.slane %v172, %v625
    %v632 = vunpack.c.l.b16 %v161
    %v633 = vunpack.c.l.b16 %v162
    %v634 = vunpack.c.l.b16 %v163
    %v635 = vunpack.c.l.b16 %v164
    %v636 = vpack.c.b16 %v633, %v632
    %v637 = vpack.c.b16 %v635, %v634
    %640 = vmatprep.subr.bf16.mxu0 0
    %641 = vmatpush1.bf16.msra.mxu0 %v636
    %642 = vmatprep.subr.bf16.mxu0 0
    %643 = vmatpush1.bf16.msra.mxu0 %v637
    %644 = vmatprep.subr.bf16.mxu0 0
    %645 = vmatpush1.bf16.msra.mxu0 0
    %646 = vmatprep.subr.bf16.mxu0 0
    %647 = vmatpush1.bf16.msra.mxu0 0
    %648 = vmatprep.subr.bf16.mxu0 0
    %649 = vmatpush1.bf16.msra.mxu0 0
    %650 = vmatprep.subr.bf16.mxu0 0
    %651 = vmatpush1.bf16.msra.mxu0 0
    %652 = vmatprep.subr.bf16.mxu0 0
    %653 = vmatpush1.bf16.msra.mxu0 0
    %654 = vmatprep.subr.bf16.mxu0 0
    %655 = vmatpush1.bf16.msra.mxu0 0
    %656 = vmatprep.subr.bf16.mxu0 0
    %657 = vmatpush1.bf16.msra.mxu0 0
    %658 = vmatprep.subr.bf16.mxu0 0
    %659 = vmatpush1.bf16.msra.mxu0 0
    %660 = vmatprep.subr.bf16.mxu0 0
    %661 = vmatpush1.bf16.msra.mxu0 0
    %662 = vmatprep.subr.bf16.mxu0 0
    %663 = vmatpush1.bf16.msra.mxu0 0
    %664 = vmatprep.subr.bf16.mxu0 0
    %665 = vmatpush1.bf16.msra.mxu0 0
    %666 = vmatprep.subr.bf16.mxu0 0
    %667 = vmatpush1.bf16.msra.mxu0 0
    %668 = vmatprep.subr.bf16.mxu0 0
    %669 = vmatpush1.bf16.msra.mxu0 0
    %670 = vmatprep.subr.bf16.mxu0 0
    %671 = vmatpush1.bf16.msra.mxu0 0
    %672 = vmatprep.mubr.bf16.mxu0 0
    %673 = vmatmul.mubr.bf16.gmra.mrb[0].mxu0 %v580
    %v674 = vpop.f32.mrb[0].mxu0
    %v675 = vadd.f32 %v626, %v674
    %v676 = vpop.f32.mrb[0].mxu0
    %v677 = vpop.f32.mrb[0].mxu0
    %v678 = vpop.f32.mrb[0].mxu0
    %679 = vdwg.mxu0
    %v681 = vlaneseq
    %v682 = vshrl.u32 %v681, 7
    %v683 = vsub.s32 0, %v682
    %v684 = vrot.slane %v174, %v683
    %v690 = vunpack.c.l.b16 %v166
    %v691 = vunpack.c.l.b16 %v167
    %v692 = vunpack.c.l.b16 %v168
    %v693 = vunpack.c.l.b16 %v169
    %v694 = vpack.c.b16 %v691, %v690
    %v695 = vpack.c.b16 %v693, %v692
    %698 = vmatprep.subr.bf16.mxu0 0
    %699 = vmatpush1.bf16.msra.mxu0 %v694
    %700 = vmatprep.subr.bf16.mxu0 0
    %701 = vmatpush1.bf16.msra.mxu0 %v695
    %702 = vmatprep.subr.bf16.mxu0 0
    %703 = vmatpush1.bf16.msra.mxu0 0
    %704 = vmatprep.subr.bf16.mxu0 0
    %705 = vmatpush1.bf16.msra.mxu0 0
    %706 = vmatprep.subr.bf16.mxu0 0
    %707 = vmatpush1.bf16.msra.mxu0 0
    %708 = vmatprep.subr.bf16.mxu0 0
    %709 = vmatpush1.bf16.msra.mxu0 0
    %710 = vmatprep.subr.bf16.mxu0 0
    %711 = vmatpush1.bf16.msra.mxu0 0
    %712 = vmatprep.subr.bf16.mxu0 0
    %713 = vmatpush1.bf16.msra.mxu0 0
    %714 = vmatprep.subr.bf16.mxu0 0
    %715 = vmatpush1.bf16.msra.mxu0 0
    %716 = vmatprep.subr.bf16.mxu0 0
    %717 = vmatpush1.bf16.msra.mxu0 0
    %718 = vmatprep.subr.bf16.mxu0 0
    %719 = vmatpush1.bf16.msra.mxu0 0
    %720 = vmatprep.subr.bf16.mxu0 0
    %721 = vmatpush1.bf16.msra.mxu0 0
    %722 = vmatprep.subr.bf16.mxu0 0
    %723 = vmatpush1.bf16.msra.mxu0 0
    %724 = vmatprep.subr.bf16.mxu0 0
    %725 = vmatpush1.bf16.msra.mxu0 0
    %726 = vmatprep.subr.bf16.mxu0 0
    %727 = vmatpush1.bf16.msra.mxu0 0
    %728 = vmatprep.subr.bf16.mxu0 0
    %729 = vmatpush1.bf16.msra.mxu0 0
    %730 = vmatprep.mubr.bf16.mxu0 0
    %731 = vmatmul.mubr.bf16.gmra.mrb[0].mxu0 %v580
    %v732 = vpop.f32.mrb[0].mxu0
    %v733 = vadd.f32 %v684, %v732
    %v734 = vpop.f32.mrb[0].mxu0
    %v735 = vpop.f32.mrb[0].mxu0
    %v736 = vpop.f32.mrb[0].mxu0
    %737 = vdwg.mxu0
    %v738 = vadd.f32 %v440, %v617
    %v739 = vxor.u32 %v738, 2147483648
    %v740 = vmul.f32 %v739, 1.442695
    %v741 = vpow.pop %v740
    %v742 = vadd.f32 %v741, 1.0
    %v743 = vrcp.pop %v742
    %v744 = vmul.f32 1.0, %v743
    %v745 = vadd.f32 %v498, %v675
    %v746 = vxor.u32 %v745, 2147483648
    %v747 = vmul.f32 %v746, 1.442695
    %v748 = vpow.pop %v747
    %v749 = vadd.f32 %v748, 1.0
    %v750 = vrcp.pop %v749
    %v751 = vmul.f32 1.0, %v750
    %v752 = vmul.f32 %v744, %v733
    %v753 = vadd.f32 %v556, %v752
    %v754 = vtanh.pop %v753
    %v755 = vsub.f32 1.0, %v751
    %v756 = vmul.f32 %v755, %v754
    %v757 = vmul.f32 %v751, %v176
    %v758 = vadd.f32 %v756, %v757
    %v759 = vmax.f32 %v177, %v758
    %v760 = vadd.f32 %v178, %v758
    %761 = vmatprep.subr.bf16.mxu0 0
    %762 = vmatpush1.bf16.msra.mxu0 %v194
    %763 = vmatprep.subr.bf16.mxu0 0
    %764 = vmatpush1.bf16.msra.mxu0 %v195
    %765 = vmatprep.subr.bf16.mxu0 0
    %766 = vmatpush1.bf16.msra.mxu0 0
    %767 = vmatprep.subr.bf16.mxu0 0
    %768 = vmatpush1.bf16.msra.mxu0 0
    %769 = vmatprep.subr.bf16.mxu0 0
    %770 = vmatpush1.bf16.msra.mxu0 0
    %771 = vmatprep.subr.bf16.mxu0 0
    %772 = vmatpush1.bf16.msra.mxu0 0
    %773 = vmatprep.subr.bf16.mxu0 0
    %774 = vmatpush1.bf16.msra.mxu0 0
    %775 = vmatprep.subr.bf16.mxu0 0
    %776 = vmatpush1.bf16.msra.mxu0 0
    %777 = vmatprep.subr.bf16.mxu0 0
    %778 = vmatpush1.bf16.msra.mxu0 0
    %779 = vmatprep.subr.bf16.mxu0 0
    %780 = vmatpush1.bf16.msra.mxu0 0
    %781 = vmatprep.subr.bf16.mxu0 0
    %782 = vmatpush1.bf16.msra.mxu0 0
    %783 = vmatprep.subr.bf16.mxu0 0
    %784 = vmatpush1.bf16.msra.mxu0 0
    %785 = vmatprep.subr.bf16.mxu0 0
    %786 = vmatpush1.bf16.msra.mxu0 0
    %787 = vmatprep.subr.bf16.mxu0 0
    %788 = vmatpush1.bf16.msra.mxu0 0
    %789 = vmatprep.subr.bf16.mxu0 0
    %790 = vmatpush1.bf16.msra.mxu0 0
    %791 = vmatprep.subr.bf16.mxu0 0
    %792 = vmatpush1.bf16.msra.mxu0 0
    %793 = vmatprep.mubr.bf16.mxu0 0
    %794 = vmatmul.mubr.bf16.gmra.mrb[0].mxu0 %v403
    %v795 = vpop.f32.mrb[0].mxu0
    %v796 = vadd.f32 %v184, %v795
    %v797 = vpop.f32.mrb[0].mxu0
    %v798 = vpop.f32.mrb[0].mxu0
    %v799 = vpop.f32.mrb[0].mxu0
    %800 = vdwg.mxu0
    %801 = vmatprep.subr.bf16.mxu0 0
    %802 = vmatpush1.bf16.msra.mxu0 %v256
    %803 = vmatprep.subr.bf16.mxu0 0
    %804 = vmatpush1.bf16.msra.mxu0 %v257
    %805 = vmatprep.subr.bf16.mxu0 0
    %806 = vmatpush1.bf16.msra.mxu0 0
    %807 = vmatprep.subr.bf16.mxu0 0
    %808 = vmatpush1.bf16.msra.mxu0 0
    %809 = vmatprep.subr.bf16.mxu0 0
    %810 = vmatpush1.bf16.msra.mxu0 0
    %811 = vmatprep.subr.bf16.mxu0 0
    %812 = vmatpush1.bf16.msra.mxu0 0
    %813 = vmatprep.subr.bf16.mxu0 0
    %814 = vmatpush1.bf16.msra.mxu0 0
    %815 = vmatprep.subr.bf16.mxu0 0
    %816 = vmatpush1.bf16.msra.mxu0 0
    %817 = vmatprep.subr.bf16.mxu0 0
    %818 = vmatpush1.bf16.msra.mxu0 0
    %819 = vmatprep.subr.bf16.mxu0 0
    %820 = vmatpush1.bf16.msra.mxu0 0
    %821 = vmatprep.subr.bf16.mxu0 0
    %822 = vmatpush1.bf16.msra.mxu0 0
    %823 = vmatprep.subr.bf16.mxu0 0
    %824 = vmatpush1.bf16.msra.mxu0 0
    %825 = vmatprep.subr.bf16.mxu0 0
    %826 = vmatpush1.bf16.msra.mxu0 0
    %827 = vmatprep.subr.bf16.mxu0 0
    %828 = vmatpush1.bf16.msra.mxu0 0
    %829 = vmatprep.subr.bf16.mxu0 0
    %830 = vmatpush1.bf16.msra.mxu0 0
    %831 = vmatprep.subr.bf16.mxu0 0
    %832 = vmatpush1.bf16.msra.mxu0 0
    %833 = vmatprep.mubr.bf16.mxu0 0
    %834 = vmatmul.mubr.bf16.gmra.mrb[0].mxu0 %v403
    %v835 = vpop.f32.mrb[0].mxu0
    %v836 = vadd.f32 %v246, %v835
    %v837 = vpop.f32.mrb[0].mxu0
    %v838 = vpop.f32.mrb[0].mxu0
    %v839 = vpop.f32.mrb[0].mxu0
    %840 = vdwg.mxu0
    %841 = vmatprep.subr.bf16.mxu0 0
    %842 = vmatpush1.bf16.msra.mxu0 %v314
    %843 = vmatprep.subr.bf16.mxu0 0
    %844 = vmatpush1.bf16.msra.mxu0 %v315
    %845 = vmatprep.subr.bf16.mxu0 0
    %846 = vmatpush1.bf16.msra.mxu0 0
    %847 = vmatprep.subr.bf16.mxu0 0
    %848 = vmatpush1.bf16.msra.mxu0 0
    %849 = vmatprep.subr.bf16.mxu0 0
    %850 = vmatpush1.bf16.msra.mxu0 0
    %851 = vmatprep.subr.bf16.mxu0 0
    %852 = vmatpush1.bf16.msra.mxu0 0
    %853 = vmatprep.subr.bf16.mxu0 0
    %854 = vmatpush1.bf16.msra.mxu0 0
    %855 = vmatprep.subr.bf16.mxu0 0
    %856 = vmatpush1.bf16.msra.mxu0 0
    %857 = vmatprep.subr.bf16.mxu0 0
    %858 = vmatpush1.bf16.msra.mxu0 0
    %859 = vmatprep.subr.bf16.mxu0 0
    %860 = vmatpush1.bf16.msra.mxu0 0
    %861 = vmatprep.subr.bf16.mxu0 0
    %862 = vmatpush1.bf16.msra.mxu0 0
    %863 = vmatprep.subr.bf16.mxu0 0
    %864 = vmatpush1.bf16.msra.mxu0 0
    %865 = vmatprep.subr.bf16.mxu0 0
    %866 = vmatpush1.bf16.msra.mxu0 0
    %867 = vmatprep.subr.bf16.mxu0 0
    %868 = vmatpush1.bf16.msra.mxu0 0
    %869 = vmatprep.subr.bf16.mxu0 0
    %870 = vmatpush1.bf16.msra.mxu0 0
    %871 = vmatprep.subr.bf16.mxu0 0
    %872 = vmatpush1.bf16.msra.mxu0 0
    %873 = vmatprep.mubr.bf16.mxu0 0
    %874 = vmatmul.mubr.bf16.gmra.mrb[0].mxu0 %v403
    %v875 = vpop.f32.mrb[0].mxu0
    %v876 = vadd.f32 %v304, %v875
    %v877 = vpop.f32.mrb[0].mxu0
    %v878 = vpop.f32.mrb[0].mxu0
    %v879 = vpop.f32.mrb[0].mxu0
    %880 = vdwg.mxu0
    %s881 = scalar_lea.vmem [#allocation7], 8
    %v882 = vld [vmem:[%s881] sm:$0xff]
    %v883 = vadd.f32 %v882, %v796
    %v884 = vxor.u32 %v883, 2147483648
    %v885 = vmul.f32 %v884, 1.442695
    %v886 = vpow.pop %v885
    %v887 = vadd.f32 %v886, 1.0
    %v888 = vrcp.pop %v887
    %v889 = vmul.f32 1.0, %v888
    %s890 = scalar_lea.vmem [#allocation9], 8
    %v891 = vld [vmem:[%s890] sm:$0xff]
    %v892 = vadd.f32 %v891, %v836
    %v893 = vxor.u32 %v892, 2147483648
    %v894 = vmul.f32 %v893, 1.442695
    %v895 = vpow.pop %v894
    %v896 = vadd.f32 %v895, 1.0
    %v897 = vrcp.pop %v896
    %v898 = vmul.f32 1.0, %v897
    %s899 = scalar_lea.vmem [#allocation11], 8
    %v900 = vld [vmem:[%s899] sm:$0xff]
    %v901 = vmul.f32 %v889, %v876
    %v902 = vadd.f32 %v900, %v901
    %v903 = vtanh.pop %v902
    %v904 = vsub.f32 1.0, %v898
    %v905 = vmul.f32 %v904, %v903
    %v906 = vmul.f32 %v898, %v381
    %v907 = vadd.f32 %v905, %v906
    %v908 = vpack.c.bf16 %v907, %v907
    %v909 = vpack.c.bf16 %v758, %v758
    %v911 = vsel %vm198, %v908, 0
    %913 = vmatprep.subr.bf16.mxu0 0
    %914 = vmatpush1.bf16.msra.mxu0 %v398
    %915 = vmatprep.subr.bf16.mxu0 0
    %916 = vmatpush1.bf16.msra.mxu0 %v399
    %917 = vmatprep.subr.bf16.mxu0 0
    %918 = vmatpush1.bf16.msra.mxu0 0
    %919 = vmatprep.subr.bf16.mxu0 0
    %920 = vmatpush1.bf16.msra.mxu0 0
    %921 = vmatprep.subr.bf16.mxu0 0
    %922 = vmatpush1.bf16.msra.mxu0 0
    %923 = vmatprep.subr.bf16.mxu0 0
    %924 = vmatpush1.bf16.msra.mxu0 0
    %925 = vmatprep.subr.bf16.mxu0 0
    %926 = vmatpush1.bf16.msra.mxu0 0
    %927 = vmatprep.subr.bf16.mxu0 0
    %928 = vmatpush1.bf16.msra.mxu0 0
    %929 = vmatprep.subr.bf16.mxu0 0
    %930 = vmatpush1.bf16.msra.mxu0 0
    %931 = vmatprep.subr.bf16.mxu0 0
    %932 = vmatpush1.bf16.msra.mxu0 0
    %933 = vmatprep.subr.bf16.mxu0 0
    %934 = vmatpush1.bf16.msra.mxu0 0
    %935 = vmatprep.subr.bf16.mxu0 0
    %936 = vmatpush1.bf16.msra.mxu0 0
    %937 = vmatprep.subr.bf16.mxu0 0
    %938 = vmatpush1.bf16.msra.mxu0 0
    %939 = vmatprep.subr.bf16.mxu0 0
    %940 = vmatpush1.bf16.msra.mxu0 0
    %941 = vmatprep.subr.bf16.mxu0 0
    %942 = vmatpush1.bf16.msra.mxu0 0
    %943 = vmatprep.subr.bf16.mxu0 0
    %944 = vmatpush1.bf16.msra.mxu0 0
    %945 = vmatprep.mubr.bf16.mxu0 0
    %946 = vmatmul.mubr.bf16.gmra.mrb[0].mxu0 %v911
    %v947 = vpop.f32.mrb[0].mxu0
    %v948 = vadd.f32 %v388, %v947
    %v949 = vpop.f32.mrb[0].mxu0
    %v950 = vpop.f32.mrb[0].mxu0
    %v951 = vpop.f32.mrb[0].mxu0
    %952 = vdwg.mxu0
    %953 = vmatprep.subr.bf16.mxu0 0
    %954 = vmatpush1.bf16.msra.mxu0 %v459
    %955 = vmatprep.subr.bf16.mxu0 0
    %956 = vmatpush1.bf16.msra.mxu0 %v460
    %957 = vmatprep.subr.bf16.mxu0 0
    %958 = vmatpush1.bf16.msra.mxu0 0
    %959 = vmatprep.subr.bf16.mxu0 0
    %960 = vmatpush1.bf16.msra.mxu0 0
    %961 = vmatprep.subr.bf16.mxu0 0
    %962 = vmatpush1.bf16.msra.mxu0 0
    %963 = vmatprep.subr.bf16.mxu0 0
    %964 = vmatpush1.bf16.msra.mxu0 0
    %965 = vmatprep.subr.bf16.mxu0 0
    %966 = vmatpush1.bf16.msra.mxu0 0
    %967 = vmatprep.subr.bf16.mxu0 0
    %968 = vmatpush1.bf16.msra.mxu0 0
    %969 = vmatprep.subr.bf16.mxu0 0
    %970 = vmatpush1.bf16.msra.mxu0 0
    %971 = vmatprep.subr.bf16.mxu0 0
    %972 = vmatpush1.bf16.msra.mxu0 0
    %973 = vmatprep.subr.bf16.mxu0 0
    %974 = vmatpush1.bf16.msra.mxu0 0
    %975 = vmatprep.subr.bf16.mxu0 0
    %976 = vmatpush1.bf16.msra.mxu0 0
    %977 = vmatprep.subr.bf16.mxu0 0
    %978 = vmatpush1.bf16.msra.mxu0 0
    %979 = vmatprep.subr.bf16.mxu0 0
    %980 = vmatpush1.bf16.msra.mxu0 0
    %981 = vmatprep.subr.bf16.mxu0 0
    %982 = vmatpush1.bf16.msra.mxu0 0
    %983 = vmatprep.subr.bf16.mxu0 0
    %984 = vmatpush1.bf16.msra.mxu0 0
    %985 = vmatprep.mubr.bf16.mxu0 0
    %986 = vmatmul.mubr.bf16.gmra.mrb[0].mxu0 %v911
    %v987 = vpop.f32.mrb[0].mxu0
    %v988 = vadd.f32 %v449, %v987
    %v989 = vpop.f32.mrb[0].mxu0
    %v990 = vpop.f32.mrb[0].mxu0
    %v991 = vpop.f32.mrb[0].mxu0
    %992 = vdwg.mxu0
    %993 = vmatprep.subr.bf16.mxu0 0
    %994 = vmatpush1.bf16.msra.mxu0 %v517
    %995 = vmatprep.subr.bf16.mxu0 0
    %996 = vmatpush1.bf16.msra.mxu0 %v518
    %997 = vmatprep.subr.bf16.mxu0 0
    %998 = vmatpush1.bf16.msra.mxu0 0
    %999 = vmatprep.subr.bf16.mxu0 0
    %1000 = vmatpush1.bf16.msra.mxu0 0
    %1001 = vmatprep.subr.bf16.mxu0 0
    %1002 = vmatpush1.bf16.msra.mxu0 0
    %1003 = vmatprep.subr.bf16.mxu0 0
    %1004 = vmatpush1.bf16.msra.mxu0 0
    %1005 = vmatprep.subr.bf16.mxu0 0
    %1006 = vmatpush1.bf16.msra.mxu0 0
    %1007 = vmatprep.subr.bf16.mxu0 0
    %1008 = vmatpush1.bf16.msra.mxu0 0
    %1009 = vmatprep.subr.bf16.mxu0 0
    %1010 = vmatpush1.bf16.msra.mxu0 0
    %1011 = vmatprep.subr.bf16.mxu0 0
    %1012 = vmatpush1.bf16.msra.mxu0 0
    %1013 = vmatprep.subr.bf16.mxu0 0
    %1014 = vmatpush1.bf16.msra.mxu0 0
    %1015 = vmatprep.subr.bf16.mxu0 0
    %1016 = vmatpush1.bf16.msra.mxu0 0
    %1017 = vmatprep.subr.bf16.mxu0 0
    %1018 = vmatpush1.bf16.msra.mxu0 0
    %1019 = vmatprep.subr.bf16.mxu0 0
    %1020 = vmatpush1.bf16.msra.mxu0 0
    %1021 = vmatprep.subr.bf16.mxu0 0
    %1022 = vmatpush1.bf16.msra.mxu0 0
    %1023 = vmatprep.subr.bf16.mxu0 0
    %1024 = vmatpush1.bf16.msra.mxu0 0
    %1025 = vmatprep.mubr.bf16.mxu0 0
    %1026 = vmatmul.mubr.bf16.gmra.mrb[0].mxu0 %v911
    %v1027 = vpop.f32.mrb[0].mxu0
    %v1028 = vadd.f32 %v507, %v1027
    %v1029 = vpop.f32.mrb[0].mxu0
    %v1030 = vpop.f32.mrb[0].mxu0
    %v1031 = vpop.f32.mrb[0].mxu0
    %1032 = vdwg.mxu0
    %v1034 = vsel %vm198, %v909, 0
    %1036 = vmatprep.subr.bf16.mxu0 0
    %1037 = vmatpush1.bf16.msra.mxu0 %v575
    %1038 = vmatprep.subr.bf16.mxu0 0
    %1039 = vmatpush1.bf16.msra.mxu0 %v576
    %1040 = vmatprep.subr.bf16.mxu0 0
    %1041 = vmatpush1.bf16.msra.mxu0 0
    %1042 = vmatprep.subr.bf16.mxu0 0
    %1043 = vmatpush1.bf16.msra.mxu0 0
    %1044 = vmatprep.subr.bf16.mxu0 0
    %1045 = vmatpush1.bf16.msra.mxu0 0
    %1046 = vmatprep.subr.bf16.mxu0 0
    %1047 = vmatpush1.bf16.msra.mxu0 0
    %1048 = vmatprep.subr.bf16.mxu0 0
    %1049 = vmatpush1.bf16.msra.mxu0 0
    %1050 = vmatprep.subr.bf16.mxu0 0
    %1051 = vmatpush1.bf16.msra.mxu0 0
    %1052 = vmatprep.subr.bf16.mxu0 0
    %1053 = vmatpush1.bf16.msra.mxu0 0
    %1054 = vmatprep.subr.bf16.mxu0 0
    %1055 = vmatpush1.bf16.msra.mxu0 0
    %1056 = vmatprep.subr.bf16.mxu0 0
    %1057 = vmatpush1.bf16.msra.mxu0 0
    %1058 = vmatprep.subr.bf16.mxu0 0
    %1059 = vmatpush1.bf16.msra.mxu0 0
    %1060 = vmatprep.subr.bf16.mxu0 0
    %1061 = vmatpush1.bf16.msra.mxu0 0
    %1062 = vmatprep.subr.bf16.mxu0 0
    %1063 = vmatpush1.bf16.msra.mxu0 0
    %1064 = vmatprep.subr.bf16.mxu0 0
    %1065 = vmatpush1.bf16.msra.mxu0 0
    %1066 = vmatprep.subr.bf16.mxu0 0
    %1067 = vmatpush1.bf16.msra.mxu0 0
    %1068 = vmatprep.mubr.bf16.mxu0 0
    %1069 = vmatmul.mubr.bf16.gmra.mrb[0].mxu0 %v1034
    %v1070 = vpop.f32.mrb[0].mxu0
    %v1071 = vadd.f32 %v565, %v1070
    %v1072 = vpop.f32.mrb[0].mxu0
    %v1073 = vpop.f32.mrb[0].mxu0
    %v1074 = vpop.f32.mrb[0].mxu0
    %1075 = vdwg.mxu0
    %1076 = vmatprep.subr.bf16.mxu0 0
    %1077 = vmatpush1.bf16.msra.mxu0 %v636
    %1078 = vmatprep.subr.bf16.mxu0 0
    %1079 = vmatpush1.bf16.msra.mxu0 %v637
    %1080 = vmatprep.subr.bf16.mxu0 0
    %1081 = vmatpush1.bf16.msra.mxu0 0
    %1082 = vmatprep.subr.bf16.mxu0 0
    %1083 = vmatpush1.bf16.msra.mxu0 0
    %1084 = vmatprep.subr.bf16.mxu0 0
    %1085 = vmatpush1.bf16.msra.mxu0 0
    %1086 = vmatprep.subr.bf16.mxu0 0
    %1087 = vmatpush1.bf16.msra.mxu0 0
    %1088 = vmatprep.subr.bf16.mxu0 0
    %1089 = vmatpush1.bf16.msra.mxu0 0
    %1090 = vmatprep.subr.bf16.mxu0 0
    %1091 = vmatpush1.bf16.msra.mxu0 0
    %1092 = vmatprep.subr.bf16.mxu0 0
    %1093 = vmatpush1.bf16.msra.mxu0 0
    %1094 = vmatprep.subr.bf16.mxu0 0
    %1095 = vmatpush1.bf16.msra.mxu0 0
    %1096 = vmatprep.subr.bf16.mxu0 0
    %1097 = vmatpush1.bf16.msra.mxu0 0
    %1098 = vmatprep.subr.bf16.mxu0 0
    %1099 = vmatpush1.bf16.msra.mxu0 0
    %1100 = vmatprep.subr.bf16.mxu0 0
    %1101 = vmatpush1.bf16.msra.mxu0 0
    %1102 = vmatprep.subr.bf16.mxu0 0
    %1103 = vmatpush1.bf16.msra.mxu0 0
    %1104 = vmatprep.subr.bf16.mxu0 0
    %1105 = vmatpush1.bf16.msra.mxu0 0
    %1106 = vmatprep.subr.bf16.mxu0 0
    %1107 = vmatpush1.bf16.msra.mxu0 0
    %1108 = vmatprep.mubr.bf16.mxu0 0
    %1109 = vmatmul.mubr.bf16.gmra.mrb[0].mxu0 %v1034
    %v1110 = vpop.f32.mrb[0].mxu0
    %v1111 = vadd.f32 %v626, %v1110
    %v1112 = vpop.f32.mrb[0].mxu0
    %v1113 = vpop.f32.mrb[0].mxu0
    %v1114 = vpop.f32.mrb[0].mxu0
    %1115 = vdwg.mxu0
    %1116 = vmatprep.subr.bf16.mxu0 0
    %1117 = vmatpush1.bf16.msra.mxu0 %v694
    %1118 = vmatprep.subr.bf16.mxu0 0
    %1119 = vmatpush1.bf16.msra.mxu0 %v695
    %1120 = vmatprep.subr.bf16.mxu0 0
    %1121 = vmatpush1.bf16.msra.mxu0 0
    %1122 = vmatprep.subr.bf16.mxu0 0
    %1123 = vmatpush1.bf16.msra.mxu0 0
    %1124 = vmatprep.subr.bf16.mxu0 0
    %1125 = vmatpush1.bf16.msra.mxu0 0
    %1126 = vmatprep.subr.bf16.mxu0 0
    %1127 = vmatpush1.bf16.msra.mxu0 0
    %1128 = vmatprep.subr.bf16.mxu0 0
    %1129 = vmatpush1.bf16.msra.mxu0 0
    %1130 = vmatprep.subr.bf16.mxu0 0
    %1131 = vmatpush1.bf16.msra.mxu0 0
    %1132 = vmatprep.subr.bf16.mxu0 0
    %1133 = vmatpush1.bf16.msra.mxu0 0
    %1134 = vmatprep.subr.bf16.mxu0 0
    %1135 = vmatpush1.bf16.msra.mxu0 0
    %1136 = vmatprep.subr.bf16.mxu0 0
    %1137 = vmatpush1.bf16.msra.mxu0 0
    %1138 = vmatprep.subr.bf16.mxu0 0
    %1139 = vmatpush1.bf16.msra.mxu0 0
    %1140 = vmatprep.subr.bf16.mxu0 0
    %1141 = vmatpush1.bf16.msra.mxu0 0
    %1142 = vmatprep.subr.bf16.mxu0 0
    %1143 = vmatpush1.bf16.msra.mxu0 0
    %1144 = vmatprep.subr.bf16.mxu0 0
    %1145 = vmatpush1.bf16.msra.mxu0 0
    %1146 = vmatprep.subr.bf16.mxu0 0
    %1147 = vmatpush1.bf16.msra.mxu0 0
    %1148 = vmatprep.mubr.bf16.mxu0 0
    %1149 = vmatmul.mubr.bf16.gmra.mrb[0].mxu0 %v1034
    %v1150 = vpop.f32.mrb[0].mxu0
    %v1151 = vadd.f32 %v684, %v1150
    %v1152 = vpop.f32.mrb[0].mxu0
    %v1153 = vpop.f32.mrb[0].mxu0
    %v1154 = vpop.f32.mrb[0].mxu0
    %1155 = vdwg.mxu0
    %v1156 = vadd.f32 %v948, %v1071
    %v1157 = vxor.u32 %v1156, 2147483648
    %v1158 = vmul.f32 %v1157, 1.442695
    %v1159 = vpow.pop %v1158
    %v1160 = vadd.f32 %v1159, 1.0
    %v1161 = vrcp.pop %v1160
    %v1162 = vmul.f32 1.0, %v1161
    %v1163 = vadd.f32 %v988, %v1111
    %v1164 = vxor.u32 %v1163, 2147483648
    %v1165 = vmul.f32 %v1164, 1.442695
    %v1166 = vpow.pop %v1165
    %v1167 = vadd.f32 %v1166, 1.0
    %v1168 = vrcp.pop %v1167
    %v1169 = vmul.f32 1.0, %v1168
    %v1170 = vmul.f32 %v1162, %v1151
    %v1171 = vadd.f32 %v1028, %v1170
    %v1172 = vtanh.pop %v1171
    %v1173 = vsub.f32 1.0, %v1169
    %v1174 = vmul.f32 %v1173, %v1172
    %v1175 = vmul.f32 %v1169, %v758
    %v1176 = vadd.f32 %v1174, %v1175
    %v1177 = vmax.f32 %v759, %v1176
    %v1178 = vadd.f32 %v760, %v1176
    %1179 = vmatprep.subr.bf16.mxu0 0
    %1180 = vmatpush1.bf16.msra.mxu0 %v194
    %1181 = vmatprep.subr.bf16.mxu0 0
    %1182 = vmatpush1.bf16.msra.mxu0 %v195
    %1183 = vmatprep.subr.bf16.mxu0 0
    %1184 = vmatpush1.bf16.msra.mxu0 0
    %1185 = vmatprep.subr.bf16.mxu0 0
    %1186 = vmatpush1.bf16.msra.mxu0 0
    %1187 = vmatprep.subr.bf16.mxu0 0
    %1188 = vmatpush1.bf16.msra.mxu0 0
    %1189 = vmatprep.subr.bf16.mxu0 0
    %1190 = vmatpush1.bf16.msra.mxu0 0
    %1191 = vmatprep.subr.bf16.mxu0 0
    %1192 = vmatpush1.bf16.msra.mxu0 0
    %1193 = vmatprep.subr.bf16.mxu0 0
    %1194 = vmatpush1.bf16.msra.mxu0 0
    %1195 = vmatprep.subr.bf16.mxu0 0
    %1196 = vmatpush1.bf16.msra.mxu0 0
    %1197 = vmatprep.subr.bf16.mxu0 0
    %1198 = vmatpush1.bf16.msra.mxu0 0
    %1199 = vmatprep.subr.bf16.mxu0 0
    %1200 = vmatpush1.bf16.msra.mxu0 0
    %1201 = vmatprep.subr.bf16.mxu0 0
    %1202 = vmatpush1.bf16.msra.mxu0 0
    %1203 = vmatprep.subr.bf16.mxu0 0
    %1204 = vmatpush1.bf16.msra.mxu0 0
    %1205 = vmatprep.subr.bf16.mxu0 0
    %1206 = vmatpush1.bf16.msra.mxu0 0
    %1207 = vmatprep.subr.bf16.mxu0 0
    %1208 = vmatpush1.bf16.msra.mxu0 0
    %1209 = vmatprep.subr.bf16.mxu0 0
    %1210 = vmatpush1.bf16.msra.mxu0 0
    %1211 = vmatprep.mubr.bf16.mxu0 0
    %1212 = vmatmul.mubr.bf16.gmra.mrb[0].mxu0 %v911
    %v1213 = vpop.f32.mrb[0].mxu0
    %v1214 = vadd.f32 %v184, %v1213
    %v1215 = vpop.f32.mrb[0].mxu0
    %v1216 = vpop.f32.mrb[0].mxu0
    %v1217 = vpop.f32.mrb[0].mxu0
    %1218 = vdwg.mxu0
    %1219 = vmatprep.subr.bf16.mxu0 0
    %1220 = vmatpush1.bf16.msra.mxu0 %v256
    %1221 = vmatprep.subr.bf16.mxu0 0
    %1222 = vmatpush1.bf16.msra.mxu0 %v257
    %1223 = vmatprep.subr.bf16.mxu0 0
    %1224 = vmatpush1.bf16.msra.mxu0 0
    %1225 = vmatprep.subr.bf16.mxu0 0
    %1226 = vmatpush1.bf16.msra.mxu0 0
    %1227 = vmatprep.subr.bf16.mxu0 0
    %1228 = vmatpush1.bf16.msra.mxu0 0
    %1229 = vmatprep.subr.bf16.mxu0 0
    %1230 = vmatpush1.bf16.msra.mxu0 0
    %1231 = vmatprep.subr.bf16.mxu0 0
    %1232 = vmatpush1.bf16.msra.mxu0 0
    %1233 = vmatprep.subr.bf16.mxu0 0
    %1234 = vmatpush1.bf16.msra.mxu0 0
    %1235 = vmatprep.subr.bf16.mxu0 0
    %1236 = vmatpush1.bf16.msra.mxu0 0
    %1237 = vmatprep.subr.bf16.mxu0 0
    %1238 = vmatpush1.bf16.msra.mxu0 0
    %1239 = vmatprep.subr.bf16.mxu0 0
    %1240 = vmatpush1.bf16.msra.mxu0 0
    %1241 = vmatprep.subr.bf16.mxu0 0
    %1242 = vmatpush1.bf16.msra.mxu0 0
    %1243 = vmatprep.subr.bf16.mxu0 0
    %1244 = vmatpush1.bf16.msra.mxu0 0
    %1245 = vmatprep.subr.bf16.mxu0 0
    %1246 = vmatpush1.bf16.msra.mxu0 0
    %1247 = vmatprep.subr.bf16.mxu0 0
    %1248 = vmatpush1.bf16.msra.mxu0 0
    %1249 = vmatprep.subr.bf16.mxu0 0
    %1250 = vmatpush1.bf16.msra.mxu0 0
    %1251 = vmatprep.mubr.bf16.mxu0 0
    %1252 = vmatmul.mubr.bf16.gmra.mrb[0].mxu0 %v911
    %v1253 = vpop.f32.mrb[0].mxu0
    %v1254 = vadd.f32 %v246, %v1253
    %v1255 = vpop.f32.mrb[0].mxu0
    %v1256 = vpop.f32.mrb[0].mxu0
    %v1257 = vpop.f32.mrb[0].mxu0
    %1258 = vdwg.mxu0
    %1259 = vmatprep.subr.bf16.mxu0 0
    %1260 = vmatpush1.bf16.msra.mxu0 %v314
    %1261 = vmatprep.subr.bf16.mxu0 0
    %1262 = vmatpush1.bf16.msra.mxu0 %v315
    %1263 = vmatprep.subr.bf16.mxu0 0
    %1264 = vmatpush1.bf16.msra.mxu0 0
    %1265 = vmatprep.subr.bf16.mxu0 0
    %1266 = vmatpush1.bf16.msra.mxu0 0
    %1267 = vmatprep.subr.bf16.mxu0 0
    %1268 = vmatpush1.bf16.msra.mxu0 0
    %1269 = vmatprep.subr.bf16.mxu0 0
    %1270 = vmatpush1.bf16.msra.mxu0 0
    %1271 = vmatprep.subr.bf16.mxu0 0
    %1272 = vmatpush1.bf16.msra.mxu0 0
    %1273 = vmatprep.subr.bf16.mxu0 0
    %1274 = vmatpush1.bf16.msra.mxu0 0
    %1275 = vmatprep.subr.bf16.mxu0 0
    %1276 = vmatpush1.bf16.msra.mxu0 0
    %1277 = vmatprep.subr.bf16.mxu0 0
    %1278 = vmatpush1.bf16.msra.mxu0 0
    %1279 = vmatprep.subr.bf16.mxu0 0
    %1280 = vmatpush1.bf16.msra.mxu0 0
    %1281 = vmatprep.subr.bf16.mxu0 0
    %1282 = vmatpush1.bf16.msra.mxu0 0
    %1283 = vmatprep.subr.bf16.mxu0 0
    %1284 = vmatpush1.bf16.msra.mxu0 0
    %1285 = vmatprep.subr.bf16.mxu0 0
    %1286 = vmatpush1.bf16.msra.mxu0 0
    %1287 = vmatprep.subr.bf16.mxu0 0
    %1288 = vmatpush1.bf16.msra.mxu0 0
    %1289 = vmatprep.subr.bf16.mxu0 0
    %1290 = vmatpush1.bf16.msra.mxu0 0
    %1291 = vmatprep.mubr.bf16.mxu0 0
    %1292 = vmatmul.mubr.bf16.gmra.mrb[0].mxu0 %v911
    %v1293 = vpop.f32.mrb[0].mxu0
    %v1294 = vadd.f32 %v304, %v1293
    %v1295 = vpop.f32.mrb[0].mxu0
    %v1296 = vpop.f32.mrb[0].mxu0
    %v1297 = vpop.f32.mrb[0].mxu0
    %1298 = vdwg.mxu0
    %s1299 = scalar_lea.vmem [#allocation7], 16
    %v1300 = vld [vmem:[%s1299] sm:$0xff]
    %v1301 = vadd.f32 %v1300, %v1214
    %v1302 = vxor.u32 %v1301, 2147483648
    %v1303 = vmul.f32 %v1302, 1.442695
    %v1304 = vpow.pop %v1303
    %v1305 = vadd.f32 %v1304, 1.0
    %v1306 = vrcp.pop %v1305
    %v1307 = vmul.f32 1.0, %v1306
    %s1308 = scalar_lea.vmem [#allocation9], 16
    %v1309 = vld [vmem:[%s1308] sm:$0xff]
    %v1310 = vadd.f32 %v1309, %v1254
    %v1311 = vxor.u32 %v1310, 2147483648
    %v1312 = vmul.f32 %v1311, 1.442695
    %v1313 = vpow.pop %v1312
    %v1314 = vadd.f32 %v1313, 1.0
    %v1315 = vrcp.pop %v1314
    %v1316 = vmul.f32 1.0, %v1315
    %s1317 = scalar_lea.vmem [#allocation11], 16
    %v1318 = vld [vmem:[%s1317] sm:$0xff]
    %v1319 = vmul.f32 %v1307, %v1294
    %v1320 = vadd.f32 %v1318, %v1319
    %v1321 = vtanh.pop %v1320
    %v1322 = vsub.f32 1.0, %v1316
    %v1323 = vmul.f32 %v1322, %v1321
    %v1324 = vmul.f32 %v1316, %v907
    %v1325 = vadd.f32 %v1323, %v1324
    %v1326 = vpack.c.bf16 %v1325, %v1325
    %v1327 = vpack.c.bf16 %v1176, %v1176
    %v1329 = vsel %vm198, %v1326, 0
    %1331 = vmatprep.subr.bf16.mxu0 0
    %1332 = vmatpush1.bf16.msra.mxu0 %v398
    %1333 = vmatprep.subr.bf16.mxu0 0
    %1334 = vmatpush1.bf16.msra.mxu0 %v399
    %1335 = vmatprep.subr.bf16.mxu0 0
    %1336 = vmatpush1.bf16.msra.mxu0 0
    %1337 = vmatprep.subr.bf16.mxu0 0
    %1338 = vmatpush1.bf16.msra.mxu0 0
    %1339 = vmatprep.subr.bf16.mxu0 0
    %1340 = vmatpush1.bf16.msra.mxu0 0
    %1341 = vmatprep.subr.bf16.mxu0 0
    %1342 = vmatpush1.bf16.msra.mxu0 0
    %1343 = vmatprep.subr.bf16.mxu0 0
    %1344 = vmatpush1.bf16.msra.mxu0 0
    %1345 = vmatprep.subr.bf16.mxu0 0
    %1346 = vmatpush1.bf16.msra.mxu0 0
    %1347 = vmatprep.subr.bf16.mxu0 0
    %1348 = vmatpush1.bf16.msra.mxu0 0
    %1349 = vmatprep.subr.bf16.mxu0 0
    %1350 = vmatpush1.bf16.msra.mxu0 0
    %1351 = vmatprep.subr.bf16.mxu0 0
    %1352 = vmatpush1.bf16.msra.mxu0 0
    %1353 = vmatprep.subr.bf16.mxu0 0
    %1354 = vmatpush1.bf16.msra.mxu0 0
    %1355 = vmatprep.subr.bf16.mxu0 0
    %1356 = vmatpush1.bf16.msra.mxu0 0
    %1357 = vmatprep.subr.bf16.mxu0 0
    %1358 = vmatpush1.bf16.msra.mxu0 0
    %1359 = vmatprep.subr.bf16.mxu0 0
    %1360 = vmatpush1.bf16.msra.mxu0 0
    %1361 = vmatprep.subr.bf16.mxu0 0
    %1362 = vmatpush1.bf16.msra.mxu0 0
    %1363 = vmatprep.mubr.bf16.mxu0 0
    %1364 = vmatmul.mubr.bf16.gmra.mrb[0].mxu0 %v1329
    %v1365 = vpop.f32.mrb[0].mxu0
    %v1366 = vadd.f32 %v388, %v1365
    %v1367 = vpop.f32.mrb[0].mxu0
    %v1368 = vpop.f32.mrb[0].mxu0
    %v1369 = vpop.f32.mrb[0].mxu0
    %1370 = vdwg.mxu0
    %1371 = vmatprep.subr.bf16.mxu0 0
    %1372 = vmatpush1.bf16.msra.mxu0 %v459
    %1373 = vmatprep.subr.bf16.mxu0 0
    %1374 = vmatpush1.bf16.msra.mxu0 %v460
    %1375 = vmatprep.subr.bf16.mxu0 0
    %1376 = vmatpush1.bf16.msra.mxu0 0
    %1377 = vmatprep.subr.bf16.mxu0 0
    %1378 = vmatpush1.bf16.msra.mxu0 0
    %1379 = vmatprep.subr.bf16.mxu0 0
    %1380 = vmatpush1.bf16.msra.mxu0 0
    %1381 = vmatprep.subr.bf16.mxu0 0
    %1382 = vmatpush1.bf16.msra.mxu0 0
    %1383 = vmatprep.subr.bf16.mxu0 0
    %1384 = vmatpush1.bf16.msra.mxu0 0
    %1385 = vmatprep.subr.bf16.mxu0 0
    %1386 = vmatpush1.bf16.msra.mxu0 0
    %1387 = vmatprep.subr.bf16.mxu0 0
    %1388 = vmatpush1.bf16.msra.mxu0 0
    %1389 = vmatprep.subr.bf16.mxu0 0
    %1390 = vmatpush1.bf16.msra.mxu0 0
    %1391 = vmatprep.subr.bf16.mxu0 0
    %1392 = vmatpush1.bf16.msra.mxu0 0
    %1393 = vmatprep.subr.bf16.mxu0 0
    %1394 = vmatpush1.bf16.msra.mxu0 0
    %1395 = vmatprep.subr.bf16.mxu0 0
    %1396 = vmatpush1.bf16.msra.mxu0 0
    %1397 = vmatprep.subr.bf16.mxu0 0
    %1398 = vmatpush1.bf16.msra.mxu0 0
    %1399 = vmatprep.subr.bf16.mxu0 0
    %1400 = vmatpush1.bf16.msra.mxu0 0
    %1401 = vmatprep.subr.bf16.mxu0 0
    %1402 = vmatpush1.bf16.msra.mxu0 0
    %1403 = vmatprep.mubr.bf16.mxu0 0
    %1404 = vmatmul.mubr.bf16.gmra.mrb[0].mxu0 %v1329
    %v1405 = vpop.f32.mrb[0].mxu0
    %v1406 = vadd.f32 %v449, %v1405
    %v1407 = vpop.f32.mrb[0].mxu0
    %v1408 = vpop.f32.mrb[0].mxu0
    %v1409 = vpop.f32.mrb[0].mxu0
    %1410 = vdwg.mxu0
    %1411 = vmatprep.subr.bf16.mxu0 0
    %1412 = vmatpush1.bf16.msra.mxu0 %v517
    %1413 = vmatprep.subr.bf16.mxu0 0
    %1414 = vmatpush1.bf16.msra.mxu0 %v518
    %1415 = vmatprep.subr.bf16.mxu0 0
    %1416 = vmatpush1.bf16.msra.mxu0 0
    %1417 = vmatprep.subr.bf16.mxu0 0
    %1418 = vmatpush1.bf16.msra.mxu0 0
    %1419 = vmatprep.subr.bf16.mxu0 0
    %1420 = vmatpush1.bf16.msra.mxu0 0
    %1421 = vmatprep.subr.bf16.mxu0 0
    %1422 = vmatpush1.bf16.msra.mxu0 0
    %1423 = vmatprep.subr.bf16.mxu0 0
    %1424 = vmatpush1.bf16.msra.mxu0 0
    %1425 = vmatprep.subr.bf16.mxu0 0
    %1426 = vmatpush1.bf16.msra.mxu0 0
    %1427 = vmatprep.subr.bf16.mxu0 0
    %1428 = vmatpush1.bf16.msra.mxu0 0
    %1429 = vmatprep.subr.bf16.mxu0 0
    %1430 = vmatpush1.bf16.msra.mxu0 0
    %1431 = vmatprep.subr.bf16.mxu0 0
    %1432 = vmatpush1.bf16.msra.mxu0 0
    %1433 = vmatprep.subr.bf16.mxu0 0
    %1434 = vmatpush1.bf16.msra.mxu0 0
    %1435 = vmatprep.subr.bf16.mxu0 0
    %1436 = vmatpush1.bf16.msra.mxu0 0
    %1437 = vmatprep.subr.bf16.mxu0 0
    %1438 = vmatpush1.bf16.msra.mxu0 0
    %1439 = vmatprep.subr.bf16.mxu0 0
    %1440 = vmatpush1.bf16.msra.mxu0 0
    %1441 = vmatprep.subr.bf16.mxu0 0
    %1442 = vmatpush1.bf16.msra.mxu0 0
    %1443 = vmatprep.mubr.bf16.mxu0 0
    %1444 = vmatmul.mubr.bf16.gmra.mrb[0].mxu0 %v1329
    %v1445 = vpop.f32.mrb[0].mxu0
    %v1446 = vadd.f32 %v507, %v1445
    %v1447 = vpop.f32.mrb[0].mxu0
    %v1448 = vpop.f32.mrb[0].mxu0
    %v1449 = vpop.f32.mrb[0].mxu0
    %1450 = vdwg.mxu0
    %v1452 = vsel %vm198, %v1327, 0
    %1454 = vmatprep.subr.bf16.mxu0 0
    %1455 = vmatpush1.bf16.msra.mxu0 %v575
    %1456 = vmatprep.subr.bf16.mxu0 0
    %1457 = vmatpush1.bf16.msra.mxu0 %v576
    %1458 = vmatprep.subr.bf16.mxu0 0
    %1459 = vmatpush1.bf16.msra.mxu0 0
    %1460 = vmatprep.subr.bf16.mxu0 0
    %1461 = vmatpush1.bf16.msra.mxu0 0
    %1462 = vmatprep.subr.bf16.mxu0 0
    %1463 = vmatpush1.bf16.msra.mxu0 0
    %1464 = vmatprep.subr.bf16.mxu0 0
    %1465 = vmatpush1.bf16.msra.mxu0 0
    %1466 = vmatprep.subr.bf16.mxu0 0
    %1467 = vmatpush1.bf16.msra.mxu0 0
    %1468 = vmatprep.subr.bf16.mxu0 0
    %1469 = vmatpush1.bf16.msra.mxu0 0
    %1470 = vmatprep.subr.bf16.mxu0 0
    %1471 = vmatpush1.bf16.msra.mxu0 0
    %1472 = vmatprep.subr.bf16.mxu0 0
    %1473 = vmatpush1.bf16.msra.mxu0 0
    %1474 = vmatprep.subr.bf16.mxu0 0
    %1475 = vmatpush1.bf16.msra.mxu0 0
    %1476 = vmatprep.subr.bf16.mxu0 0
    %1477 = vmatpush1.bf16.msra.mxu0 0
    %1478 = vmatprep.subr.bf16.mxu0 0
    %1479 = vmatpush1.bf16.msra.mxu0 0
    %1480 = vmatprep.subr.bf16.mxu0 0
    %1481 = vmatpush1.bf16.msra.mxu0 0
    %1482 = vmatprep.subr.bf16.mxu0 0
    %1483 = vmatpush1.bf16.msra.mxu0 0
    %1484 = vmatprep.subr.bf16.mxu0 0
    %1485 = vmatpush1.bf16.msra.mxu0 0
    %1486 = vmatprep.mubr.bf16.mxu0 0
    %1487 = vmatmul.mubr.bf16.gmra.mrb[0].mxu0 %v1452
    %v1488 = vpop.f32.mrb[0].mxu0
    %v1489 = vadd.f32 %v565, %v1488
    %v1490 = vpop.f32.mrb[0].mxu0
    %v1491 = vpop.f32.mrb[0].mxu0
    %v1492 = vpop.f32.mrb[0].mxu0
    %1493 = vdwg.mxu0
    %1494 = vmatprep.subr.bf16.mxu0 0
    %1495 = vmatpush1.bf16.msra.mxu0 %v636
    %1496 = vmatprep.subr.bf16.mxu0 0
    %1497 = vmatpush1.bf16.msra.mxu0 %v637
    %1498 = vmatprep.subr.bf16.mxu0 0
    %1499 = vmatpush1.bf16.msra.mxu0 0
    %1500 = vmatprep.subr.bf16.mxu0 0
    %1501 = vmatpush1.bf16.msra.mxu0 0
    %1502 = vmatprep.subr.bf16.mxu0 0
    %1503 = vmatpush1.bf16.msra.mxu0 0
    %1504 = vmatprep.subr.bf16.mxu0 0
    %1505 = vmatpush1.bf16.msra.mxu0 0
    %1506 = vmatprep.subr.bf16.mxu0 0
    %1507 = vmatpush1.bf16.msra.mxu0 0
    %1508 = vmatprep.subr.bf16.mxu0 0
    %1509 = vmatpush1.bf16.msra.mxu0 0
    %1510 = vmatprep.subr.bf16.mxu0 0
    %1511 = vmatpush1.bf16.msra.mxu0 0
    %1512 = vmatprep.subr.bf16.mxu0 0
    %1513 = vmatpush1.bf16.msra.mxu0 0
    %1514 = vmatprep.subr.bf16.mxu0 0
    %1515 = vmatpush1.bf16.msra.mxu0 0
    %1516 = vmatprep.subr.bf16.mxu0 0
    %1517 = vmatpush1.bf16.msra.mxu0 0
    %1518 = vmatprep.subr.bf16.mxu0 0
    %1519 = vmatpush1.bf16.msra.mxu0 0
    %1520 = vmatprep.subr.bf16.mxu0 0
    %1521 = vmatpush1.bf16.msra.mxu0 0
    %1522 = vmatprep.subr.bf16.mxu0 0
    %1523 = vmatpush1.bf16.msra.mxu0 0
    %1524 = vmatprep.subr.bf16.mxu0 0
    %1525 = vmatpush1.bf16.msra.mxu0 0
    %1526 = vmatprep.mubr.bf16.mxu0 0
    %1527 = vmatmul.mubr.bf16.gmra.mrb[0].mxu0 %v1452
    %v1528 = vpop.f32.mrb[0].mxu0
    %v1529 = vadd.f32 %v626, %v1528
    %v1530 = vpop.f32.mrb[0].mxu0
    %v1531 = vpop.f32.mrb[0].mxu0
    %v1532 = vpop.f32.mrb[0].mxu0
    %1533 = vdwg.mxu0
    %1534 = vmatprep.subr.bf16.mxu0 0
    %1535 = vmatpush1.bf16.msra.mxu0 %v694
    %1536 = vmatprep.subr.bf16.mxu0 0
    %1537 = vmatpush1.bf16.msra.mxu0 %v695
    %1538 = vmatprep.subr.bf16.mxu0 0
    %1539 = vmatpush1.bf16.msra.mxu0 0
    %1540 = vmatprep.subr.bf16.mxu0 0
    %1541 = vmatpush1.bf16.msra.mxu0 0
    %1542 = vmatprep.subr.bf16.mxu0 0
    %1543 = vmatpush1.bf16.msra.mxu0 0
    %1544 = vmatprep.subr.bf16.mxu0 0
    %1545 = vmatpush1.bf16.msra.mxu0 0
    %1546 = vmatprep.subr.bf16.mxu0 0
    %1547 = vmatpush1.bf16.msra.mxu0 0
    %1548 = vmatprep.subr.bf16.mxu0 0
    %1549 = vmatpush1.bf16.msra.mxu0 0
    %1550 = vmatprep.subr.bf16.mxu0 0
    %1551 = vmatpush1.bf16.msra.mxu0 0
    %1552 = vmatprep.subr.bf16.mxu0 0
    %1553 = vmatpush1.bf16.msra.mxu0 0
    %1554 = vmatprep.subr.bf16.mxu0 0
    %1555 = vmatpush1.bf16.msra.mxu0 0
    %1556 = vmatprep.subr.bf16.mxu0 0
    %1557 = vmatpush1.bf16.msra.mxu0 0
    %1558 = vmatprep.subr.bf16.mxu0 0
    %1559 = vmatpush1.bf16.msra.mxu0 0
    %1560 = vmatprep.subr.bf16.mxu0 0
    %1561 = vmatpush1.bf16.msra.mxu0 0
    %1562 = vmatprep.subr.bf16.mxu0 0
    %1563 = vmatpush1.bf16.msra.mxu0 0
    %1564 = vmatprep.subr.bf16.mxu0 0
    %1565 = vmatpush1.bf16.msra.mxu0 0
    %1566 = vmatprep.mubr.bf16.mxu0 0
    %1567 = vmatmul.mubr.bf16.gmra.mrb[0].mxu0 %v1452
    %v1568 = vpop.f32.mrb[0].mxu0
    %v1569 = vadd.f32 %v684, %v1568
    %v1570 = vpop.f32.mrb[0].mxu0
    %v1571 = vpop.f32.mrb[0].mxu0
    %v1572 = vpop.f32.mrb[0].mxu0
    %1573 = vdwg.mxu0
    %v1574 = vadd.f32 %v1366, %v1489
    %v1575 = vxor.u32 %v1574, 2147483648
    %v1576 = vmul.f32 %v1575, 1.442695
    %v1577 = vpow.pop %v1576
    %v1578 = vadd.f32 %v1577, 1.0
    %v1579 = vrcp.pop %v1578
    %v1580 = vmul.f32 1.0, %v1579
    %v1581 = vadd.f32 %v1406, %v1529
    %v1582 = vxor.u32 %v1581, 2147483648
    %v1583 = vmul.f32 %v1582, 1.442695
    %v1584 = vpow.pop %v1583
    %v1585 = vadd.f32 %v1584, 1.0
    %v1586 = vrcp.pop %v1585
    %v1587 = vmul.f32 1.0, %v1586
    %v1588 = vmul.f32 %v1580, %v1569
    %v1589 = vadd.f32 %v1446, %v1588
    %v1590 = vtanh.pop %v1589
    %v1591 = vsub.f32 1.0, %v1587
    %v1592 = vmul.f32 %v1591, %v1590
    %v1593 = vmul.f32 %v1587, %v1176
    %v1594 = vadd.f32 %v1592, %v1593
    %v1595 = vmax.f32 %v1177, %v1594
    %v1596 = vadd.f32 %v1178, %v1594
    %1597 = vmatprep.subr.bf16.mxu0 0
    %1598 = vmatpush1.bf16.msra.mxu0 %v194
    %1599 = vmatprep.subr.bf16.mxu0 0
    %1600 = vmatpush1.bf16.msra.mxu0 %v195
    %1601 = vmatprep.subr.bf16.mxu0 0
    %1602 = vmatpush1.bf16.msra.mxu0 0
    %1603 = vmatprep.subr.bf16.mxu0 0
    %1604 = vmatpush1.bf16.msra.mxu0 0
    %1605 = vmatprep.subr.bf16.mxu0 0
    %1606 = vmatpush1.bf16.msra.mxu0 0
    %1607 = vmatprep.subr.bf16.mxu0 0
    %1608 = vmatpush1.bf16.msra.mxu0 0
    %1609 = vmatprep.subr.bf16.mxu0 0
    %1610 = vmatpush1.bf16.msra.mxu0 0
    %1611 = vmatprep.subr.bf16.mxu0 0
    %1612 = vmatpush1.bf16.msra.mxu0 0
    %1613 = vmatprep.subr.bf16.mxu0 0
    %1614 = vmatpush1.bf16.msra.mxu0 0
    %1615 = vmatprep.subr.bf16.mxu0 0
    %1616 = vmatpush1.bf16.msra.mxu0 0
    %1617 = vmatprep.subr.bf16.mxu0 0
    %1618 = vmatpush1.bf16.msra.mxu0 0
    %1619 = vmatprep.subr.bf16.mxu0 0
    %1620 = vmatpush1.bf16.msra.mxu0 0
    %1621 = vmatprep.subr.bf16.mxu0 0
    %1622 = vmatpush1.bf16.msra.mxu0 0
    %1623 = vmatprep.subr.bf16.mxu0 0
    %1624 = vmatpush1.bf16.msra.mxu0 0
    %1625 = vmatprep.subr.bf16.mxu0 0
    %1626 = vmatpush1.bf16.msra.mxu0 0
    %1627 = vmatprep.subr.bf16.mxu0 0
    %1628 = vmatpush1.bf16.msra.mxu0 0
    %1629 = vmatprep.mubr.bf16.mxu0 0
    %1630 = vmatmul.mubr.bf16.gmra.mrb[0].mxu0 %v1329
    %v1631 = vpop.f32.mrb[0].mxu0
    %v1632 = vadd.f32 %v184, %v1631
    %v1633 = vpop.f32.mrb[0].mxu0
    %v1634 = vpop.f32.mrb[0].mxu0
    %v1635 = vpop.f32.mrb[0].mxu0
    %1636 = vdwg.mxu0
    %1637 = vmatprep.subr.bf16.mxu0 0
    %1638 = vmatpush1.bf16.msra.mxu0 %v256
    %1639 = vmatprep.subr.bf16.mxu0 0
    %1640 = vmatpush1.bf16.msra.mxu0 %v257
    %1641 = vmatprep.subr.bf16.mxu0 0
    %1642 = vmatpush1.bf16.msra.mxu0 0
    %1643 = vmatprep.subr.bf16.mxu0 0
    %1644 = vmatpush1.bf16.msra.mxu0 0
    %1645 = vmatprep.subr.bf16.mxu0 0
    %1646 = vmatpush1.bf16.msra.mxu0 0
    %1647 = vmatprep.subr.bf16.mxu0 0
    %1648 = vmatpush1.bf16.msra.mxu0 0
    %1649 = vmatprep.subr.bf16.mxu0 0
    %1650 = vmatpush1.bf16.msra.mxu0 0
    %1651 = vmatprep.subr.bf16.mxu0 0
    %1652 = vmatpush1.bf16.msra.mxu0 0
    %1653 = vmatprep.subr.bf16.mxu0 0
    %1654 = vmatpush1.bf16.msra.mxu0 0
    %1655 = vmatprep.subr.bf16.mxu0 0
    %1656 = vmatpush1.bf16.msra.mxu0 0
    %1657 = vmatprep.subr.bf16.mxu0 0
    %1658 = vmatpush1.bf16.msra.mxu0 0
    %1659 = vmatprep.subr.bf16.mxu0 0
    %1660 = vmatpush1.bf16.msra.mxu0 0
    %1661 = vmatprep.subr.bf16.mxu0 0
    %1662 = vmatpush1.bf16.msra.mxu0 0
    %1663 = vmatprep.subr.bf16.mxu0 0
    %1664 = vmatpush1.bf16.msra.mxu0 0
    %1665 = vmatprep.subr.bf16.mxu0 0
    %1666 = vmatpush1.bf16.msra.mxu0 0
    %1667 = vmatprep.subr.bf16.mxu0 0
    %1668 = vmatpush1.bf16.msra.mxu0 0
    %1669 = vmatprep.mubr.bf16.mxu0 0
    %1670 = vmatmul.mubr.bf16.gmra.mrb[0].mxu0 %v1329
    %v1671 = vpop.f32.mrb[0].mxu0
    %v1672 = vadd.f32 %v246, %v1671
    %v1673 = vpop.f32.mrb[0].mxu0
    %v1674 = vpop.f32.mrb[0].mxu0
    %v1675 = vpop.f32.mrb[0].mxu0
    %1676 = vdwg.mxu0
    %1677 = vmatprep.subr.bf16.mxu0 0
    %1678 = vmatpush1.bf16.msra.mxu0 %v314
    %1679 = vmatprep.subr.bf16.mxu0 0
    %1680 = vmatpush1.bf16.msra.mxu0 %v315
    %1681 = vmatprep.subr.bf16.mxu0 0
    %1682 = vmatpush1.bf16.msra.mxu0 0
    %1683 = vmatprep.subr.bf16.mxu0 0
    %1684 = vmatpush1.bf16.msra.mxu0 0
    %1685 = vmatprep.subr.bf16.mxu0 0
    %1686 = vmatpush1.bf16.msra.mxu0 0
    %1687 = vmatprep.subr.bf16.mxu0 0
    %1688 = vmatpush1.bf16.msra.mxu0 0
    %1689 = vmatprep.subr.bf16.mxu0 0
    %1690 = vmatpush1.bf16.msra.mxu0 0
    %1691 = vmatprep.subr.bf16.mxu0 0
    %1692 = vmatpush1.bf16.msra.mxu0 0
    %1693 = vmatprep.subr.bf16.mxu0 0
    %1694 = vmatpush1.bf16.msra.mxu0 0
    %1695 = vmatprep.subr.bf16.mxu0 0
    %1696 = vmatpush1.bf16.msra.mxu0 0
    %1697 = vmatprep.subr.bf16.mxu0 0
    %1698 = vmatpush1.bf16.msra.mxu0 0
    %1699 = vmatprep.subr.bf16.mxu0 0
    %1700 = vmatpush1.bf16.msra.mxu0 0
    %1701 = vmatprep.subr.bf16.mxu0 0
    %1702 = vmatpush1.bf16.msra.mxu0 0
    %1703 = vmatprep.subr.bf16.mxu0 0
    %1704 = vmatpush1.bf16.msra.mxu0 0
    %1705 = vmatprep.subr.bf16.mxu0 0
    %1706 = vmatpush1.bf16.msra.mxu0 0
    %1707 = vmatprep.subr.bf16.mxu0 0
    %1708 = vmatpush1.bf16.msra.mxu0 0
    %1709 = vmatprep.mubr.bf16.mxu0 0
    %1710 = vmatmul.mubr.bf16.gmra.mrb[0].mxu0 %v1329
    %v1711 = vpop.f32.mrb[0].mxu0
    %v1712 = vadd.f32 %v304, %v1711
    %v1713 = vpop.f32.mrb[0].mxu0
    %v1714 = vpop.f32.mrb[0].mxu0
    %v1715 = vpop.f32.mrb[0].mxu0
    %1716 = vdwg.mxu0
    %s1717 = scalar_lea.vmem [#allocation7], 24
    %v1718 = vld [vmem:[%s1717] sm:$0xff]
    %v1719 = vadd.f32 %v1718, %v1632
    %v1720 = vxor.u32 %v1719, 2147483648
    %v1721 = vmul.f32 %v1720, 1.442695
    %v1722 = vpow.pop %v1721
    %v1723 = vadd.f32 %v1722, 1.0
    %v1724 = vrcp.pop %v1723
    %v1725 = vmul.f32 1.0, %v1724
    %s1726 = scalar_lea.vmem [#allocation9], 24
    %v1727 = vld [vmem:[%s1726] sm:$0xff]
    %v1728 = vadd.f32 %v1727, %v1672
    %v1729 = vxor.u32 %v1728, 2147483648
    %v1730 = vmul.f32 %v1729, 1.442695
    %v1731 = vpow.pop %v1730
    %v1732 = vadd.f32 %v1731, 1.0
    %v1733 = vrcp.pop %v1732
    %v1734 = vmul.f32 1.0, %v1733
    %s1735 = scalar_lea.vmem [#allocation11], 24
    %v1736 = vld [vmem:[%s1735] sm:$0xff]
    %v1737 = vmul.f32 %v1725, %v1712
    %v1738 = vadd.f32 %v1736, %v1737
    %v1739 = vtanh.pop %v1738
    %v1740 = vsub.f32 1.0, %v1734
    %v1741 = vmul.f32 %v1740, %v1739
    %v1742 = vmul.f32 %v1734, %v1325
    %v1743 = vadd.f32 %v1741, %v1742
    %v1744 = vpack.c.bf16 %v1743, %v1743
    %v1745 = vpack.c.bf16 %v1594, %v1594
    %v1747 = vsel %vm198, %v1744, 0
    %1749 = vmatprep.subr.bf16.mxu0 0
    %1750 = vmatpush1.bf16.msra.mxu0 %v398
    %1751 = vmatprep.subr.bf16.mxu0 0
    %1752 = vmatpush1.bf16.msra.mxu0 %v399
    %1753 = vmatprep.subr.bf16.mxu0 0
    %1754 = vmatpush1.bf16.msra.mxu0 0
    %1755 = vmatprep.subr.bf16.mxu0 0
    %1756 = vmatpush1.bf16.msra.mxu0 0
    %1757 = vmatprep.subr.bf16.mxu0 0
    %1758 = vmatpush1.bf16.msra.mxu0 0
    %1759 = vmatprep.subr.bf16.mxu0 0
    %1760 = vmatpush1.bf16.msra.mxu0 0
    %1761 = vmatprep.subr.bf16.mxu0 0
    %1762 = vmatpush1.bf16.msra.mxu0 0
    %1763 = vmatprep.subr.bf16.mxu0 0
    %1764 = vmatpush1.bf16.msra.mxu0 0
    %1765 = vmatprep.subr.bf16.mxu0 0
    %1766 = vmatpush1.bf16.msra.mxu0 0
    %1767 = vmatprep.subr.bf16.mxu0 0
    %1768 = vmatpush1.bf16.msra.mxu0 0
    %1769 = vmatprep.subr.bf16.mxu0 0
    %1770 = vmatpush1.bf16.msra.mxu0 0
    %1771 = vmatprep.subr.bf16.mxu0 0
    %1772 = vmatpush1.bf16.msra.mxu0 0
    %1773 = vmatprep.subr.bf16.mxu0 0
    %1774 = vmatpush1.bf16.msra.mxu0 0
    %1775 = vmatprep.subr.bf16.mxu0 0
    %1776 = vmatpush1.bf16.msra.mxu0 0
    %1777 = vmatprep.subr.bf16.mxu0 0
    %1778 = vmatpush1.bf16.msra.mxu0 0
    %1779 = vmatprep.subr.bf16.mxu0 0
    %1780 = vmatpush1.bf16.msra.mxu0 0
    %1781 = vmatprep.mubr.bf16.mxu0 0
    %1782 = vmatmul.mubr.bf16.gmra.mrb[0].mxu0 %v1747
    %v1783 = vpop.f32.mrb[0].mxu0
    %v1784 = vadd.f32 %v388, %v1783
    %v1785 = vpop.f32.mrb[0].mxu0
    %v1786 = vpop.f32.mrb[0].mxu0
    %v1787 = vpop.f32.mrb[0].mxu0
    %1788 = vdwg.mxu0
    %1789 = vmatprep.subr.bf16.mxu0 0
    %1790 = vmatpush1.bf16.msra.mxu0 %v459
    %1791 = vmatprep.subr.bf16.mxu0 0
    %1792 = vmatpush1.bf16.msra.mxu0 %v460
    %1793 = vmatprep.subr.bf16.mxu0 0
    %1794 = vmatpush1.bf16.msra.mxu0 0
    %1795 = vmatprep.subr.bf16.mxu0 0
    %1796 = vmatpush1.bf16.msra.mxu0 0
    %1797 = vmatprep.subr.bf16.mxu0 0
    %1798 = vmatpush1.bf16.msra.mxu0 0
    %1799 = vmatprep.subr.bf16.mxu0 0
    %1800 = vmatpush1.bf16.msra.mxu0 0
    %1801 = vmatprep.subr.bf16.mxu0 0
    %1802 = vmatpush1.bf16.msra.mxu0 0
    %1803 = vmatprep.subr.bf16.mxu0 0
    %1804 = vmatpush1.bf16.msra.mxu0 0
    %1805 = vmatprep.subr.bf16.mxu0 0
    %1806 = vmatpush1.bf16.msra.mxu0 0
    %1807 = vmatprep.subr.bf16.mxu0 0
    %1808 = vmatpush1.bf16.msra.mxu0 0
    %1809 = vmatprep.subr.bf16.mxu0 0
    %1810 = vmatpush1.bf16.msra.mxu0 0
    %1811 = vmatprep.subr.bf16.mxu0 0
    %1812 = vmatpush1.bf16.msra.mxu0 0
    %1813 = vmatprep.subr.bf16.mxu0 0
    %1814 = vmatpush1.bf16.msra.mxu0 0
    %1815 = vmatprep.subr.bf16.mxu0 0
    %1816 = vmatpush1.bf16.msra.mxu0 0
    %1817 = vmatprep.subr.bf16.mxu0 0
    %1818 = vmatpush1.bf16.msra.mxu0 0
    %1819 = vmatprep.subr.bf16.mxu0 0
    %1820 = vmatpush1.bf16.msra.mxu0 0
    %1821 = vmatprep.mubr.bf16.mxu0 0
    %1822 = vmatmul.mubr.bf16.gmra.mrb[0].mxu0 %v1747
    %v1823 = vpop.f32.mrb[0].mxu0
    %v1824 = vadd.f32 %v449, %v1823
    %v1825 = vpop.f32.mrb[0].mxu0
    %v1826 = vpop.f32.mrb[0].mxu0
    %v1827 = vpop.f32.mrb[0].mxu0
    %1828 = vdwg.mxu0
    %1829 = vmatprep.subr.bf16.mxu0 0
    %1830 = vmatpush1.bf16.msra.mxu0 %v517
    %1831 = vmatprep.subr.bf16.mxu0 0
    %1832 = vmatpush1.bf16.msra.mxu0 %v518
    %1833 = vmatprep.subr.bf16.mxu0 0
    %1834 = vmatpush1.bf16.msra.mxu0 0
    %1835 = vmatprep.subr.bf16.mxu0 0
    %1836 = vmatpush1.bf16.msra.mxu0 0
    %1837 = vmatprep.subr.bf16.mxu0 0
    %1838 = vmatpush1.bf16.msra.mxu0 0
    %1839 = vmatprep.subr.bf16.mxu0 0
    %1840 = vmatpush1.bf16.msra.mxu0 0
    %1841 = vmatprep.subr.bf16.mxu0 0
    %1842 = vmatpush1.bf16.msra.mxu0 0
    %1843 = vmatprep.subr.bf16.mxu0 0
    %1844 = vmatpush1.bf16.msra.mxu0 0
    %1845 = vmatprep.subr.bf16.mxu0 0
    %1846 = vmatpush1.bf16.msra.mxu0 0
    %1847 = vmatprep.subr.bf16.mxu0 0
    %1848 = vmatpush1.bf16.msra.mxu0 0
    %1849 = vmatprep.subr.bf16.mxu0 0
    %1850 = vmatpush1.bf16.msra.mxu0 0
    %1851 = vmatprep.subr.bf16.mxu0 0
    %1852 = vmatpush1.bf16.msra.mxu0 0
    %1853 = vmatprep.subr.bf16.mxu0 0
    %1854 = vmatpush1.bf16.msra.mxu0 0
    %1855 = vmatprep.subr.bf16.mxu0 0
    %1856 = vmatpush1.bf16.msra.mxu0 0
    %1857 = vmatprep.subr.bf16.mxu0 0
    %1858 = vmatpush1.bf16.msra.mxu0 0
    %1859 = vmatprep.subr.bf16.mxu0 0
    %1860 = vmatpush1.bf16.msra.mxu0 0
    %1861 = vmatprep.mubr.bf16.mxu0 0
    %1862 = vmatmul.mubr.bf16.gmra.mrb[0].mxu0 %v1747
    %v1863 = vpop.f32.mrb[0].mxu0
    %v1864 = vadd.f32 %v507, %v1863
    %v1865 = vpop.f32.mrb[0].mxu0
    %v1866 = vpop.f32.mrb[0].mxu0
    %v1867 = vpop.f32.mrb[0].mxu0
    %1868 = vdwg.mxu0
    %v1870 = vsel %vm198, %v1745, 0
    %1872 = vmatprep.subr.bf16.mxu0 0
    %1873 = vmatpush1.bf16.msra.mxu0 %v575
    %1874 = vmatprep.subr.bf16.mxu0 0
    %1875 = vmatpush1.bf16.msra.mxu0 %v576
    %1876 = vmatprep.subr.bf16.mxu0 0
    %1877 = vmatpush1.bf16.msra.mxu0 0
    %1878 = vmatprep.subr.bf16.mxu0 0
    %1879 = vmatpush1.bf16.msra.mxu0 0
    %1880 = vmatprep.subr.bf16.mxu0 0
    %1881 = vmatpush1.bf16.msra.mxu0 0
    %1882 = vmatprep.subr.bf16.mxu0 0
    %1883 = vmatpush1.bf16.msra.mxu0 0
    %1884 = vmatprep.subr.bf16.mxu0 0
    %1885 = vmatpush1.bf16.msra.mxu0 0
    %1886 = vmatprep.subr.bf16.mxu0 0
    %1887 = vmatpush1.bf16.msra.mxu0 0
    %1888 = vmatprep.subr.bf16.mxu0 0
    %1889 = vmatpush1.bf16.msra.mxu0 0
    %1890 = vmatprep.subr.bf16.mxu0 0
    %1891 = vmatpush1.bf16.msra.mxu0 0
    %1892 = vmatprep.subr.bf16.mxu0 0
    %1893 = vmatpush1.bf16.msra.mxu0 0
    %1894 = vmatprep.subr.bf16.mxu0 0
    %1895 = vmatpush1.bf16.msra.mxu0 0
    %1896 = vmatprep.subr.bf16.mxu0 0
    %1897 = vmatpush1.bf16.msra.mxu0 0
    %1898 = vmatprep.subr.bf16.mxu0 0
    %1899 = vmatpush1.bf16.msra.mxu0 0
    %1900 = vmatprep.subr.bf16.mxu0 0
    %1901 = vmatpush1.bf16.msra.mxu0 0
    %1902 = vmatprep.subr.bf16.mxu0 0
    %1903 = vmatpush1.bf16.msra.mxu0 0
    %1904 = vmatprep.mubr.bf16.mxu0 0
    %1905 = vmatmul.mubr.bf16.gmra.mrb[0].mxu0 %v1870
    %v1906 = vpop.f32.mrb[0].mxu0
    %v1907 = vadd.f32 %v565, %v1906
    %v1908 = vpop.f32.mrb[0].mxu0
    %v1909 = vpop.f32.mrb[0].mxu0
    %v1910 = vpop.f32.mrb[0].mxu0
    %1911 = vdwg.mxu0
    %1912 = vmatprep.subr.bf16.mxu0 0
    %1913 = vmatpush1.bf16.msra.mxu0 %v636
    %1914 = vmatprep.subr.bf16.mxu0 0
    %1915 = vmatpush1.bf16.msra.mxu0 %v637
    %1916 = vmatprep.subr.bf16.mxu0 0
    %1917 = vmatpush1.bf16.msra.mxu0 0
    %1918 = vmatprep.subr.bf16.mxu0 0
    %1919 = vmatpush1.bf16.msra.mxu0 0
    %1920 = vmatprep.subr.bf16.mxu0 0
    %1921 = vmatpush1.bf16.msra.mxu0 0
    %1922 = vmatprep.subr.bf16.mxu0 0
    %1923 = vmatpush1.bf16.msra.mxu0 0
    %1924 = vmatprep.subr.bf16.mxu0 0
    %1925 = vmatpush1.bf16.msra.mxu0 0
    %1926 = vmatprep.subr.bf16.mxu0 0
    %1927 = vmatpush1.bf16.msra.mxu0 0
    %1928 = vmatprep.subr.bf16.mxu0 0
    %1929 = vmatpush1.bf16.msra.mxu0 0
    %1930 = vmatprep.subr.bf16.mxu0 0
    %1931 = vmatpush1.bf16.msra.mxu0 0
    %1932 = vmatprep.subr.bf16.mxu0 0
    %1933 = vmatpush1.bf16.msra.mxu0 0
    %1934 = vmatprep.subr.bf16.mxu0 0
    %1935 = vmatpush1.bf16.msra.mxu0 0
    %1936 = vmatprep.subr.bf16.mxu0 0
    %1937 = vmatpush1.bf16.msra.mxu0 0
    %1938 = vmatprep.subr.bf16.mxu0 0
    %1939 = vmatpush1.bf16.msra.mxu0 0
    %1940 = vmatprep.subr.bf16.mxu0 0
    %1941 = vmatpush1.bf16.msra.mxu0 0
    %1942 = vmatprep.subr.bf16.mxu0 0
    %1943 = vmatpush1.bf16.msra.mxu0 0
    %1944 = vmatprep.mubr.bf16.mxu0 0
    %1945 = vmatmul.mubr.bf16.gmra.mrb[0].mxu0 %v1870
    %v1946 = vpop.f32.mrb[0].mxu0
    %v1947 = vadd.f32 %v626, %v1946
    %v1948 = vpop.f32.mrb[0].mxu0
    %v1949 = vpop.f32.mrb[0].mxu0
    %v1950 = vpop.f32.mrb[0].mxu0
    %1951 = vdwg.mxu0
    %1952 = vmatprep.subr.bf16.mxu0 0
    %1953 = vmatpush1.bf16.msra.mxu0 %v694
    %1954 = vmatprep.subr.bf16.mxu0 0
    %1955 = vmatpush1.bf16.msra.mxu0 %v695
    %1956 = vmatprep.subr.bf16.mxu0 0
    %1957 = vmatpush1.bf16.msra.mxu0 0
    %1958 = vmatprep.subr.bf16.mxu0 0
    %1959 = vmatpush1.bf16.msra.mxu0 0
    %1960 = vmatprep.subr.bf16.mxu0 0
    %1961 = vmatpush1.bf16.msra.mxu0 0
    %1962 = vmatprep.subr.bf16.mxu0 0
    %1963 = vmatpush1.bf16.msra.mxu0 0
    %1964 = vmatprep.subr.bf16.mxu0 0
    %1965 = vmatpush1.bf16.msra.mxu0 0
    %1966 = vmatprep.subr.bf16.mxu0 0
    %1967 = vmatpush1.bf16.msra.mxu0 0
    %1968 = vmatprep.subr.bf16.mxu0 0
    %1969 = vmatpush1.bf16.msra.mxu0 0
    %1970 = vmatprep.subr.bf16.mxu0 0
    %1971 = vmatpush1.bf16.msra.mxu0 0
    %1972 = vmatprep.subr.bf16.mxu0 0
    %1973 = vmatpush1.bf16.msra.mxu0 0
    %1974 = vmatprep.subr.bf16.mxu0 0
    %1975 = vmatpush1.bf16.msra.mxu0 0
    %1976 = vmatprep.subr.bf16.mxu0 0
    %1977 = vmatpush1.bf16.msra.mxu0 0
    %1978 = vmatprep.subr.bf16.mxu0 0
    %1979 = vmatpush1.bf16.msra.mxu0 0
    %1980 = vmatprep.subr.bf16.mxu0 0
    %1981 = vmatpush1.bf16.msra.mxu0 0
    %1982 = vmatprep.subr.bf16.mxu0 0
    %1983 = vmatpush1.bf16.msra.mxu0 0
    %1984 = vmatprep.mubr.bf16.mxu0 0
    %1985 = vmatmul.mubr.bf16.gmra.mrb[0].mxu0 %v1870
    %v1986 = vpop.f32.mrb[0].mxu0
    %v1987 = vadd.f32 %v684, %v1986
    %v1988 = vpop.f32.mrb[0].mxu0
    %v1989 = vpop.f32.mrb[0].mxu0
    %v1990 = vpop.f32.mrb[0].mxu0
    %1991 = vdwg.mxu0
    %v1992 = vadd.f32 %v1784, %v1907
    %v1993 = vxor.u32 %v1992, 2147483648
    %v1994 = vmul.f32 %v1993, 1.442695
    %v1995 = vpow.pop %v1994
    %v1996 = vadd.f32 %v1995, 1.0
    %v1997 = vrcp.pop %v1996
    %v1998 = vmul.f32 1.0, %v1997
    %v1999 = vadd.f32 %v1824, %v1947
    %v2000 = vxor.u32 %v1999, 2147483648
    %v2001 = vmul.f32 %v2000, 1.442695
    %v2002 = vpow.pop %v2001
    %v2003 = vadd.f32 %v2002, 1.0
    %v2004 = vrcp.pop %v2003
    %v2005 = vmul.f32 1.0, %v2004
    %v2006 = vmul.f32 %v1998, %v1987
    %v2007 = vadd.f32 %v1864, %v2006
    %v2008 = vtanh.pop %v2007
    %v2009 = vsub.f32 1.0, %v2005
    %v2010 = vmul.f32 %v2009, %v2008
    %v2011 = vmul.f32 %v2005, %v1594
    %v2012 = vadd.f32 %v2010, %v2011
    %v2013 = vmax.f32 %v1595, %v2012
    %v2014 = vadd.f32 %v1596, %v2012
    %2015 = vmatprep.subr.bf16.mxu0 0
    %2016 = vmatpush1.bf16.msra.mxu0 %v194
    %2017 = vmatprep.subr.bf16.mxu0 0
    %2018 = vmatpush1.bf16.msra.mxu0 %v195
    %2019 = vmatprep.subr.bf16.mxu0 0
    %2020 = vmatpush1.bf16.msra.mxu0 0
    %2021 = vmatprep.subr.bf16.mxu0 0
    %2022 = vmatpush1.bf16.msra.mxu0 0
    %2023 = vmatprep.subr.bf16.mxu0 0
    %2024 = vmatpush1.bf16.msra.mxu0 0
    %2025 = vmatprep.subr.bf16.mxu0 0
    %2026 = vmatpush1.bf16.msra.mxu0 0
    %2027 = vmatprep.subr.bf16.mxu0 0
    %2028 = vmatpush1.bf16.msra.mxu0 0
    %2029 = vmatprep.subr.bf16.mxu0 0
    %2030 = vmatpush1.bf16.msra.mxu0 0
    %2031 = vmatprep.subr.bf16.mxu0 0
    %2032 = vmatpush1.bf16.msra.mxu0 0
    %2033 = vmatprep.subr.bf16.mxu0 0
    %2034 = vmatpush1.bf16.msra.mxu0 0
    %2035 = vmatprep.subr.bf16.mxu0 0
    %2036 = vmatpush1.bf16.msra.mxu0 0
    %2037 = vmatprep.subr.bf16.mxu0 0
    %2038 = vmatpush1.bf16.msra.mxu0 0
    %2039 = vmatprep.subr.bf16.mxu0 0
    %2040 = vmatpush1.bf16.msra.mxu0 0
    %2041 = vmatprep.subr.bf16.mxu0 0
    %2042 = vmatpush1.bf16.msra.mxu0 0
    %2043 = vmatprep.subr.bf16.mxu0 0
    %2044 = vmatpush1.bf16.msra.mxu0 0
    %2045 = vmatprep.subr.bf16.mxu0 0
    %2046 = vmatpush1.bf16.msra.mxu0 0
    %2047 = vmatprep.mubr.bf16.mxu0 0
    %2048 = vmatmul.mubr.bf16.gmra.mrb[0].mxu0 %v1747
    %v2049 = vpop.f32.mrb[0].mxu0
    %v2050 = vadd.f32 %v184, %v2049
    %v2051 = vpop.f32.mrb[0].mxu0
    %v2052 = vpop.f32.mrb[0].mxu0
    %v2053 = vpop.f32.mrb[0].mxu0
    %2054 = vdwg.mxu0
    %2055 = vmatprep.subr.bf16.mxu0 0
    %2056 = vmatpush1.bf16.msra.mxu0 %v256
    %2057 = vmatprep.subr.bf16.mxu0 0
    %2058 = vmatpush1.bf16.msra.mxu0 %v257
    %2059 = vmatprep.subr.bf16.mxu0 0
    %2060 = vmatpush1.bf16.msra.mxu0 0
    %2061 = vmatprep.subr.bf16.mxu0 0
    %2062 = vmatpush1.bf16.msra.mxu0 0
    %2063 = vmatprep.subr.bf16.mxu0 0
    %2064 = vmatpush1.bf16.msra.mxu0 0
    %2065 = vmatprep.subr.bf16.mxu0 0
    %2066 = vmatpush1.bf16.msra.mxu0 0
    %2067 = vmatprep.subr.bf16.mxu0 0
    %2068 = vmatpush1.bf16.msra.mxu0 0
    %2069 = vmatprep.subr.bf16.mxu0 0
    %2070 = vmatpush1.bf16.msra.mxu0 0
    %2071 = vmatprep.subr.bf16.mxu0 0
    %2072 = vmatpush1.bf16.msra.mxu0 0
    %2073 = vmatprep.subr.bf16.mxu0 0
    %2074 = vmatpush1.bf16.msra.mxu0 0
    %2075 = vmatprep.subr.bf16.mxu0 0
    %2076 = vmatpush1.bf16.msra.mxu0 0
    %2077 = vmatprep.subr.bf16.mxu0 0
    %2078 = vmatpush1.bf16.msra.mxu0 0
    %2079 = vmatprep.subr.bf16.mxu0 0
    %2080 = vmatpush1.bf16.msra.mxu0 0
    %2081 = vmatprep.subr.bf16.mxu0 0
    %2082 = vmatpush1.bf16.msra.mxu0 0
    %2083 = vmatprep.subr.bf16.mxu0 0
    %2084 = vmatpush1.bf16.msra.mxu0 0
    %2085 = vmatprep.subr.bf16.mxu0 0
    %2086 = vmatpush1.bf16.msra.mxu0 0
    %2087 = vmatprep.mubr.bf16.mxu0 0
    %2088 = vmatmul.mubr.bf16.gmra.mrb[0].mxu0 %v1747
    %v2089 = vpop.f32.mrb[0].mxu0
    %v2090 = vadd.f32 %v246, %v2089
    %v2091 = vpop.f32.mrb[0].mxu0
    %v2092 = vpop.f32.mrb[0].mxu0
    %v2093 = vpop.f32.mrb[0].mxu0
    %2094 = vdwg.mxu0
    %2095 = vmatprep.subr.bf16.mxu0 0
    %2096 = vmatpush1.bf16.msra.mxu0 %v314
    %2097 = vmatprep.subr.bf16.mxu0 0
    %2098 = vmatpush1.bf16.msra.mxu0 %v315
    %2099 = vmatprep.subr.bf16.mxu0 0
    %2100 = vmatpush1.bf16.msra.mxu0 0
    %2101 = vmatprep.subr.bf16.mxu0 0
    %2102 = vmatpush1.bf16.msra.mxu0 0
    %2103 = vmatprep.subr.bf16.mxu0 0
    %2104 = vmatpush1.bf16.msra.mxu0 0
    %2105 = vmatprep.subr.bf16.mxu0 0
    %2106 = vmatpush1.bf16.msra.mxu0 0
    %2107 = vmatprep.subr.bf16.mxu0 0
    %2108 = vmatpush1.bf16.msra.mxu0 0
    %2109 = vmatprep.subr.bf16.mxu0 0
    %2110 = vmatpush1.bf16.msra.mxu0 0
    %2111 = vmatprep.subr.bf16.mxu0 0
    %2112 = vmatpush1.bf16.msra.mxu0 0
    %2113 = vmatprep.subr.bf16.mxu0 0
    %2114 = vmatpush1.bf16.msra.mxu0 0
    %2115 = vmatprep.subr.bf16.mxu0 0
    %2116 = vmatpush1.bf16.msra.mxu0 0
    %2117 = vmatprep.subr.bf16.mxu0 0
    %2118 = vmatpush1.bf16.msra.mxu0 0
    %2119 = vmatprep.subr.bf16.mxu0 0
    %2120 = vmatpush1.bf16.msra.mxu0 0
    %2121 = vmatprep.subr.bf16.mxu0 0
    %2122 = vmatpush1.bf16.msra.mxu0 0
    %2123 = vmatprep.subr.bf16.mxu0 0
    %2124 = vmatpush1.bf16.msra.mxu0 0
    %2125 = vmatprep.subr.bf16.mxu0 0
    %2126 = vmatpush1.bf16.msra.mxu0 0
    %2127 = vmatprep.mubr.bf16.mxu0 0
    %2128 = vmatmul.mubr.bf16.gmra.mrb[0].mxu0 %v1747
    %v2129 = vpop.f32.mrb[0].mxu0
    %v2130 = vadd.f32 %v304, %v2129
    %v2131 = vpop.f32.mrb[0].mxu0
    %v2132 = vpop.f32.mrb[0].mxu0
    %v2133 = vpop.f32.mrb[0].mxu0
    %2134 = vdwg.mxu0
    %s2135 = scalar_lea.vmem [#allocation7], 32
    %v2136 = vld [vmem:[%s2135] sm:$0xff]
    %v2137 = vadd.f32 %v2136, %v2050
    %v2138 = vxor.u32 %v2137, 2147483648
    %v2139 = vmul.f32 %v2138, 1.442695
    %v2140 = vpow.pop %v2139
    %v2141 = vadd.f32 %v2140, 1.0
    %v2142 = vrcp.pop %v2141
    %v2143 = vmul.f32 1.0, %v2142
    %s2144 = scalar_lea.vmem [#allocation9], 32
    %v2145 = vld [vmem:[%s2144] sm:$0xff]
    %v2146 = vadd.f32 %v2145, %v2090
    %v2147 = vxor.u32 %v2146, 2147483648
    %v2148 = vmul.f32 %v2147, 1.442695
    %v2149 = vpow.pop %v2148
    %v2150 = vadd.f32 %v2149, 1.0
    %v2151 = vrcp.pop %v2150
    %v2152 = vmul.f32 1.0, %v2151
    %s2153 = scalar_lea.vmem [#allocation11], 32
    %v2154 = vld [vmem:[%s2153] sm:$0xff]
    %v2155 = vmul.f32 %v2143, %v2130
    %v2156 = vadd.f32 %v2154, %v2155
    %v2157 = vtanh.pop %v2156
    %v2158 = vsub.f32 1.0, %v2152
    %v2159 = vmul.f32 %v2158, %v2157
    %v2160 = vmul.f32 %v2152, %v1743
    %v2161 = vadd.f32 %v2159, %v2160
    %v2162 = vpack.c.bf16 %v2161, %v2161
    %v2163 = vpack.c.bf16 %v2012, %v2012
    %v2165 = vsel %vm198, %v2162, 0
    %2167 = vmatprep.subr.bf16.mxu0 0
    %2168 = vmatpush1.bf16.msra.mxu0 %v398
    %2169 = vmatprep.subr.bf16.mxu0 0
    %2170 = vmatpush1.bf16.msra.mxu0 %v399
    %2171 = vmatprep.subr.bf16.mxu0 0
    %2172 = vmatpush1.bf16.msra.mxu0 0
    %2173 = vmatprep.subr.bf16.mxu0 0
    %2174 = vmatpush1.bf16.msra.mxu0 0
    %2175 = vmatprep.subr.bf16.mxu0 0
    %2176 = vmatpush1.bf16.msra.mxu0 0
    %2177 = vmatprep.subr.bf16.mxu0 0
    %2178 = vmatpush1.bf16.msra.mxu0 0
    %2179 = vmatprep.subr.bf16.mxu0 0
    %2180 = vmatpush1.bf16.msra.mxu0 0
    %2181 = vmatprep.subr.bf16.mxu0 0
    %2182 = vmatpush1.bf16.msra.mxu0 0
    %2183 = vmatprep.subr.bf16.mxu0 0
    %2184 = vmatpush1.bf16.msra.mxu0 0
    %2185 = vmatprep.subr.bf16.mxu0 0
    %2186 = vmatpush1.bf16.msra.mxu0 0
    %2187 = vmatprep.subr.bf16.mxu0 0
    %2188 = vmatpush1.bf16.msra.mxu0 0
    %2189 = vmatprep.subr.bf16.mxu0 0
    %2190 = vmatpush1.bf16.msra.mxu0 0
    %2191 = vmatprep.subr.bf16.mxu0 0
    %2192 = vmatpush1.bf16.msra.mxu0 0
    %2193 = vmatprep.subr.bf16.mxu0 0
    %2194 = vmatpush1.bf16.msra.mxu0 0
    %2195 = vmatprep.subr.bf16.mxu0 0
    %2196 = vmatpush1.bf16.msra.mxu0 0
    %2197 = vmatprep.subr.bf16.mxu0 0
    %2198 = vmatpush1.bf16.msra.mxu0 0
    %2199 = vmatprep.mubr.bf16.mxu0 0
    %2200 = vmatmul.mubr.bf16.gmra.mrb[0].mxu0 %v2165
    %v2201 = vpop.f32.mrb[0].mxu0
    %v2202 = vadd.f32 %v388, %v2201
    %v2203 = vpop.f32.mrb[0].mxu0
    %v2204 = vpop.f32.mrb[0].mxu0
    %v2205 = vpop.f32.mrb[0].mxu0
    %2206 = vdwg.mxu0
    %2207 = vmatprep.subr.bf16.mxu0 0
    %2208 = vmatpush1.bf16.msra.mxu0 %v459
    %2209 = vmatprep.subr.bf16.mxu0 0
    %2210 = vmatpush1.bf16.msra.mxu0 %v460
    %2211 = vmatprep.subr.bf16.mxu0 0
    %2212 = vmatpush1.bf16.msra.mxu0 0
    %2213 = vmatprep.subr.bf16.mxu0 0
    %2214 = vmatpush1.bf16.msra.mxu0 0
    %2215 = vmatprep.subr.bf16.mxu0 0
    %2216 = vmatpush1.bf16.msra.mxu0 0
    %2217 = vmatprep.subr.bf16.mxu0 0
    %2218 = vmatpush1.bf16.msra.mxu0 0
    %2219 = vmatprep.subr.bf16.mxu0 0
    %2220 = vmatpush1.bf16.msra.mxu0 0
    %2221 = vmatprep.subr.bf16.mxu0 0
    %2222 = vmatpush1.bf16.msra.mxu0 0
    %2223 = vmatprep.subr.bf16.mxu0 0
    %2224 = vmatpush1.bf16.msra.mxu0 0
    %2225 = vmatprep.subr.bf16.mxu0 0
    %2226 = vmatpush1.bf16.msra.mxu0 0
    %2227 = vmatprep.subr.bf16.mxu0 0
    %2228 = vmatpush1.bf16.msra.mxu0 0
    %2229 = vmatprep.subr.bf16.mxu0 0
    %2230 = vmatpush1.bf16.msra.mxu0 0
    %2231 = vmatprep.subr.bf16.mxu0 0
    %2232 = vmatpush1.bf16.msra.mxu0 0
    %2233 = vmatprep.subr.bf16.mxu0 0
    %2234 = vmatpush1.bf16.msra.mxu0 0
    %2235 = vmatprep.subr.bf16.mxu0 0
    %2236 = vmatpush1.bf16.msra.mxu0 0
    %2237 = vmatprep.subr.bf16.mxu0 0
    %2238 = vmatpush1.bf16.msra.mxu0 0
    %2239 = vmatprep.mubr.bf16.mxu0 0
    %2240 = vmatmul.mubr.bf16.gmra.mrb[0].mxu0 %v2165
    %v2241 = vpop.f32.mrb[0].mxu0
    %v2242 = vadd.f32 %v449, %v2241
    %v2243 = vpop.f32.mrb[0].mxu0
    %v2244 = vpop.f32.mrb[0].mxu0
    %v2245 = vpop.f32.mrb[0].mxu0
    %2246 = vdwg.mxu0
    %2247 = vmatprep.subr.bf16.mxu0 0
    %2248 = vmatpush1.bf16.msra.mxu0 %v517
    %2249 = vmatprep.subr.bf16.mxu0 0
    %2250 = vmatpush1.bf16.msra.mxu0 %v518
    %2251 = vmatprep.subr.bf16.mxu0 0
    %2252 = vmatpush1.bf16.msra.mxu0 0
    %2253 = vmatprep.subr.bf16.mxu0 0
    %2254 = vmatpush1.bf16.msra.mxu0 0
    %2255 = vmatprep.subr.bf16.mxu0 0
    %2256 = vmatpush1.bf16.msra.mxu0 0
    %2257 = vmatprep.subr.bf16.mxu0 0
    %2258 = vmatpush1.bf16.msra.mxu0 0
    %2259 = vmatprep.subr.bf16.mxu0 0
    %2260 = vmatpush1.bf16.msra.mxu0 0
    %2261 = vmatprep.subr.bf16.mxu0 0
    %2262 = vmatpush1.bf16.msra.mxu0 0
    %2263 = vmatprep.subr.bf16.mxu0 0
    %2264 = vmatpush1.bf16.msra.mxu0 0
    %2265 = vmatprep.subr.bf16.mxu0 0
    %2266 = vmatpush1.bf16.msra.mxu0 0
    %2267 = vmatprep.subr.bf16.mxu0 0
    %2268 = vmatpush1.bf16.msra.mxu0 0
    %2269 = vmatprep.subr.bf16.mxu0 0
    %2270 = vmatpush1.bf16.msra.mxu0 0
    %2271 = vmatprep.subr.bf16.mxu0 0
    %2272 = vmatpush1.bf16.msra.mxu0 0
    %2273 = vmatprep.subr.bf16.mxu0 0
    %2274 = vmatpush1.bf16.msra.mxu0 0
    %2275 = vmatprep.subr.bf16.mxu0 0
    %2276 = vmatpush1.bf16.msra.mxu0 0
    %2277 = vmatprep.subr.bf16.mxu0 0
    %2278 = vmatpush1.bf16.msra.mxu0 0
    %2279 = vmatprep.mubr.bf16.mxu0 0
    %2280 = vmatmul.mubr.bf16.gmra.mrb[0].mxu0 %v2165
    %v2281 = vpop.f32.mrb[0].mxu0
    %v2282 = vadd.f32 %v507, %v2281
    %v2283 = vpop.f32.mrb[0].mxu0
    %v2284 = vpop.f32.mrb[0].mxu0
    %v2285 = vpop.f32.mrb[0].mxu0
    %2286 = vdwg.mxu0
    %v2288 = vsel %vm198, %v2163, 0
    %2290 = vmatprep.subr.bf16.mxu0 0
    %2291 = vmatpush1.bf16.msra.mxu0 %v575
    %2292 = vmatprep.subr.bf16.mxu0 0
    %2293 = vmatpush1.bf16.msra.mxu0 %v576
    %2294 = vmatprep.subr.bf16.mxu0 0
    %2295 = vmatpush1.bf16.msra.mxu0 0
    %2296 = vmatprep.subr.bf16.mxu0 0
    %2297 = vmatpush1.bf16.msra.mxu0 0
    %2298 = vmatprep.subr.bf16.mxu0 0
    %2299 = vmatpush1.bf16.msra.mxu0 0
    %2300 = vmatprep.subr.bf16.mxu0 0
    %2301 = vmatpush1.bf16.msra.mxu0 0
    %2302 = vmatprep.subr.bf16.mxu0 0
    %2303 = vmatpush1.bf16.msra.mxu0 0
    %2304 = vmatprep.subr.bf16.mxu0 0
    %2305 = vmatpush1.bf16.msra.mxu0 0
    %2306 = vmatprep.subr.bf16.mxu0 0
    %2307 = vmatpush1.bf16.msra.mxu0 0
    %2308 = vmatprep.subr.bf16.mxu0 0
    %2309 = vmatpush1.bf16.msra.mxu0 0
    %2310 = vmatprep.subr.bf16.mxu0 0
    %2311 = vmatpush1.bf16.msra.mxu0 0
    %2312 = vmatprep.subr.bf16.mxu0 0
    %2313 = vmatpush1.bf16.msra.mxu0 0
    %2314 = vmatprep.subr.bf16.mxu0 0
    %2315 = vmatpush1.bf16.msra.mxu0 0
    %2316 = vmatprep.subr.bf16.mxu0 0
    %2317 = vmatpush1.bf16.msra.mxu0 0
    %2318 = vmatprep.subr.bf16.mxu0 0
    %2319 = vmatpush1.bf16.msra.mxu0 0
    %2320 = vmatprep.subr.bf16.mxu0 0
    %2321 = vmatpush1.bf16.msra.mxu0 0
    %2322 = vmatprep.mubr.bf16.mxu0 0
    %2323 = vmatmul.mubr.bf16.gmra.mrb[0].mxu0 %v2288
    %v2324 = vpop.f32.mrb[0].mxu0
    %v2325 = vadd.f32 %v565, %v2324
    %v2326 = vpop.f32.mrb[0].mxu0
    %v2327 = vpop.f32.mrb[0].mxu0
    %v2328 = vpop.f32.mrb[0].mxu0
    %2329 = vdwg.mxu0
    %2330 = vmatprep.subr.bf16.mxu0 0
    %2331 = vmatpush1.bf16.msra.mxu0 %v636
    %2332 = vmatprep.subr.bf16.mxu0 0
    %2333 = vmatpush1.bf16.msra.mxu0 %v637
    %2334 = vmatprep.subr.bf16.mxu0 0
    %2335 = vmatpush1.bf16.msra.mxu0 0
    %2336 = vmatprep.subr.bf16.mxu0 0
    %2337 = vmatpush1.bf16.msra.mxu0 0
    %2338 = vmatprep.subr.bf16.mxu0 0
    %2339 = vmatpush1.bf16.msra.mxu0 0
    %2340 = vmatprep.subr.bf16.mxu0 0
    %2341 = vmatpush1.bf16.msra.mxu0 0
    %2342 = vmatprep.subr.bf16.mxu0 0
    %2343 = vmatpush1.bf16.msra.mxu0 0
    %2344 = vmatprep.subr.bf16.mxu0 0
    %2345 = vmatpush1.bf16.msra.mxu0 0
    %2346 = vmatprep.subr.bf16.mxu0 0
    %2347 = vmatpush1.bf16.msra.mxu0 0
    %2348 = vmatprep.subr.bf16.mxu0 0
    %2349 = vmatpush1.bf16.msra.mxu0 0
    %2350 = vmatprep.subr.bf16.mxu0 0
    %2351 = vmatpush1.bf16.msra.mxu0 0
    %2352 = vmatprep.subr.bf16.mxu0 0
    %2353 = vmatpush1.bf16.msra.mxu0 0
    %2354 = vmatprep.subr.bf16.mxu0 0
    %2355 = vmatpush1.bf16.msra.mxu0 0
    %2356 = vmatprep.subr.bf16.mxu0 0
    %2357 = vmatpush1.bf16.msra.mxu0 0
    %2358 = vmatprep.subr.bf16.mxu0 0
    %2359 = vmatpush1.bf16.msra.mxu0 0
    %2360 = vmatprep.subr.bf16.mxu0 0
    %2361 = vmatpush1.bf16.msra.mxu0 0
    %2362 = vmatprep.mubr.bf16.mxu0 0
    %2363 = vmatmul.mubr.bf16.gmra.mrb[0].mxu0 %v2288
    %v2364 = vpop.f32.mrb[0].mxu0
    %v2365 = vadd.f32 %v626, %v2364
    %v2366 = vpop.f32.mrb[0].mxu0
    %v2367 = vpop.f32.mrb[0].mxu0
    %v2368 = vpop.f32.mrb[0].mxu0
    %2369 = vdwg.mxu0
    %2370 = vmatprep.subr.bf16.mxu0 0
    %2371 = vmatpush1.bf16.msra.mxu0 %v694
    %2372 = vmatprep.subr.bf16.mxu0 0
    %2373 = vmatpush1.bf16.msra.mxu0 %v695
    %2374 = vmatprep.subr.bf16.mxu0 0
    %2375 = vmatpush1.bf16.msra.mxu0 0
    %2376 = vmatprep.subr.bf16.mxu0 0
    %2377 = vmatpush1.bf16.msra.mxu0 0
    %2378 = vmatprep.subr.bf16.mxu0 0
    %2379 = vmatpush1.bf16.msra.mxu0 0
    %2380 = vmatprep.subr.bf16.mxu0 0
    %2381 = vmatpush1.bf16.msra.mxu0 0
    %2382 = vmatprep.subr.bf16.mxu0 0
    %2383 = vmatpush1.bf16.msra.mxu0 0
    %2384 = vmatprep.subr.bf16.mxu0 0
    %2385 = vmatpush1.bf16.msra.mxu0 0
    %2386 = vmatprep.subr.bf16.mxu0 0
    %2387 = vmatpush1.bf16.msra.mxu0 0
    %2388 = vmatprep.subr.bf16.mxu0 0
    %2389 = vmatpush1.bf16.msra.mxu0 0
    %2390 = vmatprep.subr.bf16.mxu0 0
    %2391 = vmatpush1.bf16.msra.mxu0 0
    %2392 = vmatprep.subr.bf16.mxu0 0
    %2393 = vmatpush1.bf16.msra.mxu0 0
    %2394 = vmatprep.subr.bf16.mxu0 0
    %2395 = vmatpush1.bf16.msra.mxu0 0
    %2396 = vmatprep.subr.bf16.mxu0 0
    %2397 = vmatpush1.bf16.msra.mxu0 0
    %2398 = vmatprep.subr.bf16.mxu0 0
    %2399 = vmatpush1.bf16.msra.mxu0 0
    %2400 = vmatprep.subr.bf16.mxu0 0
    %2401 = vmatpush1.bf16.msra.mxu0 0
    %2402 = vmatprep.mubr.bf16.mxu0 0
    %2403 = vmatmul.mubr.bf16.gmra.mrb[0].mxu0 %v2288
    %v2404 = vpop.f32.mrb[0].mxu0
    %v2405 = vadd.f32 %v684, %v2404
    %v2406 = vpop.f32.mrb[0].mxu0
    %v2407 = vpop.f32.mrb[0].mxu0
    %v2408 = vpop.f32.mrb[0].mxu0
    %2409 = vdwg.mxu0
    %v2410 = vadd.f32 %v2202, %v2325
    %v2411 = vxor.u32 %v2410, 2147483648
    %v2412 = vmul.f32 %v2411, 1.442695
    %v2413 = vpow.pop %v2412
    %v2414 = vadd.f32 %v2413, 1.0
    %v2415 = vrcp.pop %v2414
    %v2416 = vmul.f32 1.0, %v2415
    %v2417 = vadd.f32 %v2242, %v2365
    %v2418 = vxor.u32 %v2417, 2147483648
    %v2419 = vmul.f32 %v2418, 1.442695
    %v2420 = vpow.pop %v2419
    %v2421 = vadd.f32 %v2420, 1.0
    %v2422 = vrcp.pop %v2421
    %v2423 = vmul.f32 1.0, %v2422
    %v2424 = vmul.f32 %v2416, %v2405
    %v2425 = vadd.f32 %v2282, %v2424
    %v2426 = vtanh.pop %v2425
    %v2427 = vsub.f32 1.0, %v2423
    %v2428 = vmul.f32 %v2427, %v2426
    %v2429 = vmul.f32 %v2423, %v2012
    %v2430 = vadd.f32 %v2428, %v2429
    %v2431 = vmax.f32 %v2013, %v2430
    %v2432 = vadd.f32 %v2014, %v2430
    %2433 = vmatprep.subr.bf16.mxu0 0
    %2434 = vmatpush1.bf16.msra.mxu0 %v194
    %2435 = vmatprep.subr.bf16.mxu0 0
    %2436 = vmatpush1.bf16.msra.mxu0 %v195
    %2437 = vmatprep.subr.bf16.mxu0 0
    %2438 = vmatpush1.bf16.msra.mxu0 0
    %2439 = vmatprep.subr.bf16.mxu0 0
    %2440 = vmatpush1.bf16.msra.mxu0 0
    %2441 = vmatprep.subr.bf16.mxu0 0
    %2442 = vmatpush1.bf16.msra.mxu0 0
    %2443 = vmatprep.subr.bf16.mxu0 0
    %2444 = vmatpush1.bf16.msra.mxu0 0
    %2445 = vmatprep.subr.bf16.mxu0 0
    %2446 = vmatpush1.bf16.msra.mxu0 0
    %2447 = vmatprep.subr.bf16.mxu0 0
    %2448 = vmatpush1.bf16.msra.mxu0 0
    %2449 = vmatprep.subr.bf16.mxu0 0
    %2450 = vmatpush1.bf16.msra.mxu0 0
    %2451 = vmatprep.subr.bf16.mxu0 0
    %2452 = vmatpush1.bf16.msra.mxu0 0
    %2453 = vmatprep.subr.bf16.mxu0 0
    %2454 = vmatpush1.bf16.msra.mxu0 0
    %2455 = vmatprep.subr.bf16.mxu0 0
    %2456 = vmatpush1.bf16.msra.mxu0 0
    %2457 = vmatprep.subr.bf16.mxu0 0
    %2458 = vmatpush1.bf16.msra.mxu0 0
    %2459 = vmatprep.subr.bf16.mxu0 0
    %2460 = vmatpush1.bf16.msra.mxu0 0
    %2461 = vmatprep.subr.bf16.mxu0 0
    %2462 = vmatpush1.bf16.msra.mxu0 0
    %2463 = vmatprep.subr.bf16.mxu0 0
    %2464 = vmatpush1.bf16.msra.mxu0 0
    %2465 = vmatprep.mubr.bf16.mxu0 0
    %2466 = vmatmul.mubr.bf16.gmra.mrb[0].mxu0 %v2165
    %v2467 = vpop.f32.mrb[0].mxu0
    %v2468 = vadd.f32 %v184, %v2467
    %v2469 = vpop.f32.mrb[0].mxu0
    %v2470 = vpop.f32.mrb[0].mxu0
    %v2471 = vpop.f32.mrb[0].mxu0
    %2472 = vdwg.mxu0
    %2473 = vmatprep.subr.bf16.mxu0 0
    %2474 = vmatpush1.bf16.msra.mxu0 %v256
    %2475 = vmatprep.subr.bf16.mxu0 0
    %2476 = vmatpush1.bf16.msra.mxu0 %v257
    %2477 = vmatprep.subr.bf16.mxu0 0
    %2478 = vmatpush1.bf16.msra.mxu0 0
    %2479 = vmatprep.subr.bf16.mxu0 0
    %2480 = vmatpush1.bf16.msra.mxu0 0
    %2481 = vmatprep.subr.bf16.mxu0 0
    %2482 = vmatpush1.bf16.msra.mxu0 0
    %2483 = vmatprep.subr.bf16.mxu0 0
    %2484 = vmatpush1.bf16.msra.mxu0 0
    %2485 = vmatprep.subr.bf16.mxu0 0
    %2486 = vmatpush1.bf16.msra.mxu0 0
    %2487 = vmatprep.subr.bf16.mxu0 0
    %2488 = vmatpush1.bf16.msra.mxu0 0
    %2489 = vmatprep.subr.bf16.mxu0 0
    %2490 = vmatpush1.bf16.msra.mxu0 0
    %2491 = vmatprep.subr.bf16.mxu0 0
    %2492 = vmatpush1.bf16.msra.mxu0 0
    %2493 = vmatprep.subr.bf16.mxu0 0
    %2494 = vmatpush1.bf16.msra.mxu0 0
    %2495 = vmatprep.subr.bf16.mxu0 0
    %2496 = vmatpush1.bf16.msra.mxu0 0
    %2497 = vmatprep.subr.bf16.mxu0 0
    %2498 = vmatpush1.bf16.msra.mxu0 0
    %2499 = vmatprep.subr.bf16.mxu0 0
    %2500 = vmatpush1.bf16.msra.mxu0 0
    %2501 = vmatprep.subr.bf16.mxu0 0
    %2502 = vmatpush1.bf16.msra.mxu0 0
    %2503 = vmatprep.subr.bf16.mxu0 0
    %2504 = vmatpush1.bf16.msra.mxu0 0
    %2505 = vmatprep.mubr.bf16.mxu0 0
    %2506 = vmatmul.mubr.bf16.gmra.mrb[0].mxu0 %v2165
    %v2507 = vpop.f32.mrb[0].mxu0
    %v2508 = vadd.f32 %v246, %v2507
    %v2509 = vpop.f32.mrb[0].mxu0
    %v2510 = vpop.f32.mrb[0].mxu0
    %v2511 = vpop.f32.mrb[0].mxu0
    %2512 = vdwg.mxu0
    %2513 = vmatprep.subr.bf16.mxu0 0
    %2514 = vmatpush1.bf16.msra.mxu0 %v314
    %2515 = vmatprep.subr.bf16.mxu0 0
    %2516 = vmatpush1.bf16.msra.mxu0 %v315
    %2517 = vmatprep.subr.bf16.mxu0 0
    %2518 = vmatpush1.bf16.msra.mxu0 0
    %2519 = vmatprep.subr.bf16.mxu0 0
    %2520 = vmatpush1.bf16.msra.mxu0 0
    %2521 = vmatprep.subr.bf16.mxu0 0
    %2522 = vmatpush1.bf16.msra.mxu0 0
    %2523 = vmatprep.subr.bf16.mxu0 0
    %2524 = vmatpush1.bf16.msra.mxu0 0
    %2525 = vmatprep.subr.bf16.mxu0 0
    %2526 = vmatpush1.bf16.msra.mxu0 0
    %2527 = vmatprep.subr.bf16.mxu0 0
    %2528 = vmatpush1.bf16.msra.mxu0 0
    %2529 = vmatprep.subr.bf16.mxu0 0
    %2530 = vmatpush1.bf16.msra.mxu0 0
    %2531 = vmatprep.subr.bf16.mxu0 0
    %2532 = vmatpush1.bf16.msra.mxu0 0
    %2533 = vmatprep.subr.bf16.mxu0 0
    %2534 = vmatpush1.bf16.msra.mxu0 0
    %2535 = vmatprep.subr.bf16.mxu0 0
    %2536 = vmatpush1.bf16.msra.mxu0 0
    %2537 = vmatprep.subr.bf16.mxu0 0
    %2538 = vmatpush1.bf16.msra.mxu0 0
    %2539 = vmatprep.subr.bf16.mxu0 0
    %2540 = vmatpush1.bf16.msra.mxu0 0
    %2541 = vmatprep.subr.bf16.mxu0 0
    %2542 = vmatpush1.bf16.msra.mxu0 0
    %2543 = vmatprep.subr.bf16.mxu0 0
    %2544 = vmatpush1.bf16.msra.mxu0 0
    %2545 = vmatprep.mubr.bf16.mxu0 0
    %2546 = vmatmul.mubr.bf16.gmra.mrb[0].mxu0 %v2165
    %v2547 = vpop.f32.mrb[0].mxu0
    %v2548 = vadd.f32 %v304, %v2547
    %v2549 = vpop.f32.mrb[0].mxu0
    %v2550 = vpop.f32.mrb[0].mxu0
    %v2551 = vpop.f32.mrb[0].mxu0
    %2552 = vdwg.mxu0
    %s2553 = scalar_lea.vmem [#allocation7], 40
    %v2554 = vld [vmem:[%s2553] sm:$0xff]
    %v2555 = vadd.f32 %v2554, %v2468
    %v2556 = vxor.u32 %v2555, 2147483648
    %v2557 = vmul.f32 %v2556, 1.442695
    %v2558 = vpow.pop %v2557
    %v2559 = vadd.f32 %v2558, 1.0
    %v2560 = vrcp.pop %v2559
    %v2561 = vmul.f32 1.0, %v2560
    %s2562 = scalar_lea.vmem [#allocation9], 40
    %v2563 = vld [vmem:[%s2562] sm:$0xff]
    %v2564 = vadd.f32 %v2563, %v2508
    %v2565 = vxor.u32 %v2564, 2147483648
    %v2566 = vmul.f32 %v2565, 1.442695
    %v2567 = vpow.pop %v2566
    %v2568 = vadd.f32 %v2567, 1.0
    %v2569 = vrcp.pop %v2568
    %v2570 = vmul.f32 1.0, %v2569
    %s2571 = scalar_lea.vmem [#allocation11], 40
    %v2572 = vld [vmem:[%s2571] sm:$0xff]
    %v2573 = vmul.f32 %v2561, %v2548
    %v2574 = vadd.f32 %v2572, %v2573
    %v2575 = vtanh.pop %v2574
    %v2576 = vsub.f32 1.0, %v2570
    %v2577 = vmul.f32 %v2576, %v2575
    %v2578 = vmul.f32 %v2570, %v2161
    %v2579 = vadd.f32 %v2577, %v2578
    %v2580 = vpack.c.bf16 %v2579, %v2579
    %v2581 = vpack.c.bf16 %v2430, %v2430
    %v2583 = vsel %vm198, %v2580, 0
    %2585 = vmatprep.subr.bf16.mxu0 0
    %2586 = vmatpush1.bf16.msra.mxu0 %v398
    %2587 = vmatprep.subr.bf16.mxu0 0
    %2588 = vmatpush1.bf16.msra.mxu0 %v399
    %2589 = vmatprep.subr.bf16.mxu0 0
    %2590 = vmatpush1.bf16.msra.mxu0 0
    %2591 = vmatprep.subr.bf16.mxu0 0
    %2592 = vmatpush1.bf16.msra.mxu0 0
    %2593 = vmatprep.subr.bf16.mxu0 0
    %2594 = vmatpush1.bf16.msra.mxu0 0
    %2595 = vmatprep.subr.bf16.mxu0 0
    %2596 = vmatpush1.bf16.msra.mxu0 0
    %2597 = vmatprep.subr.bf16.mxu0 0
    %2598 = vmatpush1.bf16.msra.mxu0 0
    %2599 = vmatprep.subr.bf16.mxu0 0
    %2600 = vmatpush1.bf16.msra.mxu0 0
    %2601 = vmatprep.subr.bf16.mxu0 0
    %2602 = vmatpush1.bf16.msra.mxu0 0
    %2603 = vmatprep.subr.bf16.mxu0 0
    %2604 = vmatpush1.bf16.msra.mxu0 0
    %2605 = vmatprep.subr.bf16.mxu0 0
    %2606 = vmatpush1.bf16.msra.mxu0 0
    %2607 = vmatprep.subr.bf16.mxu0 0
    %2608 = vmatpush1.bf16.msra.mxu0 0
    %2609 = vmatprep.subr.bf16.mxu0 0
    %2610 = vmatpush1.bf16.msra.mxu0 0
    %2611 = vmatprep.subr.bf16.mxu0 0
    %2612 = vmatpush1.bf16.msra.mxu0 0
    %2613 = vmatprep.subr.bf16.mxu0 0
    %2614 = vmatpush1.bf16.msra.mxu0 0
    %2615 = vmatprep.subr.bf16.mxu0 0
    %2616 = vmatpush1.bf16.msra.mxu0 0
    %2617 = vmatprep.mubr.bf16.mxu0 0
    %2618 = vmatmul.mubr.bf16.gmra.mrb[0].mxu0 %v2583
    %v2619 = vpop.f32.mrb[0].mxu0
    %v2620 = vadd.f32 %v388, %v2619
    %v2621 = vpop.f32.mrb[0].mxu0
    %v2622 = vpop.f32.mrb[0].mxu0
    %v2623 = vpop.f32.mrb[0].mxu0
    %2624 = vdwg.mxu0
    %2625 = vmatprep.subr.bf16.mxu0 0
    %2626 = vmatpush1.bf16.msra.mxu0 %v459
    %2627 = vmatprep.subr.bf16.mxu0 0
    %2628 = vmatpush1.bf16.msra.mxu0 %v460
    %2629 = vmatprep.subr.bf16.mxu0 0
    %2630 = vmatpush1.bf16.msra.mxu0 0
    %2631 = vmatprep.subr.bf16.mxu0 0
    %2632 = vmatpush1.bf16.msra.mxu0 0
    %2633 = vmatprep.subr.bf16.mxu0 0
    %2634 = vmatpush1.bf16.msra.mxu0 0
    %2635 = vmatprep.subr.bf16.mxu0 0
    %2636 = vmatpush1.bf16.msra.mxu0 0
    %2637 = vmatprep.subr.bf16.mxu0 0
    %2638 = vmatpush1.bf16.msra.mxu0 0
    %2639 = vmatprep.subr.bf16.mxu0 0
    %2640 = vmatpush1.bf16.msra.mxu0 0
    %2641 = vmatprep.subr.bf16.mxu0 0
    %2642 = vmatpush1.bf16.msra.mxu0 0
    %2643 = vmatprep.subr.bf16.mxu0 0
    %2644 = vmatpush1.bf16.msra.mxu0 0
    %2645 = vmatprep.subr.bf16.mxu0 0
    %2646 = vmatpush1.bf16.msra.mxu0 0
    %2647 = vmatprep.subr.bf16.mxu0 0
    %2648 = vmatpush1.bf16.msra.mxu0 0
    %2649 = vmatprep.subr.bf16.mxu0 0
    %2650 = vmatpush1.bf16.msra.mxu0 0
    %2651 = vmatprep.subr.bf16.mxu0 0
    %2652 = vmatpush1.bf16.msra.mxu0 0
    %2653 = vmatprep.subr.bf16.mxu0 0
    %2654 = vmatpush1.bf16.msra.mxu0 0
    %2655 = vmatprep.subr.bf16.mxu0 0
    %2656 = vmatpush1.bf16.msra.mxu0 0
    %2657 = vmatprep.mubr.bf16.mxu0 0
    %2658 = vmatmul.mubr.bf16.gmra.mrb[0].mxu0 %v2583
    %v2659 = vpop.f32.mrb[0].mxu0
    %v2660 = vadd.f32 %v449, %v2659
    %v2661 = vpop.f32.mrb[0].mxu0
    %v2662 = vpop.f32.mrb[0].mxu0
    %v2663 = vpop.f32.mrb[0].mxu0
    %2664 = vdwg.mxu0
    %2665 = vmatprep.subr.bf16.mxu0 0
    %2666 = vmatpush1.bf16.msra.mxu0 %v517
    %2667 = vmatprep.subr.bf16.mxu0 0
    %2668 = vmatpush1.bf16.msra.mxu0 %v518
    %2669 = vmatprep.subr.bf16.mxu0 0
    %2670 = vmatpush1.bf16.msra.mxu0 0
    %2671 = vmatprep.subr.bf16.mxu0 0
    %2672 = vmatpush1.bf16.msra.mxu0 0
    %2673 = vmatprep.subr.bf16.mxu0 0
    %2674 = vmatpush1.bf16.msra.mxu0 0
    %2675 = vmatprep.subr.bf16.mxu0 0
    %2676 = vmatpush1.bf16.msra.mxu0 0
    %2677 = vmatprep.subr.bf16.mxu0 0
    %2678 = vmatpush1.bf16.msra.mxu0 0
    %2679 = vmatprep.subr.bf16.mxu0 0
    %2680 = vmatpush1.bf16.msra.mxu0 0
    %2681 = vmatprep.subr.bf16.mxu0 0
    %2682 = vmatpush1.bf16.msra.mxu0 0
    %2683 = vmatprep.subr.bf16.mxu0 0
    %2684 = vmatpush1.bf16.msra.mxu0 0
    %2685 = vmatprep.subr.bf16.mxu0 0
    %2686 = vmatpush1.bf16.msra.mxu0 0
    %2687 = vmatprep.subr.bf16.mxu0 0
    %2688 = vmatpush1.bf16.msra.mxu0 0
    %2689 = vmatprep.subr.bf16.mxu0 0
    %2690 = vmatpush1.bf16.msra.mxu0 0
    %2691 = vmatprep.subr.bf16.mxu0 0
    %2692 = vmatpush1.bf16.msra.mxu0 0
    %2693 = vmatprep.subr.bf16.mxu0 0
    %2694 = vmatpush1.bf16.msra.mxu0 0
    %2695 = vmatprep.subr.bf16.mxu0 0
    %2696 = vmatpush1.bf16.msra.mxu0 0
    %2697 = vmatprep.mubr.bf16.mxu0 0
    %2698 = vmatmul.mubr.bf16.gmra.mrb[0].mxu0 %v2583
    %v2699 = vpop.f32.mrb[0].mxu0
    %v2700 = vadd.f32 %v507, %v2699
    %v2701 = vpop.f32.mrb[0].mxu0
    %v2702 = vpop.f32.mrb[0].mxu0
    %v2703 = vpop.f32.mrb[0].mxu0
    %2704 = vdwg.mxu0
    %v2706 = vsel %vm198, %v2581, 0
    %2708 = vmatprep.subr.bf16.mxu0 0
    %2709 = vmatpush1.bf16.msra.mxu0 %v575
    %2710 = vmatprep.subr.bf16.mxu0 0
    %2711 = vmatpush1.bf16.msra.mxu0 %v576
    %2712 = vmatprep.subr.bf16.mxu0 0
    %2713 = vmatpush1.bf16.msra.mxu0 0
    %2714 = vmatprep.subr.bf16.mxu0 0
    %2715 = vmatpush1.bf16.msra.mxu0 0
    %2716 = vmatprep.subr.bf16.mxu0 0
    %2717 = vmatpush1.bf16.msra.mxu0 0
    %2718 = vmatprep.subr.bf16.mxu0 0
    %2719 = vmatpush1.bf16.msra.mxu0 0
    %2720 = vmatprep.subr.bf16.mxu0 0
    %2721 = vmatpush1.bf16.msra.mxu0 0
    %2722 = vmatprep.subr.bf16.mxu0 0
    %2723 = vmatpush1.bf16.msra.mxu0 0
    %2724 = vmatprep.subr.bf16.mxu0 0
    %2725 = vmatpush1.bf16.msra.mxu0 0
    %2726 = vmatprep.subr.bf16.mxu0 0
    %2727 = vmatpush1.bf16.msra.mxu0 0
    %2728 = vmatprep.subr.bf16.mxu0 0
    %2729 = vmatpush1.bf16.msra.mxu0 0
    %2730 = vmatprep.subr.bf16.mxu0 0
    %2731 = vmatpush1.bf16.msra.mxu0 0
    %2732 = vmatprep.subr.bf16.mxu0 0
    %2733 = vmatpush1.bf16.msra.mxu0 0
    %2734 = vmatprep.subr.bf16.mxu0 0
    %2735 = vmatpush1.bf16.msra.mxu0 0
    %2736 = vmatprep.subr.bf16.mxu0 0
    %2737 = vmatpush1.bf16.msra.mxu0 0
    %2738 = vmatprep.subr.bf16.mxu0 0
    %2739 = vmatpush1.bf16.msra.mxu0 0
    %2740 = vmatprep.mubr.bf16.mxu0 0
    %2741 = vmatmul.mubr.bf16.gmra.mrb[0].mxu0 %v2706
    %v2742 = vpop.f32.mrb[0].mxu0
    %v2743 = vadd.f32 %v565, %v2742
    %v2744 = vpop.f32.mrb[0].mxu0
    %v2745 = vpop.f32.mrb[0].mxu0
    %v2746 = vpop.f32.mrb[0].mxu0
    %2747 = vdwg.mxu0
    %2748 = vmatprep.subr.bf16.mxu0 0
    %2749 = vmatpush1.bf16.msra.mxu0 %v636
    %2750 = vmatprep.subr.bf16.mxu0 0
    %2751 = vmatpush1.bf16.msra.mxu0 %v637
    %2752 = vmatprep.subr.bf16.mxu0 0
    %2753 = vmatpush1.bf16.msra.mxu0 0
    %2754 = vmatprep.subr.bf16.mxu0 0
    %2755 = vmatpush1.bf16.msra.mxu0 0
    %2756 = vmatprep.subr.bf16.mxu0 0
    %2757 = vmatpush1.bf16.msra.mxu0 0
    %2758 = vmatprep.subr.bf16.mxu0 0
    %2759 = vmatpush1.bf16.msra.mxu0 0
    %2760 = vmatprep.subr.bf16.mxu0 0
    %2761 = vmatpush1.bf16.msra.mxu0 0
    %2762 = vmatprep.subr.bf16.mxu0 0
    %2763 = vmatpush1.bf16.msra.mxu0 0
    %2764 = vmatprep.subr.bf16.mxu0 0
    %2765 = vmatpush1.bf16.msra.mxu0 0
    %2766 = vmatprep.subr.bf16.mxu0 0
    %2767 = vmatpush1.bf16.msra.mxu0 0
    %2768 = vmatprep.subr.bf16.mxu0 0
    %2769 = vmatpush1.bf16.msra.mxu0 0
    %2770 = vmatprep.subr.bf16.mxu0 0
    %2771 = vmatpush1.bf16.msra.mxu0 0
    %2772 = vmatprep.subr.bf16.mxu0 0
    %2773 = vmatpush1.bf16.msra.mxu0 0
    %2774 = vmatprep.subr.bf16.mxu0 0
    %2775 = vmatpush1.bf16.msra.mxu0 0
    %2776 = vmatprep.subr.bf16.mxu0 0
    %2777 = vmatpush1.bf16.msra.mxu0 0
    %2778 = vmatprep.subr.bf16.mxu0 0
    %2779 = vmatpush1.bf16.msra.mxu0 0
    %2780 = vmatprep.mubr.bf16.mxu0 0
    %2781 = vmatmul.mubr.bf16.gmra.mrb[0].mxu0 %v2706
    %v2782 = vpop.f32.mrb[0].mxu0
    %v2783 = vadd.f32 %v626, %v2782
    %v2784 = vpop.f32.mrb[0].mxu0
    %v2785 = vpop.f32.mrb[0].mxu0
    %v2786 = vpop.f32.mrb[0].mxu0
    %2787 = vdwg.mxu0
    %2788 = vmatprep.subr.bf16.mxu0 0
    %2789 = vmatpush1.bf16.msra.mxu0 %v694
    %2790 = vmatprep.subr.bf16.mxu0 0
    %2791 = vmatpush1.bf16.msra.mxu0 %v695
    %2792 = vmatprep.subr.bf16.mxu0 0
    %2793 = vmatpush1.bf16.msra.mxu0 0
    %2794 = vmatprep.subr.bf16.mxu0 0
    %2795 = vmatpush1.bf16.msra.mxu0 0
    %2796 = vmatprep.subr.bf16.mxu0 0
    %2797 = vmatpush1.bf16.msra.mxu0 0
    %2798 = vmatprep.subr.bf16.mxu0 0
    %2799 = vmatpush1.bf16.msra.mxu0 0
    %2800 = vmatprep.subr.bf16.mxu0 0
    %2801 = vmatpush1.bf16.msra.mxu0 0
    %2802 = vmatprep.subr.bf16.mxu0 0
    %2803 = vmatpush1.bf16.msra.mxu0 0
    %2804 = vmatprep.subr.bf16.mxu0 0
    %2805 = vmatpush1.bf16.msra.mxu0 0
    %2806 = vmatprep.subr.bf16.mxu0 0
    %2807 = vmatpush1.bf16.msra.mxu0 0
    %2808 = vmatprep.subr.bf16.mxu0 0
    %2809 = vmatpush1.bf16.msra.mxu0 0
    %2810 = vmatprep.subr.bf16.mxu0 0
    %2811 = vmatpush1.bf16.msra.mxu0 0
    %2812 = vmatprep.subr.bf16.mxu0 0
    %2813 = vmatpush1.bf16.msra.mxu0 0
    %2814 = vmatprep.subr.bf16.mxu0 0
    %2815 = vmatpush1.bf16.msra.mxu0 0
    %2816 = vmatprep.subr.bf16.mxu0 0
    %2817 = vmatpush1.bf16.msra.mxu0 0
    %2818 = vmatprep.subr.bf16.mxu0 0
    %2819 = vmatpush1.bf16.msra.mxu0 0
    %2820 = vmatprep.mubr.bf16.mxu0 0
    %2821 = vmatmul.mubr.bf16.gmra.mrb[0].mxu0 %v2706
    %v2822 = vpop.f32.mrb[0].mxu0
    %v2823 = vadd.f32 %v684, %v2822
    %v2824 = vpop.f32.mrb[0].mxu0
    %v2825 = vpop.f32.mrb[0].mxu0
    %v2826 = vpop.f32.mrb[0].mxu0
    %2827 = vdwg.mxu0
    %v2828 = vadd.f32 %v2620, %v2743
    %v2829 = vxor.u32 %v2828, 2147483648
    %v2830 = vmul.f32 %v2829, 1.442695
    %v2831 = vpow.pop %v2830
    %v2832 = vadd.f32 %v2831, 1.0
    %v2833 = vrcp.pop %v2832
    %v2834 = vmul.f32 1.0, %v2833
    %v2835 = vadd.f32 %v2660, %v2783
    %v2836 = vxor.u32 %v2835, 2147483648
    %v2837 = vmul.f32 %v2836, 1.442695
    %v2838 = vpow.pop %v2837
    %v2839 = vadd.f32 %v2838, 1.0
    %v2840 = vrcp.pop %v2839
    %v2841 = vmul.f32 1.0, %v2840
    %v2842 = vmul.f32 %v2834, %v2823
    %v2843 = vadd.f32 %v2700, %v2842
    %v2844 = vtanh.pop %v2843
    %v2845 = vsub.f32 1.0, %v2841
    %v2846 = vmul.f32 %v2845, %v2844
    %v2847 = vmul.f32 %v2841, %v2430
    %v2848 = vadd.f32 %v2846, %v2847
    %v2849 = vmax.f32 %v2431, %v2848
    %v2850 = vadd.f32 %v2432, %v2848
    %2851 = vmatprep.subr.bf16.mxu0 0
    %2852 = vmatpush1.bf16.msra.mxu0 %v194
    %2853 = vmatprep.subr.bf16.mxu0 0
    %2854 = vmatpush1.bf16.msra.mxu0 %v195
    %2855 = vmatprep.subr.bf16.mxu0 0
    %2856 = vmatpush1.bf16.msra.mxu0 0
    %2857 = vmatprep.subr.bf16.mxu0 0
    %2858 = vmatpush1.bf16.msra.mxu0 0
    %2859 = vmatprep.subr.bf16.mxu0 0
    %2860 = vmatpush1.bf16.msra.mxu0 0
    %2861 = vmatprep.subr.bf16.mxu0 0
    %2862 = vmatpush1.bf16.msra.mxu0 0
    %2863 = vmatprep.subr.bf16.mxu0 0
    %2864 = vmatpush1.bf16.msra.mxu0 0
    %2865 = vmatprep.subr.bf16.mxu0 0
    %2866 = vmatpush1.bf16.msra.mxu0 0
    %2867 = vmatprep.subr.bf16.mxu0 0
    %2868 = vmatpush1.bf16.msra.mxu0 0
    %2869 = vmatprep.subr.bf16.mxu0 0
    %2870 = vmatpush1.bf16.msra.mxu0 0
    %2871 = vmatprep.subr.bf16.mxu0 0
    %2872 = vmatpush1.bf16.msra.mxu0 0
    %2873 = vmatprep.subr.bf16.mxu0 0
    %2874 = vmatpush1.bf16.msra.mxu0 0
    %2875 = vmatprep.subr.bf16.mxu0 0
    %2876 = vmatpush1.bf16.msra.mxu0 0
    %2877 = vmatprep.subr.bf16.mxu0 0
    %2878 = vmatpush1.bf16.msra.mxu0 0
    %2879 = vmatprep.subr.bf16.mxu0 0
    %2880 = vmatpush1.bf16.msra.mxu0 0
    %2881 = vmatprep.subr.bf16.mxu0 0
    %2882 = vmatpush1.bf16.msra.mxu0 0
    %2883 = vmatprep.mubr.bf16.mxu0 0
    %2884 = vmatmul.mubr.bf16.gmra.mrb[0].mxu0 %v2583
    %v2885 = vpop.f32.mrb[0].mxu0
    %v2886 = vadd.f32 %v184, %v2885
    %v2887 = vpop.f32.mrb[0].mxu0
    %v2888 = vpop.f32.mrb[0].mxu0
    %v2889 = vpop.f32.mrb[0].mxu0
    %2890 = vdwg.mxu0
    %2891 = vmatprep.subr.bf16.mxu0 0
    %2892 = vmatpush1.bf16.msra.mxu0 %v256
    %2893 = vmatprep.subr.bf16.mxu0 0
    %2894 = vmatpush1.bf16.msra.mxu0 %v257
    %2895 = vmatprep.subr.bf16.mxu0 0
    %2896 = vmatpush1.bf16.msra.mxu0 0
    %2897 = vmatprep.subr.bf16.mxu0 0
    %2898 = vmatpush1.bf16.msra.mxu0 0
    %2899 = vmatprep.subr.bf16.mxu0 0
    %2900 = vmatpush1.bf16.msra.mxu0 0
    %2901 = vmatprep.subr.bf16.mxu0 0
    %2902 = vmatpush1.bf16.msra.mxu0 0
    %2903 = vmatprep.subr.bf16.mxu0 0
    %2904 = vmatpush1.bf16.msra.mxu0 0
    %2905 = vmatprep.subr.bf16.mxu0 0
    %2906 = vmatpush1.bf16.msra.mxu0 0
    %2907 = vmatprep.subr.bf16.mxu0 0
    %2908 = vmatpush1.bf16.msra.mxu0 0
    %2909 = vmatprep.subr.bf16.mxu0 0
    %2910 = vmatpush1.bf16.msra.mxu0 0
    %2911 = vmatprep.subr.bf16.mxu0 0
    %2912 = vmatpush1.bf16.msra.mxu0 0
    %2913 = vmatprep.subr.bf16.mxu0 0
    %2914 = vmatpush1.bf16.msra.mxu0 0
    %2915 = vmatprep.subr.bf16.mxu0 0
    %2916 = vmatpush1.bf16.msra.mxu0 0
    %2917 = vmatprep.subr.bf16.mxu0 0
    %2918 = vmatpush1.bf16.msra.mxu0 0
    %2919 = vmatprep.subr.bf16.mxu0 0
    %2920 = vmatpush1.bf16.msra.mxu0 0
    %2921 = vmatprep.subr.bf16.mxu0 0
    %2922 = vmatpush1.bf16.msra.mxu0 0
    %2923 = vmatprep.mubr.bf16.mxu0 0
    %2924 = vmatmul.mubr.bf16.gmra.mrb[0].mxu0 %v2583
    %v2925 = vpop.f32.mrb[0].mxu0
    %v2926 = vadd.f32 %v246, %v2925
    %v2927 = vpop.f32.mrb[0].mxu0
    %v2928 = vpop.f32.mrb[0].mxu0
    %v2929 = vpop.f32.mrb[0].mxu0
    %2930 = vdwg.mxu0
    %2931 = vmatprep.subr.bf16.mxu0 0
    %2932 = vmatpush1.bf16.msra.mxu0 %v314
    %2933 = vmatprep.subr.bf16.mxu0 0
    %2934 = vmatpush1.bf16.msra.mxu0 %v315
    %2935 = vmatprep.subr.bf16.mxu0 0
    %2936 = vmatpush1.bf16.msra.mxu0 0
    %2937 = vmatprep.subr.bf16.mxu0 0
    %2938 = vmatpush1.bf16.msra.mxu0 0
    %2939 = vmatprep.subr.bf16.mxu0 0
    %2940 = vmatpush1.bf16.msra.mxu0 0
    %2941 = vmatprep.subr.bf16.mxu0 0
    %2942 = vmatpush1.bf16.msra.mxu0 0
    %2943 = vmatprep.subr.bf16.mxu0 0
    %2944 = vmatpush1.bf16.msra.mxu0 0
    %2945 = vmatprep.subr.bf16.mxu0 0
    %2946 = vmatpush1.bf16.msra.mxu0 0
    %2947 = vmatprep.subr.bf16.mxu0 0
    %2948 = vmatpush1.bf16.msra.mxu0 0
    %2949 = vmatprep.subr.bf16.mxu0 0
    %2950 = vmatpush1.bf16.msra.mxu0 0
    %2951 = vmatprep.subr.bf16.mxu0 0
    %2952 = vmatpush1.bf16.msra.mxu0 0
    %2953 = vmatprep.subr.bf16.mxu0 0
    %2954 = vmatpush1.bf16.msra.mxu0 0
    %2955 = vmatprep.subr.bf16.mxu0 0
    %2956 = vmatpush1.bf16.msra.mxu0 0
    %2957 = vmatprep.subr.bf16.mxu0 0
    %2958 = vmatpush1.bf16.msra.mxu0 0
    %2959 = vmatprep.subr.bf16.mxu0 0
    %2960 = vmatpush1.bf16.msra.mxu0 0
    %2961 = vmatprep.subr.bf16.mxu0 0
    %2962 = vmatpush1.bf16.msra.mxu0 0
    %2963 = vmatprep.mubr.bf16.mxu0 0
    %2964 = vmatmul.mubr.bf16.gmra.mrb[0].mxu0 %v2583
    %v2965 = vpop.f32.mrb[0].mxu0
    %v2966 = vadd.f32 %v304, %v2965
    %v2967 = vpop.f32.mrb[0].mxu0
    %v2968 = vpop.f32.mrb[0].mxu0
    %v2969 = vpop.f32.mrb[0].mxu0
    %2970 = vdwg.mxu0
    %s2971 = scalar_lea.vmem [#allocation7], 48
    %v2972 = vld [vmem:[%s2971] sm:$0xff]
    %v2973 = vadd.f32 %v2972, %v2886
    %v2974 = vxor.u32 %v2973, 2147483648
    %v2975 = vmul.f32 %v2974, 1.442695
    %v2976 = vpow.pop %v2975
    %v2977 = vadd.f32 %v2976, 1.0
    %v2978 = vrcp.pop %v2977
    %v2979 = vmul.f32 1.0, %v2978
    %s2980 = scalar_lea.vmem [#allocation9], 48
    %v2981 = vld [vmem:[%s2980] sm:$0xff]
    %v2982 = vadd.f32 %v2981, %v2926
    %v2983 = vxor.u32 %v2982, 2147483648
    %v2984 = vmul.f32 %v2983, 1.442695
    %v2985 = vpow.pop %v2984
    %v2986 = vadd.f32 %v2985, 1.0
    %v2987 = vrcp.pop %v2986
    %v2988 = vmul.f32 1.0, %v2987
    %s2989 = scalar_lea.vmem [#allocation11], 48
    %v2990 = vld [vmem:[%s2989] sm:$0xff]
    %v2991 = vmul.f32 %v2979, %v2966
    %v2992 = vadd.f32 %v2990, %v2991
    %v2993 = vtanh.pop %v2992
    %v2994 = vsub.f32 1.0, %v2988
    %v2995 = vmul.f32 %v2994, %v2993
    %v2996 = vmul.f32 %v2988, %v2579
    %v2997 = vadd.f32 %v2995, %v2996
    %v2998 = vpack.c.bf16 %v2997, %v2997
    %v2999 = vpack.c.bf16 %v2848, %v2848
    %v3001 = vsel %vm198, %v2998, 0
    %3003 = vmatprep.subr.bf16.mxu0 0
    %3004 = vmatpush1.bf16.msra.mxu0 %v398
    %3005 = vmatprep.subr.bf16.mxu0 0
    %3006 = vmatpush1.bf16.msra.mxu0 %v399
    %3007 = vmatprep.subr.bf16.mxu0 0
    %3008 = vmatpush1.bf16.msra.mxu0 0
    %3009 = vmatprep.subr.bf16.mxu0 0
    %3010 = vmatpush1.bf16.msra.mxu0 0
    %3011 = vmatprep.subr.bf16.mxu0 0
    %3012 = vmatpush1.bf16.msra.mxu0 0
    %3013 = vmatprep.subr.bf16.mxu0 0
    %3014 = vmatpush1.bf16.msra.mxu0 0
    %3015 = vmatprep.subr.bf16.mxu0 0
    %3016 = vmatpush1.bf16.msra.mxu0 0
    %3017 = vmatprep.subr.bf16.mxu0 0
    %3018 = vmatpush1.bf16.msra.mxu0 0
    %3019 = vmatprep.subr.bf16.mxu0 0
    %3020 = vmatpush1.bf16.msra.mxu0 0
    %3021 = vmatprep.subr.bf16.mxu0 0
    %3022 = vmatpush1.bf16.msra.mxu0 0
    %3023 = vmatprep.subr.bf16.mxu0 0
    %3024 = vmatpush1.bf16.msra.mxu0 0
    %3025 = vmatprep.subr.bf16.mxu0 0
    %3026 = vmatpush1.bf16.msra.mxu0 0
    %3027 = vmatprep.subr.bf16.mxu0 0
    %3028 = vmatpush1.bf16.msra.mxu0 0
    %3029 = vmatprep.subr.bf16.mxu0 0
    %3030 = vmatpush1.bf16.msra.mxu0 0
    %3031 = vmatprep.subr.bf16.mxu0 0
    %3032 = vmatpush1.bf16.msra.mxu0 0
    %3033 = vmatprep.subr.bf16.mxu0 0
    %3034 = vmatpush1.bf16.msra.mxu0 0
    %3035 = vmatprep.mubr.bf16.mxu0 0
    %3036 = vmatmul.mubr.bf16.gmra.mrb[0].mxu0 %v3001
    %v3037 = vpop.f32.mrb[0].mxu0
    %v3038 = vadd.f32 %v388, %v3037
    %v3039 = vpop.f32.mrb[0].mxu0
    %v3040 = vpop.f32.mrb[0].mxu0
    %v3041 = vpop.f32.mrb[0].mxu0
    %3042 = vdwg.mxu0
    %3043 = vmatprep.subr.bf16.mxu0 0
    %3044 = vmatpush1.bf16.msra.mxu0 %v459
    %3045 = vmatprep.subr.bf16.mxu0 0
    %3046 = vmatpush1.bf16.msra.mxu0 %v460
    %3047 = vmatprep.subr.bf16.mxu0 0
    %3048 = vmatpush1.bf16.msra.mxu0 0
    %3049 = vmatprep.subr.bf16.mxu0 0
    %3050 = vmatpush1.bf16.msra.mxu0 0
    %3051 = vmatprep.subr.bf16.mxu0 0
    %3052 = vmatpush1.bf16.msra.mxu0 0
    %3053 = vmatprep.subr.bf16.mxu0 0
    %3054 = vmatpush1.bf16.msra.mxu0 0
    %3055 = vmatprep.subr.bf16.mxu0 0
    %3056 = vmatpush1.bf16.msra.mxu0 0
    %3057 = vmatprep.subr.bf16.mxu0 0
    %3058 = vmatpush1.bf16.msra.mxu0 0
    %3059 = vmatprep.subr.bf16.mxu0 0
    %3060 = vmatpush1.bf16.msra.mxu0 0
    %3061 = vmatprep.subr.bf16.mxu0 0
    %3062 = vmatpush1.bf16.msra.mxu0 0
    %3063 = vmatprep.subr.bf16.mxu0 0
    %3064 = vmatpush1.bf16.msra.mxu0 0
    %3065 = vmatprep.subr.bf16.mxu0 0
    %3066 = vmatpush1.bf16.msra.mxu0 0
    %3067 = vmatprep.subr.bf16.mxu0 0
    %3068 = vmatpush1.bf16.msra.mxu0 0
    %3069 = vmatprep.subr.bf16.mxu0 0
    %3070 = vmatpush1.bf16.msra.mxu0 0
    %3071 = vmatprep.subr.bf16.mxu0 0
    %3072 = vmatpush1.bf16.msra.mxu0 0
    %3073 = vmatprep.subr.bf16.mxu0 0
    %3074 = vmatpush1.bf16.msra.mxu0 0
    %3075 = vmatprep.mubr.bf16.mxu0 0
    %3076 = vmatmul.mubr.bf16.gmra.mrb[0].mxu0 %v3001
    %v3077 = vpop.f32.mrb[0].mxu0
    %v3078 = vadd.f32 %v449, %v3077
    %v3079 = vpop.f32.mrb[0].mxu0
    %v3080 = vpop.f32.mrb[0].mxu0
    %v3081 = vpop.f32.mrb[0].mxu0
    %3082 = vdwg.mxu0
    %3083 = vmatprep.subr.bf16.mxu0 0
    %3084 = vmatpush1.bf16.msra.mxu0 %v517
    %3085 = vmatprep.subr.bf16.mxu0 0
    %3086 = vmatpush1.bf16.msra.mxu0 %v518
    %3087 = vmatprep.subr.bf16.mxu0 0
    %3088 = vmatpush1.bf16.msra.mxu0 0
    %3089 = vmatprep.subr.bf16.mxu0 0
    %3090 = vmatpush1.bf16.msra.mxu0 0
    %3091 = vmatprep.subr.bf16.mxu0 0
    %3092 = vmatpush1.bf16.msra.mxu0 0
    %3093 = vmatprep.subr.bf16.mxu0 0
    %3094 = vmatpush1.bf16.msra.mxu0 0
    %3095 = vmatprep.subr.bf16.mxu0 0
    %3096 = vmatpush1.bf16.msra.mxu0 0
    %3097 = vmatprep.subr.bf16.mxu0 0
    %3098 = vmatpush1.bf16.msra.mxu0 0
    %3099 = vmatprep.subr.bf16.mxu0 0
    %3100 = vmatpush1.bf16.msra.mxu0 0
    %3101 = vmatprep.subr.bf16.mxu0 0
    %3102 = vmatpush1.bf16.msra.mxu0 0
    %3103 = vmatprep.subr.bf16.mxu0 0
    %3104 = vmatpush1.bf16.msra.mxu0 0
    %3105 = vmatprep.subr.bf16.mxu0 0
    %3106 = vmatpush1.bf16.msra.mxu0 0
    %3107 = vmatprep.subr.bf16.mxu0 0
    %3108 = vmatpush1.bf16.msra.mxu0 0
    %3109 = vmatprep.subr.bf16.mxu0 0
    %3110 = vmatpush1.bf16.msra.mxu0 0
    %3111 = vmatprep.subr.bf16.mxu0 0
    %3112 = vmatpush1.bf16.msra.mxu0 0
    %3113 = vmatprep.subr.bf16.mxu0 0
    %3114 = vmatpush1.bf16.msra.mxu0 0
    %3115 = vmatprep.mubr.bf16.mxu0 0
    %3116 = vmatmul.mubr.bf16.gmra.mrb[0].mxu0 %v3001
    %v3117 = vpop.f32.mrb[0].mxu0
    %v3118 = vadd.f32 %v507, %v3117
    %v3119 = vpop.f32.mrb[0].mxu0
    %v3120 = vpop.f32.mrb[0].mxu0
    %v3121 = vpop.f32.mrb[0].mxu0
    %3122 = vdwg.mxu0
    %v3124 = vsel %vm198, %v2999, 0
    %3126 = vmatprep.subr.bf16.mxu0 0
    %3127 = vmatpush1.bf16.msra.mxu0 %v575
    %3128 = vmatprep.subr.bf16.mxu0 0
    %3129 = vmatpush1.bf16.msra.mxu0 %v576
    %3130 = vmatprep.subr.bf16.mxu0 0
    %3131 = vmatpush1.bf16.msra.mxu0 0
    %3132 = vmatprep.subr.bf16.mxu0 0
    %3133 = vmatpush1.bf16.msra.mxu0 0
    %3134 = vmatprep.subr.bf16.mxu0 0
    %3135 = vmatpush1.bf16.msra.mxu0 0
    %3136 = vmatprep.subr.bf16.mxu0 0
    %3137 = vmatpush1.bf16.msra.mxu0 0
    %3138 = vmatprep.subr.bf16.mxu0 0
    %3139 = vmatpush1.bf16.msra.mxu0 0
    %3140 = vmatprep.subr.bf16.mxu0 0
    %3141 = vmatpush1.bf16.msra.mxu0 0
    %3142 = vmatprep.subr.bf16.mxu0 0
    %3143 = vmatpush1.bf16.msra.mxu0 0
    %3144 = vmatprep.subr.bf16.mxu0 0
    %3145 = vmatpush1.bf16.msra.mxu0 0
    %3146 = vmatprep.subr.bf16.mxu0 0
    %3147 = vmatpush1.bf16.msra.mxu0 0
    %3148 = vmatprep.subr.bf16.mxu0 0
    %3149 = vmatpush1.bf16.msra.mxu0 0
    %3150 = vmatprep.subr.bf16.mxu0 0
    %3151 = vmatpush1.bf16.msra.mxu0 0
    %3152 = vmatprep.subr.bf16.mxu0 0
    %3153 = vmatpush1.bf16.msra.mxu0 0
    %3154 = vmatprep.subr.bf16.mxu0 0
    %3155 = vmatpush1.bf16.msra.mxu0 0
    %3156 = vmatprep.subr.bf16.mxu0 0
    %3157 = vmatpush1.bf16.msra.mxu0 0
    %3158 = vmatprep.mubr.bf16.mxu0 0
    %3159 = vmatmul.mubr.bf16.gmra.mrb[0].mxu0 %v3124
    %v3160 = vpop.f32.mrb[0].mxu0
    %v3161 = vadd.f32 %v565, %v3160
    %v3162 = vpop.f32.mrb[0].mxu0
    %v3163 = vpop.f32.mrb[0].mxu0
    %v3164 = vpop.f32.mrb[0].mxu0
    %3165 = vdwg.mxu0
    %3166 = vmatprep.subr.bf16.mxu0 0
    %3167 = vmatpush1.bf16.msra.mxu0 %v636
    %3168 = vmatprep.subr.bf16.mxu0 0
    %3169 = vmatpush1.bf16.msra.mxu0 %v637
    %3170 = vmatprep.subr.bf16.mxu0 0
    %3171 = vmatpush1.bf16.msra.mxu0 0
    %3172 = vmatprep.subr.bf16.mxu0 0
    %3173 = vmatpush1.bf16.msra.mxu0 0
    %3174 = vmatprep.subr.bf16.mxu0 0
    %3175 = vmatpush1.bf16.msra.mxu0 0
    %3176 = vmatprep.subr.bf16.mxu0 0
    %3177 = vmatpush1.bf16.msra.mxu0 0
    %3178 = vmatprep.subr.bf16.mxu0 0
    %3179 = vmatpush1.bf16.msra.mxu0 0
    %3180 = vmatprep.subr.bf16.mxu0 0
    %3181 = vmatpush1.bf16.msra.mxu0 0
    %3182 = vmatprep.subr.bf16.mxu0 0
    %3183 = vmatpush1.bf16.msra.mxu0 0
    %3184 = vmatprep.subr.bf16.mxu0 0
    %3185 = vmatpush1.bf16.msra.mxu0 0
    %3186 = vmatprep.subr.bf16.mxu0 0
    %3187 = vmatpush1.bf16.msra.mxu0 0
    %3188 = vmatprep.subr.bf16.mxu0 0
    %3189 = vmatpush1.bf16.msra.mxu0 0
    %3190 = vmatprep.subr.bf16.mxu0 0
    %3191 = vmatpush1.bf16.msra.mxu0 0
    %3192 = vmatprep.subr.bf16.mxu0 0
    %3193 = vmatpush1.bf16.msra.mxu0 0
    %3194 = vmatprep.subr.bf16.mxu0 0
    %3195 = vmatpush1.bf16.msra.mxu0 0
    %3196 = vmatprep.subr.bf16.mxu0 0
    %3197 = vmatpush1.bf16.msra.mxu0 0
    %3198 = vmatprep.mubr.bf16.mxu0 0
    %3199 = vmatmul.mubr.bf16.gmra.mrb[0].mxu0 %v3124
    %v3200 = vpop.f32.mrb[0].mxu0
    %v3201 = vadd.f32 %v626, %v3200
    %v3202 = vpop.f32.mrb[0].mxu0
    %v3203 = vpop.f32.mrb[0].mxu0
    %v3204 = vpop.f32.mrb[0].mxu0
    %3205 = vdwg.mxu0
    %3206 = vmatprep.subr.bf16.mxu0 0
    %3207 = vmatpush1.bf16.msra.mxu0 %v694
    %3208 = vmatprep.subr.bf16.mxu0 0
    %3209 = vmatpush1.bf16.msra.mxu0 %v695
    %3210 = vmatprep.subr.bf16.mxu0 0
    %3211 = vmatpush1.bf16.msra.mxu0 0
    %3212 = vmatprep.subr.bf16.mxu0 0
    %3213 = vmatpush1.bf16.msra.mxu0 0
    %3214 = vmatprep.subr.bf16.mxu0 0
    %3215 = vmatpush1.bf16.msra.mxu0 0
    %3216 = vmatprep.subr.bf16.mxu0 0
    %3217 = vmatpush1.bf16.msra.mxu0 0
    %3218 = vmatprep.subr.bf16.mxu0 0
    %3219 = vmatpush1.bf16.msra.mxu0 0
    %3220 = vmatprep.subr.bf16.mxu0 0
    %3221 = vmatpush1.bf16.msra.mxu0 0
    %3222 = vmatprep.subr.bf16.mxu0 0
    %3223 = vmatpush1.bf16.msra.mxu0 0
    %3224 = vmatprep.subr.bf16.mxu0 0
    %3225 = vmatpush1.bf16.msra.mxu0 0
    %3226 = vmatprep.subr.bf16.mxu0 0
    %3227 = vmatpush1.bf16.msra.mxu0 0
    %3228 = vmatprep.subr.bf16.mxu0 0
    %3229 = vmatpush1.bf16.msra.mxu0 0
    %3230 = vmatprep.subr.bf16.mxu0 0
    %3231 = vmatpush1.bf16.msra.mxu0 0
    %3232 = vmatprep.subr.bf16.mxu0 0
    %3233 = vmatpush1.bf16.msra.mxu0 0
    %3234 = vmatprep.subr.bf16.mxu0 0
    %3235 = vmatpush1.bf16.msra.mxu0 0
    %3236 = vmatprep.subr.bf16.mxu0 0
    %3237 = vmatpush1.bf16.msra.mxu0 0
    %3238 = vmatprep.mubr.bf16.mxu0 0
    %3239 = vmatmul.mubr.bf16.gmra.mrb[0].mxu0 %v3124
    %v3240 = vpop.f32.mrb[0].mxu0
    %v3241 = vadd.f32 %v684, %v3240
    %v3242 = vpop.f32.mrb[0].mxu0
    %v3243 = vpop.f32.mrb[0].mxu0
    %v3244 = vpop.f32.mrb[0].mxu0
    %3245 = vdwg.mxu0
    %v3246 = vadd.f32 %v3038, %v3161
    %v3247 = vxor.u32 %v3246, 2147483648
    %v3248 = vmul.f32 %v3247, 1.442695
    %v3249 = vpow.pop %v3248
    %v3250 = vadd.f32 %v3249, 1.0
    %v3251 = vrcp.pop %v3250
    %v3252 = vmul.f32 1.0, %v3251
    %v3253 = vadd.f32 %v3078, %v3201
    %v3254 = vxor.u32 %v3253, 2147483648
    %v3255 = vmul.f32 %v3254, 1.442695
    %v3256 = vpow.pop %v3255
    %v3257 = vadd.f32 %v3256, 1.0
    %v3258 = vrcp.pop %v3257
    %v3259 = vmul.f32 1.0, %v3258
    %v3260 = vmul.f32 %v3252, %v3241
    %v3261 = vadd.f32 %v3118, %v3260
    %v3262 = vtanh.pop %v3261
    %v3263 = vsub.f32 1.0, %v3259
    %v3264 = vmul.f32 %v3263, %v3262
    %v3265 = vmul.f32 %v3259, %v2848
    %v3266 = vadd.f32 %v3264, %v3265
    %v3267 = vmax.f32 %v2849, %v3266
    %v3268 = vadd.f32 %v2850, %v3266
    %3269 = vmatprep.subr.bf16.mxu0 0
    %3270 = vmatpush1.bf16.msra.mxu0 %v194
    %3271 = vmatprep.subr.bf16.mxu0 0
    %3272 = vmatpush1.bf16.msra.mxu0 %v195
    %3273 = vmatprep.subr.bf16.mxu0 0
    %3274 = vmatpush1.bf16.msra.mxu0 0
    %3275 = vmatprep.subr.bf16.mxu0 0
    %3276 = vmatpush1.bf16.msra.mxu0 0
    %3277 = vmatprep.subr.bf16.mxu0 0
    %3278 = vmatpush1.bf16.msra.mxu0 0
    %3279 = vmatprep.subr.bf16.mxu0 0
    %3280 = vmatpush1.bf16.msra.mxu0 0
    %3281 = vmatprep.subr.bf16.mxu0 0
    %3282 = vmatpush1.bf16.msra.mxu0 0
    %3283 = vmatprep.subr.bf16.mxu0 0
    %3284 = vmatpush1.bf16.msra.mxu0 0
    %3285 = vmatprep.subr.bf16.mxu0 0
    %3286 = vmatpush1.bf16.msra.mxu0 0
    %3287 = vmatprep.subr.bf16.mxu0 0
    %3288 = vmatpush1.bf16.msra.mxu0 0
    %3289 = vmatprep.subr.bf16.mxu0 0
    %3290 = vmatpush1.bf16.msra.mxu0 0
    %3291 = vmatprep.subr.bf16.mxu0 0
    %3292 = vmatpush1.bf16.msra.mxu0 0
    %3293 = vmatprep.subr.bf16.mxu0 0
    %3294 = vmatpush1.bf16.msra.mxu0 0
    %3295 = vmatprep.subr.bf16.mxu0 0
    %3296 = vmatpush1.bf16.msra.mxu0 0
    %3297 = vmatprep.subr.bf16.mxu0 0
    %3298 = vmatpush1.bf16.msra.mxu0 0
    %3299 = vmatprep.subr.bf16.mxu0 0
    %3300 = vmatpush1.bf16.msra.mxu0 0
    %3301 = vmatprep.mubr.bf16.mxu0 0
    %3302 = vmatmul.mubr.bf16.gmra.mrb[0].mxu0 %v3001
    %v3303 = vpop.f32.mrb[0].mxu0
    %v3304 = vadd.f32 %v184, %v3303
    %v3305 = vpop.f32.mrb[0].mxu0
    %v3306 = vpop.f32.mrb[0].mxu0
    %v3307 = vpop.f32.mrb[0].mxu0
    %3308 = vdwg.mxu0
    %3309 = vmatprep.subr.bf16.mxu0 0
    %3310 = vmatpush1.bf16.msra.mxu0 %v256
    %3311 = vmatprep.subr.bf16.mxu0 0
    %3312 = vmatpush1.bf16.msra.mxu0 %v257
    %3313 = vmatprep.subr.bf16.mxu0 0
    %3314 = vmatpush1.bf16.msra.mxu0 0
    %3315 = vmatprep.subr.bf16.mxu0 0
    %3316 = vmatpush1.bf16.msra.mxu0 0
    %3317 = vmatprep.subr.bf16.mxu0 0
    %3318 = vmatpush1.bf16.msra.mxu0 0
    %3319 = vmatprep.subr.bf16.mxu0 0
    %3320 = vmatpush1.bf16.msra.mxu0 0
    %3321 = vmatprep.subr.bf16.mxu0 0
    %3322 = vmatpush1.bf16.msra.mxu0 0
    %3323 = vmatprep.subr.bf16.mxu0 0
    %3324 = vmatpush1.bf16.msra.mxu0 0
    %3325 = vmatprep.subr.bf16.mxu0 0
    %3326 = vmatpush1.bf16.msra.mxu0 0
    %3327 = vmatprep.subr.bf16.mxu0 0
    %3328 = vmatpush1.bf16.msra.mxu0 0
    %3329 = vmatprep.subr.bf16.mxu0 0
    %3330 = vmatpush1.bf16.msra.mxu0 0
    %3331 = vmatprep.subr.bf16.mxu0 0
    %3332 = vmatpush1.bf16.msra.mxu0 0
    %3333 = vmatprep.subr.bf16.mxu0 0
    %3334 = vmatpush1.bf16.msra.mxu0 0
    %3335 = vmatprep.subr.bf16.mxu0 0
    %3336 = vmatpush1.bf16.msra.mxu0 0
    %3337 = vmatprep.subr.bf16.mxu0 0
    %3338 = vmatpush1.bf16.msra.mxu0 0
    %3339 = vmatprep.subr.bf16.mxu0 0
    %3340 = vmatpush1.bf16.msra.mxu0 0
    %3341 = vmatprep.mubr.bf16.mxu0 0
    %3342 = vmatmul.mubr.bf16.gmra.mrb[0].mxu0 %v3001
    %v3343 = vpop.f32.mrb[0].mxu0
    %v3344 = vadd.f32 %v246, %v3343
    %v3345 = vpop.f32.mrb[0].mxu0
    %v3346 = vpop.f32.mrb[0].mxu0
    %v3347 = vpop.f32.mrb[0].mxu0
    %3348 = vdwg.mxu0
    %3349 = vmatprep.subr.bf16.mxu0 0
    %3350 = vmatpush1.bf16.msra.mxu0 %v314
    %3351 = vmatprep.subr.bf16.mxu0 0
    %3352 = vmatpush1.bf16.msra.mxu0 %v315
    %3353 = vmatprep.subr.bf16.mxu0 0
    %3354 = vmatpush1.bf16.msra.mxu0 0
    %3355 = vmatprep.subr.bf16.mxu0 0
    %3356 = vmatpush1.bf16.msra.mxu0 0
    %3357 = vmatprep.subr.bf16.mxu0 0
    %3358 = vmatpush1.bf16.msra.mxu0 0
    %3359 = vmatprep.subr.bf16.mxu0 0
    %3360 = vmatpush1.bf16.msra.mxu0 0
    %3361 = vmatprep.subr.bf16.mxu0 0
    %3362 = vmatpush1.bf16.msra.mxu0 0
    %3363 = vmatprep.subr.bf16.mxu0 0
    %3364 = vmatpush1.bf16.msra.mxu0 0
    %3365 = vmatprep.subr.bf16.mxu0 0
    %3366 = vmatpush1.bf16.msra.mxu0 0
    %3367 = vmatprep.subr.bf16.mxu0 0
    %3368 = vmatpush1.bf16.msra.mxu0 0
    %3369 = vmatprep.subr.bf16.mxu0 0
    %3370 = vmatpush1.bf16.msra.mxu0 0
    %3371 = vmatprep.subr.bf16.mxu0 0
    %3372 = vmatpush1.bf16.msra.mxu0 0
    %3373 = vmatprep.subr.bf16.mxu0 0
    %3374 = vmatpush1.bf16.msra.mxu0 0
    %3375 = vmatprep.subr.bf16.mxu0 0
    %3376 = vmatpush1.bf16.msra.mxu0 0
    %3377 = vmatprep.subr.bf16.mxu0 0
    %3378 = vmatpush1.bf16.msra.mxu0 0
    %3379 = vmatprep.subr.bf16.mxu0 0
    %3380 = vmatpush1.bf16.msra.mxu0 0
    %3381 = vmatprep.mubr.bf16.mxu0 0
    %3382 = vmatmul.mubr.bf16.gmra.mrb[0].mxu0 %v3001
    %v3383 = vpop.f32.mrb[0].mxu0
    %v3384 = vadd.f32 %v304, %v3383
    %v3385 = vpop.f32.mrb[0].mxu0
    %v3386 = vpop.f32.mrb[0].mxu0
    %v3387 = vpop.f32.mrb[0].mxu0
    %3388 = vdwg.mxu0
    %s3389 = scalar_lea.vmem [#allocation7], 56
    %v3390 = vld [vmem:[%s3389] sm:$0xff]
    %v3391 = vadd.f32 %v3390, %v3304
    %v3392 = vxor.u32 %v3391, 2147483648
    %v3393 = vmul.f32 %v3392, 1.442695
    %v3394 = vpow.pop %v3393
    %v3395 = vadd.f32 %v3394, 1.0
    %v3396 = vrcp.pop %v3395
    %v3397 = vmul.f32 1.0, %v3396
    %s3398 = scalar_lea.vmem [#allocation9], 56
    %v3399 = vld [vmem:[%s3398] sm:$0xff]
    %v3400 = vadd.f32 %v3399, %v3344
    %v3401 = vxor.u32 %v3400, 2147483648
    %v3402 = vmul.f32 %v3401, 1.442695
    %v3403 = vpow.pop %v3402
    %v3404 = vadd.f32 %v3403, 1.0
    %v3405 = vrcp.pop %v3404
    %v3406 = vmul.f32 1.0, %v3405
    %s3407 = scalar_lea.vmem [#allocation11], 56
    %v3408 = vld [vmem:[%s3407] sm:$0xff]
    %v3409 = vmul.f32 %v3397, %v3384
    %v3410 = vadd.f32 %v3408, %v3409
    %v3411 = vtanh.pop %v3410
    %v3412 = vsub.f32 1.0, %v3406
    %v3413 = vmul.f32 %v3412, %v3411
    %v3414 = vmul.f32 %v3406, %v2997
    %v3415 = vadd.f32 %v3413, %v3414
    %v3416 = vpack.c.bf16 %v3415, %v3415
    %v3417 = vpack.c.bf16 %v3266, %v3266
    %v3419 = vsel %vm198, %v3416, 0
    %3421 = vmatprep.subr.bf16.mxu0 0
    %3422 = vmatpush1.bf16.msra.mxu0 %v398
    %3423 = vmatprep.subr.bf16.mxu0 0
    %3424 = vmatpush1.bf16.msra.mxu0 %v399
    %3425 = vmatprep.subr.bf16.mxu0 0
    %3426 = vmatpush1.bf16.msra.mxu0 0
    %3427 = vmatprep.subr.bf16.mxu0 0
    %3428 = vmatpush1.bf16.msra.mxu0 0
    %3429 = vmatprep.subr.bf16.mxu0 0
    %3430 = vmatpush1.bf16.msra.mxu0 0
    %3431 = vmatprep.subr.bf16.mxu0 0
    %3432 = vmatpush1.bf16.msra.mxu0 0
    %3433 = vmatprep.subr.bf16.mxu0 0
    %3434 = vmatpush1.bf16.msra.mxu0 0
    %3435 = vmatprep.subr.bf16.mxu0 0
    %3436 = vmatpush1.bf16.msra.mxu0 0
    %3437 = vmatprep.subr.bf16.mxu0 0
    %3438 = vmatpush1.bf16.msra.mxu0 0
    %3439 = vmatprep.subr.bf16.mxu0 0
    %3440 = vmatpush1.bf16.msra.mxu0 0
    %3441 = vmatprep.subr.bf16.mxu0 0
    %3442 = vmatpush1.bf16.msra.mxu0 0
    %3443 = vmatprep.subr.bf16.mxu0 0
    %3444 = vmatpush1.bf16.msra.mxu0 0
    %3445 = vmatprep.subr.bf16.mxu0 0
    %3446 = vmatpush1.bf16.msra.mxu0 0
    %3447 = vmatprep.subr.bf16.mxu0 0
    %3448 = vmatpush1.bf16.msra.mxu0 0
    %3449 = vmatprep.subr.bf16.mxu0 0
    %3450 = vmatpush1.bf16.msra.mxu0 0
    %3451 = vmatprep.subr.bf16.mxu0 0
    %3452 = vmatpush1.bf16.msra.mxu0 0
    %3453 = vmatprep.mubr.bf16.mxu0 0
    %3454 = vmatmul.mubr.bf16.gmra.mrb[0].mxu0 %v3419
    %v3455 = vpop.f32.mrb[0].mxu0
    %v3456 = vadd.f32 %v388, %v3455
    %v3457 = vpop.f32.mrb[0].mxu0
    %v3458 = vpop.f32.mrb[0].mxu0
    %v3459 = vpop.f32.mrb[0].mxu0
    %3460 = vdwg.mxu0
    %3461 = vmatprep.subr.bf16.mxu0 0
    %3462 = vmatpush1.bf16.msra.mxu0 %v459
    %3463 = vmatprep.subr.bf16.mxu0 0
    %3464 = vmatpush1.bf16.msra.mxu0 %v460
    %3465 = vmatprep.subr.bf16.mxu0 0
    %3466 = vmatpush1.bf16.msra.mxu0 0
    %3467 = vmatprep.subr.bf16.mxu0 0
    %3468 = vmatpush1.bf16.msra.mxu0 0
    %3469 = vmatprep.subr.bf16.mxu0 0
    %3470 = vmatpush1.bf16.msra.mxu0 0
    %3471 = vmatprep.subr.bf16.mxu0 0
    %3472 = vmatpush1.bf16.msra.mxu0 0
    %3473 = vmatprep.subr.bf16.mxu0 0
    %3474 = vmatpush1.bf16.msra.mxu0 0
    %3475 = vmatprep.subr.bf16.mxu0 0
    %3476 = vmatpush1.bf16.msra.mxu0 0
    %3477 = vmatprep.subr.bf16.mxu0 0
    %3478 = vmatpush1.bf16.msra.mxu0 0
    %3479 = vmatprep.subr.bf16.mxu0 0
    %3480 = vmatpush1.bf16.msra.mxu0 0
    %3481 = vmatprep.subr.bf16.mxu0 0
    %3482 = vmatpush1.bf16.msra.mxu0 0
    %3483 = vmatprep.subr.bf16.mxu0 0
    %3484 = vmatpush1.bf16.msra.mxu0 0
    %3485 = vmatprep.subr.bf16.mxu0 0
    %3486 = vmatpush1.bf16.msra.mxu0 0
    %3487 = vmatprep.subr.bf16.mxu0 0
    %3488 = vmatpush1.bf16.msra.mxu0 0
    %3489 = vmatprep.subr.bf16.mxu0 0
    %3490 = vmatpush1.bf16.msra.mxu0 0
    %3491 = vmatprep.subr.bf16.mxu0 0
    %3492 = vmatpush1.bf16.msra.mxu0 0
    %3493 = vmatprep.mubr.bf16.mxu0 0
    %3494 = vmatmul.mubr.bf16.gmra.mrb[0].mxu0 %v3419
    %v3495 = vpop.f32.mrb[0].mxu0
    %v3496 = vadd.f32 %v449, %v3495
    %v3497 = vpop.f32.mrb[0].mxu0
    %v3498 = vpop.f32.mrb[0].mxu0
    %v3499 = vpop.f32.mrb[0].mxu0
    %3500 = vdwg.mxu0
    %3501 = vmatprep.subr.bf16.mxu0 0
    %3502 = vmatpush1.bf16.msra.mxu0 %v517
    %3503 = vmatprep.subr.bf16.mxu0 0
    %3504 = vmatpush1.bf16.msra.mxu0 %v518
    %3505 = vmatprep.subr.bf16.mxu0 0
    %3506 = vmatpush1.bf16.msra.mxu0 0
    %3507 = vmatprep.subr.bf16.mxu0 0
    %3508 = vmatpush1.bf16.msra.mxu0 0
    %3509 = vmatprep.subr.bf16.mxu0 0
    %3510 = vmatpush1.bf16.msra.mxu0 0
    %3511 = vmatprep.subr.bf16.mxu0 0
    %3512 = vmatpush1.bf16.msra.mxu0 0
    %3513 = vmatprep.subr.bf16.mxu0 0
    %3514 = vmatpush1.bf16.msra.mxu0 0
    %3515 = vmatprep.subr.bf16.mxu0 0
    %3516 = vmatpush1.bf16.msra.mxu0 0
    %3517 = vmatprep.subr.bf16.mxu0 0
    %3518 = vmatpush1.bf16.msra.mxu0 0
    %3519 = vmatprep.subr.bf16.mxu0 0
    %3520 = vmatpush1.bf16.msra.mxu0 0
    %3521 = vmatprep.subr.bf16.mxu0 0
    %3522 = vmatpush1.bf16.msra.mxu0 0
    %3523 = vmatprep.subr.bf16.mxu0 0
    %3524 = vmatpush1.bf16.msra.mxu0 0
    %3525 = vmatprep.subr.bf16.mxu0 0
    %3526 = vmatpush1.bf16.msra.mxu0 0
    %3527 = vmatprep.subr.bf16.mxu0 0
    %3528 = vmatpush1.bf16.msra.mxu0 0
    %3529 = vmatprep.subr.bf16.mxu0 0
    %3530 = vmatpush1.bf16.msra.mxu0 0
    %3531 = vmatprep.subr.bf16.mxu0 0
    %3532 = vmatpush1.bf16.msra.mxu0 0
    %3533 = vmatprep.mubr.bf16.mxu0 0
    %3534 = vmatmul.mubr.bf16.gmra.mrb[0].mxu0 %v3419
    %v3535 = vpop.f32.mrb[0].mxu0
    %v3536 = vadd.f32 %v507, %v3535
    %v3537 = vpop.f32.mrb[0].mxu0
    %v3538 = vpop.f32.mrb[0].mxu0
    %v3539 = vpop.f32.mrb[0].mxu0
    %3540 = vdwg.mxu0
    %v3542 = vsel %vm198, %v3417, 0
    %3544 = vmatprep.subr.bf16.mxu0 0
    %3545 = vmatpush1.bf16.msra.mxu0 %v575
    %3546 = vmatprep.subr.bf16.mxu0 0
    %3547 = vmatpush1.bf16.msra.mxu0 %v576
    %3548 = vmatprep.subr.bf16.mxu0 0
    %3549 = vmatpush1.bf16.msra.mxu0 0
    %3550 = vmatprep.subr.bf16.mxu0 0
    %3551 = vmatpush1.bf16.msra.mxu0 0
    %3552 = vmatprep.subr.bf16.mxu0 0
    %3553 = vmatpush1.bf16.msra.mxu0 0
    %3554 = vmatprep.subr.bf16.mxu0 0
    %3555 = vmatpush1.bf16.msra.mxu0 0
    %3556 = vmatprep.subr.bf16.mxu0 0
    %3557 = vmatpush1.bf16.msra.mxu0 0
    %3558 = vmatprep.subr.bf16.mxu0 0
    %3559 = vmatpush1.bf16.msra.mxu0 0
    %3560 = vmatprep.subr.bf16.mxu0 0
    %3561 = vmatpush1.bf16.msra.mxu0 0
    %3562 = vmatprep.subr.bf16.mxu0 0
    %3563 = vmatpush1.bf16.msra.mxu0 0
    %3564 = vmatprep.subr.bf16.mxu0 0
    %3565 = vmatpush1.bf16.msra.mxu0 0
    %3566 = vmatprep.subr.bf16.mxu0 0
    %3567 = vmatpush1.bf16.msra.mxu0 0
    %3568 = vmatprep.subr.bf16.mxu0 0
    %3569 = vmatpush1.bf16.msra.mxu0 0
    %3570 = vmatprep.subr.bf16.mxu0 0
    %3571 = vmatpush1.bf16.msra.mxu0 0
    %3572 = vmatprep.subr.bf16.mxu0 0
    %3573 = vmatpush1.bf16.msra.mxu0 0
    %3574 = vmatprep.subr.bf16.mxu0 0
    %3575 = vmatpush1.bf16.msra.mxu0 0
    %3576 = vmatprep.mubr.bf16.mxu0 0
    %3577 = vmatmul.mubr.bf16.gmra.mrb[0].mxu0 %v3542
    %v3578 = vpop.f32.mrb[0].mxu0
    %v3579 = vadd.f32 %v565, %v3578
    %v3580 = vpop.f32.mrb[0].mxu0
    %v3581 = vpop.f32.mrb[0].mxu0
    %v3582 = vpop.f32.mrb[0].mxu0
    %3583 = vdwg.mxu0
    %3584 = vmatprep.subr.bf16.mxu0 0
    %3585 = vmatpush1.bf16.msra.mxu0 %v636
    %3586 = vmatprep.subr.bf16.mxu0 0
    %3587 = vmatpush1.bf16.msra.mxu0 %v637
    %3588 = vmatprep.subr.bf16.mxu0 0
    %3589 = vmatpush1.bf16.msra.mxu0 0
    %3590 = vmatprep.subr.bf16.mxu0 0
    %3591 = vmatpush1.bf16.msra.mxu0 0
    %3592 = vmatprep.subr.bf16.mxu0 0
    %3593 = vmatpush1.bf16.msra.mxu0 0
    %3594 = vmatprep.subr.bf16.mxu0 0
    %3595 = vmatpush1.bf16.msra.mxu0 0
    %3596 = vmatprep.subr.bf16.mxu0 0
    %3597 = vmatpush1.bf16.msra.mxu0 0
    %3598 = vmatprep.subr.bf16.mxu0 0
    %3599 = vmatpush1.bf16.msra.mxu0 0
    %3600 = vmatprep.subr.bf16.mxu0 0
    %3601 = vmatpush1.bf16.msra.mxu0 0
    %3602 = vmatprep.subr.bf16.mxu0 0
    %3603 = vmatpush1.bf16.msra.mxu0 0
    %3604 = vmatprep.subr.bf16.mxu0 0
    %3605 = vmatpush1.bf16.msra.mxu0 0
    %3606 = vmatprep.subr.bf16.mxu0 0
    %3607 = vmatpush1.bf16.msra.mxu0 0
    %3608 = vmatprep.subr.bf16.mxu0 0
    %3609 = vmatpush1.bf16.msra.mxu0 0
    %3610 = vmatprep.subr.bf16.mxu0 0
    %3611 = vmatpush1.bf16.msra.mxu0 0
    %3612 = vmatprep.subr.bf16.mxu0 0
    %3613 = vmatpush1.bf16.msra.mxu0 0
    %3614 = vmatprep.subr.bf16.mxu0 0
    %3615 = vmatpush1.bf16.msra.mxu0 0
    %3616 = vmatprep.mubr.bf16.mxu0 0
    %3617 = vmatmul.mubr.bf16.gmra.mrb[0].mxu0 %v3542
    %v3618 = vpop.f32.mrb[0].mxu0
    %v3619 = vadd.f32 %v626, %v3618
    %v3620 = vpop.f32.mrb[0].mxu0
    %v3621 = vpop.f32.mrb[0].mxu0
    %v3622 = vpop.f32.mrb[0].mxu0
    %3623 = vdwg.mxu0
    %3624 = vmatprep.subr.bf16.mxu0 0
    %3625 = vmatpush1.bf16.msra.mxu0 %v694
    %3626 = vmatprep.subr.bf16.mxu0 0
    %3627 = vmatpush1.bf16.msra.mxu0 %v695
    %3628 = vmatprep.subr.bf16.mxu0 0
    %3629 = vmatpush1.bf16.msra.mxu0 0
    %3630 = vmatprep.subr.bf16.mxu0 0
    %3631 = vmatpush1.bf16.msra.mxu0 0
    %3632 = vmatprep.subr.bf16.mxu0 0
    %3633 = vmatpush1.bf16.msra.mxu0 0
    %3634 = vmatprep.subr.bf16.mxu0 0
    %3635 = vmatpush1.bf16.msra.mxu0 0
    %3636 = vmatprep.subr.bf16.mxu0 0
    %3637 = vmatpush1.bf16.msra.mxu0 0
    %3638 = vmatprep.subr.bf16.mxu0 0
    %3639 = vmatpush1.bf16.msra.mxu0 0
    %3640 = vmatprep.subr.bf16.mxu0 0
    %3641 = vmatpush1.bf16.msra.mxu0 0
    %3642 = vmatprep.subr.bf16.mxu0 0
    %3643 = vmatpush1.bf16.msra.mxu0 0
    %3644 = vmatprep.subr.bf16.mxu0 0
    %3645 = vmatpush1.bf16.msra.mxu0 0
    %3646 = vmatprep.subr.bf16.mxu0 0
    %3647 = vmatpush1.bf16.msra.mxu0 0
    %3648 = vmatprep.subr.bf16.mxu0 0
    %3649 = vmatpush1.bf16.msra.mxu0 0
    %3650 = vmatprep.subr.bf16.mxu0 0
    %3651 = vmatpush1.bf16.msra.mxu0 0
    %3652 = vmatprep.subr.bf16.mxu0 0
    %3653 = vmatpush1.bf16.msra.mxu0 0
    %3654 = vmatprep.subr.bf16.mxu0 0
    %3655 = vmatpush1.bf16.msra.mxu0 0
    %3656 = vmatprep.mubr.bf16.mxu0 0
    %3657 = vmatmul.mubr.bf16.gmra.mrb[0].mxu0 %v3542
    %v3658 = vpop.f32.mrb[0].mxu0
    %v3659 = vadd.f32 %v684, %v3658
    %v3660 = vpop.f32.mrb[0].mxu0
    %v3661 = vpop.f32.mrb[0].mxu0
    %v3662 = vpop.f32.mrb[0].mxu0
    %3663 = vdwg.mxu0
    %v3664 = vadd.f32 %v3456, %v3579
    %v3665 = vxor.u32 %v3664, 2147483648
    %v3666 = vmul.f32 %v3665, 1.442695
    %v3667 = vpow.pop %v3666
    %v3668 = vadd.f32 %v3667, 1.0
    %v3669 = vrcp.pop %v3668
    %v3670 = vmul.f32 1.0, %v3669
    %v3671 = vadd.f32 %v3496, %v3619
    %v3672 = vxor.u32 %v3671, 2147483648
    %v3673 = vmul.f32 %v3672, 1.442695
    %v3674 = vpow.pop %v3673
    %v3675 = vadd.f32 %v3674, 1.0
    %v3676 = vrcp.pop %v3675
    %v3677 = vmul.f32 1.0, %v3676
    %v3678 = vmul.f32 %v3670, %v3659
    %v3679 = vadd.f32 %v3536, %v3678
    %v3680 = vtanh.pop %v3679
    %v3681 = vsub.f32 1.0, %v3677
    %v3682 = vmul.f32 %v3681, %v3680
    %v3683 = vmul.f32 %v3677, %v3266
    %v3684 = vadd.f32 %v3682, %v3683
    %v3685 = vmax.f32 %v3267, %v3684
    %v3686 = vadd.f32 %v3268, %v3684
    %3687 = vst.msk [vmem:[#allocation2] sm:$0xff] %vm198, %v3415
    %3688 = vst.msk [vmem:[#allocation3] sm:$0xff] %vm198, %v3684
    %3689 = vst.msk [vmem:[#allocation4] sm:$0xff] %vm198, %v3685
    %3690 = vst.msk [vmem:[#allocation5] sm:$0xff] %vm198, %v3686
    // Predicated region
    $region70: #{tpu_custom_call.1} parent=1 // pred_check
      %p3691 = pneg %p109
    $region71: #{tpu_custom_call.1} parent=1 // pred_check_branch
      %3693 = sbr.rel (%p3691) target = $region73
    $region72: #{tpu_custom_call.1} parent=1 // pred_region
      %v3694 = vmul.f32 %v3686, 0.125
      %v3695 = vpack.c.bf16 %v3685, %v3685
      %v3696 = vld [vmem:[%s9] sm:$0xf]
      %v3697 = vld [vmem:[%s9 + $0x4] sm:$0xf]
      %v3698 = vld [vmem:[%s9 + $0x8] sm:$0xf]
      %v3699 = vld [vmem:[%s9 + $0xc] sm:$0xf]
      %v3700 = vpack.c.bf16 %v3694, %v3694
      %s3701 = scalar_lea.vmem %s9, 16
      %v3702 = vld [vmem:[%s3701] sm:$0xf]
      %v3703 = vld [vmem:[%s3701 + $0x4] sm:$0xf]
      %v3704 = vld [vmem:[%s3701 + $0x8] sm:$0xf]
      %v3705 = vld [vmem:[%s3701 + $0xc] sm:$0xf]
      %v3710 = vunpack.c.l.b16 %v3702
      %v3711 = vunpack.c.l.b16 %v3703
      %v3712 = vunpack.c.l.b16 %v3704
      %v3713 = vunpack.c.l.b16 %v3705
      %v3714 = vpack.c.b16 %v3711, %v3710
      %v3715 = vpack.c.b16 %v3713, %v3712
      %v3719 = vsel %vm198, %v3700, 0
      %3721 = vmatprep.subr.bf16.mxu0 0
      %3722 = vmatpush1.bf16.msra.mxu0 %v3714
      %3723 = vmatprep.subr.bf16.mxu0 0
      %3724 = vmatpush1.bf16.msra.mxu0 %v3715
      %3725 = vmatprep.subr.bf16.mxu0 0
      %3726 = vmatpush1.bf16.msra.mxu0 0
      %3727 = vmatprep.subr.bf16.mxu0 0
      %3728 = vmatpush1.bf16.msra.mxu0 0
      %3729 = vmatprep.subr.bf16.mxu0 0
      %3730 = vmatpush1.bf16.msra.mxu0 0
      %3731 = vmatprep.subr.bf16.mxu0 0
      %3732 = vmatpush1.bf16.msra.mxu0 0
      %3733 = vmatprep.subr.bf16.mxu0 0
      %3734 = vmatpush1.bf16.msra.mxu0 0
      %3735 = vmatprep.subr.bf16.mxu0 0
      %3736 = vmatpush1.bf16.msra.mxu0 0
      %3737 = vmatprep.subr.bf16.mxu0 0
      %3738 = vmatpush1.bf16.msra.mxu0 0
      %3739 = vmatprep.subr.bf16.mxu0 0
      %3740 = vmatpush1.bf16.msra.mxu0 0
      %3741 = vmatprep.subr.bf16.mxu0 0
      %3742 = vmatpush1.bf16.msra.mxu0 0
      %3743 = vmatprep.subr.bf16.mxu0 0
      %3744 = vmatpush1.bf16.msra.mxu0 0
      %3745 = vmatprep.subr.bf16.mxu0 0
      %3746 = vmatpush1.bf16.msra.mxu0 0
      %3747 = vmatprep.subr.bf16.mxu0 0
      %3748 = vmatpush1.bf16.msra.mxu0 0
      %3749 = vmatprep.subr.bf16.mxu0 0
      %3750 = vmatpush1.bf16.msra.mxu0 0
      %3751 = vmatprep.subr.bf16.mxu0 0
      %3752 = vmatpush1.bf16.msra.mxu0 0
      %3753 = vmatprep.mubr.bf16.mxu0 0
      %3754 = vmatmul.mubr.bf16.gmra.mrb[0].mxu0 %v3719
      %v3755 = vpop.f32.mrb[0].mxu0
      %v3756 = vadd.f32 0.0, %v3755
      %v3757 = vpop.f32.mrb[0].mxu0
      %v3758 = vpop.f32.mrb[0].mxu0
      %v3759 = vpop.f32.mrb[0].mxu0
      %3760 = vdwg.mxu0
      %v3765 = vunpack.c.l.b16 %v3696
      %v3766 = vunpack.c.l.b16 %v3697
      %v3767 = vunpack.c.l.b16 %v3698
      %v3768 = vunpack.c.l.b16 %v3699
      %v3769 = vpack.c.b16 %v3766, %v3765
      %v3770 = vpack.c.b16 %v3768, %v3767
      %v3774 = vsel %vm198, %v3695, 0
      %3776 = vmatprep.subr.bf16.mxu0 0
      %3777 = vmatpush1.bf16.msra.mxu0 %v3769
      %3778 = vmatprep.subr.bf16.mxu0 0
      %3779 = vmatpush1.bf16.msra.mxu0 %v3770
      %3780 = vmatprep.subr.bf16.mxu0 0
      %3781 = vmatpush1.bf16.msra.mxu0 0
      %3782 = vmatprep.subr.bf16.mxu0 0
      %3783 = vmatpush1.bf16.msra.mxu0 0
      %3784 = vmatprep.subr.bf16.mxu0 0
      %3785 = vmatpush1.bf16.msra.mxu0 0
      %3786 = vmatprep.subr.bf16.mxu0 0
      %3787 = vmatpush1.bf16.msra.mxu0 0
      %3788 = vmatprep.subr.bf16.mxu0 0
      %3789 = vmatpush1.bf16.msra.mxu0 0
      %3790 = vmatprep.subr.bf16.mxu0 0
      %3791 = vmatpush1.bf16.msra.mxu0 0
      %3792 = vmatprep.subr.bf16.mxu0 0
      %3793 = vmatpush1.bf16.msra.mxu0 0
      %3794 = vmatprep.subr.bf16.mxu0 0
      %3795 = vmatpush1.bf16.msra.mxu0 0
      %3796 = vmatprep.subr.bf16.mxu0 0
      %3797 = vmatpush1.bf16.msra.mxu0 0
      %3798 = vmatprep.subr.bf16.mxu0 0
      %3799 = vmatpush1.bf16.msra.mxu0 0
      %3800 = vmatprep.subr.bf16.mxu0 0
      %3801 = vmatpush1.bf16.msra.mxu0 0
      %3802 = vmatprep.subr.bf16.mxu0 0
      %3803 = vmatpush1.bf16.msra.mxu0 0
      %3804 = vmatprep.subr.bf16.mxu0 0
      %3805 = vmatpush1.bf16.msra.mxu0 0
      %3806 = vmatprep.subr.bf16.mxu0 0
      %3807 = vmatpush1.bf16.msra.mxu0 0
      %3808 = vmatprep.mubr.bf16.mxu0 0
      %3809 = vmatmul.mubr.bf16.gmra.mrb[0].mxu0 %v3774
      %v3810 = vpop.f32.mrb[0].mxu0
      %v3811 = vadd.f32 %v3756, %v3810
      %v3812 = vpop.f32.mrb[0].mxu0
      %v3813 = vpop.f32.mrb[0].mxu0
      %v3814 = vpop.f32.mrb[0].mxu0
      %3815 = vdwg.mxu0
      %v3816 = vld [vmem:[#allocation6] sm:$0x1]
      %v3818 = vlaneseq
      %v3819 = vshrl.u32 %v3818, 7
      %v3820 = vsub.s32 0, %v3819
      %v3821 = vrot.slane %v3816, %v3820
      %v3823 = vadd.f32 %v3811, %v3821
      %v3824 = vxor.u32 %v3823, 2147483648
      %v3825 = vmul.f32 %v3824, 1.442695
      %v3826 = vpow.pop %v3825
      %v3827 = vadd.f32 %v3826, 1.0
      %v3828 = vrcp.pop %v3827
      %v3829 = vmul.f32 1.0, %v3828
      %vm3830 = vcmask 7168
      %3831 = vst.msk [vmem:[%s11] sm:$0xff] %vm3830, %v3829
    $region73: #{tpu_custom_call.1} parent=1 // pred_fallthru
      _
    // Predicated region
    $region74: #{tpu_custom_call.1} parent=1 // pred_check
      _
    $region75: #{tpu_custom_call.1} parent=1 // pred_check_branch
      %3833 = sbr.rel (0) target = $region77
    $region76: #{tpu_custom_call.1} parent=1 // pred_region
      _
    $region77: #{tpu_custom_call.1} parent=1 // pred_fallthru
      _
    // Predicated region
    $region78: #{tpu_custom_call.1} parent=1 // pred_check
      _
    $region79: #{tpu_custom_call.1} parent=1 // pred_check_branch
      %3835 = sbr.rel (0) target = $region81
    $region80: #{tpu_custom_call.1} parent=1 // pred_region
      _
    $region81: #{tpu_custom_call.1} parent=1 // pred_fallthru
      _
    %3836 = vsyncpa [#allocation8], 1
    %3837 = vsyncpa [#allocation10], 1
    %3838 = vsyncpa [#allocation13], 1

// kernel: tpu_custom_call.1
$region0: #{tpu_custom_call.1}
  #allocation0 [shape = 'u32[]', space=smem, size = 0x4, offset = 0x4, fixed_abs, tag = 'smem constant byte address 0x4 - core index']
  #allocation1 [shape = 'u32[144,128]{1,0:T(1,128)}', space=vmem, size = 0x12000, scoped, tag = 'internal scratch']
  #allocation2 [shape = 'f32[8,32]{1,0:T(8,128)}', space=vmem, size = 0x1000, scoped, tag = 'scratch operand']
  #allocation3 [shape = 'f32[8,32]{1,0:T(8,128)}', space=vmem, size = 0x1000, scoped, tag = 'scratch operand']
  #allocation4 [shape = 'f32[8,32]{1,0:T(8,128)}', space=vmem, size = 0x1000, scoped, tag = 'scratch operand']
  #allocation5 [shape = 'f32[8,32]{1,0:T(8,128)}', space=vmem, size = 0x1000, scoped, tag = 'scratch operand']
  #allocation6 [shape = 'f32[1,1]{1,0:T(1,128)S(1)}', space=vmem, size = 0x200, scoped, tag = 'scoped memory for tpu_custom_call.1']
  %s0 = inlined_call_operand.hbm [shape: f32[8,8,32], index: 0, kind: input, shape index: {}]
  %s1 = inlined_call_operand.hbm [shape: f32[8,8,32], index: 1, kind: input, shape index: {}]
  %s2 = inlined_call_operand.hbm [shape: f32[8,8,32], index: 2, kind: input, shape index: {}]
  %s3 = inlined_call_operand.vmem [shape: bf16[3,32,32], index: 3, kind: input, shape index: {}]
  %s4 = inlined_call_operand.vmem [shape: f32[3,1,32], index: 4, kind: input, shape index: {}]
  %s5 = inlined_call_operand.hbm [shape: bf16[3,32,32], index: 5, kind: input, shape index: {}]
  %s6 = inlined_call_operand.vmem [shape: f32[3,1,32], index: 6, kind: input, shape index: {}]
  %s7 = inlined_call_operand.hbm [shape: bf16[3,32,32], index: 7, kind: input, shape index: {}]
  %s8 = inlined_call_operand.vmem [shape: f32[3,1,32], index: 8, kind: input, shape index: {}]
  %s9 = inlined_call_operand.vmem [shape: bf16[2,32,1], index: 9, kind: input, shape index: {}]
  %s10 = inlined_call_operand.<no memory space> [shape: f32[1,1], index: 10, kind: input, shape index: {}]
  %s11 = inlined_call_operand.vmem [shape: f32[8,1], index: 11, kind: output, shape index: {}]
  %s12 = sld [smem:[#allocation0]]
  $region82: #{tpu_custom_call.1} parent=0
    _
  %s14 = ssub.s32 1, %s12
  %s15 = scalar_select 0, %s14, %s12
  %v16 = vstv %s10
  %17 = vst [vmem:[#allocation6] sm:$0x1] %v16
  $region1: #{tpu_custom_call.1} parent=0
    #allocation7 [shape = 'u8[32768]{0}', space=vmem, size = 0x8000, scoped, tag = 'input window, operand 0, single buffered']
    #allocation8 [shape = 's32[1]{0}', space=sflag, size = 0x4, scoped, tag = 'scoped memory for tpu_custom_call.1']
    #allocation9 [shape = 'u8[32768]{0}', space=vmem, size = 0x8000, scoped, tag = 'input window, operand 1, single buffered']
    #allocation10 [shape = 's32[1]{0}', space=sflag, size = 0x4, scoped, tag = 'scoped memory for tpu_custom_call.1']
    #allocation11 [shape = 'u8[32768]{0}', space=vmem, size = 0x8000, scoped, tag = 'input window, operand 2, single buffered']
    #allocation12 [shape = 'u8[24576]{0}', space=vmem, size = 0x6000, scoped, tag = 'input window, operand 5, single buffered']
    #allocation13 [shape = 's32[1]{0}', space=sflag, size = 0x4, scoped, tag = 'scoped memory for tpu_custom_call.1']
    #allocation14 [shape = 'u8[24576]{0}', space=vmem, size = 0x6000, scoped, tag = 'input window, operand 7, single buffered']
    %18 = vsyncpa [#allocation8], 0
    %19 = vsyncpa [#allocation10], 0
    %20 = vsyncpa [#allocation13], 0
    // Predicated region
    $region2: #{tpu_custom_call.1} parent=1 // pred_check
      _
    $region3: #{tpu_custom_call.1} parent=1 // pred_check_branch
      %22 = sbr.rel (0) target = $region5
    $region4: #{tpu_custom_call.1} parent=1 // pred_region
      %s24 = ssub.s32 1024, 1024
      %25 = vsyncadd [#allocation8], %s24
      %s26 = sshll.u32 [#allocation7], 4
      %s27 = int_to_ptr.vmem [resolvable:$true] %s26
      %32 = dma.hbm_to_vmem [thread:$0]  %s0, 1024, %s27, [#allocation8], 128, 128, 8
    $region5: #{tpu_custom_call.1} parent=1 // pred_fallthru
      _
    // Predicated region
    $region6: #{tpu_custom_call.1} parent=1 // pred_check
      _
    $region7: #{tpu_custom_call.1} parent=1 // pred_check_branch
      %34 = sbr.rel (0) target = $region9
    $region8: #{tpu_custom_call.1} parent=1 // pred_region
      %s36 = ssub.s32 1024, 1024
      %37 = vsyncadd [#allocation10], %s36
      %s38 = sshll.u32 [#allocation9], 4
      %s39 = int_to_ptr.vmem [resolvable:$true] %s38
      %44 = dma.hbm_to_vmem [thread:$0]  %s1, 1024, %s39, [#allocation10], 128, 128, 8
    $region9: #{tpu_custom_call.1} parent=1 // pred_fallthru
      _
    // Predicated region
    $region10: #{tpu_custom_call.1} parent=1 // pred_check
      _
    $region11: #{tpu_custom_call.1} parent=1 // pred_check_branch
      %46 = sbr.rel (0) target = $region13
    $region12: #{tpu_custom_call.1} parent=1 // pred_region
      %s48 = ssub.s32 1024, 1024
      %49 = vsyncadd [#allocation10], %s48
      %s50 = sshll.u32 [#allocation11], 4
      %s51 = int_to_ptr.vmem [resolvable:$true] %s50
      %56 = dma.hbm_to_vmem [thread:$0]  %s2, 1024, %s51, [#allocation10], 128, 128, 8
    $region13: #{tpu_custom_call.1} parent=1 // pred_fallthru
      _
    // Predicated region
    $region14: #{tpu_custom_call.1} parent=1 // pred_check
      _
    $region15: #{tpu_custom_call.1} parent=1 // pred_check_branch
      %58 = sbr.rel (0) target = $region17
    $region16: #{tpu_custom_call.1} parent=1 // pred_region
      _
    $region17: #{tpu_custom_call.1} parent=1 // pred_fallthru
      _
    // Predicated region
    $region18: #{tpu_custom_call.1} parent=1 // pred_check
      _
    $region19: #{tpu_custom_call.1} parent=1 // pred_check_branch
      %60 = sbr.rel (0) target = $region21
    $region20: #{tpu_custom_call.1} parent=1 // pred_region
      _
    $region21: #{tpu_custom_call.1} parent=1 // pred_fallthru
      _
    // Predicated region
    $region22: #{tpu_custom_call.1} parent=1 // pred_check
      _
    $region23: #{tpu_custom_call.1} parent=1 // pred_check_branch
      %62 = sbr.rel (0) target = $region25
    $region24: #{tpu_custom_call.1} parent=1 // pred_region
      %s64 = ssub.s32 768, 768
      %65 = vsyncadd [#allocation13], %s64
      %s66 = sshll.u32 [#allocation12], 4
      %s67 = int_to_ptr.vmem [resolvable:$true] %s66
      %72 = dma.hbm_to_vmem [thread:$0]  %s5, 768, %s67, [#allocation13], 64, 64, 4
    $region25: #{tpu_custom_call.1} parent=1 // pred_fallthru
      _
    // Predicated region
    $region26: #{tpu_custom_call.1} parent=1 // pred_check
      _
    $region27: #{tpu_custom_call.1} parent=1 // pred_check_branch
      %74 = sbr.rel (0) target = $region29
    $region28: #{tpu_custom_call.1} parent=1 // pred_region
      _
    $region29: #{tpu_custom_call.1} parent=1 // pred_fallthru
      _
    // Predicated region
    $region30: #{tpu_custom_call.1} parent=1 // pred_check
      _
    $region31: #{tpu_custom_call.1} parent=1 // pred_check_branch
      %76 = sbr.rel (0) target = $region33
    $region32: #{tpu_custom_call.1} parent=1 // pred_region
      %s78 = ssub.s32 768, 768
      %79 = vsyncadd [#allocation13], %s78
      %s80 = sshll.u32 [#allocation14], 4
      %s81 = int_to_ptr.vmem [resolvable:$true] %s80
      %86 = dma.hbm_to_vmem [thread:$0]  %s7, 768, %s81, [#allocation13], 64, 64, 4
    $region33: #{tpu_custom_call.1} parent=1 // pred_fallthru
      _
    // Predicated region
    $region34: #{tpu_custom_call.1} parent=1 // pred_check
      _
    $region35: #{tpu_custom_call.1} parent=1 // pred_check_branch
      %88 = sbr.rel (0) target = $region37
    $region36: #{tpu_custom_call.1} parent=1 // pred_region
      _
    $region37: #{tpu_custom_call.1} parent=1 // pred_fallthru
      _
    // Predicated region
    $region38: #{tpu_custom_call.1} parent=1 // pred_check
      _
    $region39: #{tpu_custom_call.1} parent=1 // pred_check_branch
      %90 = sbr.rel (0) target = $region41
    $region40: #{tpu_custom_call.1} parent=1 // pred_region
      _
    $region41: #{tpu_custom_call.1} parent=1 // pred_fallthru
      _
    // Predicated region
    $region42: #{tpu_custom_call.1} parent=1 // pred_check
      _
    $region43: #{tpu_custom_call.1} parent=1 // pred_check_branch
      %92 = sbr.rel (0) target = $region45
    $region44: #{tpu_custom_call.1} parent=1 // pred_region
      _
    $region45: #{tpu_custom_call.1} parent=1 // pred_fallthru
      _
    // Predicated region
    $region46: #{tpu_custom_call.1} parent=1 // pred_check
      _
    $region47: #{tpu_custom_call.1} parent=1 // pred_check_branch
      %94 = sbr.rel (0) target = $region49
    $region48: #{tpu_custom_call.1} parent=1 // pred_region
      %95 = dma.done [#allocation8], 1024
    $region49: #{tpu_custom_call.1} parent=1 // pred_fallthru
      _
    // Predicated region
    $region50: #{tpu_custom_call.1} parent=1 // pred_check
      _
    $region51: #{tpu_custom_call.1} parent=1 // pred_check_branch
      %97 = sbr.rel (0) target = $region53
    $region52: #{tpu_custom_call.1} parent=1 // pred_region
      %98 = dma.done [#allocation10], 1024
    $region53: #{tpu_custom_call.1} parent=1 // pred_fallthru
      _
    // Predicated region
    $region54: #{tpu_custom_call.1} parent=1 // pred_check
      _
    $region55: #{tpu_custom_call.1} parent=1 // pred_check_branch
      %100 = sbr.rel (0) target = $region57
    $region56: #{tpu_custom_call.1} parent=1 // pred_region
      %101 = dma.done [#allocation10], 1024
    $region57: #{tpu_custom_call.1} parent=1 // pred_fallthru
      _
    // Predicated region
    $region58: #{tpu_custom_call.1} parent=1 // pred_check
      _
    $region59: #{tpu_custom_call.1} parent=1 // pred_check_branch
      %103 = sbr.rel (0) target = $region61
    $region60: #{tpu_custom_call.1} parent=1 // pred_region
      %104 = dma.done [#allocation13], 768
    $region61: #{tpu_custom_call.1} parent=1 // pred_fallthru
      _
    // Predicated region
    $region62: #{tpu_custom_call.1} parent=1 // pred_check
      _
    $region63: #{tpu_custom_call.1} parent=1 // pred_check_branch
      %106 = sbr.rel (0) target = $region65
    $region64: #{tpu_custom_call.1} parent=1 // pred_region
      %107 = dma.done [#allocation13], 768
    $region65: #{tpu_custom_call.1} parent=1 // pred_fallthru
      _
    %p109 = scmp.eq.s32.totalorder 0, 0
    // Predicated region
    $region66: #{tpu_custom_call.1} parent=1 // pred_check
      %p110 = pneg %p109
    $region67: #{tpu_custom_call.1} parent=1 // pred_check_branch
      %112 = sbr.rel (%p110) target = $region69
    $region68: #{tpu_custom_call.1} parent=1 // pred_region
      %vm113 = vcmask 261120
      %114 = vst.msk [vmem:[#allocation2] sm:$0xff] %vm113, 0.0
      %115 = vst.msk [vmem:[#allocation3] sm:$0xff] %vm113, 0.0
      %116 = vst.msk [vmem:[#allocation4] sm:$0xff] %vm113, -inf
      %117 = vst.msk [vmem:[#allocation5] sm:$0xff] %vm113, 0.0
    $region69: #{tpu_custom_call.1} parent=1 // pred_fallthru
      _
    %v118 = vld [vmem:[%s3] sm:$0xf]
    %v119 = vld [vmem:[%s3 + $0x4] sm:$0xf]
    %v120 = vld [vmem:[%s3 + $0x8] sm:$0xf]
    %v121 = vld [vmem:[%s3 + $0xc] sm:$0xf]
    %s122 = scalar_lea.vmem %s3, 16
    %v123 = vld [vmem:[%s122] sm:$0xf]
    %v124 = vld [vmem:[%s122 + $0x4] sm:$0xf]
    %v125 = vld [vmem:[%s122 + $0x8] sm:$0xf]
    %v126 = vld [vmem:[%s122 + $0xc] sm:$0xf]
    %s127 = scalar_lea.vmem %s3, 32
    %v128 = vld [vmem:[%s127] sm:$0xf]
    %v129 = vld [vmem:[%s127 + $0x4] sm:$0xf]
    %v130 = vld [vmem:[%s127 + $0x8] sm:$0xf]
    %v131 = vld [vmem:[%s127 + $0xc] sm:$0xf]
    %v132 = vld [vmem:[%s4] sm:$0x1]
    %s133 = scalar_lea.vmem %s4, 1
    %v134 = vld [vmem:[%s133] sm:$0x1]
    %s135 = scalar_lea.vmem %s4, 2
    %v136 = vld [vmem:[%s135] sm:$0x1]
    %v137 = vld [vmem:[#allocation12] sm:$0xf]
    %v138 = vld [vmem:[#allocation12 + $0x4] sm:$0xf]
    %v139 = vld [vmem:[#allocation12 + $0x8] sm:$0xf]
    %v140 = vld [vmem:[#allocation12 + $0xc] sm:$0xf]
    %s141 = scalar_lea.vmem [#allocation12], 16
    %v142 = vld [vmem:[%s141] sm:$0xf]
    %v143 = vld [vmem:[%s141 + $0x4] sm:$0xf]
    %v144 = vld [vmem:[%s141 + $0x8] sm:$0xf]
    %v145 = vld [vmem:[%s141 + $0xc] sm:$0xf]
    %s146 = scalar_lea.vmem [#allocation12], 32
    %v147 = vld [vmem:[%s146] sm:$0xf]
    %v148 = vld [vmem:[%s146 + $0x4] sm:$0xf]
    %v149 = vld [vmem:[%s146 + $0x8] sm:$0xf]
    %v150 = vld [vmem:[%s146 + $0xc] sm:$0xf]
    %v151 = vld [vmem:[%s6] sm:$0x1]
    %s152 = scalar_lea.vmem %s6, 1
    %v153 = vld [vmem:[%s152] sm:$0x1]
    %s154 = scalar_lea.vmem %s6, 2
    %v155 = vld [vmem:[%s154] sm:$0x1]
    %v156 = vld [vmem:[#allocation14] sm:$0xf]
    %v157 = vld [vmem:[#allocation14 + $0x4] sm:$0xf]
    %v158 = vld [vmem:[#allocation14 + $0x8] sm:$0xf]
    %v159 = vld [vmem:[#allocation14 + $0xc] sm:$0xf]
    %s160 = scalar_lea.vmem [#allocation14], 16
    %v161 = vld [vmem:[%s160] sm:$0xf]
    %v162 = vld [vmem:[%s160 + $0x4] sm:$0xf]
    %v163 = vld [vmem:[%s160 + $0x8] sm:$0xf]
    %v164 = vld [vmem:[%s160 + $0xc] sm:$0xf]
    %s165 = scalar_lea.vmem [#allocation14], 32
    %v166 = vld [vmem:[%s165] sm:$0xf]
    %v167 = vld [vmem:[%s165 + $0x4] sm:$0xf]
    %v168 = vld [vmem:[%s165 + $0x8] sm:$0xf]
    %v169 = vld [vmem:[%s165 + $0xc] sm:$0xf]
    %v170 = vld [vmem:[%s8] sm:$0x1]
    %s171 = scalar_lea.vmem %s8, 1
    %v172 = vld [vmem:[%s171] sm:$0x1]
    %s173 = scalar_lea.vmem %s8, 2
    %v174 = vld [vmem:[%s173] sm:$0x1]
    %v175 = vld [vmem:[#allocation2] sm:$0xff]
    %v176 = vld [vmem:[#allocation3] sm:$0xff]
    %v177 = vld [vmem:[#allocation4] sm:$0xff]
    %v178 = vld [vmem:[#allocation5] sm:$0xff]
    %v179 = vpack.c.bf16 %v175, %v175
    %v181 = vlaneseq
    %v182 = vshrl.u32 %v181, 7
    %v183 = vsub.s32 0, %v182
    %v184 = vrot.slane %v132, %v183
    %v190 = vunpack.c.l.b16 %v118
    %v191 = vunpack.c.l.b16 %v119
    %v192 = vunpack.c.l.b16 %v120
    %v193 = vunpack.c.l.b16 %v121
    %v194 = vpack.c.b16 %v191, %v190
    %v195 = vpack.c.b16 %v193, %v192
    %vm198 = vcmask 261120
    %v200 = vsel %vm198, %v179, 0
    %202 = vmatprep.subr.bf16.mxu0 0
    %203 = vmatpush1.bf16.msra.mxu0 %v194
    %204 = vmatprep.subr.bf16.mxu0 0
    %205 = vmatpush1.bf16.msra.mxu0 %v195
    %206 = vmatprep.subr.bf16.mxu0 0
    %207 = vmatpush1.bf16.msra.mxu0 0
    %208 = vmatprep.subr.bf16.mxu0 0
    %209 = vmatpush1.bf16.msra.mxu0 0
    %210 = vmatprep.subr.bf16.mxu0 0
    %211 = vmatpush1.bf16.msra.mxu0 0
    %212 = vmatprep.subr.bf16.mxu0 0
    %213 = vmatpush1.bf16.msra.mxu0 0
    %214 = vmatprep.subr.bf16.mxu0 0
    %215 = vmatpush1.bf16.msra.mxu0 0
    %216 = vmatprep.subr.bf16.mxu0 0
    %217 = vmatpush1.bf16.msra.mxu0 0
    %218 = vmatprep.subr.bf16.mxu0 0
    %219 = vmatpush1.bf16.msra.mxu0 0
    %220 = vmatprep.subr.bf16.mxu0 0
    %221 = vmatpush1.bf16.msra.mxu0 0
    %222 = vmatprep.subr.bf16.mxu0 0
    %223 = vmatpush1.bf16.msra.mxu0 0
    %224 = vmatprep.subr.bf16.mxu0 0
    %225 = vmatpush1.bf16.msra.mxu0 0
    %226 = vmatprep.subr.bf16.mxu0 0
    %227 = vmatpush1.bf16.msra.mxu0 0
    %228 = vmatprep.subr.bf16.mxu0 0
    %229 = vmatpush1.bf16.msra.mxu0 0
    %230 = vmatprep.subr.bf16.mxu0 0
    %231 = vmatpush1.bf16.msra.mxu0 0
    %232 = vmatprep.subr.bf16.mxu0 0
    %233 = vmatpush1.bf16.msra.mxu0 0
    %234 = vmatprep.mubr.bf16.mxu0 0
    %235 = vmatmul.mubr.bf16.gmra.mrb[0].mxu0 %v200
    %v236 = vpop.f32.mrb[0].mxu0
    %v237 = vadd.f32 %v184, %v236
    %v238 = vpop.f32.mrb[0].mxu0
    %v239 = vpop.f32.mrb[0].mxu0
    %v240 = vpop.f32.mrb[0].mxu0
    %241 = vdwg.mxu0
    %v243 = vlaneseq
    %v244 = vshrl.u32 %v243, 7
    %v245 = vsub.s32 0, %v244
    %v246 = vrot.slane %v134, %v245
    %v252 = vunpack.c.l.b16 %v123
    %v253 = vunpack.c.l.b16 %v124
    %v254 = vunpack.c.l.b16 %v125
    %v255 = vunpack.c.l.b16 %v126
    %v256 = vpack.c.b16 %v253, %v252
    %v257 = vpack.c.b16 %v255, %v254
    %260 = vmatprep.subr.bf16.mxu0 0
    %261 = vmatpush1.bf16.msra.mxu0 %v256
    %262 = vmatprep.subr.bf16.mxu0 0
    %263 = vmatpush1.bf16.msra.mxu0 %v257
    %264 = vmatprep.subr.bf16.mxu0 0
    %265 = vmatpush1.bf16.msra.mxu0 0
    %266 = vmatprep.subr.bf16.mxu0 0
    %267 = vmatpush1.bf16.msra.mxu0 0
    %268 = vmatprep.subr.bf16.mxu0 0
    %269 = vmatpush1.bf16.msra.mxu0 0
    %270 = vmatprep.subr.bf16.mxu0 0
    %271 = vmatpush1.bf16.msra.mxu0 0
    %272 = vmatprep.subr.bf16.mxu0 0
    %273 = vmatpush1.bf16.msra.mxu0 0
    %274 = vmatprep.subr.bf16.mxu0 0
    %275 = vmatpush1.bf16.msra.mxu0 0
    %276 = vmatprep.subr.bf16.mxu0 0
    %277 = vmatpush1.bf16.msra.mxu0 0
    %278 = vmatprep.subr.bf16.mxu0 0
    %279 = vmatpush1.bf16.msra.mxu0 0
    %280 = vmatprep.subr.bf16.mxu0 0
    %281 = vmatpush1.bf16.msra.mxu0 0
    %282 = vmatprep.subr.bf16.mxu0 0
    %283 = vmatpush1.bf16.msra.mxu0 0
    %284 = vmatprep.subr.bf16.mxu0 0
    %285 = vmatpush1.bf16.msra.mxu0 0
    %286 = vmatprep.subr.bf16.mxu0 0
    %287 = vmatpush1.bf16.msra.mxu0 0
    %288 = vmatprep.subr.bf16.mxu0 0
    %289 = vmatpush1.bf16.msra.mxu0 0
    %290 = vmatprep.subr.bf16.mxu0 0
    %291 = vmatpush1.bf16.msra.mxu0 0
    %292 = vmatprep.mubr.bf16.mxu0 0
    %293 = vmatmul.mubr.bf16.gmra.mrb[0].mxu0 %v200
    %v294 = vpop.f32.mrb[0].mxu0
    %v295 = vadd.f32 %v246, %v294
    %v296 = vpop.f32.mrb[0].mxu0
    %v297 = vpop.f32.mrb[0].mxu0
    %v298 = vpop.f32.mrb[0].mxu0
    %299 = vdwg.mxu0
    %v301 = vlaneseq
    %v302 = vshrl.u32 %v301, 7
    %v303 = vsub.s32 0, %v302
    %v304 = vrot.slane %v136, %v303
    %v310 = vunpack.c.l.b16 %v128
    %v311 = vunpack.c.l.b16 %v129
    %v312 = vunpack.c.l.b16 %v130
    %v313 = vunpack.c.l.b16 %v131
    %v314 = vpack.c.b16 %v311, %v310
    %v315 = vpack.c.b16 %v313, %v312
    %318 = vmatprep.subr.bf16.mxu0 0
    %319 = vmatpush1.bf16.msra.mxu0 %v314
    %320 = vmatprep.subr.bf16.mxu0 0
    %321 = vmatpush1.bf16.msra.mxu0 %v315
    %322 = vmatprep.subr.bf16.mxu0 0
    %323 = vmatpush1.bf16.msra.mxu0 0
    %324 = vmatprep.subr.bf16.mxu0 0
    %325 = vmatpush1.bf16.msra.mxu0 0
    %326 = vmatprep.subr.bf16.mxu0 0
    %327 = vmatpush1.bf16.msra.mxu0 0
    %328 = vmatprep.subr.bf16.mxu0 0
    %329 = vmatpush1.bf16.msra.mxu0 0
    %330 = vmatprep.subr.bf16.mxu0 0
    %331 = vmatpush1.bf16.msra.mxu0 0
    %332 = vmatprep.subr.bf16.mxu0 0
    %333 = vmatpush1.bf16.msra.mxu0 0
    %334 = vmatprep.subr.bf16.mxu0 0
    %335 = vmatpush1.bf16.msra.mxu0 0
    %336 = vmatprep.subr.bf16.mxu0 0
    %337 = vmatpush1.bf16.msra.mxu0 0
    %338 = vmatprep.subr.bf16.mxu0 0
    %339 = vmatpush1.bf16.msra.mxu0 0
    %340 = vmatprep.subr.bf16.mxu0 0
    %341 = vmatpush1.bf16.msra.mxu0 0
    %342 = vmatprep.subr.bf16.mxu0 0
    %343 = vmatpush1.bf16.msra.mxu0 0
    %344 = vmatprep.subr.bf16.mxu0 0
    %345 = vmatpush1.bf16.msra.mxu0 0
    %346 = vmatprep.subr.bf16.mxu0 0
    %347 = vmatpush1.bf16.msra.mxu0 0
    %348 = vmatprep.subr.bf16.mxu0 0
    %349 = vmatpush1.bf16.msra.mxu0 0
    %350 = vmatprep.mubr.bf16.mxu0 0
    %351 = vmatmul.mubr.bf16.gmra.mrb[0].mxu0 %v200
    %v352 = vpop.f32.mrb[0].mxu0
    %v353 = vadd.f32 %v304, %v352
    %v354 = vpop.f32.mrb[0].mxu0
    %v355 = vpop.f32.mrb[0].mxu0
    %v356 = vpop.f32.mrb[0].mxu0
    %357 = vdwg.mxu0
    %v358 = vld [vmem:[#allocation7] sm:$0xff]
    %v359 = vadd.f32 %v358, %v237
    %v360 = vxor.u32 %v359, 2147483648
    %v361 = vmul.f32 %v360, 1.442695
    %v362 = vpow.pop %v361
    %v363 = vadd.f32 %v362, 1.0
    %v364 = vrcp.pop %v363
    %v365 = vmul.f32 1.0, %v364
    %v366 = vld [vmem:[#allocation9] sm:$0xff]
    %v367 = vadd.f32 %v366, %v295
    %v368 = vxor.u32 %v367, 2147483648
    %v369 = vmul.f32 %v368, 1.442695
    %v370 = vpow.pop %v369
    %v371 = vadd.f32 %v370, 1.0
    %v372 = vrcp.pop %v371
    %v373 = vmul.f32 1.0, %v372
    %v374 = vld [vmem:[#allocation11] sm:$0xff]
    %v375 = vmul.f32 %v365, %v353
    %v376 = vadd.f32 %v374, %v375
    %v377 = vtanh.pop %v376
    %v378 = vsub.f32 1.0, %v373
    %v379 = vmul.f32 %v378, %v377
    %v380 = vmul.f32 %v373, %v175
    %v381 = vadd.f32 %v379, %v380
    %v382 = vpack.c.bf16 %v381, %v381
    %v383 = vpack.c.bf16 %v176, %v176
    %v385 = vlaneseq
    %v386 = vshrl.u32 %v385, 7
    %v387 = vsub.s32 0, %v386
    %v388 = vrot.slane %v151, %v387
    %v394 = vunpack.c.l.b16 %v137
    %v395 = vunpack.c.l.b16 %v138
    %v396 = vunpack.c.l.b16 %v139
    %v397 = vunpack.c.l.b16 %v140
    %v398 = vpack.c.b16 %v395, %v394
    %v399 = vpack.c.b16 %v397, %v396
    %v403 = vsel %vm198, %v382, 0
    %405 = vmatprep.subr.bf16.mxu0 0
    %406 = vmatpush1.bf16.msra.mxu0 %v398
    %407 = vmatprep.subr.bf16.mxu0 0
    %408 = vmatpush1.bf16.msra.mxu0 %v399
    %409 = vmatprep.subr.bf16.mxu0 0
    %410 = vmatpush1.bf16.msra.mxu0 0
    %411 = vmatprep.subr.bf16.mxu0 0
    %412 = vmatpush1.bf16.msra.mxu0 0
    %413 = vmatprep.subr.bf16.mxu0 0
    %414 = vmatpush1.bf16.msra.mxu0 0
    %415 = vmatprep.subr.bf16.mxu0 0
    %416 = vmatpush1.bf16.msra.mxu0 0
    %417 = vmatprep.subr.bf16.mxu0 0
    %418 = vmatpush1.bf16.msra.mxu0 0
    %419 = vmatprep.subr.bf16.mxu0 0
    %420 = vmatpush1.bf16.msra.mxu0 0
    %421 = vmatprep.subr.bf16.mxu0 0
    %422 = vmatpush1.bf16.msra.mxu0 0
    %423 = vmatprep.subr.bf16.mxu0 0
    %424 = vmatpush1.bf16.msra.mxu0 0
    %425 = vmatprep.subr.bf16.mxu0 0
    %426 = vmatpush1.bf16.msra.mxu0 0
    %427 = vmatprep.subr.bf16.mxu0 0
    %428 = vmatpush1.bf16.msra.mxu0 0
    %429 = vmatprep.subr.bf16.mxu0 0
    %430 = vmatpush1.bf16.msra.mxu0 0
    %431 = vmatprep.subr.bf16.mxu0 0
    %432 = vmatpush1.bf16.msra.mxu0 0
    %433 = vmatprep.subr.bf16.mxu0 0
    %434 = vmatpush1.bf16.msra.mxu0 0
    %435 = vmatprep.subr.bf16.mxu0 0
    %436 = vmatpush1.bf16.msra.mxu0 0
    %437 = vmatprep.mubr.bf16.mxu0 0
    %438 = vmatmul.mubr.bf16.gmra.mrb[0].mxu0 %v403
    %v439 = vpop.f32.mrb[0].mxu0
    %v440 = vadd.f32 %v388, %v439
    %v441 = vpop.f32.mrb[0].mxu0
    %v442 = vpop.f32.mrb[0].mxu0
    %v443 = vpop.f32.mrb[0].mxu0
    %444 = vdwg.mxu0
    %v446 = vlaneseq
    %v447 = vshrl.u32 %v446, 7
    %v448 = vsub.s32 0, %v447
    %v449 = vrot.slane %v153, %v448
    %v455 = vunpack.c.l.b16 %v142
    %v456 = vunpack.c.l.b16 %v143
    %v457 = vunpack.c.l.b16 %v144
    %v458 = vunpack.c.l.b16 %v145
    %v459 = vpack.c.b16 %v456, %v455
    %v460 = vpack.c.b16 %v458, %v457
    %463 = vmatprep.subr.bf16.mxu0 0
    %464 = vmatpush1.bf16.msra.mxu0 %v459
    %465 = vmatprep.subr.bf16.mxu0 0
    %466 = vmatpush1.bf16.msra.mxu0 %v460
    %467 = vmatprep.subr.bf16.mxu0 0
    %468 = vmatpush1.bf16.msra.mxu0 0
    %469 = vmatprep.subr.bf16.mxu0 0
    %470 = vmatpush1.bf16.msra.mxu0 0
    %471 = vmatprep.subr.bf16.mxu0 0
    %472 = vmatpush1.bf16.msra.mxu0 0
    %473 = vmatprep.subr.bf16.mxu0 0
    %474 = vmatpush1.bf16.msra.mxu0 0
    %475 = vmatprep.subr.bf16.mxu0 0
    %476 = vmatpush1.bf16.msra.mxu0 0
    %477 = vmatprep.subr.bf16.mxu0 0
    %478 = vmatpush1.bf16.msra.mxu0 0
    %479 = vmatprep.subr.bf16.mxu0 0
    %480 = vmatpush1.bf16.msra.mxu0 0
    %481 = vmatprep.subr.bf16.mxu0 0
    %482 = vmatpush1.bf16.msra.mxu0 0
    %483 = vmatprep.subr.bf16.mxu0 0
    %484 = vmatpush1.bf16.msra.mxu0 0
    %485 = vmatprep.subr.bf16.mxu0 0
    %486 = vmatpush1.bf16.msra.mxu0 0
    %487 = vmatprep.subr.bf16.mxu0 0
    %488 = vmatpush1.bf16.msra.mxu0 0
    %489 = vmatprep.subr.bf16.mxu0 0
    %490 = vmatpush1.bf16.msra.mxu0 0
    %491 = vmatprep.subr.bf16.mxu0 0
    %492 = vmatpush1.bf16.msra.mxu0 0
    %493 = vmatprep.subr.bf16.mxu0 0
    %494 = vmatpush1.bf16.msra.mxu0 0
    %495 = vmatprep.mubr.bf16.mxu0 0
    %496 = vmatmul.mubr.bf16.gmra.mrb[0].mxu0 %v403
    %v497 = vpop.f32.mrb[0].mxu0
    %v498 = vadd.f32 %v449, %v497
    %v499 = vpop.f32.mrb[0].mxu0
    %v500 = vpop.f32.mrb[0].mxu0
    %v501 = vpop.f32.mrb[0].mxu0
    %502 = vdwg.mxu0
    %v504 = vlaneseq
    %v505 = vshrl.u32 %v504, 7
    %v506 = vsub.s32 0, %v505
    %v507 = vrot.slane %v155, %v506
    %v513 = vunpack.c.l.b16 %v147
    %v514 = vunpack.c.l.b16 %v148
    %v515 = vunpack.c.l.b16 %v149
    %v516 = vunpack.c.l.b16 %v150
    %v517 = vpack.c.b16 %v514, %v513
    %v518 = vpack.c.b16 %v516, %v515
    %521 = vmatprep.subr.bf16.mxu0 0
    %522 = vmatpush1.bf16.msra.mxu0 %v517
    %523 = vmatprep.subr.bf16.mxu0 0
    %524 = vmatpush1.bf16.msra.mxu0 %v518
    %525 = vmatprep.subr.bf16.mxu0 0
    %526 = vmatpush1.bf16.msra.mxu0 0
    %527 = vmatprep.subr.bf16.mxu0 0
    %528 = vmatpush1.bf16.msra.mxu0 0
    %529 = vmatprep.subr.bf16.mxu0 0
    %530 = vmatpush1.bf16.msra.mxu0 0
    %531 = vmatprep.subr.bf16.mxu0 0
    %532 = vmatpush1.bf16.msra.mxu0 0
    %533 = vmatprep.subr.bf16.mxu0 0
    %534 = vmatpush1.bf16.msra.mxu0 0
    %535 = vmatprep.subr.bf16.mxu0 0
    %536 = vmatpush1.bf16.msra.mxu0 0
    %537 = vmatprep.subr.bf16.mxu0 0
    %538 = vmatpush1.bf16.msra.mxu0 0
    %539 = vmatprep.subr.bf16.mxu0 0
    %540 = vmatpush1.bf16.msra.mxu0 0
    %541 = vmatprep.subr.bf16.mxu0 0
    %542 = vmatpush1.bf16.msra.mxu0 0
    %543 = vmatprep.subr.bf16.mxu0 0
    %544 = vmatpush1.bf16.msra.mxu0 0
    %545 = vmatprep.subr.bf16.mxu0 0
    %546 = vmatpush1.bf16.msra.mxu0 0
    %547 = vmatprep.subr.bf16.mxu0 0
    %548 = vmatpush1.bf16.msra.mxu0 0
    %549 = vmatprep.subr.bf16.mxu0 0
    %550 = vmatpush1.bf16.msra.mxu0 0
    %551 = vmatprep.subr.bf16.mxu0 0
    %552 = vmatpush1.bf16.msra.mxu0 0
    %553 = vmatprep.mubr.bf16.mxu0 0
    %554 = vmatmul.mubr.bf16.gmra.mrb[0].mxu0 %v403
    %v555 = vpop.f32.mrb[0].mxu0
    %v556 = vadd.f32 %v507, %v555
    %v557 = vpop.f32.mrb[0].mxu0
    %v558 = vpop.f32.mrb[0].mxu0
    %v559 = vpop.f32.mrb[0].mxu0
    %560 = vdwg.mxu0
    %v562 = vlaneseq
    %v563 = vshrl.u32 %v562, 7
    %v564 = vsub.s32 0, %v563
    %v565 = vrot.slane %v170, %v564
    %v571 = vunpack.c.l.b16 %v156
    %v572 = vunpack.c.l.b16 %v157
    %v573 = vunpack.c.l.b16 %v158
    %v574 = vunpack.c.l.b16 %v159
    %v575 = vpack.c.b16 %v572, %v571
    %v576 = vpack.c.b16 %v574, %v573
    %v580 = vsel %vm198, %v383, 0
    %582 = vmatprep.subr.bf16.mxu0 0
    %583 = vmatpush1.bf16.msra.mxu0 %v575
    %584 = vmatprep.subr.bf16.mxu0 0
    %585 = vmatpush1.bf16.msra.mxu0 %v576
    %586 = vmatprep.subr.bf16.mxu0 0
    %587 = vmatpush1.bf16.msra.mxu0 0
    %588 = vmatprep.subr.bf16.mxu0 0
    %589 = vmatpush1.bf16.msra.mxu0 0
    %590 = vmatprep.subr.bf16.mxu0 0
    %591 = vmatpush1.bf16.msra.mxu0 0
    %592 = vmatprep.subr.bf16.mxu0 0
    %593 = vmatpush1.bf16.msra.mxu0 0
    %594 = vmatprep.subr.bf16.mxu0 0
    %595 = vmatpush1.bf16.msra.mxu0 0
    %596 = vmatprep.subr.bf16.mxu0 0
    %597 = vmatpush1.bf16.msra.mxu0 0
    %598 = vmatprep.subr.bf16.mxu0 0
    %599 = vmatpush1.bf16.msra.mxu0 0
    %600 = vmatprep.subr.bf16.mxu0 0
    %601 = vmatpush1.bf16.msra.mxu0 0
    %602 = vmatprep.subr.bf16.mxu0 0
    %603 = vmatpush1.bf16.msra.mxu0 0
    %604 = vmatprep.subr.bf16.mxu0 0
    %605 = vmatpush1.bf16.msra.mxu0 0
    %606 = vmatprep.subr.bf16.mxu0 0
    %607 = vmatpush1.bf16.msra.mxu0 0
    %608 = vmatprep.subr.bf16.mxu0 0
    %609 = vmatpush1.bf16.msra.mxu0 0
    %610 = vmatprep.subr.bf16.mxu0 0
    %611 = vmatpush1.bf16.msra.mxu0 0
    %612 = vmatprep.subr.bf16.mxu0 0
    %613 = vmatpush1.bf16.msra.mxu0 0
    %614 = vmatprep.mubr.bf16.mxu0 0
    %615 = vmatmul.mubr.bf16.gmra.mrb[0].mxu0 %v580
    %v616 = vpop.f32.mrb[0].mxu0
    %v617 = vadd.f32 %v565, %v616
    %v618 = vpop.f32.mrb[0].mxu0
    %v619 = vpop.f32.mrb[0].mxu0
    %v620 = vpop.f32.mrb[0].mxu0
    %621 = vdwg.mxu0
    %v623 = vlaneseq
    %v624 = vshrl.u32 %v623, 7
    %v625 = vsub.s32 0, %v624
    %v626 = vrot.slane %v172, %v625
    %v632 = vunpack.c.l.b16 %v161
    %v633 = vunpack.c.l.b16 %v162
    %v634 = vunpack.c.l.b16 %v163
    %v635 = vunpack.c.l.b16 %v164
    %v636 = vpack.c.b16 %v633, %v632
    %v637 = vpack.c.b16 %v635, %v634
    %640 = vmatprep.subr.bf16.mxu0 0
    %641 = vmatpush1.bf16.msra.mxu0 %v636
    %642 = vmatprep.subr.bf16.mxu0 0
    %643 = vmatpush1.bf16.msra.mxu0 %v637
    %644 = vmatprep.subr.bf16.mxu0 0
    %645 = vmatpush1.bf16.msra.mxu0 0
    %646 = vmatprep.subr.bf16.mxu0 0
    %647 = vmatpush1.bf16.msra.mxu0 0
    %648 = vmatprep.subr.bf16.mxu0 0
    %649 = vmatpush1.bf16.msra.mxu0 0
    %650 = vmatprep.subr.bf16.mxu0 0
    %651 = vmatpush1.bf16.msra.mxu0 0
    %652 = vmatprep.subr.bf16.mxu0 0
    %653 = vmatpush1.bf16.msra.mxu0 0
    %654 = vmatprep.subr.bf16.mxu0 0
    %655 = vmatpush1.bf16.msra.mxu0 0
    %656 = vmatprep.subr.bf16.mxu0 0
    %657 = vmatpush1.bf16.msra.mxu0 0
    %658 = vmatprep.subr.bf16.mxu0 0
    %659 = vmatpush1.bf16.msra.mxu0 0
    %660 = vmatprep.subr.bf16.mxu0 0
    %661 = vmatpush1.bf16.msra.mxu0 0
    %662 = vmatprep.subr.bf16.mxu0 0
    %663 = vmatpush1.bf16.msra.mxu0 0
    %664 = vmatprep.subr.bf16.mxu0 0
    %665 = vmatpush1.bf16.msra.mxu0 0
    %666 = vmatprep.subr.bf16.mxu0 0
    %667 = vmatpush1.bf16.msra.mxu0 0
    %668 = vmatprep.subr.bf16.mxu0 0
    %669 = vmatpush1.bf16.msra.mxu0 0
    %670 = vmatprep.subr.bf16.mxu0 0
    %671 = vmatpush1.bf16.msra.mxu0 0
    %672 = vmatprep.mubr.bf16.mxu0 0
    %673 = vmatmul.mubr.bf16.gmra.mrb[0].mxu0 %v580
    %v674 = vpop.f32.mrb[0].mxu0
    %v675 = vadd.f32 %v626, %v674
    %v676 = vpop.f32.mrb[0].mxu0
    %v677 = vpop.f32.mrb[0].mxu0
    %v678 = vpop.f32.mrb[0].mxu0
    %679 = vdwg.mxu0
    %v681 = vlaneseq
    %v682 = vshrl.u32 %v681, 7
    %v683 = vsub.s32 0, %v682
    %v684 = vrot.slane %v174, %v683
    %v690 = vunpack.c.l.b16 %v166
    %v691 = vunpack.c.l.b16 %v167
    %v692 = vunpack.c.l.b16 %v168
    %v693 = vunpack.c.l.b16 %v169
    %v694 = vpack.c.b16 %v691, %v690
    %v695 = vpack.c.b16 %v693, %v692
    %698 = vmatprep.subr.bf16.mxu0 0
    %699 = vmatpush1.bf16.msra.mxu0 %v694
    %700 = vmatprep.subr.bf16.mxu0 0
    %701 = vmatpush1.bf16.msra.mxu0 %v695
    %702 = vmatprep.subr.bf16.mxu0 0
    %703 = vmatpush1.bf16.msra.mxu0 0
    %704 = vmatprep.subr.bf16.mxu0 0
    %705 = vmatpush1.bf16.msra.mxu0 0
    %706 = vmatprep.subr.bf16.mxu0 0
    %707 = vmatpush1.bf16.msra.mxu0 0
    %708 = vmatprep.subr.bf16.mxu0 0
    %709 = vmatpush1.bf16.msra.mxu0 0
    %710 = vmatprep.subr.bf16.mxu0 0
    %711 = vmatpush1.bf16.msra.mxu0 0
    %712 = vmatprep.subr.bf16.mxu0 0
    %713 = vmatpush1.bf16.msra.mxu0 0
    %714 = vmatprep.subr.bf16.mxu0 0
    %715 = vmatpush1.bf16.msra.mxu0 0
    %716 = vmatprep.subr.bf16.mxu0 0
    %717 = vmatpush1.bf16.msra.mxu0 0
    %718 = vmatprep.subr.bf16.mxu0 0
    %719 = vmatpush1.bf16.msra.mxu0 0
    %720 = vmatprep.subr.bf16.mxu0 0
    %721 = vmatpush1.bf16.msra.mxu0 0
    %722 = vmatprep.subr.bf16.mxu0 0
    %723 = vmatpush1.bf16.msra.mxu0 0
    %724 = vmatprep.subr.bf16.mxu0 0
    %725 = vmatpush1.bf16.msra.mxu0 0
    %726 = vmatprep.subr.bf16.mxu0 0
    %727 = vmatpush1.bf16.msra.mxu0 0
    %728 = vmatprep.subr.bf16.mxu0 0
    %729 = vmatpush1.bf16.msra.mxu0 0
    %730 = vmatprep.mubr.bf16.mxu0 0
    %731 = vmatmul.mubr.bf16.gmra.mrb[0].mxu0 %v580
    %v732 = vpop.f32.mrb[0].mxu0
    %v733 = vadd.f32 %v684, %v732
    %v734 = vpop.f32.mrb[0].mxu0
    %v735 = vpop.f32.mrb[0].mxu0
    %v736 = vpop.f32.mrb[0].mxu0
    %737 = vdwg.mxu0
    %v738 = vadd.f32 %v440, %v617
    %v739 = vxor.u32 %v738, 2147483648
    %v740 = vmul.f32 %v739, 1.442695
    %v741 = vpow.pop %v740
    %v742 = vadd.f32 %v741, 1.0
    %v743 = vrcp.pop %v742
    %v744 = vmul.f32 1.0, %v743
    %v745 = vadd.f32 %v498, %v675
    %v746 = vxor.u32 %v745, 2147483648
    %v747 = vmul.f32 %v746, 1.442695
    %v748 = vpow.pop %v747
    %v749 = vadd.f32 %v748, 1.0
    %v750 = vrcp.pop %v749
    %v751 = vmul.f32 1.0, %v750
    %v752 = vmul.f32 %v744, %v733
    %v753 = vadd.f32 %v556, %v752
    %v754 = vtanh.pop %v753
    %v755 = vsub.f32 1.0, %v751
    %v756 = vmul.f32 %v755, %v754
    %v757 = vmul.f32 %v751, %v176
    %v758 = vadd.f32 %v756, %v757
    %v759 = vmax.f32 %v177, %v758
    %v760 = vadd.f32 %v178, %v758
    %761 = vmatprep.subr.bf16.mxu0 0
    %762 = vmatpush1.bf16.msra.mxu0 %v194
    %763 = vmatprep.subr.bf16.mxu0 0
    %764 = vmatpush1.bf16.msra.mxu0 %v195
    %765 = vmatprep.subr.bf16.mxu0 0
    %766 = vmatpush1.bf16.msra.mxu0 0
    %767 = vmatprep.subr.bf16.mxu0 0
    %768 = vmatpush1.bf16.msra.mxu0 0
    %769 = vmatprep.subr.bf16.mxu0 0
    %770 = vmatpush1.bf16.msra.mxu0 0
    %771 = vmatprep.subr.bf16.mxu0 0
    %772 = vmatpush1.bf16.msra.mxu0 0
    %773 = vmatprep.subr.bf16.mxu0 0
    %774 = vmatpush1.bf16.msra.mxu0 0
    %775 = vmatprep.subr.bf16.mxu0 0
    %776 = vmatpush1.bf16.msra.mxu0 0
    %777 = vmatprep.subr.bf16.mxu0 0
    %778 = vmatpush1.bf16.msra.mxu0 0
    %779 = vmatprep.subr.bf16.mxu0 0
    %780 = vmatpush1.bf16.msra.mxu0 0
    %781 = vmatprep.subr.bf16.mxu0 0
    %782 = vmatpush1.bf16.msra.mxu0 0
    %783 = vmatprep.subr.bf16.mxu0 0
    %784 = vmatpush1.bf16.msra.mxu0 0
    %785 = vmatprep.subr.bf16.mxu0 0
    %786 = vmatpush1.bf16.msra.mxu0 0
    %787 = vmatprep.subr.bf16.mxu0 0
    %788 = vmatpush1.bf16.msra.mxu0 0
    %789 = vmatprep.subr.bf16.mxu0 0
    %790 = vmatpush1.bf16.msra.mxu0 0
    %791 = vmatprep.subr.bf16.mxu0 0
    %792 = vmatpush1.bf16.msra.mxu0 0
    %793 = vmatprep.mubr.bf16.mxu0 0
    %794 = vmatmul.mubr.bf16.gmra.mrb[0].mxu0 %v403
    %v795 = vpop.f32.mrb[0].mxu0
    %v796 = vadd.f32 %v184, %v795
    %v797 = vpop.f32.mrb[0].mxu0
    %v798 = vpop.f32.mrb[0].mxu0
    %v799 = vpop.f32.mrb[0].mxu0
    %800 = vdwg.mxu0
    %801 = vmatprep.subr.bf16.mxu0 0
    %802 = vmatpush1.bf16.msra.mxu0 %v256
    %803 = vmatprep.subr.bf16.mxu0 0
    %804 = vmatpush1.bf16.msra.mxu0 %v257
    %805 = vmatprep.subr.bf16.mxu0 0
    %806 = vmatpush1.bf16.msra.mxu0 0
    %807 = vmatprep.subr.bf16.mxu0 0
    %808 = vmatpush1.bf16.msra.mxu0 0
    %809 = vmatprep.subr.bf16.mxu0 0
    %810 = vmatpush1.bf16.msra.mxu0 0
    %811 = vmatprep.subr.bf16.mxu0 0
    %812 = vmatpush1.bf16.msra.mxu0 0
    %813 = vmatprep.subr.bf16.mxu0 0
    %814 = vmatpush1.bf16.msra.mxu0 0
    %815 = vmatprep.subr.bf16.mxu0 0
    %816 = vmatpush1.bf16.msra.mxu0 0
    %817 = vmatprep.subr.bf16.mxu0 0
    %818 = vmatpush1.bf16.msra.mxu0 0
    %819 = vmatprep.subr.bf16.mxu0 0
    %820 = vmatpush1.bf16.msra.mxu0 0
    %821 = vmatprep.subr.bf16.mxu0 0
    %822 = vmatpush1.bf16.msra.mxu0 0
    %823 = vmatprep.subr.bf16.mxu0 0
    %824 = vmatpush1.bf16.msra.mxu0 0
    %825 = vmatprep.subr.bf16.mxu0 0
    %826 = vmatpush1.bf16.msra.mxu0 0
    %827 = vmatprep.subr.bf16.mxu0 0
    %828 = vmatpush1.bf16.msra.mxu0 0
    %829 = vmatprep.subr.bf16.mxu0 0
    %830 = vmatpush1.bf16.msra.mxu0 0
    %831 = vmatprep.subr.bf16.mxu0 0
    %832 = vmatpush1.bf16.msra.mxu0 0
    %833 = vmatprep.mubr.bf16.mxu0 0
    %834 = vmatmul.mubr.bf16.gmra.mrb[0].mxu0 %v403
    %v835 = vpop.f32.mrb[0].mxu0
    %v836 = vadd.f32 %v246, %v835
    %v837 = vpop.f32.mrb[0].mxu0
    %v838 = vpop.f32.mrb[0].mxu0
    %v839 = vpop.f32.mrb[0].mxu0
    %840 = vdwg.mxu0
    %841 = vmatprep.subr.bf16.mxu0 0
    %842 = vmatpush1.bf16.msra.mxu0 %v314
    %843 = vmatprep.subr.bf16.mxu0 0
    %844 = vmatpush1.bf16.msra.mxu0 %v315
    %845 = vmatprep.subr.bf16.mxu0 0
    %846 = vmatpush1.bf16.msra.mxu0 0
    %847 = vmatprep.subr.bf16.mxu0 0
    %848 = vmatpush1.bf16.msra.mxu0 0
    %849 = vmatprep.subr.bf16.mxu0 0
    %850 = vmatpush1.bf16.msra.mxu0 0
    %851 = vmatprep.subr.bf16.mxu0 0
    %852 = vmatpush1.bf16.msra.mxu0 0
    %853 = vmatprep.subr.bf16.mxu0 0
    %854 = vmatpush1.bf16.msra.mxu0 0
    %855 = vmatprep.subr.bf16.mxu0 0
    %856 = vmatpush1.bf16.msra.mxu0 0
    %857 = vmatprep.subr.bf16.mxu0 0
    %858 = vmatpush1.bf16.msra.mxu0 0
    %859 = vmatprep.subr.bf16.mxu0 0
    %860 = vmatpush1.bf16.msra.mxu0 0
    %861 = vmatprep.subr.bf16.mxu0 0
    %862 = vmatpush1.bf16.msra.mxu0 0
    %863 = vmatprep.subr.bf16.mxu0 0
    %864 = vmatpush1.bf16.msra.mxu0 0
    %865 = vmatprep.subr.bf16.mxu0 0
    %866 = vmatpush1.bf16.msra.mxu0 0
    %867 = vmatprep.subr.bf16.mxu0 0
    %868 = vmatpush1.bf16.msra.mxu0 0
    %869 = vmatprep.subr.bf16.mxu0 0
    %870 = vmatpush1.bf16.msra.mxu0 0
    %871 = vmatprep.subr.bf16.mxu0 0
    %872 = vmatpush1.bf16.msra.mxu0 0
    %873 = vmatprep.mubr.bf16.mxu0 0
    %874 = vmatmul.mubr.bf16.gmra.mrb[0].mxu0 %v403
    %v875 = vpop.f32.mrb[0].mxu0
    %v876 = vadd.f32 %v304, %v875
    %v877 = vpop.f32.mrb[0].mxu0
    %v878 = vpop.f32.mrb[0].mxu0
    %v879 = vpop.f32.mrb[0].mxu0
    %880 = vdwg.mxu0
    %s881 = scalar_lea.vmem [#allocation7], 8
    %v882 = vld [vmem:[%s881] sm:$0xff]
    %v883 = vadd.f32 %v882, %v796
    %v884 = vxor.u32 %v883, 2147483648
    %v885 = vmul.f32 %v884, 1.442695
    %v886 = vpow.pop %v885
    %v887 = vadd.f32 %v886, 1.0
    %v888 = vrcp.pop %v887
    %v889 = vmul.f32 1.0, %v888
    %s890 = scalar_lea.vmem [#allocation9], 8
    %v891 = vld [vmem:[%s890] sm:$0xff]
    %v892 = vadd.f32 %v891, %v836
    %v893 = vxor.u32 %v892, 2147483648
    %v894 = vmul.f32 %v893, 1.442695
    %v895 = vpow.pop %v894
    %v896 = vadd.f32 %v895, 1.0
    %v897 = vrcp.pop %v896
    %v898 = vmul.f32 1.0, %v897
    %s899 = scalar_lea.vmem [#allocation11], 8
    %v900 = vld [vmem:[%s899] sm:$0xff]
    %v901 = vmul.f32 %v889, %v876
    %v902 = vadd.f32 %v900, %v901
    %v903 = vtanh.pop %v902
    %v904 = vsub.f32 1.0, %v898
    %v905 = vmul.f32 %v904, %v903
    %v906 = vmul.f32 %v898, %v381
    %v907 = vadd.f32 %v905, %v906
    %v908 = vpack.c.bf16 %v907, %v907
    %v909 = vpack.c.bf16 %v758, %v758
    %v911 = vsel %vm198, %v908, 0
    %913 = vmatprep.subr.bf16.mxu0 0
    %914 = vmatpush1.bf16.msra.mxu0 %v398
    %915 = vmatprep.subr.bf16.mxu0 0
    %916 = vmatpush1.bf16.msra.mxu0 %v399
    %917 = vmatprep.subr.bf16.mxu0 0
    %918 = vmatpush1.bf16.msra.mxu0 0
    %919 = vmatprep.subr.bf16.mxu0 0
    %920 = vmatpush1.bf16.msra.mxu0 0
    %921 = vmatprep.subr.bf16.mxu0 0
    %922 = vmatpush1.bf16.msra.mxu0 0
    %923 = vmatprep.subr.bf16.mxu0 0
    %924 = vmatpush1.bf16.msra.mxu0 0
    %925 = vmatprep.subr.bf16.mxu0 0
    %926 = vmatpush1.bf16.msra.mxu0 0
    %927 = vmatprep.subr.bf16.mxu0 0
    %928 = vmatpush1.bf16.msra.mxu0 0
    %929 = vmatprep.subr.bf16.mxu0 0
    %930 = vmatpush1.bf16.msra.mxu0 0
    %931 = vmatprep.subr.bf16.mxu0 0
    %932 = vmatpush1.bf16.msra.mxu0 0
    %933 = vmatprep.subr.bf16.mxu0 0
    %934 = vmatpush1.bf16.msra.mxu0 0
    %935 = vmatprep.subr.bf16.mxu0 0
    %936 = vmatpush1.bf16.msra.mxu0 0
    %937 = vmatprep.subr.bf16.mxu0 0
    %938 = vmatpush1.bf16.msra.mxu0 0
    %939 = vmatprep.subr.bf16.mxu0 0
    %940 = vmatpush1.bf16.msra.mxu0 0
    %941 = vmatprep.subr.bf16.mxu0 0
    %942 = vmatpush1.bf16.msra.mxu0 0
    %943 = vmatprep.subr.bf16.mxu0 0
    %944 = vmatpush1.bf16.msra.mxu0 0
    %945 = vmatprep.mubr.bf16.mxu0 0
    %946 = vmatmul.mubr.bf16.gmra.mrb[0].mxu0 %v911
    %v947 = vpop.f32.mrb[0].mxu0
    %v948 = vadd.f32 %v388, %v947
    %v949 = vpop.f32.mrb[0].mxu0
    %v950 = vpop.f32.mrb[0].mxu0
    %v951 = vpop.f32.mrb[0].mxu0
    %952 = vdwg.mxu0
    %953 = vmatprep.subr.bf16.mxu0 0
    %954 = vmatpush1.bf16.msra.mxu0 %v459
    %955 = vmatprep.subr.bf16.mxu0 0
    %956 = vmatpush1.bf16.msra.mxu0 %v460
    %957 = vmatprep.subr.bf16.mxu0 0
    %958 = vmatpush1.bf16.msra.mxu0 0
    %959 = vmatprep.subr.bf16.mxu0 0
    %960 = vmatpush1.bf16.msra.mxu0 0
    %961 = vmatprep.subr.bf16.mxu0 0
    %962 = vmatpush1.bf16.msra.mxu0 0
    %963 = vmatprep.subr.bf16.mxu0 0
    %964 = vmatpush1.bf16.msra.mxu0 0
    %965 = vmatprep.subr.bf16.mxu0 0
    %966 = vmatpush1.bf16.msra.mxu0 0
    %967 = vmatprep.subr.bf16.mxu0 0
    %968 = vmatpush1.bf16.msra.mxu0 0
    %969 = vmatprep.subr.bf16.mxu0 0
    %970 = vmatpush1.bf16.msra.mxu0 0
    %971 = vmatprep.subr.bf16.mxu0 0
    %972 = vmatpush1.bf16.msra.mxu0 0
    %973 = vmatprep.subr.bf16.mxu0 0
    %974 = vmatpush1.bf16.msra.mxu0 0
    %975 = vmatprep.subr.bf16.mxu0 0
    %976 = vmatpush1.bf16.msra.mxu0 0
    %977 = vmatprep.subr.bf16.mxu0 0
    %978 = vmatpush1.bf16.msra.mxu0 0
    %979 = vmatprep.subr.bf16.mxu0 0
    %980 = vmatpush1.bf16.msra.mxu0 0
    %981 = vmatprep.subr.bf16.mxu0 0
    %982 = vmatpush1.bf16.msra.mxu0 0
    %983 = vmatprep.subr.bf16.mxu0 0
    %984 = vmatpush1.bf16.msra.mxu0 0
    %985 = vmatprep.mubr.bf16.mxu0 0
    %986 = vmatmul.mubr.bf16.gmra.mrb[0].mxu0 %v911
    %v987 = vpop.f32.mrb[0].mxu0
    %v988 = vadd.f32 %v449, %v987
    %v989 = vpop.f32.mrb[0].mxu0
    %v990 = vpop.f32.mrb[0].mxu0
    %v991 = vpop.f32.mrb[0].mxu0
    %992 = vdwg.mxu0
    %993 = vmatprep.subr.bf16.mxu0 0
    %994 = vmatpush1.bf16.msra.mxu0 %v517
    %995 = vmatprep.subr.bf16.mxu0 0
    %996 = vmatpush1.bf16.msra.mxu0 %v518
    %997 = vmatprep.subr.bf16.mxu0 0
    %998 = vmatpush1.bf16.msra.mxu0 0
    %999 = vmatprep.subr.bf16.mxu0 0
    %1000 = vmatpush1.bf16.msra.mxu0 0
    %1001 = vmatprep.subr.bf16.mxu0 0
    %1002 = vmatpush1.bf16.msra.mxu0 0
    %1003 = vmatprep.subr.bf16.mxu0 0
    %1004 = vmatpush1.bf16.msra.mxu0 0
    %1005 = vmatprep.subr.bf16.mxu0 0
    %1006 = vmatpush1.bf16.msra.mxu0 0
    %1007 = vmatprep.subr.bf16.mxu0 0
    %1008 = vmatpush1.bf16.msra.mxu0 0
    %1009 = vmatprep.subr.bf16.mxu0 0
    %1010 = vmatpush1.bf16.msra.mxu0 0
    %1011 = vmatprep.subr.bf16.mxu0 0
    %1012 = vmatpush1.bf16.msra.mxu0 0
    %1013 = vmatprep.subr.bf16.mxu0 0
    %1014 = vmatpush1.bf16.msra.mxu0 0
    %1015 = vmatprep.subr.bf16.mxu0 0
    %1016 = vmatpush1.bf16.msra.mxu0 0
    %1017 = vmatprep.subr.bf16.mxu0 0
    %1018 = vmatpush1.bf16.msra.mxu0 0
    %1019 = vmatprep.subr.bf16.mxu0 0
    %1020 = vmatpush1.bf16.msra.mxu0 0
    %1021 = vmatprep.subr.bf16.mxu0 0
    %1022 = vmatpush1.bf16.msra.mxu0 0
    %1023 = vmatprep.subr.bf16.mxu0 0
    %1024 = vmatpush1.bf16.msra.mxu0 0
    %1025 = vmatprep.mubr.bf16.mxu0 0
    %1026 = vmatmul.mubr.bf16.gmra.mrb[0].mxu0 %v911
    %v1027 = vpop.f32.mrb[0].mxu0
    %v1028 = vadd.f32 %v507, %v1027
    %v1029 = vpop.f32.mrb[0].mxu0
    %v1030 = vpop.f32.mrb[0].mxu0
    %v1031 = vpop.f32.mrb[0].mxu0
    %1032 = vdwg.mxu0
    %v1034 = vsel %vm198, %v909, 0
    %1036 = vmatprep.subr.bf16.mxu0 0
    %1037 = vmatpush1.bf16.msra.mxu0 %v575
    %1038 = vmatprep.subr.bf16.mxu0 0
    %1039 = vmatpush1.bf16.msra.mxu0 %v576
    %1040 = vmatprep.subr.bf16.mxu0 0
    %1041 = vmatpush1.bf16.msra.mxu0 0
    %1042 = vmatprep.subr.bf16.mxu0 0
    %1043 = vmatpush1.bf16.msra.mxu0 0
    %1044 = vmatprep.subr.bf16.mxu0 0
    %1045 = vmatpush1.bf16.msra.mxu0 0
    %1046 = vmatprep.subr.bf16.mxu0 0
    %1047 = vmatpush1.bf16.msra.mxu0 0
    %1048 = vmatprep.subr.bf16.mxu0 0
    %1049 = vmatpush1.bf16.msra.mxu0 0
    %1050 = vmatprep.subr.bf16.mxu0 0
    %1051 = vmatpush1.bf16.msra.mxu0 0
    %1052 = vmatprep.subr.bf16.mxu0 0
    %1053 = vmatpush1.bf16.msra.mxu0 0
    %1054 = vmatprep.subr.bf16.mxu0 0
    %1055 = vmatpush1.bf16.msra.mxu0 0
    %1056 = vmatprep.subr.bf16.mxu0 0
    %1057 = vmatpush1.bf16.msra.mxu0 0
    %1058 = vmatprep.subr.bf16.mxu0 0
    %1059 = vmatpush1.bf16.msra.mxu0 0
    %1060 = vmatprep.subr.bf16.mxu0 0
    %1061 = vmatpush1.bf16.msra.mxu0 0
    %1062 = vmatprep.subr.bf16.mxu0 0
    %1063 = vmatpush1.bf16.msra.mxu0 0
    %1064 = vmatprep.subr.bf16.mxu0 0
    %1065 = vmatpush1.bf16.msra.mxu0 0
    %1066 = vmatprep.subr.bf16.mxu0 0
    %1067 = vmatpush1.bf16.msra.mxu0 0
    %1068 = vmatprep.mubr.bf16.mxu0 0
    %1069 = vmatmul.mubr.bf16.gmra.mrb[0].mxu0 %v1034
    %v1070 = vpop.f32.mrb[0].mxu0
    %v1071 = vadd.f32 %v565, %v1070
    %v1072 = vpop.f32.mrb[0].mxu0
    %v1073 = vpop.f32.mrb[0].mxu0
    %v1074 = vpop.f32.mrb[0].mxu0
    %1075 = vdwg.mxu0
    %1076 = vmatprep.subr.bf16.mxu0 0
    %1077 = vmatpush1.bf16.msra.mxu0 %v636
    %1078 = vmatprep.subr.bf16.mxu0 0
    %1079 = vmatpush1.bf16.msra.mxu0 %v637
    %1080 = vmatprep.subr.bf16.mxu0 0
    %1081 = vmatpush1.bf16.msra.mxu0 0
    %1082 = vmatprep.subr.bf16.mxu0 0
    %1083 = vmatpush1.bf16.msra.mxu0 0
    %1084 = vmatprep.subr.bf16.mxu0 0
    %1085 = vmatpush1.bf16.msra.mxu0 0
    %1086 = vmatprep.subr.bf16.mxu0 0
    %1087 = vmatpush1.bf16.msra.mxu0 0
    %1088 = vmatprep.subr.bf16.mxu0 0
    %1089 = vmatpush1.bf16.msra.mxu0 0
    %1090 = vmatprep.subr.bf16.mxu0 0
    %1091 = vmatpush1.bf16.msra.mxu0 0
    %1092 = vmatprep.subr.bf16.mxu0 0
    %1093 = vmatpush1.bf16.msra.mxu0 0
    %1094 = vmatprep.subr.bf16.mxu0 0
    %1095 = vmatpush1.bf16.msra.mxu0 0
    %1096 = vmatprep.subr.bf16.mxu0 0
    %1097 = vmatpush1.bf16.msra.mxu0 0
    %1098 = vmatprep.subr.bf16.mxu0 0
    %1099 = vmatpush1.bf16.msra.mxu0 0
    %1100 = vmatprep.subr.bf16.mxu0 0
    %1101 = vmatpush1.bf16.msra.mxu0 0
    %1102 = vmatprep.subr.bf16.mxu0 0
    %1103 = vmatpush1.bf16.msra.mxu0 0
    %1104 = vmatprep.subr.bf16.mxu0 0
    %1105 = vmatpush1.bf16.msra.mxu0 0
    %1106 = vmatprep.subr.bf16.mxu0 0
    %1107 = vmatpush1.bf16.msra.mxu0 0
    %1108 = vmatprep.mubr.bf16.mxu0 0
    %1109 = vmatmul.mubr.bf16.gmra.mrb[0].mxu0 %v1034
    %v1110 = vpop.f32.mrb[0].mxu0
    %v1111 = vadd.f32 %v626, %v1110
    %v1112 = vpop.f32.mrb[0].mxu0
    %v1113 = vpop.f32.mrb[0].mxu0
    %v1114 = vpop.f32.mrb[0].mxu0
    %1115 = vdwg.mxu0
    %1116 = vmatprep.subr.bf16.mxu0 0
    %1117 = vmatpush1.bf16.msra.mxu0 %v694
    %1118 = vmatprep.subr.bf16.mxu0 0
    %1119 = vmatpush1.bf16.msra.mxu0 %v695
    %1120 = vmatprep.subr.bf16.mxu0 0
    %1121 = vmatpush1.bf16.msra.mxu0 0
    %1122 = vmatprep.subr.bf16.mxu0 0
    %1123 = vmatpush1.bf16.msra.mxu0 0
    %1124 = vmatprep.subr.bf16.mxu0 0
    %1125 = vmatpush1.bf16.msra.mxu0 0
    %1126 = vmatprep.subr.bf16.mxu0 0
    %1127 = vmatpush1.bf16.msra.mxu0 0
    %1128 = vmatprep.subr.bf16.mxu0 0
    %1129 = vmatpush1.bf16.msra.mxu0 0
    %1130 = vmatprep.subr.bf16.mxu0 0
    %1131 = vmatpush1.bf16.msra.mxu0 0
    %1132 = vmatprep.subr.bf16.mxu0 0
    %1133 = vmatpush1.bf16.msra.mxu0 0
    %1134 = vmatprep.subr.bf16.mxu0 0
    %1135 = vmatpush1.bf16.msra.mxu0 0
    %1136 = vmatprep.subr.bf16.mxu0 0
    %1137 = vmatpush1.bf16.msra.mxu0 0
    %1138 = vmatprep.subr.bf16.mxu0 0
    %1139 = vmatpush1.bf16.msra.mxu0 0
    %1140 = vmatprep.subr.bf16.mxu0 0
    %1141 = vmatpush1.bf16.msra.mxu0 0
    %1142 = vmatprep.subr.bf16.mxu0 0
    %1143 = vmatpush1.bf16.msra.mxu0 0
    %1144 = vmatprep.subr.bf16.mxu0 0
    %1145 = vmatpush1.bf16.msra.mxu0 0
    %1146 = vmatprep.subr.bf16.mxu0 0
    %1147 = vmatpush1.bf16.msra.mxu0 0
    %1148 = vmatprep.mubr.bf16.mxu0 0
    %1149 = vmatmul.mubr.bf16.gmra.mrb[0].mxu0 %v1034
    %v1150 = vpop.f32.mrb[0].mxu0
    %v1151 = vadd.f32 %v684, %v1150
    %v1152 = vpop.f32.mrb[0].mxu0
    %v1153 = vpop.f32.mrb[0].mxu0
    %v1154 = vpop.f32.mrb[0].mxu0
    %1155 = vdwg.mxu0
    %v1156 = vadd.f32 %v948, %v1071
    %v1157 = vxor.u32 %v1156, 2147483648
    %v1158 = vmul.f32 %v1157, 1.442695
    %v1159 = vpow.pop %v1158
    %v1160 = vadd.f32 %v1159, 1.0
    %v1161 = vrcp.pop %v1160
    %v1162 = vmul.f32 1.0, %v1161
    %v1163 = vadd.f32 %v988, %v1111
    %v1164 = vxor.u32 %v1163, 2147483648
    %v1165 = vmul.f32 %v1164, 1.442695
    %v1166 = vpow.pop %v1165
    %v1167 = vadd.f32 %v1166, 1.0
    %v1168 = vrcp.pop %v1167
    %v1169 = vmul.f32 1.0, %v1168
    %v1170 = vmul.f32 %v1162, %v1151
    %v1171 = vadd.f32 %v1028, %v1170
    %v1172 = vtanh.pop %v1171
    %v1173 = vsub.f32 1.0, %v1169
    %v1174 = vmul.f32 %v1173, %v1172
    %v1175 = vmul.f32 %v1169, %v758
    %v1176 = vadd.f32 %v1174, %v1175
    %v1177 = vmax.f32 %v759, %v1176
    %v1178 = vadd.f32 %v760, %v1176
    %1179 = vmatprep.subr.bf16.mxu0 0
    %1180 = vmatpush1.bf16.msra.mxu0 %v194
    %1181 = vmatprep.subr.bf16.mxu0 0
    %1182 = vmatpush1.bf16.msra.mxu0 %v195
    %1183 = vmatprep.subr.bf16.mxu0 0
    %1184 = vmatpush1.bf16.msra.mxu0 0
    %1185 = vmatprep.subr.bf16.mxu0 0
    %1186 = vmatpush1.bf16.msra.mxu0 0
    %1187 = vmatprep.subr.bf16.mxu0 0
    %1188 = vmatpush1.bf16.msra.mxu0 0
    %1189 = vmatprep.subr.bf16.mxu0 0
    %1190 = vmatpush1.bf16.msra.mxu0 0
    %1191 = vmatprep.subr.bf16.mxu0 0
    %1192 = vmatpush1.bf16.msra.mxu0 0
    %1193 = vmatprep.subr.bf16.mxu0 0
    %1194 = vmatpush1.bf16.msra.mxu0 0
    %1195 = vmatprep.subr.bf16.mxu0 0
    %1196 = vmatpush1.bf16.msra.mxu0 0
    %1197 = vmatprep.subr.bf16.mxu0 0
    %1198 = vmatpush1.bf16.msra.mxu0 0
    %1199 = vmatprep.subr.bf16.mxu0 0
    %1200 = vmatpush1.bf16.msra.mxu0 0
    %1201 = vmatprep.subr.bf16.mxu0 0
    %1202 = vmatpush1.bf16.msra.mxu0 0
    %1203 = vmatprep.subr.bf16.mxu0 0
    %1204 = vmatpush1.bf16.msra.mxu0 0
    %1205 = vmatprep.subr.bf16.mxu0 0
    %1206 = vmatpush1.bf16.msra.mxu0 0
    %1207 = vmatprep.subr.bf16.mxu0 0
    %1208 = vmatpush1.bf16.msra.mxu0 0
    %1209 = vmatprep.subr.bf16.mxu0 0
    %1210 = vmatpush1.bf16.msra.mxu0 0
    %1211 = vmatprep.mubr.bf16.mxu0 0
    %1212 = vmatmul.mubr.bf16.gmra.mrb[0].mxu0 %v911
    %v1213 = vpop.f32.mrb[0].mxu0
    %v1214 = vadd.f32 %v184, %v1213
    %v1215 = vpop.f32.mrb[0].mxu0
    %v1216 = vpop.f32.mrb[0].mxu0
    %v1217 = vpop.f32.mrb[0].mxu0
    %1218 = vdwg.mxu0
    %1219 = vmatprep.subr.bf16.mxu0 0
    %1220 = vmatpush1.bf16.msra.mxu0 %v256
    %1221 = vmatprep.subr.bf16.mxu0 0
    %1222 = vmatpush1.bf16.msra.mxu0 %v257
    %1223 = vmatprep.subr.bf16.mxu0 0
    %1224 = vmatpush1.bf16.msra.mxu0 0
    %1225 = vmatprep.subr.bf16.mxu0 0
    %1226 = vmatpush1.bf16.msra.mxu0 0
    %1227 = vmatprep.subr.bf16.mxu0 0
    %1228 = vmatpush1.bf16.msra.mxu0 0
    %1229 = vmatprep.subr.bf16.mxu0 0
    %1230 = vmatpush1.bf16.msra.mxu0 0
    %1231 = vmatprep.subr.bf16.mxu0 0
    %1232 = vmatpush1.bf16.msra.mxu0 0
    %1233 = vmatprep.subr.bf16.mxu0 0
    %1234 = vmatpush1.bf16.msra.mxu0 0
    %1235 = vmatprep.subr.bf16.mxu0 0
    %1236 = vmatpush1.bf16.msra.mxu0 0
    %1237 = vmatprep.subr.bf16.mxu0 0
    %1238 = vmatpush1.bf16.msra.mxu0 0
    %1239 = vmatprep.subr.bf16.mxu0 0
    %1240 = vmatpush1.bf16.msra.mxu0 0
    %1241 = vmatprep.subr.bf16.mxu0 0
    %1242 = vmatpush1.bf16.msra.mxu0 0
    %1243 = vmatprep.subr.bf16.mxu0 0
    %1244 = vmatpush1.bf16.msra.mxu0 0
    %1245 = vmatprep.subr.bf16.mxu0 0
    %1246 = vmatpush1.bf16.msra.mxu0 0
    %1247 = vmatprep.subr.bf16.mxu0 0
    %1248 = vmatpush1.bf16.msra.mxu0 0
    %1249 = vmatprep.subr.bf16.mxu0 0
    %1250 = vmatpush1.bf16.msra.mxu0 0
    %1251 = vmatprep.mubr.bf16.mxu0 0
    %1252 = vmatmul.mubr.bf16.gmra.mrb[0].mxu0 %v911
    %v1253 = vpop.f32.mrb[0].mxu0
    %v1254 = vadd.f32 %v246, %v1253
    %v1255 = vpop.f32.mrb[0].mxu0
    %v1256 = vpop.f32.mrb[0].mxu0
    %v1257 = vpop.f32.mrb[0].mxu0
    %1258 = vdwg.mxu0
    %1259 = vmatprep.subr.bf16.mxu0 0
    %1260 = vmatpush1.bf16.msra.mxu0 %v314
    %1261 = vmatprep.subr.bf16.mxu0 0
    %1262 = vmatpush1.bf16.msra.mxu0 %v315
    %1263 = vmatprep.subr.bf16.mxu0 0
    %1264 = vmatpush1.bf16.msra.mxu0 0
    %1265 = vmatprep.subr.bf16.mxu0 0
    %1266 = vmatpush1.bf16.msra.mxu0 0
    %1267 = vmatprep.subr.bf16.mxu0 0
    %1268 = vmatpush1.bf16.msra.mxu0 0
    %1269 = vmatprep.subr.bf16.mxu0 0
    %1270 = vmatpush1.bf16.msra.mxu0 0
    %1271 = vmatprep.subr.bf16.mxu0 0
    %1272 = vmatpush1.bf16.msra.mxu0 0
    %1273 = vmatprep.subr.bf16.mxu0 0
    %1274 = vmatpush1.bf16.msra.mxu0 0
    %1275 = vmatprep.subr.bf16.mxu0 0
    %1276 = vmatpush1.bf16.msra.mxu0 0
    %1277 = vmatprep.subr.bf16.mxu0 0
    %1278 = vmatpush1.bf16.msra.mxu0 0
    %1279 = vmatprep.subr.bf16.mxu0 0
    %1280 = vmatpush1.bf16.msra.mxu0 0
    %1281 = vmatprep.subr.bf16.mxu0 0
    %1282 = vmatpush1.bf16.msra.mxu0 0
    %1283 = vmatprep.subr.bf16.mxu0 0
    %1284 = vmatpush1.bf16.msra.mxu0 0
    %1285 = vmatprep.subr.bf16.mxu0 0
    %1286 = vmatpush1.bf16.msra.mxu0 0
    %1287 = vmatprep.subr.bf16.mxu0 0
    %1288 = vmatpush1.bf16.msra.mxu0 0
    %1289 = vmatprep.subr.bf16.mxu0 0
    %1290 = vmatpush1.bf16.msra.mxu0 0
    %1291 = vmatprep.mubr.bf16.mxu0 0
    %1292 = vmatmul.mubr.bf16.gmra.mrb[0].mxu0 %v911
    %v1293 = vpop.f32.mrb[0].mxu0
    %v1294 = vadd.f32 %v304, %v1293
    %v1295 = vpop.f32.mrb[0].mxu0
    %v1296 = vpop.f32.mrb[0].mxu0
    %v1297 = vpop.f32.mrb[0].mxu0
    %1298 = vdwg.mxu0
    %s1299 = scalar_lea.vmem [#allocation7], 16
    %v1300 = vld [vmem:[%s1299] sm:$0xff]
    %v1301 = vadd.f32 %v1300, %v1214
    %v1302 = vxor.u32 %v1301, 2147483648
    %v1303 = vmul.f32 %v1302, 1.442695
    %v1304 = vpow.pop %v1303
    %v1305 = vadd.f32 %v1304, 1.0
    %v1306 = vrcp.pop %v1305
    %v1307 = vmul.f32 1.0, %v1306
    %s1308 = scalar_lea.vmem [#allocation9], 16
    %v1309 = vld [vmem:[%s1308] sm:$0xff]
    %v1310 = vadd.f32 %v1309, %v1254
    %v1311 = vxor.u32 %v1310, 2147483648
    %v1312 = vmul.f32 %v1311, 1.442695
    %v1313 = vpow.pop %v1312
    %v1314 = vadd.f32 %v1313, 1.0
    %v1315 = vrcp.pop %v1314
    %v1316 = vmul.f32 1.0, %v1315
    %s1317 = scalar_lea.vmem [#allocation11], 16
    %v1318 = vld [vmem:[%s1317] sm:$0xff]
    %v1319 = vmul.f32 %v1307, %v1294
    %v1320 = vadd.f32 %v1318, %v1319
    %v1321 = vtanh.pop %v1320
    %v1322 = vsub.f32 1.0, %v1316
    %v1323 = vmul.f32 %v1322, %v1321
    %v1324 = vmul.f32 %v1316, %v907
    %v1325 = vadd.f32 %v1323, %v1324
    %v1326 = vpack.c.bf16 %v1325, %v1325
    %v1327 = vpack.c.bf16 %v1176, %v1176
    %v1329 = vsel %vm198, %v1326, 0
    %1331 = vmatprep.subr.bf16.mxu0 0
    %1332 = vmatpush1.bf16.msra.mxu0 %v398
    %1333 = vmatprep.subr.bf16.mxu0 0
    %1334 = vmatpush1.bf16.msra.mxu0 %v399
    %1335 = vmatprep.subr.bf16.mxu0 0
    %1336 = vmatpush1.bf16.msra.mxu0 0
    %1337 = vmatprep.subr.bf16.mxu0 0
    %1338 = vmatpush1.bf16.msra.mxu0 0
    %1339 = vmatprep.subr.bf16.mxu0 0
    %1340 = vmatpush1.bf16.msra.mxu0 0
    %1341 = vmatprep.subr.bf16.mxu0 0
    %1342 = vmatpush1.bf16.msra.mxu0 0
    %1343 = vmatprep.subr.bf16.mxu0 0
    %1344 = vmatpush1.bf16.msra.mxu0 0
    %1345 = vmatprep.subr.bf16.mxu0 0
    %1346 = vmatpush1.bf16.msra.mxu0 0
    %1347 = vmatprep.subr.bf16.mxu0 0
    %1348 = vmatpush1.bf16.msra.mxu0 0
    %1349 = vmatprep.subr.bf16.mxu0 0
    %1350 = vmatpush1.bf16.msra.mxu0 0
    %1351 = vmatprep.subr.bf16.mxu0 0
    %1352 = vmatpush1.bf16.msra.mxu0 0
    %1353 = vmatprep.subr.bf16.mxu0 0
    %1354 = vmatpush1.bf16.msra.mxu0 0
    %1355 = vmatprep.subr.bf16.mxu0 0
    %1356 = vmatpush1.bf16.msra.mxu0 0
    %1357 = vmatprep.subr.bf16.mxu0 0
    %1358 = vmatpush1.bf16.msra.mxu0 0
    %1359 = vmatprep.subr.bf16.mxu0 0
    %1360 = vmatpush1.bf16.msra.mxu0 0
    %1361 = vmatprep.subr.bf16.mxu0 0
    %1362 = vmatpush1.bf16.msra.mxu0 0
    %1363 = vmatprep.mubr.bf16.mxu0 0
    %1364 = vmatmul.mubr.bf16.gmra.mrb[0].mxu0 %v1329
    %v1365 = vpop.f32.mrb[0].mxu0
    %v1366 = vadd.f32 %v388, %v1365
    %v1367 = vpop.f32.mrb[0].mxu0
    %v1368 = vpop.f32.mrb[0].mxu0
    %v1369 = vpop.f32.mrb[0].mxu0
    %1370 = vdwg.mxu0
    %1371 = vmatprep.subr.bf16.mxu0 0
    %1372 = vmatpush1.bf16.msra.mxu0 %v459
    %1373 = vmatprep.subr.bf16.mxu0 0
    %1374 = vmatpush1.bf16.msra.mxu0 %v460
    %1375 = vmatprep.subr.bf16.mxu0 0
    %1376 = vmatpush1.bf16.msra.mxu0 0
    %1377 = vmatprep.subr.bf16.mxu0 0
    %1378 = vmatpush1.bf16.msra.mxu0 0
    %1379 = vmatprep.subr.bf16.mxu0 0
    %1380 = vmatpush1.bf16.msra.mxu0 0
    %1381 = vmatprep.subr.bf16.mxu0 0
    %1382 = vmatpush1.bf16.msra.mxu0 0
    %1383 = vmatprep.subr.bf16.mxu0 0
    %1384 = vmatpush1.bf16.msra.mxu0 0
    %1385 = vmatprep.subr.bf16.mxu0 0
    %1386 = vmatpush1.bf16.msra.mxu0 0
    %1387 = vmatprep.subr.bf16.mxu0 0
    %1388 = vmatpush1.bf16.msra.mxu0 0
    %1389 = vmatprep.subr.bf16.mxu0 0
    %1390 = vmatpush1.bf16.msra.mxu0 0
    %1391 = vmatprep.subr.bf16.mxu0 0
    %1392 = vmatpush1.bf16.msra.mxu0 0
    %1393 = vmatprep.subr.bf16.mxu0 0
    %1394 = vmatpush1.bf16.msra.mxu0 0
    %1395 = vmatprep.subr.bf16.mxu0 0
    %1396 = vmatpush1.bf16.msra.mxu0 0
    %1397 = vmatprep.subr.bf16.mxu0 0
    %1398 = vmatpush1.bf16.msra.mxu0 0
    %1399 = vmatprep.subr.bf16.mxu0 0
    %1400 = vmatpush1.bf16.msra.mxu0 0
    %1401 = vmatprep.subr.bf16.mxu0 0
    %1402 = vmatpush1.bf16.msra.mxu0 0
    %1403 = vmatprep.mubr.bf16.mxu0 0
    %1404 = vmatmul.mubr.bf16.gmra.mrb[0].mxu0 %v1329
    %v1405 = vpop.f32.mrb[0].mxu0
    %v1406 = vadd.f32 %v449, %v1405
    %v1407 = vpop.f32.mrb[0].mxu0
    %v1408 = vpop.f32.mrb[0].mxu0
    %v1409 = vpop.f32.mrb[0].mxu0
    %1410 = vdwg.mxu0
    %1411 = vmatprep.subr.bf16.mxu0 0
    %1412 = vmatpush1.bf16.msra.mxu0 %v517
    %1413 = vmatprep.subr.bf16.mxu0 0
    %1414 = vmatpush1.bf16.msra.mxu0 %v518
    %1415 = vmatprep.subr.bf16.mxu0 0
    %1416 = vmatpush1.bf16.msra.mxu0 0
    %1417 = vmatprep.subr.bf16.mxu0 0
    %1418 = vmatpush1.bf16.msra.mxu0 0
    %1419 = vmatprep.subr.bf16.mxu0 0
    %1420 = vmatpush1.bf16.msra.mxu0 0
    %1421 = vmatprep.subr.bf16.mxu0 0
    %1422 = vmatpush1.bf16.msra.mxu0 0
    %1423 = vmatprep.subr.bf16.mxu0 0
    %1424 = vmatpush1.bf16.msra.mxu0 0
    %1425 = vmatprep.subr.bf16.mxu0 0
    %1426 = vmatpush1.bf16.msra.mxu0 0
    %1427 = vmatprep.subr.bf16.mxu0 0
    %1428 = vmatpush1.bf16.msra.mxu0 0
    %1429 = vmatprep.subr.bf16.mxu0 0
    %1430 = vmatpush1.bf16.msra.mxu0 0
    %1431 = vmatprep.subr.bf16.mxu0 0
    %1432 = vmatpush1.bf16.msra.mxu0 0
    %1433 = vmatprep.subr.bf16.mxu0 0
    %1434 = vmatpush1.bf16.msra.mxu0 0
    %1435 = vmatprep.subr.bf16.mxu0 0
    %1436 = vmatpush1.bf16.msra.mxu0 0
    %1437 = vmatprep.subr.bf16.mxu0 0
    %1438 = vmatpush1.bf16.msra.mxu0 0
    %1439 = vmatprep.subr.bf16.mxu0 0
    %1440 = vmatpush1.bf16.msra.mxu0 0
    %1441 = vmatprep.subr.bf16.mxu0 0
    %1442 = vmatpush1.bf16.msra.mxu0 0
    %1443 = vmatprep.mubr.bf16.mxu0 0
    %1444 = vmatmul.mubr.bf16.gmra.mrb[0].mxu0 %v1329
    %v1445 = vpop.f32.mrb[0].mxu0
    %v1446 = vadd.f32 %v507, %v1445
    %v1447 = vpop.f32.mrb[0].mxu0
    %v1448 = vpop.f32.mrb[0].mxu0
    %v1449 = vpop.f32.mrb[0].mxu0
    %1450 = vdwg.mxu0
    %v1452 = vsel %vm198, %v1327, 0
    %1454 = vmatprep.subr.bf16.mxu0 0
    %1455 = vmatpush1.bf16.msra.mxu0 %v575
    %1456 = vmatprep.subr.bf16.mxu0 0
    %1457 = vmatpush1.bf16.msra.mxu0 %v576
    %1458 = vmatprep.subr.bf16.mxu0 0
    %1459 = vmatpush1.bf16.msra.mxu0 0
    %1460 = vmatprep.subr.bf16.mxu0 0
    %1461 = vmatpush1.bf16.msra.mxu0 0
    %1462 = vmatprep.subr.bf16.mxu0 0
    %1463 = vmatpush1.bf16.msra.mxu0 0
    %1464 = vmatprep.subr.bf16.mxu0 0
    %1465 = vmatpush1.bf16.msra.mxu0 0
    %1466 = vmatprep.subr.bf16.mxu0 0
    %1467 = vmatpush1.bf16.msra.mxu0 0
    %1468 = vmatprep.subr.bf16.mxu0 0
    %1469 = vmatpush1.bf16.msra.mxu0 0
    %1470 = vmatprep.subr.bf16.mxu0 0
    %1471 = vmatpush1.bf16.msra.mxu0 0
    %1472 = vmatprep.subr.bf16.mxu0 0
    %1473 = vmatpush1.bf16.msra.mxu0 0
    %1474 = vmatprep.subr.bf16.mxu0 0
    %1475 = vmatpush1.bf16.msra.mxu0 0
    %1476 = vmatprep.subr.bf16.mxu0 0
    %1477 = vmatpush1.bf16.msra.mxu0 0
    %1478 = vmatprep.subr.bf16.mxu0 0
    %1479 = vmatpush1.bf16.msra.mxu0 0
    %1480 = vmatprep.subr.bf16.mxu0 0
    %1481 = vmatpush1.bf16.msra.mxu0 0
    %1482 = vmatprep.subr.bf16.mxu0 0
    %1483 = vmatpush1.bf16.msra.mxu0 0
    %1484 = vmatprep.subr.bf16.mxu0 0
    %1485 = vmatpush1.bf16.msra.mxu0 0
    %1486 = vmatprep.mubr.bf16.mxu0 0
    %1487 = vmatmul.mubr.bf16.gmra.mrb[0].mxu0 %v1452
    %v1488 = vpop.f32.mrb[0].mxu0
    %v1489 = vadd.f32 %v565, %v1488
    %v1490 = vpop.f32.mrb[0].mxu0
    %v1491 = vpop.f32.mrb[0].mxu0
    %v1492 = vpop.f32.mrb[0].mxu0
    %1493 = vdwg.mxu0
    %1494 = vmatprep.subr.bf16.mxu0 0
    %1495 = vmatpush1.bf16.msra.mxu0 %v636
    %1496 = vmatprep.subr.bf16.mxu0 0
    %1497 = vmatpush1.bf16.msra.mxu0 %v637
    %1498 = vmatprep.subr.bf16.mxu0 0
    %1499 = vmatpush1.bf16.msra.mxu0 0
    %1500 = vmatprep.subr.bf16.mxu0 0
    %1501 = vmatpush1.bf16.msra.mxu0 0
    %1502 = vmatprep.subr.bf16.mxu0 0
    %1503 = vmatpush1.bf16.msra.mxu0 0
    %1504 = vmatprep.subr.bf16.mxu0 0
    %1505 = vmatpush1.bf16.msra.mxu0 0
    %1506 = vmatprep.subr.bf16.mxu0 0
    %1507 = vmatpush1.bf16.msra.mxu0 0
    %1508 = vmatprep.subr.bf16.mxu0 0
    %1509 = vmatpush1.bf16.msra.mxu0 0
    %1510 = vmatprep.subr.bf16.mxu0 0
    %1511 = vmatpush1.bf16.msra.mxu0 0
    %1512 = vmatprep.subr.bf16.mxu0 0
    %1513 = vmatpush1.bf16.msra.mxu0 0
    %1514 = vmatprep.subr.bf16.mxu0 0
    %1515 = vmatpush1.bf16.msra.mxu0 0
    %1516 = vmatprep.subr.bf16.mxu0 0
    %1517 = vmatpush1.bf16.msra.mxu0 0
    %1518 = vmatprep.subr.bf16.mxu0 0
    %1519 = vmatpush1.bf16.msra.mxu0 0
    %1520 = vmatprep.subr.bf16.mxu0 0
    %1521 = vmatpush1.bf16.msra.mxu0 0
    %1522 = vmatprep.subr.bf16.mxu0 0
    %1523 = vmatpush1.bf16.msra.mxu0 0
    %1524 = vmatprep.subr.bf16.mxu0 0
    %1525 = vmatpush1.bf16.msra.mxu0 0
    %1526 = vmatprep.mubr.bf16.mxu0 0
    %1527 = vmatmul.mubr.bf16.gmra.mrb[0].mxu0 %v1452
    %v1528 = vpop.f32.mrb[0].mxu0
    %v1529 = vadd.f32 %v626, %v1528
    %v1530 = vpop.f32.mrb[0].mxu0
    %v1531 = vpop.f32.mrb[0].mxu0
    %v1532 = vpop.f32.mrb[0].mxu0
    %1533 = vdwg.mxu0
    %1534 = vmatprep.subr.bf16.mxu0 0
    %1535 = vmatpush1.bf16.msra.mxu0 %v694
    %1536 = vmatprep.subr.bf16.mxu0 0
    %1537 = vmatpush1.bf16.msra.mxu0 %v695
    %1538 = vmatprep.subr.bf16.mxu0 0
    %1539 = vmatpush1.bf16.msra.mxu0 0
    %1540 = vmatprep.subr.bf16.mxu0 0
    %1541 = vmatpush1.bf16.msra.mxu0 0
    %1542 = vmatprep.subr.bf16.mxu0 0
    %1543 = vmatpush1.bf16.msra.mxu0 0
    %1544 = vmatprep.subr.bf16.mxu0 0
    %1545 = vmatpush1.bf16.msra.mxu0 0
    %1546 = vmatprep.subr.bf16.mxu0 0
    %1547 = vmatpush1.bf16.msra.mxu0 0
    %1548 = vmatprep.subr.bf16.mxu0 0
    %1549 = vmatpush1.bf16.msra.mxu0 0
    %1550 = vmatprep.subr.bf16.mxu0 0
    %1551 = vmatpush1.bf16.msra.mxu0 0
    %1552 = vmatprep.subr.bf16.mxu0 0
    %1553 = vmatpush1.bf16.msra.mxu0 0
    %1554 = vmatprep.subr.bf16.mxu0 0
    %1555 = vmatpush1.bf16.msra.mxu0 0
    %1556 = vmatprep.subr.bf16.mxu0 0
    %1557 = vmatpush1.bf16.msra.mxu0 0
    %1558 = vmatprep.subr.bf16.mxu0 0
    %1559 = vmatpush1.bf16.msra.mxu0 0
    %1560 = vmatprep.subr.bf16.mxu0 0
    %1561 = vmatpush1.bf16.msra.mxu0 0
    %1562 = vmatprep.subr.bf16.mxu0 0
    %1563 = vmatpush1.bf16.msra.mxu0 0
    %1564 = vmatprep.subr.bf16.mxu0 0
    %1565 = vmatpush1.bf16.msra.mxu0 0
    %1566 = vmatprep.mubr.bf16.mxu0 0
    %1567 = vmatmul.mubr.bf16.gmra.mrb[0].mxu0 %v1452
    %v1568 = vpop.f32.mrb[0].mxu0
    %v1569 = vadd.f32 %v684, %v1568
    %v1570 = vpop.f32.mrb[0].mxu0
    %v1571 = vpop.f32.mrb[0].mxu0
    %v1572 = vpop.f32.mrb[0].mxu0
    %1573 = vdwg.mxu0
    %v1574 = vadd.f32 %v1366, %v1489
    %v1575 = vxor.u32 %v1574, 2147483648
    %v1576 = vmul.f32 %v1575, 1.442695
    %v1577 = vpow.pop %v1576
    %v1578 = vadd.f32 %v1577, 1.0
    %v1579 = vrcp.pop %v1578
    %v1580 = vmul.f32 1.0, %v1579
    %v1581 = vadd.f32 %v1406, %v1529
    %v1582 = vxor.u32 %v1581, 2147483648
    %v1583 = vmul.f32 %v1582, 1.442695
    %v1584 = vpow.pop %v1583
    %v1585 = vadd.f32 %v1584, 1.0
    %v1586 = vrcp.pop %v1585
    %v1587 = vmul.f32 1.0, %v1586
    %v1588 = vmul.f32 %v1580, %v1569
    %v1589 = vadd.f32 %v1446, %v1588
    %v1590 = vtanh.pop %v1589
    %v1591 = vsub.f32 1.0, %v1587
    %v1592 = vmul.f32 %v1591, %v1590
    %v1593 = vmul.f32 %v1587, %v1176
    %v1594 = vadd.f32 %v1592, %v1593
    %v1595 = vmax.f32 %v1177, %v1594
    %v1596 = vadd.f32 %v1178, %v1594
    %1597 = vmatprep.subr.bf16.mxu0 0
    %1598 = vmatpush1.bf16.msra.mxu0 %v194
    %1599 = vmatprep.subr.bf16.mxu0 0
    %1600 = vmatpush1.bf16.msra.mxu0 %v195
    %1601 = vmatprep.subr.bf16.mxu0 0
    %1602 = vmatpush1.bf16.msra.mxu0 0
    %1603 = vmatprep.subr.bf16.mxu0 0
    %1604 = vmatpush1.bf16.msra.mxu0 0
    %1605 = vmatprep.subr.bf16.mxu0 0
    %1606 = vmatpush1.bf16.msra.mxu0 0
    %1607 = vmatprep.subr.bf16.mxu0 0
    %1608 = vmatpush1.bf16.msra.mxu0 0
    %1609 = vmatprep.subr.bf16.mxu0 0
    %1610 = vmatpush1.bf16.msra.mxu0 0
    %1611 = vmatprep.subr.bf16.mxu0 0
    %1612 = vmatpush1.bf16.msra.mxu0 0
    %1613 = vmatprep.subr.bf16.mxu0 0
    %1614 = vmatpush1.bf16.msra.mxu0 0
    %1615 = vmatprep.subr.bf16.mxu0 0
    %1616 = vmatpush1.bf16.msra.mxu0 0
    %1617 = vmatprep.subr.bf16.mxu0 0
    %1618 = vmatpush1.bf16.msra.mxu0 0
    %1619 = vmatprep.subr.bf16.mxu0 0
    %1620 = vmatpush1.bf16.msra.mxu0 0
    %1621 = vmatprep.subr.bf16.mxu0 0
    %1622 = vmatpush1.bf16.msra.mxu0 0
    %1623 = vmatprep.subr.bf16.mxu0 0
    %1624 = vmatpush1.bf16.msra.mxu0 0
    %1625 = vmatprep.subr.bf16.mxu0 0
    %1626 = vmatpush1.bf16.msra.mxu0 0
    %1627 = vmatprep.subr.bf16.mxu0 0
    %1628 = vmatpush1.bf16.msra.mxu0 0
    %1629 = vmatprep.mubr.bf16.mxu0 0
    %1630 = vmatmul.mubr.bf16.gmra.mrb[0].mxu0 %v1329
    %v1631 = vpop.f32.mrb[0].mxu0
    %v1632 = vadd.f32 %v184, %v1631
    %v1633 = vpop.f32.mrb[0].mxu0
    %v1634 = vpop.f32.mrb[0].mxu0
    %v1635 = vpop.f32.mrb[0].mxu0
    %1636 = vdwg.mxu0
    %1637 = vmatprep.subr.bf16.mxu0 0
    %1638 = vmatpush1.bf16.msra.mxu0 %v256
    %1639 = vmatprep.subr.bf16.mxu0 0
    %1640 = vmatpush1.bf16.msra.mxu0 %v257
    %1641 = vmatprep.subr.bf16.mxu0 0
    %1642 = vmatpush1.bf16.msra.mxu0 0
    %1643 = vmatprep.subr.bf16.mxu0 0
    %1644 = vmatpush1.bf16.msra.mxu0 0
    %1645 = vmatprep.subr.bf16.mxu0 0
    %1646 = vmatpush1.bf16.msra.mxu0 0
    %1647 = vmatprep.subr.bf16.mxu0 0
    %1648 = vmatpush1.bf16.msra.mxu0 0
    %1649 = vmatprep.subr.bf16.mxu0 0
    %1650 = vmatpush1.bf16.msra.mxu0 0
    %1651 = vmatprep.subr.bf16.mxu0 0
    %1652 = vmatpush1.bf16.msra.mxu0 0
    %1653 = vmatprep.subr.bf16.mxu0 0
    %1654 = vmatpush1.bf16.msra.mxu0 0
    %1655 = vmatprep.subr.bf16.mxu0 0
    %1656 = vmatpush1.bf16.msra.mxu0 0
    %1657 = vmatprep.subr.bf16.mxu0 0
    %1658 = vmatpush1.bf16.msra.mxu0 0
    %1659 = vmatprep.subr.bf16.mxu0 0
    %1660 = vmatpush1.bf16.msra.mxu0 0
    %1661 = vmatprep.subr.bf16.mxu0 0
    %1662 = vmatpush1.bf16.msra.mxu0 0
    %1663 = vmatprep.subr.bf16.mxu0 0
    %1664 = vmatpush1.bf16.msra.mxu0 0
    %1665 = vmatprep.subr.bf16.mxu0 0
    %1666 = vmatpush1.bf16.msra.mxu0 0
    %1667 = vmatprep.subr.bf16.mxu0 0
    %1668 = vmatpush1.bf16.msra.mxu0 0
    %1669 = vmatprep.mubr.bf16.mxu0 0
    %1670 = vmatmul.mubr.bf16.gmra.mrb[0].mxu0 %v1329
    %v1671 = vpop.f32.mrb[0].mxu0
    %v1672 = vadd.f32 %v246, %v1671
    %v1673 = vpop.f32.mrb[0].mxu0
    %v1674 = vpop.f32.mrb[0].mxu0
    %v1675 = vpop.f32.mrb[0].mxu0
    %1676 = vdwg.mxu0
    %1677 = vmatprep.subr.bf16.mxu0 0
    %1678 = vmatpush1.bf16.msra.mxu0 %v314
    %1679 = vmatprep.subr.bf16.mxu0 0
    %1680 = vmatpush1.bf16.msra.mxu0 %v315
    %1681 = vmatprep.subr.bf16.mxu0 0
    %1682 = vmatpush1.bf16.msra.mxu0 0
    %1683 = vmatprep.subr.bf16.mxu0 0
    %1684 = vmatpush1.bf16.msra.mxu0 0
    %1685 = vmatprep.subr.bf16.mxu0 0
    %1686 = vmatpush1.bf16.msra.mxu0 0
    %1687 = vmatprep.subr.bf16.mxu0 0
    %1688 = vmatpush1.bf16.msra.mxu0 0
    %1689 = vmatprep.subr.bf16.mxu0 0
    %1690 = vmatpush1.bf16.msra.mxu0 0
    %1691 = vmatprep.subr.bf16.mxu0 0
    %1692 = vmatpush1.bf16.msra.mxu0 0
    %1693 = vmatprep.subr.bf16.mxu0 0
    %1694 = vmatpush1.bf16.msra.mxu0 0
    %1695 = vmatprep.subr.bf16.mxu0 0
    %1696 = vmatpush1.bf16.msra.mxu0 0
    %1697 = vmatprep.subr.bf16.mxu0 0
    %1698 = vmatpush1.bf16.msra.mxu0 0
    %1699 = vmatprep.subr.bf16.mxu0 0
    %1700 = vmatpush1.bf16.msra.mxu0 0
    %1701 = vmatprep.subr.bf16.mxu0 0
    %1702 = vmatpush1.bf16.msra.mxu0 0
    %1703 = vmatprep.subr.bf16.mxu0 0
    %1704 = vmatpush1.bf16.msra.mxu0 0
    %1705 = vmatprep.subr.bf16.mxu0 0
    %1706 = vmatpush1.bf16.msra.mxu0 0
    %1707 = vmatprep.subr.bf16.mxu0 0
    %1708 = vmatpush1.bf16.msra.mxu0 0
    %1709 = vmatprep.mubr.bf16.mxu0 0
    %1710 = vmatmul.mubr.bf16.gmra.mrb[0].mxu0 %v1329
    %v1711 = vpop.f32.mrb[0].mxu0
    %v1712 = vadd.f32 %v304, %v1711
    %v1713 = vpop.f32.mrb[0].mxu0
    %v1714 = vpop.f32.mrb[0].mxu0
    %v1715 = vpop.f32.mrb[0].mxu0
    %1716 = vdwg.mxu0
    %s1717 = scalar_lea.vmem [#allocation7], 24
    %v1718 = vld [vmem:[%s1717] sm:$0xff]
    %v1719 = vadd.f32 %v1718, %v1632
    %v1720 = vxor.u32 %v1719, 2147483648
    %v1721 = vmul.f32 %v1720, 1.442695
    %v1722 = vpow.pop %v1721
    %v1723 = vadd.f32 %v1722, 1.0
    %v1724 = vrcp.pop %v1723
    %v1725 = vmul.f32 1.0, %v1724
    %s1726 = scalar_lea.vmem [#allocation9], 24
    %v1727 = vld [vmem:[%s1726] sm:$0xff]
    %v1728 = vadd.f32 %v1727, %v1672
    %v1729 = vxor.u32 %v1728, 2147483648
    %v1730 = vmul.f32 %v1729, 1.442695
    %v1731 = vpow.pop %v1730
    %v1732 = vadd.f32 %v1731, 1.0
    %v1733 = vrcp.pop %v1732
    %v1734 = vmul.f32 1.0, %v1733
    %s1735 = scalar_lea.vmem [#allocation11], 24
    %v1736 = vld [vmem:[%s1735] sm:$0xff]
    %v1737 = vmul.f32 %v1725, %v1712
    %v1738 = vadd.f32 %v1736, %v1737
    %v1739 = vtanh.pop %v1738
    %v1740 = vsub.f32 1.0, %v1734
    %v1741 = vmul.f32 %v1740, %v1739
    %v1742 = vmul.f32 %v1734, %v1325
    %v1743 = vadd.f32 %v1741, %v1742
    %v1744 = vpack.c.bf16 %v1743, %v1743
    %v1745 = vpack.c.bf16 %v1594, %v1594
    %v1747 = vsel %vm198, %v1744, 0
    %1749 = vmatprep.subr.bf16.mxu0 0
    %1750 = vmatpush1.bf16.msra.mxu0 %v398
    %1751 = vmatprep.subr.bf16.mxu0 0
    %1752 = vmatpush1.bf16.msra.mxu0 %v399
    %1753 = vmatprep.subr.bf16.mxu0 0
    %1754 = vmatpush1.bf16.msra.mxu0 0
    %1755 = vmatprep.subr.bf16.mxu0 0
    %1756 = vmatpush1.bf16.msra.mxu0 0
    %1757 = vmatprep.subr.bf16.mxu0 0
    %1758 = vmatpush1.bf16.msra.mxu0 0
    %1759 = vmatprep.subr.bf16.mxu0 0
    %1760 = vmatpush1.bf16.msra.mxu0 0
    %1761 = vmatprep.subr.bf16.mxu0 0
    %1762 = vmatpush1.bf16.msra.mxu0 0
    %1763 = vmatprep.subr.bf16.mxu0 0
    %1764 = vmatpush1.bf16.msra.mxu0 0
    %1765 = vmatprep.subr.bf16.mxu0 0
    %1766 = vmatpush1.bf16.msra.mxu0 0
    %1767 = vmatprep.subr.bf16.mxu0 0
    %1768 = vmatpush1.bf16.msra.mxu0 0
    %1769 = vmatprep.subr.bf16.mxu0 0
    %1770 = vmatpush1.bf16.msra.mxu0 0
    %1771 = vmatprep.subr.bf16.mxu0 0
    %1772 = vmatpush1.bf16.msra.mxu0 0
    %1773 = vmatprep.subr.bf16.mxu0 0
    %1774 = vmatpush1.bf16.msra.mxu0 0
    %1775 = vmatprep.subr.bf16.mxu0 0
    %1776 = vmatpush1.bf16.msra.mxu0 0
    %1777 = vmatprep.subr.bf16.mxu0 0
    %1778 = vmatpush1.bf16.msra.mxu0 0
    %1779 = vmatprep.subr.bf16.mxu0 0
    %1780 = vmatpush1.bf16.msra.mxu0 0
    %1781 = vmatprep.mubr.bf16.mxu0 0
    %1782 = vmatmul.mubr.bf16.gmra.mrb[0].mxu0 %v1747
    %v1783 = vpop.f32.mrb[0].mxu0
    %v1784 = vadd.f32 %v388, %v1783
    %v1785 = vpop.f32.mrb[0].mxu0
    %v1786 = vpop.f32.mrb[0].mxu0
    %v1787 = vpop.f32.mrb[0].mxu0
    %1788 = vdwg.mxu0
    %1789 = vmatprep.subr.bf16.mxu0 0
    %1790 = vmatpush1.bf16.msra.mxu0 %v459
    %1791 = vmatprep.subr.bf16.mxu0 0
    %1792 = vmatpush1.bf16.msra.mxu0 %v460
    %1793 = vmatprep.subr.bf16.mxu0 0
    %1794 = vmatpush1.bf16.msra.mxu0 0
    %1795 = vmatprep.subr.bf16.mxu0 0
    %1796 = vmatpush1.bf16.msra.mxu0 0
    %1797 = vmatprep.subr.bf16.mxu0 0
    %1798 = vmatpush1.bf16.msra.mxu0 0
    %1799 = vmatprep.subr.bf16.mxu0 0
    %1800 = vmatpush1.bf16.msra.mxu0 0
    %1801 = vmatprep.subr.bf16.mxu0 0
    %1802 = vmatpush1.bf16.msra.mxu0 0
    %1803 = vmatprep.subr.bf16.mxu0 0
    %1804 = vmatpush1.bf16.msra.mxu0 0
    %1805 = vmatprep.subr.bf16.mxu0 0
    %1806 = vmatpush1.bf16.msra.mxu0 0
    %1807 = vmatprep.subr.bf16.mxu0 0
    %1808 = vmatpush1.bf16.msra.mxu0 0
    %1809 = vmatprep.subr.bf16.mxu0 0
    %1810 = vmatpush1.bf16.msra.mxu0 0
    %1811 = vmatprep.subr.bf16.mxu0 0
    %1812 = vmatpush1.bf16.msra.mxu0 0
    %1813 = vmatprep.subr.bf16.mxu0 0
    %1814 = vmatpush1.bf16.msra.mxu0 0
    %1815 = vmatprep.subr.bf16.mxu0 0
    %1816 = vmatpush1.bf16.msra.mxu0 0
    %1817 = vmatprep.subr.bf16.mxu0 0
    %1818 = vmatpush1.bf16.msra.mxu0 0
    %1819 = vmatprep.subr.bf16.mxu0 0
    %1820 = vmatpush1.bf16.msra.mxu0 0
    %1821 = vmatprep.mubr.bf16.mxu0 0
    %1822 = vmatmul.mubr.bf16.gmra.mrb[0].mxu0 %v1747
    %v1823 = vpop.f32.mrb[0].mxu0
    %v1824 = vadd.f32 %v449, %v1823
    %v1825 = vpop.f32.mrb[0].mxu0
    %v1826 = vpop.f32.mrb[0].mxu0
    %v1827 = vpop.f32.mrb[0].mxu0
    %1828 = vdwg.mxu0
    %1829 = vmatprep.subr.bf16.mxu0 0
    %1830 = vmatpush1.bf16.msra.mxu0 %v517
    %1831 = vmatprep.subr.bf16.mxu0 0
    %1832 = vmatpush1.bf16.msra.mxu0 %v518
    %1833 = vmatprep.subr.bf16.mxu0 0
    %1834 = vmatpush1.bf16.msra.mxu0 0
    %1835 = vmatprep.subr.bf16.mxu0 0
    %1836 = vmatpush1.bf16.msra.mxu0 0
    %1837 = vmatprep.subr.bf16.mxu0 0
    %1838 = vmatpush1.bf16.msra.mxu0 0
    %1839 = vmatprep.subr.bf16.mxu0 0
    %1840 = vmatpush1.bf16.msra.mxu0 0
    %1841 = vmatprep.subr.bf16.mxu0 0
    %1842 = vmatpush1.bf16.msra.mxu0 0
    %1843 = vmatprep.subr.bf16.mxu0 0
    %1844 = vmatpush1.bf16.msra.mxu0 0
    %1845 = vmatprep.subr.bf16.mxu0 0
    %1846 = vmatpush1.bf16.msra.mxu0 0
    %1847 = vmatprep.subr.bf16.mxu0 0
    %1848 = vmatpush1.bf16.msra.mxu0 0
    %1849 = vmatprep.subr.bf16.mxu0 0
    %1850 = vmatpush1.bf16.msra.mxu0 0
    %1851 = vmatprep.subr.bf16.mxu0 0
    %1852 = vmatpush1.bf16.msra.mxu0 0
    %1853 = vmatprep.subr.bf16.mxu0 0
    %1854 = vmatpush1.bf16.msra.mxu0 0
    %1855 = vmatprep.subr.bf16.mxu0 0
    %1856 = vmatpush1.bf16.msra.mxu0 0
    %1857 = vmatprep.subr.bf16.mxu0 0
    %1858 = vmatpush1.bf16.msra.mxu0 0
    %1859 = vmatprep.subr.bf16.mxu0 0
    %1860 = vmatpush1.bf16.msra.mxu0 0
    %1861 = vmatprep.mubr.bf16.mxu0 0
    %1862 = vmatmul.mubr.bf16.gmra.mrb[0].mxu0 %v1747
    %v1863 = vpop.f32.mrb[0].mxu0
    %v1864 = vadd.f32 %v507, %v1863
    %v1865 = vpop.f32.mrb[0].mxu0
    %v1866 = vpop.f32.mrb[0].mxu0
    %v1867 = vpop.f32.mrb[0].mxu0
    %1868 = vdwg.mxu0
    %v1870 = vsel %vm198, %v1745, 0
    %1872 = vmatprep.subr.bf16.mxu0 0
    %1873 = vmatpush1.bf16.msra.mxu0 %v575
    %1874 = vmatprep.subr.bf16.mxu0 0
    %1875 = vmatpush1.bf16.msra.mxu0 %v576
    %1876 = vmatprep.subr.bf16.mxu0 0
    %1877 = vmatpush1.bf16.msra.mxu0 0
    %1878 = vmatprep.subr.bf16.mxu0 0
    %1879 = vmatpush1.bf16.msra.mxu0 0
    %1880 = vmatprep.subr.bf16.mxu0 0
    %1881 = vmatpush1.bf16.msra.mxu0 0
    %1882 = vmatprep.subr.bf16.mxu0 0
    %1883 = vmatpush1.bf16.msra.mxu0 0
    %1884 = vmatprep.subr.bf16.mxu0 0
    %1885 = vmatpush1.bf16.msra.mxu0 0
    %1886 = vmatprep.subr.bf16.mxu0 0
    %1887 = vmatpush1.bf16.msra.mxu0 0
    %1888 = vmatprep.subr.bf16.mxu0 0
    %1889 = vmatpush1.bf16.msra.mxu0 0
    %1890 = vmatprep.subr.bf16.mxu0 0
    %1891 = vmatpush1.bf16.msra.mxu0 0
    %1892 = vmatprep.subr.bf16.mxu0 0
    %1893 = vmatpush1.bf16.msra.mxu0 0
    %1894 = vmatprep.subr.bf16.mxu0 0
    %1895 = vmatpush1.bf16.msra.mxu0 0
    %1896 = vmatprep.subr.bf16.mxu0 0
    %1897 = vmatpush1.bf16.msra.mxu0 0
    %1898 = vmatprep.subr.bf16.mxu0 0
    %1899 = vmatpush1.bf16.msra.mxu0 0
    %1900 = vmatprep.subr.bf16.mxu0 0
    %1901 = vmatpush1.bf16.msra.mxu0 0
    %1902 = vmatprep.subr.bf16.mxu0 0
    %1903 = vmatpush1.bf16.msra.mxu0 0
    %1904 = vmatprep.mubr.bf16.mxu0 0
    %1905 = vmatmul.mubr.bf16.gmra.mrb[0].mxu0 %v1870
    %v1906 = vpop.f32.mrb[0].mxu0
    %v1907 = vadd.f32 %v565, %v1906
    %v1908 = vpop.f32.mrb[0].mxu0
    %v1909 = vpop.f32.mrb[0].mxu0
    %v1910 = vpop.f32.mrb[0].mxu0
    %1911 = vdwg.mxu0
    %1912 = vmatprep.subr.bf16.mxu0 0
    %1913 = vmatpush1.bf16.msra.mxu0 %v636
    %1914 = vmatprep.subr.bf16.mxu0 0
    %1915 = vmatpush1.bf16.msra.mxu0 %v637
    %1916 = vmatprep.subr.bf16.mxu0 0
    %1917 = vmatpush1.bf16.msra.mxu0 0
    %1918 = vmatprep.subr.bf16.mxu0 0
    %1919 = vmatpush1.bf16.msra.mxu0 0
    %1920 = vmatprep.subr.bf16.mxu0 0
    %1921 = vmatpush1.bf16.msra.mxu0 0
    %1922 = vmatprep.subr.bf16.mxu0 0
    %1923 = vmatpush1.bf16.msra.mxu0 0
    %1924 = vmatprep.subr.bf16.mxu0 0
    %1925 = vmatpush1.bf16.msra.mxu0 0
    %1926 = vmatprep.subr.bf16.mxu0 0
    %1927 = vmatpush1.bf16.msra.mxu0 0
    %1928 = vmatprep.subr.bf16.mxu0 0
    %1929 = vmatpush1.bf16.msra.mxu0 0
    %1930 = vmatprep.subr.bf16.mxu0 0
    %1931 = vmatpush1.bf16.msra.mxu0 0
    %1932 = vmatprep.subr.bf16.mxu0 0
    %1933 = vmatpush1.bf16.msra.mxu0 0
    %1934 = vmatprep.subr.bf16.mxu0 0
    %1935 = vmatpush1.bf16.msra.mxu0 0
    %1936 = vmatprep.subr.bf16.mxu0 0
    %1937 = vmatpush1.bf16.msra.mxu0 0
    %1938 = vmatprep.subr.bf16.mxu0 0
    %1939 = vmatpush1.bf16.msra.mxu0 0
    %1940 = vmatprep.subr.bf16.mxu0 0
    %1941 = vmatpush1.bf16.msra.mxu0 0
    %1942 = vmatprep.subr.bf16.mxu0 0
    %1943 = vmatpush1.bf16.msra.mxu0 0
    %1944 = vmatprep.mubr.bf16.mxu0 0
    %1945 = vmatmul.mubr.bf16.gmra.mrb[0].mxu0 %v1870
    %v1946 = vpop.f32.mrb[0].mxu0
    %v1947 = vadd.f32 %v626, %v1946
    %v1948 = vpop.f32.mrb[0].mxu0
    %v1949 = vpop.f32.mrb[0].mxu0
    %v1950 = vpop.f32.mrb[0].mxu0
    %1951 = vdwg.mxu0
    %1952 = vmatprep.subr.bf16.mxu0 0
    %1953 = vmatpush1.bf16.msra.mxu0 %v694
    %1954 = vmatprep.subr.bf16.mxu0 0
    %1955 = vmatpush1.bf16.msra.mxu0 %v695
    %1956 = vmatprep.subr.bf16.mxu0 0
    %1957 = vmatpush1.bf16.msra.mxu0 0
    %1958 = vmatprep.subr.bf16.mxu0 0
    %1959 = vmatpush1.bf16.msra.mxu0 0
    %1960 = vmatprep.subr.bf16.mxu0 0
    %1961 = vmatpush1.bf16.msra.mxu0 0
    %1962 = vmatprep.subr.bf16.mxu0 0
    %1963 = vmatpush1.bf16.msra.mxu0 0
    %1964 = vmatprep.subr.bf16.mxu0 0
    %1965 = vmatpush1.bf16.msra.mxu0 0
    %1966 = vmatprep.subr.bf16.mxu0 0
    %1967 = vmatpush1.bf16.msra.mxu0 0
    %1968 = vmatprep.subr.bf16.mxu0 0
    %1969 = vmatpush1.bf16.msra.mxu0 0
    %1970 = vmatprep.subr.bf16.mxu0 0
    %1971 = vmatpush1.bf16.msra.mxu0 0
    %1972 = vmatprep.subr.bf16.mxu0 0
    %1973 = vmatpush1.bf16.msra.mxu0 0
    %1974 = vmatprep.subr.bf16.mxu0 0
    %1975 = vmatpush1.bf16.msra.mxu0 0
    %1976 = vmatprep.subr.bf16.mxu0 0
    %1977 = vmatpush1.bf16.msra.mxu0 0
    %1978 = vmatprep.subr.bf16.mxu0 0
    %1979 = vmatpush1.bf16.msra.mxu0 0
    %1980 = vmatprep.subr.bf16.mxu0 0
    %1981 = vmatpush1.bf16.msra.mxu0 0
    %1982 = vmatprep.subr.bf16.mxu0 0
    %1983 = vmatpush1.bf16.msra.mxu0 0
    %1984 = vmatprep.mubr.bf16.mxu0 0
    %1985 = vmatmul.mubr.bf16.gmra.mrb[0].mxu0 %v1870
    %v1986 = vpop.f32.mrb[0].mxu0
    %v1987 = vadd.f32 %v684, %v1986
    %v1988 = vpop.f32.mrb[0].mxu0
    %v1989 = vpop.f32.mrb[0].mxu0
    %v1990 = vpop.f32.mrb[0].mxu0
    %1991 = vdwg.mxu0
    %v1992 = vadd.f32 %v1784, %v1907
    %v1993 = vxor.u32 %v1992, 2147483648
    %v1994 = vmul.f32 %v1993, 1.442695
    %v1995 = vpow.pop %v1994
    %v1996 = vadd.f32 %v1995, 1.0
    %v1997 = vrcp.pop %v1996
    %v1998 = vmul.f32 1.0, %v1997
    %v1999 = vadd.f32 %v1824, %v1947
    %v2000 = vxor.u32 %v1999, 2147483648
    %v2001 = vmul.f32 %v2000, 1.442695
    %v2002 = vpow.pop %v2001
    %v2003 = vadd.f32 %v2002, 1.0
    %v2004 = vrcp.pop %v2003
    %v2005 = vmul.f32 1.0, %v2004
    %v2006 = vmul.f32 %v1998, %v1987
    %v2007 = vadd.f32 %v1864, %v2006
    %v2008 = vtanh.pop %v2007
    %v2009 = vsub.f32 1.0, %v2005
    %v2010 = vmul.f32 %v2009, %v2008
    %v2011 = vmul.f32 %v2005, %v1594
    %v2012 = vadd.f32 %v2010, %v2011
    %v2013 = vmax.f32 %v1595, %v2012
    %v2014 = vadd.f32 %v1596, %v2012
    %2015 = vmatprep.subr.bf16.mxu0 0
    %2016 = vmatpush1.bf16.msra.mxu0 %v194
    %2017 = vmatprep.subr.bf16.mxu0 0
    %2018 = vmatpush1.bf16.msra.mxu0 %v195
    %2019 = vmatprep.subr.bf16.mxu0 0
    %2020 = vmatpush1.bf16.msra.mxu0 0
    %2021 = vmatprep.subr.bf16.mxu0 0
    %2022 = vmatpush1.bf16.msra.mxu0 0
    %2023 = vmatprep.subr.bf16.mxu0 0
    %2024 = vmatpush1.bf16.msra.mxu0 0
    %2025 = vmatprep.subr.bf16.mxu0 0
    %2026 = vmatpush1.bf16.msra.mxu0 0
    %2027 = vmatprep.subr.bf16.mxu0 0
    %2028 = vmatpush1.bf16.msra.mxu0 0
    %2029 = vmatprep.subr.bf16.mxu0 0
    %2030 = vmatpush1.bf16.msra.mxu0 0
    %2031 = vmatprep.subr.bf16.mxu0 0
    %2032 = vmatpush1.bf16.msra.mxu0 0
    %2033 = vmatprep.subr.bf16.mxu0 0
    %2034 = vmatpush1.bf16.msra.mxu0 0
    %2035 = vmatprep.subr.bf16.mxu0 0
    %2036 = vmatpush1.bf16.msra.mxu0 0
    %2037 = vmatprep.subr.bf16.mxu0 0
    %2038 = vmatpush1.bf16.msra.mxu0 0
    %2039 = vmatprep.subr.bf16.mxu0 0
    %2040 = vmatpush1.bf16.msra.mxu0 0
    %2041 = vmatprep.subr.bf16.mxu0 0
    %2042 = vmatpush1.bf16.msra.mxu0 0
    %2043 = vmatprep.subr.bf16.mxu0 0
    %2044 = vmatpush1.bf16.msra.mxu0 0
    %2045 = vmatprep.subr.bf16.mxu0 0
    %2046 = vmatpush1.bf16.msra.mxu0 0
    %2047 = vmatprep.mubr.bf16.mxu0 0
    %2048 = vmatmul.mubr.bf16.gmra.mrb[0].mxu0 %v1747
    %v2049 = vpop.f32.mrb[0].mxu0
    %v2050 = vadd.f32 %v184, %v2049
    %v2051 = vpop.f32.mrb[0].mxu0
    %v2052 = vpop.f32.mrb[0].mxu0
    %v2053 = vpop.f32.mrb[0].mxu0
    %2054 = vdwg.mxu0
    %2055 = vmatprep.subr.bf16.mxu0 0
    %2056 = vmatpush1.bf16.msra.mxu0 %v256
    %2057 = vmatprep.subr.bf16.mxu0 0
    %2058 = vmatpush1.bf16.msra.mxu0 %v257
    %2059 = vmatprep.subr.bf16.mxu0 0
    %2060 = vmatpush1.bf16.msra.mxu0 0
    %2061 = vmatprep.subr.bf16.mxu0 0
    %2062 = vmatpush1.bf16.msra.mxu0 0
    %2063 = vmatprep.subr.bf16.mxu0 0
    %2064 = vmatpush1.bf16.msra.mxu0 0
    %2065 = vmatprep.subr.bf16.mxu0 0
    %2066 = vmatpush1.bf16.msra.mxu0 0
    %2067 = vmatprep.subr.bf16.mxu0 0
    %2068 = vmatpush1.bf16.msra.mxu0 0
    %2069 = vmatprep.subr.bf16.mxu0 0
    %2070 = vmatpush1.bf16.msra.mxu0 0
    %2071 = vmatprep.subr.bf16.mxu0 0
    %2072 = vmatpush1.bf16.msra.mxu0 0
    %2073 = vmatprep.subr.bf16.mxu0 0
    %2074 = vmatpush1.bf16.msra.mxu0 0
    %2075 = vmatprep.subr.bf16.mxu0 0
    %2076 = vmatpush1.bf16.msra.mxu0 0
    %2077 = vmatprep.subr.bf16.mxu0 0
    %2078 = vmatpush1.bf16.msra.mxu0 0
    %2079 = vmatprep.subr.bf16.mxu0 0
    %2080 = vmatpush1.bf16.msra.mxu0 0
    %2081 = vmatprep.subr.bf16.mxu0 0
    %2082 = vmatpush1.bf16.msra.mxu0 0
    %2083 = vmatprep.subr.bf16.mxu0 0
    %2084 = vmatpush1.bf16.msra.mxu0 0
    %2085 = vmatprep.subr.bf16.mxu0 0
    %2086 = vmatpush1.bf16.msra.mxu0 0
    %2087 = vmatprep.mubr.bf16.mxu0 0
    %2088 = vmatmul.mubr.bf16.gmra.mrb[0].mxu0 %v1747
    %v2089 = vpop.f32.mrb[0].mxu0
    %v2090 = vadd.f32 %v246, %v2089
    %v2091 = vpop.f32.mrb[0].mxu0
    %v2092 = vpop.f32.mrb[0].mxu0
    %v2093 = vpop.f32.mrb[0].mxu0
    %2094 = vdwg.mxu0
    %2095 = vmatprep.subr.bf16.mxu0 0
    %2096 = vmatpush1.bf16.msra.mxu0 %v314
    %2097 = vmatprep.subr.bf16.mxu0 0
    %2098 = vmatpush1.bf16.msra.mxu0 %v315
    %2099 = vmatprep.subr.bf16.mxu0 0
    %2100 = vmatpush1.bf16.msra.mxu0 0
    %2101 = vmatprep.subr.bf16.mxu0 0
    %2102 = vmatpush1.bf16.msra.mxu0 0
    %2103 = vmatprep.subr.bf16.mxu0 0
    %2104 = vmatpush1.bf16.msra.mxu0 0
    %2105 = vmatprep.subr.bf16.mxu0 0
    %2106 = vmatpush1.bf16.msra.mxu0 0
    %2107 = vmatprep.subr.bf16.mxu0 0
    %2108 = vmatpush1.bf16.msra.mxu0 0
    %2109 = vmatprep.subr.bf16.mxu0 0
    %2110 = vmatpush1.bf16.msra.mxu0 0
    %2111 = vmatprep.subr.bf16.mxu0 0
    %2112 = vmatpush1.bf16.msra.mxu0 0
    %2113 = vmatprep.subr.bf16.mxu0 0
    %2114 = vmatpush1.bf16.msra.mxu0 0
    %2115 = vmatprep.subr.bf16.mxu0 0
    %2116 = vmatpush1.bf16.msra.mxu0 0
    %2117 = vmatprep.subr.bf16.mxu0 0
    %2118 = vmatpush1.bf16.msra.mxu0 0
    %2119 = vmatprep.subr.bf16.mxu0 0
    %2120 = vmatpush1.bf16.msra.mxu0 0
    %2121 = vmatprep.subr.bf16.mxu0 0
    %2122 = vmatpush1.bf16.msra.mxu0 0
    %2123 = vmatprep.subr.bf16.mxu0 0
    %2124 = vmatpush1.bf16.msra.mxu0 0
    %2125 = vmatprep.subr.bf16.mxu0 0
    %2126 = vmatpush1.bf16.msra.mxu0 0
    %2127 = vmatprep.mubr.bf16.mxu0 0
    %2128 = vmatmul.mubr.bf16.gmra.mrb[0].mxu0 %v1747
    %v2129 = vpop.f32.mrb[0].mxu0
    %v2130 = vadd.f32 %v304, %v2129
    %v2131 = vpop.f32.mrb[0].mxu0
    %v2132 = vpop.f32.mrb[0].mxu0
    %v2133 = vpop.f32.mrb[0].mxu0
    %2134 = vdwg.mxu0
    %s2135 = scalar_lea.vmem [#allocation7], 32
    %v2136 = vld [vmem:[%s2135] sm:$0xff]
    %v2137 = vadd.f32 %v2136, %v2050
    %v2138 = vxor.u32 %v2137, 2147483648
    %v2139 = vmul.f32 %v2138, 1.442695
    %v2140 = vpow.pop %v2139
    %v2141 = vadd.f32 %v2140, 1.0
    %v2142 = vrcp.pop %v2141
    %v2143 = vmul.f32 1.0, %v2142
    %s2144 = scalar_lea.vmem [#allocation9], 32
    %v2145 = vld [vmem:[%s2144] sm:$0xff]
    %v2146 = vadd.f32 %v2145, %v2090
    %v2147 = vxor.u32 %v2146, 2147483648
    %v2148 = vmul.f32 %v2147, 1.442695
    %v2149 = vpow.pop %v2148
    %v2150 = vadd.f32 %v2149, 1.0
    %v2151 = vrcp.pop %v2150
    %v2152 = vmul.f32 1.0, %v2151
    %s2153 = scalar_lea.vmem [#allocation11], 32
    %v2154 = vld [vmem:[%s2153] sm:$0xff]
    %v2155 = vmul.f32 %v2143, %v2130
    %v2156 = vadd.f32 %v2154, %v2155
    %v2157 = vtanh.pop %v2156
    %v2158 = vsub.f32 1.0, %v2152
    %v2159 = vmul.f32 %v2158, %v2157
    %v2160 = vmul.f32 %v2152, %v1743
    %v2161 = vadd.f32 %v2159, %v2160
    %v2162 = vpack.c.bf16 %v2161, %v2161
    %v2163 = vpack.c.bf16 %v2012, %v2012
    %v2165 = vsel %vm198, %v2162, 0
    %2167 = vmatprep.subr.bf16.mxu0 0
    %2168 = vmatpush1.bf16.msra.mxu0 %v398
    %2169 = vmatprep.subr.bf16.mxu0 0
    %2170 = vmatpush1.bf16.msra.mxu0 %v399
    %2171 = vmatprep.subr.bf16.mxu0 0
    %2172 = vmatpush1.bf16.msra.mxu0 0
    %2173 = vmatprep.subr.bf16.mxu0 0
    %2174 = vmatpush1.bf16.msra.mxu0 0
    %2175 = vmatprep.subr.bf16.mxu0 0
    %2176 = vmatpush1.bf16.msra.mxu0 0
    %2177 = vmatprep.subr.bf16.mxu0 0
    %2178 = vmatpush1.bf16.msra.mxu0 0
    %2179 = vmatprep.subr.bf16.mxu0 0
    %2180 = vmatpush1.bf16.msra.mxu0 0
    %2181 = vmatprep.subr.bf16.mxu0 0
    %2182 = vmatpush1.bf16.msra.mxu0 0
    %2183 = vmatprep.subr.bf16.mxu0 0
    %2184 = vmatpush1.bf16.msra.mxu0 0
    %2185 = vmatprep.subr.bf16.mxu0 0
    %2186 = vmatpush1.bf16.msra.mxu0 0
    %2187 = vmatprep.subr.bf16.mxu0 0
    %2188 = vmatpush1.bf16.msra.mxu0 0
    %2189 = vmatprep.subr.bf16.mxu0 0
    %2190 = vmatpush1.bf16.msra.mxu0 0
    %2191 = vmatprep.subr.bf16.mxu0 0
    %2192 = vmatpush1.bf16.msra.mxu0 0
    %2193 = vmatprep.subr.bf16.mxu0 0
    %2194 = vmatpush1.bf16.msra.mxu0 0
    %2195 = vmatprep.subr.bf16.mxu0 0
    %2196 = vmatpush1.bf16.msra.mxu0 0
    %2197 = vmatprep.subr.bf16.mxu0 0
    %2198 = vmatpush1.bf16.msra.mxu0 0
    %2199 = vmatprep.mubr.bf16.mxu0 0
    %2200 = vmatmul.mubr.bf16.gmra.mrb[0].mxu0 %v2165
    %v2201 = vpop.f32.mrb[0].mxu0
    %v2202 = vadd.f32 %v388, %v2201
    %v2203 = vpop.f32.mrb[0].mxu0
    %v2204 = vpop.f32.mrb[0].mxu0
    %v2205 = vpop.f32.mrb[0].mxu0
    %2206 = vdwg.mxu0
    %2207 = vmatprep.subr.bf16.mxu0 0
    %2208 = vmatpush1.bf16.msra.mxu0 %v459
    %2209 = vmatprep.subr.bf16.mxu0 0
    %2210 = vmatpush1.bf16.msra.mxu0 %v460
    %2211 = vmatprep.subr.bf16.mxu0 0
    %2212 = vmatpush1.bf16.msra.mxu0 0
    %2213 = vmatprep.subr.bf16.mxu0 0
    %2214 = vmatpush1.bf16.msra.mxu0 0
    %2215 = vmatprep.subr.bf16.mxu0 0
    %2216 = vmatpush1.bf16.msra.mxu0 0
    %2217 = vmatprep.subr.bf16.mxu0 0
    %2218 = vmatpush1.bf16.msra.mxu0 0
    %2219 = vmatprep.subr.bf16.mxu0 0
    %2220 = vmatpush1.bf16.msra.mxu0 0
    %2221 = vmatprep.subr.bf16.mxu0 0
    %2222 = vmatpush1.bf16.msra.mxu0 0
    %2223 = vmatprep.subr.bf16.mxu0 0
    %2224 = vmatpush1.bf16.msra.mxu0 0
    %2225 = vmatprep.subr.bf16.mxu0 0
    %2226 = vmatpush1.bf16.msra.mxu0 0
    %2227 = vmatprep.subr.bf16.mxu0 0
    %2228 = vmatpush1.bf16.msra.mxu0 0
    %2229 = vmatprep.subr.bf16.mxu0 0
    %2230 = vmatpush1.bf16.msra.mxu0 0
    %2231 = vmatprep.subr.bf16.mxu0 0
    %2232 = vmatpush1.bf16.msra.mxu0 0
    %2233 = vmatprep.subr.bf16.mxu0 0
    %2234 = vmatpush1.bf16.msra.mxu0 0
    %2235 = vmatprep.subr.bf16.mxu0 0
    %2236 = vmatpush1.bf16.msra.mxu0 0
    %2237 = vmatprep.subr.bf16.mxu0 0
    %2238 = vmatpush1.bf16.msra.mxu0 0
    %2239 = vmatprep.mubr.bf16.mxu0 0
    %2240 = vmatmul.mubr.bf16.gmra.mrb[0].mxu0 %v2165
    %v2241 = vpop.f32.mrb[0].mxu0
    %v2242 = vadd.f32 %v449, %v2241
    %v2243 = vpop.f32.mrb[0].mxu0
    %v2244 = vpop.f32.mrb[0].mxu0
    %v2245 = vpop.f32.mrb[0].mxu0
    %2246 = vdwg.mxu0
    %2247 = vmatprep.subr.bf16.mxu0 0
    %2248 = vmatpush1.bf16.msra.mxu0 %v517
    %2249 = vmatprep.subr.bf16.mxu0 0
    %2250 = vmatpush1.bf16.msra.mxu0 %v518
    %2251 = vmatprep.subr.bf16.mxu0 0
    %2252 = vmatpush1.bf16.msra.mxu0 0
    %2253 = vmatprep.subr.bf16.mxu0 0
    %2254 = vmatpush1.bf16.msra.mxu0 0
    %2255 = vmatprep.subr.bf16.mxu0 0
    %2256 = vmatpush1.bf16.msra.mxu0 0
    %2257 = vmatprep.subr.bf16.mxu0 0
    %2258 = vmatpush1.bf16.msra.mxu0 0
    %2259 = vmatprep.subr.bf16.mxu0 0
    %2260 = vmatpush1.bf16.msra.mxu0 0
    %2261 = vmatprep.subr.bf16.mxu0 0
    %2262 = vmatpush1.bf16.msra.mxu0 0
    %2263 = vmatprep.subr.bf16.mxu0 0
    %2264 = vmatpush1.bf16.msra.mxu0 0
    %2265 = vmatprep.subr.bf16.mxu0 0
    %2266 = vmatpush1.bf16.msra.mxu0 0
    %2267 = vmatprep.subr.bf16.mxu0 0
    %2268 = vmatpush1.bf16.msra.mxu0 0
    %2269 = vmatprep.subr.bf16.mxu0 0
    %2270 = vmatpush1.bf16.msra.mxu0 0
    %2271 = vmatprep.subr.bf16.mxu0 0
    %2272 = vmatpush1.bf16.msra.mxu0 0
    %2273 = vmatprep.subr.bf16.mxu0 0
    %2274 = vmatpush1.bf16.msra.mxu0 0
    %2275 = vmatprep.subr.bf16.mxu0 0
    %2276 = vmatpush1.bf16.msra.mxu0 0
    %2277 = vmatprep.subr.bf16.mxu0 0
    %2278 = vmatpush1.bf16.msra.mxu0 0
    %2279 = vmatprep.mubr.bf16.mxu0 0
    %2280 = vmatmul.mubr.bf16.gmra.mrb[0].mxu0 %v2165
    %v2281 = vpop.f32.mrb[0].mxu0
    %v2282 = vadd.f32 %v507, %v2281
    %v2283 = vpop.f32.mrb[0].mxu0
    %v2284 = vpop.f32.mrb[0].mxu0
    %v2285 = vpop.f32.mrb[0].mxu0
    %2286 = vdwg.mxu0
    %v2288 = vsel %vm198, %v2163, 0
    %2290 = vmatprep.subr.bf16.mxu0 0
    %2291 = vmatpush1.bf16.msra.mxu0 %v575
    %2292 = vmatprep.subr.bf16.mxu0 0
    %2293 = vmatpush1.bf16.msra.mxu0 %v576
    %2294 = vmatprep.subr.bf16.mxu0 0
    %2295 = vmatpush1.bf16.msra.mxu0 0
    %2296 = vmatprep.subr.bf16.mxu0 0
    %2297 = vmatpush1.bf16.msra.mxu0 0
    %2298 = vmatprep.subr.bf16.mxu0 0
    %2299 = vmatpush1.bf16.msra.mxu0 0
    %2300 = vmatprep.subr.bf16.mxu0 0
    %2301 = vmatpush1.bf16.msra.mxu0 0
    %2302 = vmatprep.subr.bf16.mxu0 0
    %2303 = vmatpush1.bf16.msra.mxu0 0
    %2304 = vmatprep.subr.bf16.mxu0 0
    %2305 = vmatpush1.bf16.msra.mxu0 0
    %2306 = vmatprep.subr.bf16.mxu0 0
    %2307 = vmatpush1.bf16.msra.mxu0 0
    %2308 = vmatprep.subr.bf16.mxu0 0
    %2309 = vmatpush1.bf16.msra.mxu0 0
    %2310 = vmatprep.subr.bf16.mxu0 0
    %2311 = vmatpush1.bf16.msra.mxu0 0
    %2312 = vmatprep.subr.bf16.mxu0 0
    %2313 = vmatpush1.bf16.msra.mxu0 0
    %2314 = vmatprep.subr.bf16.mxu0 0
    %2315 = vmatpush1.bf16.msra.mxu0 0
    %2316 = vmatprep.subr.bf16.mxu0 0
    %2317 = vmatpush1.bf16.msra.mxu0 0
    %2318 = vmatprep.subr.bf16.mxu0 0
    %2319 = vmatpush1.bf16.msra.mxu0 0
    %2320 = vmatprep.subr.bf16.mxu0 0
    %2321 = vmatpush1.bf16.msra.mxu0 0
    %2322 = vmatprep.mubr.bf16.mxu0 0
    %2323 = vmatmul.mubr.bf16.gmra.mrb[0].mxu0 %v2288
    %v2324 = vpop.f32.mrb[0].mxu0
    %v2325 = vadd.f32 %v565, %v2324
    %v2326 = vpop.f32.mrb[0].mxu0
    %v2327 = vpop.f32.mrb[0].mxu0
    %v2328 = vpop.f32.mrb[0].mxu0
    %2329 = vdwg.mxu0
    %2330 = vmatprep.subr.bf16.mxu0 0
    %2331 = vmatpush1.bf16.msra.mxu0 %v636
    %2332 = vmatprep.subr.bf16.mxu0 0
    %2333 = vmatpush1.bf16.msra.mxu0 %v637
    %2334 = vmatprep.subr.bf16.mxu0 0
    %2335 = vmatpush1.bf16.msra.mxu0 0
    %2336 = vmatprep.subr.bf16.mxu0 0
    %2337 = vmatpush1.bf16.msra.mxu0 0
    %2338 = vmatprep.subr.bf16.mxu0 0
    %2339 = vmatpush1.bf16.msra.mxu0 0
    %2340 = vmatprep.subr.bf16.mxu0 0
    %2341 = vmatpush1.bf16.msra.mxu0 0
    %2342 = vmatprep.subr.bf16.mxu0 0
    %2343 = vmatpush1.bf16.msra.mxu0 0
    %2344 = vmatprep.subr.bf16.mxu0 0
    %2345 = vmatpush1.bf16.msra.mxu0 0
    %2346 = vmatprep.subr.bf16.mxu0 0
    %2347 = vmatpush1.bf16.msra.mxu0 0
    %2348 = vmatprep.subr.bf16.mxu0 0
    %2349 = vmatpush1.bf16.msra.mxu0 0
    %2350 = vmatprep.subr.bf16.mxu0 0
    %2351 = vmatpush1.bf16.msra.mxu0 0
    %2352 = vmatprep.subr.bf16.mxu0 0
    %2353 = vmatpush1.bf16.msra.mxu0 0
    %2354 = vmatprep.subr.bf16.mxu0 0
    %2355 = vmatpush1.bf16.msra.mxu0 0
    %2356 = vmatprep.subr.bf16.mxu0 0
    %2357 = vmatpush1.bf16.msra.mxu0 0
    %2358 = vmatprep.subr.bf16.mxu0 0
    %2359 = vmatpush1.bf16.msra.mxu0 0
    %2360 = vmatprep.subr.bf16.mxu0 0
    %2361 = vmatpush1.bf16.msra.mxu0 0
    %2362 = vmatprep.mubr.bf16.mxu0 0
    %2363 = vmatmul.mubr.bf16.gmra.mrb[0].mxu0 %v2288
    %v2364 = vpop.f32.mrb[0].mxu0
    %v2365 = vadd.f32 %v626, %v2364
    %v2366 = vpop.f32.mrb[0].mxu0
    %v2367 = vpop.f32.mrb[0].mxu0
    %v2368 = vpop.f32.mrb[0].mxu0
    %2369 = vdwg.mxu0
    %2370 = vmatprep.subr.bf16.mxu0 0
    %2371 = vmatpush1.bf16.msra.mxu0 %v694
    %2372 = vmatprep.subr.bf16.mxu0 0
    %2373 = vmatpush1.bf16.msra.mxu0 %v695
    %2374 = vmatprep.subr.bf16.mxu0 0
    %2375 = vmatpush1.bf16.msra.mxu0 0
    %2376 = vmatprep.subr.bf16.mxu0 0
    %2377 = vmatpush1.bf16.msra.mxu0 0
    %2378 = vmatprep.subr.bf16.mxu0 0
    %2379 = vmatpush1.bf16.msra.mxu0 0
    %2380 = vmatprep.subr.bf16.mxu0 0
    %2381 = vmatpush1.bf16.msra.mxu0 0
    %2382 = vmatprep.subr.bf16.mxu0 0
    %2383 = vmatpush1.bf16.msra.mxu0 0
    %2384 = vmatprep.subr.bf16.mxu0 0
    %2385 = vmatpush1.bf16.msra.mxu0 0
    %2386 = vmatprep.subr.bf16.mxu0 0
    %2387 = vmatpush1.bf16.msra.mxu0 0
    %2388 = vmatprep.subr.bf16.mxu0 0
    %2389 = vmatpush1.bf16.msra.mxu0 0
    %2390 = vmatprep.subr.bf16.mxu0 0
    %2391 = vmatpush1.bf16.msra.mxu0 0
    %2392 = vmatprep.subr.bf16.mxu0 0
    %2393 = vmatpush1.bf16.msra.mxu0 0
    %2394 = vmatprep.subr.bf16.mxu0 0
    %2395 = vmatpush1.bf16.msra.mxu0 0
    %2396 = vmatprep.subr.bf16.mxu0 0
    %2397 = vmatpush1.bf16.msra.mxu0 0
    %2398 = vmatprep.subr.bf16.mxu0 0
    %2399 = vmatpush1.bf16.msra.mxu0 0
    %2400 = vmatprep.subr.bf16.mxu0 0
    %2401 = vmatpush1.bf16.msra.mxu0 0
    %2402 = vmatprep.mubr.bf16.mxu0 0
    %2403 = vmatmul.mubr.bf16.gmra.mrb[0].mxu0 %v2288
    %v2404 = vpop.f32.mrb[0].mxu0
    %v2405 = vadd.f32 %v684, %v2404
    %v2406 = vpop.f32.mrb[0].mxu0
    %v2407 = vpop.f32.mrb[0].mxu0
    %v2408 = vpop.f32.mrb[0].mxu0
    %2409 = vdwg.mxu0
    %v2410 = vadd.f32 %v2202, %v2325
    %v2411 = vxor.u32 %v2410, 2147483648
    %v2412 = vmul.f32 %v2411, 1.442695
    %v2413 = vpow.pop %v2412
    %v2414 = vadd.f32 %v2413, 1.0
    %v2415 = vrcp.pop %v2414
    %v2416 = vmul.f32 1.0, %v2415
    %v2417 = vadd.f32 %v2242, %v2365
    %v2418 = vxor.u32 %v2417, 2147483648
    %v2419 = vmul.f32 %v2418, 1.442695
    %v2420 = vpow.pop %v2419
    %v2421 = vadd.f32 %v2420, 1.0
    %v2422 = vrcp.pop %v2421
    %v2423 = vmul.f32 1.0, %v2422
    %v2424 = vmul.f32 %v2416, %v2405
    %v2425 = vadd.f32 %v2282, %v2424
    %v2426 = vtanh.pop %v2425
    %v2427 = vsub.f32 1.0, %v2423
    %v2428 = vmul.f32 %v2427, %v2426
    %v2429 = vmul.f32 %v2423, %v2012
    %v2430 = vadd.f32 %v2428, %v2429
    %v2431 = vmax.f32 %v2013, %v2430
    %v2432 = vadd.f32 %v2014, %v2430
    %2433 = vmatprep.subr.bf16.mxu0 0
    %2434 = vmatpush1.bf16.msra.mxu0 %v194
    %2435 = vmatprep.subr.bf16.mxu0 0
    %2436 = vmatpush1.bf16.msra.mxu0 %v195
    %2437 = vmatprep.subr.bf16.mxu0 0
    %2438 = vmatpush1.bf16.msra.mxu0 0
    %2439 = vmatprep.subr.bf16.mxu0 0
    %2440 = vmatpush1.bf16.msra.mxu0 0
    %2441 = vmatprep.subr.bf16.mxu0 0
    %2442 = vmatpush1.bf16.msra.mxu0 0
    %2443 = vmatprep.subr.bf16.mxu0 0
    %2444 = vmatpush1.bf16.msra.mxu0 0
    %2445 = vmatprep.subr.bf16.mxu0 0
    %2446 = vmatpush1.bf16.msra.mxu0 0
    %2447 = vmatprep.subr.bf16.mxu0 0
    %2448 = vmatpush1.bf16.msra.mxu0 0
    %2449 = vmatprep.subr.bf16.mxu0 0
    %2450 = vmatpush1.bf16.msra.mxu0 0
    %2451 = vmatprep.subr.bf16.mxu0 0
    %2452 = vmatpush1.bf16.msra.mxu0 0
    %2453 = vmatprep.subr.bf16.mxu0 0
    %2454 = vmatpush1.bf16.msra.mxu0 0
    %2455 = vmatprep.subr.bf16.mxu0 0
    %2456 = vmatpush1.bf16.msra.mxu0 0
    %2457 = vmatprep.subr.bf16.mxu0 0
    %2458 = vmatpush1.bf16.msra.mxu0 0
    %2459 = vmatprep.subr.bf16.mxu0 0
    %2460 = vmatpush1.bf16.msra.mxu0 0
    %2461 = vmatprep.subr.bf16.mxu0 0
    %2462 = vmatpush1.bf16.msra.mxu0 0
    %2463 = vmatprep.subr.bf16.mxu0 0
    %2464 = vmatpush1.bf16.msra.mxu0 0
    %2465 = vmatprep.mubr.bf16.mxu0 0
    %2466 = vmatmul.mubr.bf16.gmra.mrb[0].mxu0 %v2165
    %v2467 = vpop.f32.mrb[0].mxu0
    %v2468 = vadd.f32 %v184, %v2467
    %v2469 = vpop.f32.mrb[0].mxu0
    %v2470 = vpop.f32.mrb[0].mxu0
    %v2471 = vpop.f32.mrb[0].mxu0
    %2472 = vdwg.mxu0
    %2473 = vmatprep.subr.bf16.mxu0 0
    %2474 = vmatpush1.bf16.msra.mxu0 %v256
    %2475 = vmatprep.subr.bf16.mxu0 0
    %2476 = vmatpush1.bf16.msra.mxu0 %v257
    %2477 = vmatprep.subr.bf16.mxu0 0
    %2478 = vmatpush1.bf16.msra.mxu0 0
    %2479 = vmatprep.subr.bf16.mxu0 0
    %2480 = vmatpush1.bf16.msra.mxu0 0
    %2481 = vmatprep.subr.bf16.mxu0 0
    %2482 = vmatpush1.bf16.msra.mxu0 0
    %2483 = vmatprep.subr.bf16.mxu0 0
    %2484 = vmatpush1.bf16.msra.mxu0 0
    %2485 = vmatprep.subr.bf16.mxu0 0
    %2486 = vmatpush1.bf16.msra.mxu0 0
    %2487 = vmatprep.subr.bf16.mxu0 0
    %2488 = vmatpush1.bf16.msra.mxu0 0
    %2489 = vmatprep.subr.bf16.mxu0 0
    %2490 = vmatpush1.bf16.msra.mxu0 0
    %2491 = vmatprep.subr.bf16.mxu0 0
    %2492 = vmatpush1.bf16.msra.mxu0 0
    %2493 = vmatprep.subr.bf16.mxu0 0
    %2494 = vmatpush1.bf16.msra.mxu0 0
    %2495 = vmatprep.subr.bf16.mxu0 0
    %2496 = vmatpush1.bf16.msra.mxu0 0
    %2497 = vmatprep.subr.bf16.mxu0 0
    %2498 = vmatpush1.bf16.msra.mxu0 0
    %2499 = vmatprep.subr.bf16.mxu0 0
    %2500 = vmatpush1.bf16.msra.mxu0 0
    %2501 = vmatprep.subr.bf16.mxu0 0
    %2502 = vmatpush1.bf16.msra.mxu0 0
    %2503 = vmatprep.subr.bf16.mxu0 0
    %2504 = vmatpush1.bf16.msra.mxu0 0
    %2505 = vmatprep.mubr.bf16.mxu0 0
    %2506 = vmatmul.mubr.bf16.gmra.mrb[0].mxu0 %v2165
    %v2507 = vpop.f32.mrb[0].mxu0
    %v2508 = vadd.f32 %v246, %v2507
    %v2509 = vpop.f32.mrb[0].mxu0
    %v2510 = vpop.f32.mrb[0].mxu0
    %v2511 = vpop.f32.mrb[0].mxu0
    %2512 = vdwg.mxu0
    %2513 = vmatprep.subr.bf16.mxu0 0
    %2514 = vmatpush1.bf16.msra.mxu0 %v314
    %2515 = vmatprep.subr.bf16.mxu0 0
    %2516 = vmatpush1.bf16.msra.mxu0 %v315
    %2517 = vmatprep.subr.bf16.mxu0 0
    %2518 = vmatpush1.bf16.msra.mxu0 0
    %2519 = vmatprep.subr.bf16.mxu0 0
    %2520 = vmatpush1.bf16.msra.mxu0 0
    %2521 = vmatprep.subr.bf16.mxu0 0
    %2522 = vmatpush1.bf16.msra.mxu0 0
    %2523 = vmatprep.subr.bf16.mxu0 0
    %2524 = vmatpush1.bf16.msra.mxu0 0
    %2525 = vmatprep.subr.bf16.mxu0 0
    %2526 = vmatpush1.bf16.msra.mxu0 0
    %2527 = vmatprep.subr.bf16.mxu0 0
    %2528 = vmatpush1.bf16.msra.mxu0 0
    %2529 = vmatprep.subr.bf16.mxu0 0
    %2530 = vmatpush1.bf16.msra.mxu0 0
    %2531 = vmatprep.subr.bf16.mxu0 0
    %2532 = vmatpush1.bf16.msra.mxu0 0
    %2533 = vmatprep.subr.bf16.mxu0 0
    %2534 = vmatpush1.bf16.msra.mxu0 0
    %2535 = vmatprep.subr.bf16.mxu0 0
    %2536 = vmatpush1.bf16.msra.mxu0 0
    %2537 = vmatprep.subr.bf16.mxu0 0
    %2538 = vmatpush1.bf16.msra.mxu0 0
    %2539 = vmatprep.subr.bf16.mxu0 0
    %2540 = vmatpush1.bf16.msra.mxu0 0
    %2541 = vmatprep.subr.bf16.mxu0 0
    %2542 = vmatpush1.bf16.msra.mxu0 0
    %2543 = vmatprep.subr.bf16.mxu0 0
    %2544 = vmatpush1.bf16.msra.mxu0 0
    %2545 = vmatprep.mubr.bf16.mxu0 0
    %2546 = vmatmul.mubr.bf16.gmra.mrb[0].mxu0 %v2165
    %v2547 = vpop.f32.mrb[0].mxu0
    %v2548 = vadd.f32 %v304, %v2547
    %v2549 = vpop.f32.mrb[0].mxu0
    %v2550 = vpop.f32.mrb[0].mxu0
    %v2551 = vpop.f32.mrb[0].mxu0
    %2552 = vdwg.mxu0
    %s2553 = scalar_lea.vmem [#allocation7], 40
    %v2554 = vld [vmem:[%s2553] sm:$0xff]
    %v2555 = vadd.f32 %v2554, %v2468
    %v2556 = vxor.u32 %v2555, 2147483648
    %v2557 = vmul.f32 %v2556, 1.442695
    %v2558 = vpow.pop %v2557
    %v2559 = vadd.f32 %v2558, 1.0
    %v2560 = vrcp.pop %v2559
    %v2561 = vmul.f32 1.0, %v2560
    %s2562 = scalar_lea.vmem [#allocation9], 40
    %v2563 = vld [vmem:[%s2562] sm:$0xff]
    %v2564 = vadd.f32 %v2563, %v2508
    %v2565 = vxor.u32 %v2564, 2147483648
    %v2566 = vmul.f32 %v2565, 1.442695
    %v2567 = vpow.pop %v2566
    %v2568 = vadd.f32 %v2567, 1.0
    %v2569 = vrcp.pop %v2568
    %v2570 = vmul.f32 1.0, %v2569
    %s2571 = scalar_lea.vmem [#allocation11], 40
    %v2572 = vld [vmem:[%s2571] sm:$0xff]
    %v2573 = vmul.f32 %v2561, %v2548
    %v2574 = vadd.f32 %v2572, %v2573
    %v2575 = vtanh.pop %v2574
    %v2576 = vsub.f32 1.0, %v2570
    %v2577 = vmul.f32 %v2576, %v2575
    %v2578 = vmul.f32 %v2570, %v2161
    %v2579 = vadd.f32 %v2577, %v2578
    %v2580 = vpack.c.bf16 %v2579, %v2579
    %v2581 = vpack.c.bf16 %v2430, %v2430
    %v2583 = vsel %vm198, %v2580, 0
    %2585 = vmatprep.subr.bf16.mxu0 0
    %2586 = vmatpush1.bf16.msra.mxu0 %v398
    %2587 = vmatprep.subr.bf16.mxu0 0
    %2588 = vmatpush1.bf16.msra.mxu0 %v399
    %2589 = vmatprep.subr.bf16.mxu0 0
    %2590 = vmatpush1.bf16.msra.mxu0 0
    %2591 = vmatprep.subr.bf16.mxu0 0
    %2592 = vmatpush1.bf16.msra.mxu0 0
    %2593 = vmatprep.subr.bf16.mxu0 0
    %2594 = vmatpush1.bf16.msra.mxu0 0
    %2595 = vmatprep.subr.bf16.mxu0 0
    %2596 = vmatpush1.bf16.msra.mxu0 0
    %2597 = vmatprep.subr.bf16.mxu0 0
    %2598 = vmatpush1.bf16.msra.mxu0 0
    %2599 = vmatprep.subr.bf16.mxu0 0
    %2600 = vmatpush1.bf16.msra.mxu0 0
    %2601 = vmatprep.subr.bf16.mxu0 0
    %2602 = vmatpush1.bf16.msra.mxu0 0
    %2603 = vmatprep.subr.bf16.mxu0 0
    %2604 = vmatpush1.bf16.msra.mxu0 0
    %2605 = vmatprep.subr.bf16.mxu0 0
    %2606 = vmatpush1.bf16.msra.mxu0 0
    %2607 = vmatprep.subr.bf16.mxu0 0
    %2608 = vmatpush1.bf16.msra.mxu0 0
    %2609 = vmatprep.subr.bf16.mxu0 0
    %2610 = vmatpush1.bf16.msra.mxu0 0
    %2611 = vmatprep.subr.bf16.mxu0 0
    %2612 = vmatpush1.bf16.msra.mxu0 0
    %2613 = vmatprep.subr.bf16.mxu0 0
    %2614 = vmatpush1.bf16.msra.mxu0 0
    %2615 = vmatprep.subr.bf16.mxu0 0
    %2616 = vmatpush1.bf16.msra.mxu0 0
    %2617 = vmatprep.mubr.bf16.mxu0 0
    %2618 = vmatmul.mubr.bf16.gmra.mrb[0].mxu0 %v2583
    %v2619 = vpop.f32.mrb[0].mxu0
    %v2620 = vadd.f32 %v388, %v2619
    %v2621 = vpop.f32.mrb[0].mxu0
    %v2622 = vpop.f32.mrb[0].mxu0
    %v2623 = vpop.f32.mrb[0].mxu0
    %2624 = vdwg.mxu0
    %2625 = vmatprep.subr.bf16.mxu0 0
    %2626 = vmatpush1.bf16.msra.mxu0 %v459
    %2627 = vmatprep.subr.bf16.mxu0 0
    %2628 = vmatpush1.bf16.msra.mxu0 %v460
    %2629 = vmatprep.subr.bf16.mxu0 0
    %2630 = vmatpush1.bf16.msra.mxu0 0
    %2631 = vmatprep.subr.bf16.mxu0 0
    %2632 = vmatpush1.bf16.msra.mxu0 0
    %2633 = vmatprep.subr.bf16.mxu0 0
    %2634 = vmatpush1.bf16.msra.mxu0 0
    %2635 = vmatprep.subr.bf16.mxu0 0
    %2636 = vmatpush1.bf16.msra.mxu0 0
    %2637 = vmatprep.subr.bf16.mxu0 0
    %2638 = vmatpush1.bf16.msra.mxu0 0
    %2639 = vmatprep.subr.bf16.mxu0 0
    %2640 = vmatpush1.bf16.msra.mxu0 0
    %2641 = vmatprep.subr.bf16.mxu0 0
    %2642 = vmatpush1.bf16.msra.mxu0 0
    %2643 = vmatprep.subr.bf16.mxu0 0
    %2644 = vmatpush1.bf16.msra.mxu0 0
    %2645 = vmatprep.subr.bf16.mxu0 0
    %2646 = vmatpush1.bf16.msra.mxu0 0
    %2647 = vmatprep.subr.bf16.mxu0 0
    %2648 = vmatpush1.bf16.msra.mxu0 0
    %2649 = vmatprep.subr.bf16.mxu0 0
    %2650 = vmatpush1.bf16.msra.mxu0 0
    %2651 = vmatprep.subr.bf16.mxu0 0
    %2652 = vmatpush1.bf16.msra.mxu0 0
    %2653 = vmatprep.subr.bf16.mxu0 0
    %2654 = vmatpush1.bf16.msra.mxu0 0
    %2655 = vmatprep.subr.bf16.mxu0 0
    %2656 = vmatpush1.bf16.msra.mxu0 0
    %2657 = vmatprep.mubr.bf16.mxu0 0
    %2658 = vmatmul.mubr.bf16.gmra.mrb[0].mxu0 %v2583
    %v2659 = vpop.f32.mrb[0].mxu0
    %v2660 = vadd.f32 %v449, %v2659
    %v2661 = vpop.f32.mrb[0].mxu0
    %v2662 = vpop.f32.mrb[0].mxu0
    %v2663 = vpop.f32.mrb[0].mxu0
    %2664 = vdwg.mxu0
    %2665 = vmatprep.subr.bf16.mxu0 0
    %2666 = vmatpush1.bf16.msra.mxu0 %v517
    %2667 = vmatprep.subr.bf16.mxu0 0
    %2668 = vmatpush1.bf16.msra.mxu0 %v518
    %2669 = vmatprep.subr.bf16.mxu0 0
    %2670 = vmatpush1.bf16.msra.mxu0 0
    %2671 = vmatprep.subr.bf16.mxu0 0
    %2672 = vmatpush1.bf16.msra.mxu0 0
    %2673 = vmatprep.subr.bf16.mxu0 0
    %2674 = vmatpush1.bf16.msra.mxu0 0
    %2675 = vmatprep.subr.bf16.mxu0 0
    %2676 = vmatpush1.bf16.msra.mxu0 0
    %2677 = vmatprep.subr.bf16.mxu0 0
    %2678 = vmatpush1.bf16.msra.mxu0 0
    %2679 = vmatprep.subr.bf16.mxu0 0
    %2680 = vmatpush1.bf16.msra.mxu0 0
    %2681 = vmatprep.subr.bf16.mxu0 0
    %2682 = vmatpush1.bf16.msra.mxu0 0
    %2683 = vmatprep.subr.bf16.mxu0 0
    %2684 = vmatpush1.bf16.msra.mxu0 0
    %2685 = vmatprep.subr.bf16.mxu0 0
    %2686 = vmatpush1.bf16.msra.mxu0 0
    %2687 = vmatprep.subr.bf16.mxu0 0
    %2688 = vmatpush1.bf16.msra.mxu0 0
    %2689 = vmatprep.subr.bf16.mxu0 0
    %2690 = vmatpush1.bf16.msra.mxu0 0
    %2691 = vmatprep.subr.bf16.mxu0 0
    %2692 = vmatpush1.bf16.msra.mxu0 0
    %2693 = vmatprep.subr.bf16.mxu0 0
    %2694 = vmatpush1.bf16.msra.mxu0 0
    %2695 = vmatprep.subr.bf16.mxu0 0
    %2696 = vmatpush1.bf16.msra.mxu0 0
    %2697 = vmatprep.mubr.bf16.mxu0 0
    %2698 = vmatmul.mubr.bf16.gmra.mrb[0].mxu0 %v2583
    %v2699 = vpop.f32.mrb[0].mxu0
    %v2700 = vadd.f32 %v507, %v2699
    %v2701 = vpop.f32.mrb[0].mxu0
    %v2702 = vpop.f32.mrb[0].mxu0
    %v2703 = vpop.f32.mrb[0].mxu0
    %2704 = vdwg.mxu0
    %v2706 = vsel %vm198, %v2581, 0
    %2708 = vmatprep.subr.bf16.mxu0 0
    %2709 = vmatpush1.bf16.msra.mxu0 %v575
    %2710 = vmatprep.subr.bf16.mxu0 0
    %2711 = vmatpush1.bf16.msra.mxu0 %v576
    %2712 = vmatprep.subr.bf16.mxu0 0
    %2713 = vmatpush1.bf16.msra.mxu0 0
    %2714 = vmatprep.subr.bf16.mxu0 0
    %2715 = vmatpush1.bf16.msra.mxu0 0
    %2716 = vmatprep.subr.bf16.mxu0 0
    %2717 = vmatpush1.bf16.msra.mxu0 0
    %2718 = vmatprep.subr.bf16.mxu0 0
    %2719 = vmatpush1.bf16.msra.mxu0 0
    %2720 = vmatprep.subr.bf16.mxu0 0
    %2721 = vmatpush1.bf16.msra.mxu0 0
    %2722 = vmatprep.subr.bf16.mxu0 0
    %2723 = vmatpush1.bf16.msra.mxu0 0
    %2724 = vmatprep.subr.bf16.mxu0 0
    %2725 = vmatpush1.bf16.msra.mxu0 0
    %2726 = vmatprep.subr.bf16.mxu0 0
    %2727 = vmatpush1.bf16.msra.mxu0 0
    %2728 = vmatprep.subr.bf16.mxu0 0
    %2729 = vmatpush1.bf16.msra.mxu0 0
    %2730 = vmatprep.subr.bf16.mxu0 0
    %2731 = vmatpush1.bf16.msra.mxu0 0
    %2732 = vmatprep.subr.bf16.mxu0 0
    %2733 = vmatpush1.bf16.msra.mxu0 0
    %2734 = vmatprep.subr.bf16.mxu0 0
    %2735 = vmatpush1.bf16.msra.mxu0 0
    %2736 = vmatprep.subr.bf16.mxu0 0
    %2737 = vmatpush1.bf16.msra.mxu0 0
    %2738 = vmatprep.subr.bf16.mxu0 0
    %2739 = vmatpush1.bf16.msra.mxu0 0
    %2740 = vmatprep.mubr.bf16.mxu0 0
    %2741 = vmatmul.mubr.bf16.gmra.mrb[0].mxu0 %v2706
    %v2742 = vpop.f32.mrb[0].mxu0
    %v2743 = vadd.f32 %v565, %v2742
    %v2744 = vpop.f32.mrb[0].mxu0
    %v2745 = vpop.f32.mrb[0].mxu0
    %v2746 = vpop.f32.mrb[0].mxu0
    %2747 = vdwg.mxu0
    %2748 = vmatprep.subr.bf16.mxu0 0
    %2749 = vmatpush1.bf16.msra.mxu0 %v636
    %2750 = vmatprep.subr.bf16.mxu0 0
    %2751 = vmatpush1.bf16.msra.mxu0 %v637
    %2752 = vmatprep.subr.bf16.mxu0 0
    %2753 = vmatpush1.bf16.msra.mxu0 0
    %2754 = vmatprep.subr.bf16.mxu0 0
    %2755 = vmatpush1.bf16.msra.mxu0 0
    %2756 = vmatprep.subr.bf16.mxu0 0
    %2757 = vmatpush1.bf16.msra.mxu0 0
    %2758 = vmatprep.subr.bf16.mxu0 0
    %2759 = vmatpush1.bf16.msra.mxu0 0
    %2760 = vmatprep.subr.bf16.mxu0 0
    %2761 = vmatpush1.bf16.msra.mxu0 0
    %2762 = vmatprep.subr.bf16.mxu0 0
    %2763 = vmatpush1.bf16.msra.mxu0 0
    %2764 = vmatprep.subr.bf16.mxu0 0
    %2765 = vmatpush1.bf16.msra.mxu0 0
    %2766 = vmatprep.subr.bf16.mxu0 0
    %2767 = vmatpush1.bf16.msra.mxu0 0
    %2768 = vmatprep.subr.bf16.mxu0 0
    %2769 = vmatpush1.bf16.msra.mxu0 0
    %2770 = vmatprep.subr.bf16.mxu0 0
    %2771 = vmatpush1.bf16.msra.mxu0 0
    %2772 = vmatprep.subr.bf16.mxu0 0
    %2773 = vmatpush1.bf16.msra.mxu0 0
    %2774 = vmatprep.subr.bf16.mxu0 0
    %2775 = vmatpush1.bf16.msra.mxu0 0
    %2776 = vmatprep.subr.bf16.mxu0 0
    %2777 = vmatpush1.bf16.msra.mxu0 0
    %2778 = vmatprep.subr.bf16.mxu0 0
    %2779 = vmatpush1.bf16.msra.mxu0 0
    %2780 = vmatprep.mubr.bf16.mxu0 0
    %2781 = vmatmul.mubr.bf16.gmra.mrb[0].mxu0 %v2706
    %v2782 = vpop.f32.mrb[0].mxu0
    %v2783 = vadd.f32 %v626, %v2782
    %v2784 = vpop.f32.mrb[0].mxu0
    %v2785 = vpop.f32.mrb[0].mxu0
    %v2786 = vpop.f32.mrb[0].mxu0
    %2787 = vdwg.mxu0
    %2788 = vmatprep.subr.bf16.mxu0 0
    %2789 = vmatpush1.bf16.msra.mxu0 %v694
    %2790 = vmatprep.subr.bf16.mxu0 0
    %2791 = vmatpush1.bf16.msra.mxu0 %v695
    %2792 = vmatprep.subr.bf16.mxu0 0
    %2793 = vmatpush1.bf16.msra.mxu0 0
    %2794 = vmatprep.subr.bf16.mxu0 0
    %2795 = vmatpush1.bf16.msra.mxu0 0
    %2796 = vmatprep.subr.bf16.mxu0 0
    %2797 = vmatpush1.bf16.msra.mxu0 0
    %2798 = vmatprep.subr.bf16.mxu0 0
    %2799 = vmatpush1.bf16.msra.mxu0 0
    %2800 = vmatprep.subr.bf16.mxu0 0
    %2801 = vmatpush1.bf16.msra.mxu0 0
    %2802 = vmatprep.subr.bf16.mxu0 0
    %2803 = vmatpush1.bf16.msra.mxu0 0
    %2804 = vmatprep.subr.bf16.mxu0 0
    %2805 = vmatpush1.bf16.msra.mxu0 0
    %2806 = vmatprep.subr.bf16.mxu0 0
    %2807 = vmatpush1.bf16.msra.mxu0 0
    %2808 = vmatprep.subr.bf16.mxu0 0
    %2809 = vmatpush1.bf16.msra.mxu0 0
    %2810 = vmatprep.subr.bf16.mxu0 0
    %2811 = vmatpush1.bf16.msra.mxu0 0
    %2812 = vmatprep.subr.bf16.mxu0 0
    %2813 = vmatpush1.bf16.msra.mxu0 0
    %2814 = vmatprep.subr.bf16.mxu0 0
    %2815 = vmatpush1.bf16.msra.mxu0 0
    %2816 = vmatprep.subr.bf16.mxu0 0
    %2817 = vmatpush1.bf16.msra.mxu0 0
    %2818 = vmatprep.subr.bf16.mxu0 0
    %2819 = vmatpush1.bf16.msra.mxu0 0
    %2820 = vmatprep.mubr.bf16.mxu0 0
    %2821 = vmatmul.mubr.bf16.gmra.mrb[0].mxu0 %v2706
    %v2822 = vpop.f32.mrb[0].mxu0
    %v2823 = vadd.f32 %v684, %v2822
    %v2824 = vpop.f32.mrb[0].mxu0
    %v2825 = vpop.f32.mrb[0].mxu0
    %v2826 = vpop.f32.mrb[0].mxu0
    %2827 = vdwg.mxu0
    %v2828 = vadd.f32 %v2620, %v2743
    %v2829 = vxor.u32 %v2828, 2147483648
    %v2830 = vmul.f32 %v2829, 1.442695
    %v2831 = vpow.pop %v2830
    %v2832 = vadd.f32 %v2831, 1.0
    %v2833 = vrcp.pop %v2832
    %v2834 = vmul.f32 1.0, %v2833
    %v2835 = vadd.f32 %v2660, %v2783
    %v2836 = vxor.u32 %v2835, 2147483648
    %v2837 = vmul.f32 %v2836, 1.442695
    %v2838 = vpow.pop %v2837
    %v2839 = vadd.f32 %v2838, 1.0
    %v2840 = vrcp.pop %v2839
    %v2841 = vmul.f32 1.0, %v2840
    %v2842 = vmul.f32 %v2834, %v2823
    %v2843 = vadd.f32 %v2700, %v2842
    %v2844 = vtanh.pop %v2843
    %v2845 = vsub.f32 1.0, %v2841
    %v2846 = vmul.f32 %v2845, %v2844
    %v2847 = vmul.f32 %v2841, %v2430
    %v2848 = vadd.f32 %v2846, %v2847
    %v2849 = vmax.f32 %v2431, %v2848
    %v2850 = vadd.f32 %v2432, %v2848
    %2851 = vmatprep.subr.bf16.mxu0 0
    %2852 = vmatpush1.bf16.msra.mxu0 %v194
    %2853 = vmatprep.subr.bf16.mxu0 0
    %2854 = vmatpush1.bf16.msra.mxu0 %v195
    %2855 = vmatprep.subr.bf16.mxu0 0
    %2856 = vmatpush1.bf16.msra.mxu0 0
    %2857 = vmatprep.subr.bf16.mxu0 0
    %2858 = vmatpush1.bf16.msra.mxu0 0
    %2859 = vmatprep.subr.bf16.mxu0 0
    %2860 = vmatpush1.bf16.msra.mxu0 0
    %2861 = vmatprep.subr.bf16.mxu0 0
    %2862 = vmatpush1.bf16.msra.mxu0 0
    %2863 = vmatprep.subr.bf16.mxu0 0
    %2864 = vmatpush1.bf16.msra.mxu0 0
    %2865 = vmatprep.subr.bf16.mxu0 0
    %2866 = vmatpush1.bf16.msra.mxu0 0
    %2867 = vmatprep.subr.bf16.mxu0 0
    %2868 = vmatpush1.bf16.msra.mxu0 0
    %2869 = vmatprep.subr.bf16.mxu0 0
    %2870 = vmatpush1.bf16.msra.mxu0 0
    %2871 = vmatprep.subr.bf16.mxu0 0
    %2872 = vmatpush1.bf16.msra.mxu0 0
    %2873 = vmatprep.subr.bf16.mxu0 0
    %2874 = vmatpush1.bf16.msra.mxu0 0
    %2875 = vmatprep.subr.bf16.mxu0 0
    %2876 = vmatpush1.bf16.msra.mxu0 0
    %2877 = vmatprep.subr.bf16.mxu0 0
    %2878 = vmatpush1.bf16.msra.mxu0 0
    %2879 = vmatprep.subr.bf16.mxu0 0
    %2880 = vmatpush1.bf16.msra.mxu0 0
    %2881 = vmatprep.subr.bf16.mxu0 0
    %2882 = vmatpush1.bf16.msra.mxu0 0
    %2883 = vmatprep.mubr.bf16.mxu0 0
    %2884 = vmatmul.mubr.bf16.gmra.mrb[0].mxu0 %v2583
    %v2885 = vpop.f32.mrb[0].mxu0
    %v2886 = vadd.f32 %v184, %v2885
    %v2887 = vpop.f32.mrb[0].mxu0
    %v2888 = vpop.f32.mrb[0].mxu0
    %v2889 = vpop.f32.mrb[0].mxu0
    %2890 = vdwg.mxu0
    %2891 = vmatprep.subr.bf16.mxu0 0
    %2892 = vmatpush1.bf16.msra.mxu0 %v256
    %2893 = vmatprep.subr.bf16.mxu0 0
    %2894 = vmatpush1.bf16.msra.mxu0 %v257
    %2895 = vmatprep.subr.bf16.mxu0 0
    %2896 = vmatpush1.bf16.msra.mxu0 0
    %2897 = vmatprep.subr.bf16.mxu0 0
    %2898 = vmatpush1.bf16.msra.mxu0 0
    %2899 = vmatprep.subr.bf16.mxu0 0
    %2900 = vmatpush1.bf16.msra.mxu0 0
    %2901 = vmatprep.subr.bf16.mxu0 0
    %2902 = vmatpush1.bf16.msra.mxu0 0
    %2903 = vmatprep.subr.bf16.mxu0 0
    %2904 = vmatpush1.bf16.msra.mxu0 0
    %2905 = vmatprep.subr.bf16.mxu0 0
    %2906 = vmatpush1.bf16.msra.mxu0 0
    %2907 = vmatprep.subr.bf16.mxu0 0
    %2908 = vmatpush1.bf16.msra.mxu0 0
    %2909 = vmatprep.subr.bf16.mxu0 0
    %2910 = vmatpush1.bf16.msra.mxu0 0
    %2911 = vmatprep.subr.bf16.mxu0 0
    %2912 = vmatpush1.bf16.msra.mxu0 0
    %2913 = vmatprep.subr.bf16.mxu0 0
    %2914 = vmatpush1.bf16.msra.mxu0 0
    %2915 = vmatprep.subr.bf16.mxu0 0
    %2916 = vmatpush1.bf16.msra.mxu0 0
    %2917 = vmatprep.subr.bf16.mxu0 0
    %2918 = vmatpush1.bf16.msra.mxu0 0
    %2919 = vmatprep.subr.bf16.mxu0 0
    %2920 = vmatpush1.bf16.msra.mxu0 0
    %2921 = vmatprep.subr.bf16.mxu0 0
    %2922 = vmatpush1.bf16.msra.mxu0 0
    %2923 = vmatprep.mubr.bf16.mxu0 0
    %2924 = vmatmul.mubr.bf16.gmra.mrb[0].mxu0 %v2583
    %v2925 = vpop.f32.mrb[0].mxu0
    %v2926 = vadd.f32 %v246, %v2925
    %v2927 = vpop.f32.mrb[0].mxu0
    %v2928 = vpop.f32.mrb[0].mxu0
    %v2929 = vpop.f32.mrb[0].mxu0
    %2930 = vdwg.mxu0
    %2931 = vmatprep.subr.bf16.mxu0 0
    %2932 = vmatpush1.bf16.msra.mxu0 %v314
    %2933 = vmatprep.subr.bf16.mxu0 0
    %2934 = vmatpush1.bf16.msra.mxu0 %v315
    %2935 = vmatprep.subr.bf16.mxu0 0
    %2936 = vmatpush1.bf16.msra.mxu0 0
    %2937 = vmatprep.subr.bf16.mxu0 0
    %2938 = vmatpush1.bf16.msra.mxu0 0
    %2939 = vmatprep.subr.bf16.mxu0 0
    %2940 = vmatpush1.bf16.msra.mxu0 0
    %2941 = vmatprep.subr.bf16.mxu0 0
    %2942 = vmatpush1.bf16.msra.mxu0 0
    %2943 = vmatprep.subr.bf16.mxu0 0
    %2944 = vmatpush1.bf16.msra.mxu0 0
    %2945 = vmatprep.subr.bf16.mxu0 0
    %2946 = vmatpush1.bf16.msra.mxu0 0
    %2947 = vmatprep.subr.bf16.mxu0 0
    %2948 = vmatpush1.bf16.msra.mxu0 0
    %2949 = vmatprep.subr.bf16.mxu0 0
    %2950 = vmatpush1.bf16.msra.mxu0 0
    %2951 = vmatprep.subr.bf16.mxu0 0
    %2952 = vmatpush1.bf16.msra.mxu0 0
    %2953 = vmatprep.subr.bf16.mxu0 0
    %2954 = vmatpush1.bf16.msra.mxu0 0
    %2955 = vmatprep.subr.bf16.mxu0 0
    %2956 = vmatpush1.bf16.msra.mxu0 0
    %2957 = vmatprep.subr.bf16.mxu0 0
    %2958 = vmatpush1.bf16.msra.mxu0 0
    %2959 = vmatprep.subr.bf16.mxu0 0
    %2960 = vmatpush1.bf16.msra.mxu0 0
    %2961 = vmatprep.subr.bf16.mxu0 0
    %2962 = vmatpush1.bf16.msra.mxu0 0
    %2963 = vmatprep.mubr.bf16.mxu0 0
    %2964 = vmatmul.mubr.bf16.gmra.mrb[0].mxu0 %v2583
    %v2965 = vpop.f32.mrb[0].mxu0
    %v2966 = vadd.f32 %v304, %v2965
    %v2967 = vpop.f32.mrb[0].mxu0
    %v2968 = vpop.f32.mrb[0].mxu0
    %v2969 = vpop.f32.mrb[0].mxu0
    %2970 = vdwg.mxu0
    %s2971 = scalar_lea.vmem [#allocation7], 48
    %v2972 = vld [vmem:[%s2971] sm:$0xff]
    %v2973 = vadd.f32 %v2972, %v2886
    %v2974 = vxor.u32 %v2973, 2147483648
    %v2975 = vmul.f32 %v2974, 1.442695
    %v2976 = vpow.pop %v2975
    %v2977 = vadd.f32 %v2976, 1.0
    %v2978 = vrcp.pop %v2977
    %v2979 = vmul.f32 1.0, %v2978
    %s2980 = scalar_lea.vmem [#allocation9], 48
    %v2981 = vld [vmem:[%s2980] sm:$0xff]
    %v2982 = vadd.f32 %v2981, %v2926
    %v2983 = vxor.u32 %v2982, 2147483648
    %v2984 = vmul.f32 %v2983, 1.442695
    %v2985 = vpow.pop %v2984
    %v2986 = vadd.f32 %v2985, 1.0
    %v2987 = vrcp.pop %v2986
    %v2988 = vmul.f32 1.0, %v2987
    %s2989 = scalar_lea.vmem [#allocation11], 48
    %v2990 = vld [vmem:[%s2989] sm:$0xff]
    %v2991 = vmul.f32 %v2979, %v2966
    %v2992 = vadd.f32 %v2990, %v2991
    %v2993 = vtanh.pop %v2992
    %v2994 = vsub.f32 1.0, %v2988
    %v2995 = vmul.f32 %v2994, %v2993
    %v2996 = vmul.f32 %v2988, %v2579
    %v2997 = vadd.f32 %v2995, %v2996
    %v2998 = vpack.c.bf16 %v2997, %v2997
    %v2999 = vpack.c.bf16 %v2848, %v2848
    %v3001 = vsel %vm198, %v2998, 0
    %3003 = vmatprep.subr.bf16.mxu0 0
    %3004 = vmatpush1.bf16.msra.mxu0 %v398
    %3005 = vmatprep.subr.bf16.mxu0 0
    %3006 = vmatpush1.bf16.msra.mxu0 %v399
    %3007 = vmatprep.subr.bf16.mxu0 0
    %3008 = vmatpush1.bf16.msra.mxu0 0
    %3009 = vmatprep.subr.bf16.mxu0 0
    %3010 = vmatpush1.bf16.msra.mxu0 0
    %3011 = vmatprep.subr.bf16.mxu0 0
    %3012 = vmatpush1.bf16.msra.mxu0 0
    %3013 = vmatprep.subr.bf16.mxu0 0
    %3014 = vmatpush1.bf16.msra.mxu0 0
    %3015 = vmatprep.subr.bf16.mxu0 0
    %3016 = vmatpush1.bf16.msra.mxu0 0
    %3017 = vmatprep.subr.bf16.mxu0 0
    %3018 = vmatpush1.bf16.msra.mxu0 0
    %3019 = vmatprep.subr.bf16.mxu0 0
    %3020 = vmatpush1.bf16.msra.mxu0 0
    %3021 = vmatprep.subr.bf16.mxu0 0
    %3022 = vmatpush1.bf16.msra.mxu0 0
    %3023 = vmatprep.subr.bf16.mxu0 0
    %3024 = vmatpush1.bf16.msra.mxu0 0
    %3025 = vmatprep.subr.bf16.mxu0 0
    %3026 = vmatpush1.bf16.msra.mxu0 0
    %3027 = vmatprep.subr.bf16.mxu0 0
    %3028 = vmatpush1.bf16.msra.mxu0 0
    %3029 = vmatprep.subr.bf16.mxu0 0
    %3030 = vmatpush1.bf16.msra.mxu0 0
    %3031 = vmatprep.subr.bf16.mxu0 0
    %3032 = vmatpush1.bf16.msra.mxu0 0
    %3033 = vmatprep.subr.bf16.mxu0 0
    %3034 = vmatpush1.bf16.msra.mxu0 0
    %3035 = vmatprep.mubr.bf16.mxu0 0
    %3036 = vmatmul.mubr.bf16.gmra.mrb[0].mxu0 %v3001
    %v3037 = vpop.f32.mrb[0].mxu0
    %v3038 = vadd.f32 %v388, %v3037
    %v3039 = vpop.f32.mrb[0].mxu0
    %v3040 = vpop.f32.mrb[0].mxu0
    %v3041 = vpop.f32.mrb[0].mxu0
    %3042 = vdwg.mxu0
    %3043 = vmatprep.subr.bf16.mxu0 0
    %3044 = vmatpush1.bf16.msra.mxu0 %v459
    %3045 = vmatprep.subr.bf16.mxu0 0
    %3046 = vmatpush1.bf16.msra.mxu0 %v460
    %3047 = vmatprep.subr.bf16.mxu0 0
    %3048 = vmatpush1.bf16.msra.mxu0 0
    %3049 = vmatprep.subr.bf16.mxu0 0
    %3050 = vmatpush1.bf16.msra.mxu0 0
    %3051 = vmatprep.subr.bf16.mxu0 0
    %3052 = vmatpush1.bf16.msra.mxu0 0
    %3053 = vmatprep.subr.bf16.mxu0 0
    %3054 = vmatpush1.bf16.msra.mxu0 0
    %3055 = vmatprep.subr.bf16.mxu0 0
    %3056 = vmatpush1.bf16.msra.mxu0 0
    %3057 = vmatprep.subr.bf16.mxu0 0
    %3058 = vmatpush1.bf16.msra.mxu0 0
    %3059 = vmatprep.subr.bf16.mxu0 0
    %3060 = vmatpush1.bf16.msra.mxu0 0
    %3061 = vmatprep.subr.bf16.mxu0 0
    %3062 = vmatpush1.bf16.msra.mxu0 0
    %3063 = vmatprep.subr.bf16.mxu0 0
    %3064 = vmatpush1.bf16.msra.mxu0 0
    %3065 = vmatprep.subr.bf16.mxu0 0
    %3066 = vmatpush1.bf16.msra.mxu0 0
    %3067 = vmatprep.subr.bf16.mxu0 0
    %3068 = vmatpush1.bf16.msra.mxu0 0
    %3069 = vmatprep.subr.bf16.mxu0 0
    %3070 = vmatpush1.bf16.msra.mxu0 0
    %3071 = vmatprep.subr.bf16.mxu0 0
    %3072 = vmatpush1.bf16.msra.mxu0 0
    %3073 = vmatprep.subr.bf16.mxu0 0
    %3074 = vmatpush1.bf16.msra.mxu0 0
    %3075 = vmatprep.mubr.bf16.mxu0 0
    %3076 = vmatmul.mubr.bf16.gmra.mrb[0].mxu0 %v3001
    %v3077 = vpop.f32.mrb[0].mxu0
    %v3078 = vadd.f32 %v449, %v3077
    %v3079 = vpop.f32.mrb[0].mxu0
    %v3080 = vpop.f32.mrb[0].mxu0
    %v3081 = vpop.f32.mrb[0].mxu0
    %3082 = vdwg.mxu0
    %3083 = vmatprep.subr.bf16.mxu0 0
    %3084 = vmatpush1.bf16.msra.mxu0 %v517
    %3085 = vmatprep.subr.bf16.mxu0 0
    %3086 = vmatpush1.bf16.msra.mxu0 %v518
    %3087 = vmatprep.subr.bf16.mxu0 0
    %3088 = vmatpush1.bf16.msra.mxu0 0
    %3089 = vmatprep.subr.bf16.mxu0 0
    %3090 = vmatpush1.bf16.msra.mxu0 0
    %3091 = vmatprep.subr.bf16.mxu0 0
    %3092 = vmatpush1.bf16.msra.mxu0 0
    %3093 = vmatprep.subr.bf16.mxu0 0
    %3094 = vmatpush1.bf16.msra.mxu0 0
    %3095 = vmatprep.subr.bf16.mxu0 0
    %3096 = vmatpush1.bf16.msra.mxu0 0
    %3097 = vmatprep.subr.bf16.mxu0 0
    %3098 = vmatpush1.bf16.msra.mxu0 0
    %3099 = vmatprep.subr.bf16.mxu0 0
    %3100 = vmatpush1.bf16.msra.mxu0 0
    %3101 = vmatprep.subr.bf16.mxu0 0
    %3102 = vmatpush1.bf16.msra.mxu0 0
    %3103 = vmatprep.subr.bf16.mxu0 0
    %3104 = vmatpush1.bf16.msra.mxu0 0
    %3105 = vmatprep.subr.bf16.mxu0 0
    %3106 = vmatpush1.bf16.msra.mxu0 0
    %3107 = vmatprep.subr.bf16.mxu0 0
    %3108 = vmatpush1.bf16.msra.mxu0 0
    %3109 = vmatprep.subr.bf16.mxu0 0
    %3110 = vmatpush1.bf16.msra.mxu0 0
    %3111 = vmatprep.subr.bf16.mxu0 0
    %3112 = vmatpush1.bf16.msra.mxu0 0
    %3113 = vmatprep.subr.bf16.mxu0 0
    %3114 = vmatpush1.bf16.msra.mxu0 0
    %3115 = vmatprep.mubr.bf16.mxu0 0
    %3116 = vmatmul.mubr.bf16.gmra.mrb[0].mxu0 %v3001
    %v3117 = vpop.f32.mrb[0].mxu0
    %v3118 = vadd.f32 %v507, %v3117
    %v3119 = vpop.f32.mrb[0].mxu0
    %v3120 = vpop.f32.mrb[0].mxu0
    %v3121 = vpop.f32.mrb[0].mxu0
    %3122 = vdwg.mxu0
    %v3124 = vsel %vm198, %v2999, 0
    %3126 = vmatprep.subr.bf16.mxu0 0
    %3127 = vmatpush1.bf16.msra.mxu0 %v575
    %3128 = vmatprep.subr.bf16.mxu0 0
    %3129 = vmatpush1.bf16.msra.mxu0 %v576
    %3130 = vmatprep.subr.bf16.mxu0 0
    %3131 = vmatpush1.bf16.msra.mxu0 0
    %3132 = vmatprep.subr.bf16.mxu0 0
    %3133 = vmatpush1.bf16.msra.mxu0 0
    %3134 = vmatprep.subr.bf16.mxu0 0
    %3135 = vmatpush1.bf16.msra.mxu0 0
    %3136 = vmatprep.subr.bf16.mxu0 0
    %3137 = vmatpush1.bf16.msra.mxu0 0
    %3138 = vmatprep.subr.bf16.mxu0 0
    %3139 = vmatpush1.bf16.msra.mxu0 0
    %3140 = vmatprep.subr.bf16.mxu0 0
    %3141 = vmatpush1.bf16.msra.mxu0 0
    %3142 = vmatprep.subr.bf16.mxu0 0
    %3143 = vmatpush1.bf16.msra.mxu0 0
    %3144 = vmatprep.subr.bf16.mxu0 0
    %3145 = vmatpush1.bf16.msra.mxu0 0
    %3146 = vmatprep.subr.bf16.mxu0 0
    %3147 = vmatpush1.bf16.msra.mxu0 0
    %3148 = vmatprep.subr.bf16.mxu0 0
    %3149 = vmatpush1.bf16.msra.mxu0 0
    %3150 = vmatprep.subr.bf16.mxu0 0
    %3151 = vmatpush1.bf16.msra.mxu0 0
    %3152 = vmatprep.subr.bf16.mxu0 0
    %3153 = vmatpush1.bf16.msra.mxu0 0
    %3154 = vmatprep.subr.bf16.mxu0 0
    %3155 = vmatpush1.bf16.msra.mxu0 0
    %3156 = vmatprep.subr.bf16.mxu0 0
    %3157 = vmatpush1.bf16.msra.mxu0 0
    %3158 = vmatprep.mubr.bf16.mxu0 0
    %3159 = vmatmul.mubr.bf16.gmra.mrb[0].mxu0 %v3124
    %v3160 = vpop.f32.mrb[0].mxu0
    %v3161 = vadd.f32 %v565, %v3160
    %v3162 = vpop.f32.mrb[0].mxu0
    %v3163 = vpop.f32.mrb[0].mxu0
    %v3164 = vpop.f32.mrb[0].mxu0
    %3165 = vdwg.mxu0
    %3166 = vmatprep.subr.bf16.mxu0 0
    %3167 = vmatpush1.bf16.msra.mxu0 %v636
    %3168 = vmatprep.subr.bf16.mxu0 0
    %3169 = vmatpush1.bf16.msra.mxu0 %v637
    %3170 = vmatprep.subr.bf16.mxu0 0
    %3171 = vmatpush1.bf16.msra.mxu0 0
    %3172 = vmatprep.subr.bf16.mxu0 0
    %3173 = vmatpush1.bf16.msra.mxu0 0
    %3174 = vmatprep.subr.bf16.mxu0 0
    %3175 = vmatpush1.bf16.msra.mxu0 0
    %3176 = vmatprep.subr.bf16.mxu0 0
    %3177 = vmatpush1.bf16.msra.mxu0 0
    %3178 = vmatprep.subr.bf16.mxu0 0
    %3179 = vmatpush1.bf16.msra.mxu0 0
    %3180 = vmatprep.subr.bf16.mxu0 0
    %3181 = vmatpush1.bf16.msra.mxu0 0
    %3182 = vmatprep.subr.bf16.mxu0 0
    %3183 = vmatpush1.bf16.msra.mxu0 0
    %3184 = vmatprep.subr.bf16.mxu0 0
    %3185 = vmatpush1.bf16.msra.mxu0 0
    %3186 = vmatprep.subr.bf16.mxu0 0
    %3187 = vmatpush1.bf16.msra.mxu0 0
    %3188 = vmatprep.subr.bf16.mxu0 0
    %3189 = vmatpush1.bf16.msra.mxu0 0
    %3190 = vmatprep.subr.bf16.mxu0 0
    %3191 = vmatpush1.bf16.msra.mxu0 0
    %3192 = vmatprep.subr.bf16.mxu0 0
    %3193 = vmatpush1.bf16.msra.mxu0 0
    %3194 = vmatprep.subr.bf16.mxu0 0
    %3195 = vmatpush1.bf16.msra.mxu0 0
    %3196 = vmatprep.subr.bf16.mxu0 0
    %3197 = vmatpush1.bf16.msra.mxu0 0
    %3198 = vmatprep.mubr.bf16.mxu0 0
    %3199 = vmatmul.mubr.bf16.gmra.mrb[0].mxu0 %v3124
    %v3200 = vpop.f32.mrb[0].mxu0
    %v3201 = vadd.f32 %v626, %v3200
    %v3202 = vpop.f32.mrb[0].mxu0
    %v3203 = vpop.f32.mrb[0].mxu0
    %v3204 = vpop.f32.mrb[0].mxu0
    %3205 = vdwg.mxu0
    %3206 = vmatprep.subr.bf16.mxu0 0
    %3207 = vmatpush1.bf16.msra.mxu0 %v694
    %3208 = vmatprep.subr.bf16.mxu0 0
    %3209 = vmatpush1.bf16.msra.mxu0 %v695
    %3210 = vmatprep.subr.bf16.mxu0 0
    %3211 = vmatpush1.bf16.msra.mxu0 0
    %3212 = vmatprep.subr.bf16.mxu0 0
    %3213 = vmatpush1.bf16.msra.mxu0 0
    %3214 = vmatprep.subr.bf16.mxu0 0
    %3215 = vmatpush1.bf16.msra.mxu0 0
    %3216 = vmatprep.subr.bf16.mxu0 0
    %3217 = vmatpush1.bf16.msra.mxu0 0
    %3218 = vmatprep.subr.bf16.mxu0 0
    %3219 = vmatpush1.bf16.msra.mxu0 0
    %3220 = vmatprep.subr.bf16.mxu0 0
    %3221 = vmatpush1.bf16.msra.mxu0 0
    %3222 = vmatprep.subr.bf16.mxu0 0
    %3223 = vmatpush1.bf16.msra.mxu0 0
    %3224 = vmatprep.subr.bf16.mxu0 0
    %3225 = vmatpush1.bf16.msra.mxu0 0
    %3226 = vmatprep.subr.bf16.mxu0 0
    %3227 = vmatpush1.bf16.msra.mxu0 0
    %3228 = vmatprep.subr.bf16.mxu0 0
    %3229 = vmatpush1.bf16.msra.mxu0 0
    %3230 = vmatprep.subr.bf16.mxu0 0
    %3231 = vmatpush1.bf16.msra.mxu0 0
    %3232 = vmatprep.subr.bf16.mxu0 0
    %3233 = vmatpush1.bf16.msra.mxu0 0
    %3234 = vmatprep.subr.bf16.mxu0 0
    %3235 = vmatpush1.bf16.msra.mxu0 0
    %3236 = vmatprep.subr.bf16.mxu0 0
    %3237 = vmatpush1.bf16.msra.mxu0 0
    %3238 = vmatprep.mubr.bf16.mxu0 0
    %3239 = vmatmul.mubr.bf16.gmra.mrb[0].mxu0 %v3124
    %v3240 = vpop.f32.mrb[0].mxu0
    %v3241 = vadd.f32 %v684, %v3240
    %v3242 = vpop.f32.mrb[0].mxu0
    %v3243 = vpop.f32.mrb[0].mxu0
    %v3244 = vpop.f32.mrb[0].mxu0
    %3245 = vdwg.mxu0
    %v3246 = vadd.f32 %v3038, %v3161
    %v3247 = vxor.u32 %v3246, 2147483648
    %v3248 = vmul.f32 %v3247, 1.442695
    %v3249 = vpow.pop %v3248
    %v3250 = vadd.f32 %v3249, 1.0
    %v3251 = vrcp.pop %v3250
    %v3252 = vmul.f32 1.0, %v3251
    %v3253 = vadd.f32 %v3078, %v3201
    %v3254 = vxor.u32 %v3253, 2147483648
    %v3255 = vmul.f32 %v3254, 1.442695
    %v3256 = vpow.pop %v3255
    %v3257 = vadd.f32 %v3256, 1.0
    %v3258 = vrcp.pop %v3257
    %v3259 = vmul.f32 1.0, %v3258
    %v3260 = vmul.f32 %v3252, %v3241
    %v3261 = vadd.f32 %v3118, %v3260
    %v3262 = vtanh.pop %v3261
    %v3263 = vsub.f32 1.0, %v3259
    %v3264 = vmul.f32 %v3263, %v3262
    %v3265 = vmul.f32 %v3259, %v2848
    %v3266 = vadd.f32 %v3264, %v3265
    %v3267 = vmax.f32 %v2849, %v3266
    %v3268 = vadd.f32 %v2850, %v3266
    %3269 = vmatprep.subr.bf16.mxu0 0
    %3270 = vmatpush1.bf16.msra.mxu0 %v194
    %3271 = vmatprep.subr.bf16.mxu0 0
    %3272 = vmatpush1.bf16.msra.mxu0 %v195
    %3273 = vmatprep.subr.bf16.mxu0 0
    %3274 = vmatpush1.bf16.msra.mxu0 0
    %3275 = vmatprep.subr.bf16.mxu0 0
    %3276 = vmatpush1.bf16.msra.mxu0 0
    %3277 = vmatprep.subr.bf16.mxu0 0
    %3278 = vmatpush1.bf16.msra.mxu0 0
    %3279 = vmatprep.subr.bf16.mxu0 0
    %3280 = vmatpush1.bf16.msra.mxu0 0
    %3281 = vmatprep.subr.bf16.mxu0 0
    %3282 = vmatpush1.bf16.msra.mxu0 0
    %3283 = vmatprep.subr.bf16.mxu0 0
    %3284 = vmatpush1.bf16.msra.mxu0 0
    %3285 = vmatprep.subr.bf16.mxu0 0
    %3286 = vmatpush1.bf16.msra.mxu0 0
    %3287 = vmatprep.subr.bf16.mxu0 0
    %3288 = vmatpush1.bf16.msra.mxu0 0
    %3289 = vmatprep.subr.bf16.mxu0 0
    %3290 = vmatpush1.bf16.msra.mxu0 0
    %3291 = vmatprep.subr.bf16.mxu0 0
    %3292 = vmatpush1.bf16.msra.mxu0 0
    %3293 = vmatprep.subr.bf16.mxu0 0
    %3294 = vmatpush1.bf16.msra.mxu0 0
    %3295 = vmatprep.subr.bf16.mxu0 0
    %3296 = vmatpush1.bf16.msra.mxu0 0
    %3297 = vmatprep.subr.bf16.mxu0 0
    %3298 = vmatpush1.bf16.msra.mxu0 0
    %3299 = vmatprep.subr.bf16.mxu0 0
    %3300 = vmatpush1.bf16.msra.mxu0 0
    %3301 = vmatprep.mubr.bf16.mxu0 0
    %3302 = vmatmul.mubr.bf16.gmra.mrb[0].mxu0 %v3001
    %v3303 = vpop.f32.mrb[0].mxu0
    %v3304 = vadd.f32 %v184, %v3303
    %v3305 = vpop.f32.mrb[0].mxu0
    %v3306 = vpop.f32.mrb[0].mxu0
    %v3307 = vpop.f32.mrb[0].mxu0
    %3308 = vdwg.mxu0
    %3309 = vmatprep.subr.bf16.mxu0 0
    %3310 = vmatpush1.bf16.msra.mxu0 %v256
    %3311 = vmatprep.subr.bf16.mxu0 0
    %3312 = vmatpush1.bf16.msra.mxu0 %v257
    %3313 = vmatprep.subr.bf16.mxu0 0
    %3314 = vmatpush1.bf16.msra.mxu0 0
    %3315 = vmatprep.subr.bf16.mxu0 0
    %3316 = vmatpush1.bf16.msra.mxu0 0
    %3317 = vmatprep.subr.bf16.mxu0 0
    %3318 = vmatpush1.bf16.msra.mxu0 0
    %3319 = vmatprep.subr.bf16.mxu0 0
    %3320 = vmatpush1.bf16.msra.mxu0 0
    %3321 = vmatprep.subr.bf16.mxu0 0
    %3322 = vmatpush1.bf16.msra.mxu0 0
    %3323 = vmatprep.subr.bf16.mxu0 0
    %3324 = vmatpush1.bf16.msra.mxu0 0
    %3325 = vmatprep.subr.bf16.mxu0 0
    %3326 = vmatpush1.bf16.msra.mxu0 0
    %3327 = vmatprep.subr.bf16.mxu0 0
    %3328 = vmatpush1.bf16.msra.mxu0 0
    %3329 = vmatprep.subr.bf16.mxu0 0
    %3330 = vmatpush1.bf16.msra.mxu0 0
    %3331 = vmatprep.subr.bf16.mxu0 0
    %3332 = vmatpush1.bf16.msra.mxu0 0
    %3333 = vmatprep.subr.bf16.mxu0 0
    %3334 = vmatpush1.bf16.msra.mxu0 0
    %3335 = vmatprep.subr.bf16.mxu0 0
    %3336 = vmatpush1.bf16.msra.mxu0 0
    %3337 = vmatprep.subr.bf16.mxu0 0
    %3338 = vmatpush1.bf16.msra.mxu0 0
    %3339 = vmatprep.subr.bf16.mxu0 0
    %3340 = vmatpush1.bf16.msra.mxu0 0
    %3341 = vmatprep.mubr.bf16.mxu0 0
    %3342 = vmatmul.mubr.bf16.gmra.mrb[0].mxu0 %v3001
    %v3343 = vpop.f32.mrb[0].mxu0
    %v3344 = vadd.f32 %v246, %v3343
    %v3345 = vpop.f32.mrb[0].mxu0
    %v3346 = vpop.f32.mrb[0].mxu0
    %v3347 = vpop.f32.mrb[0].mxu0
    %3348 = vdwg.mxu0
    %3349 = vmatprep.subr.bf16.mxu0 0
    %3350 = vmatpush1.bf16.msra.mxu0 %v314
    %3351 = vmatprep.subr.bf16.mxu0 0
    %3352 = vmatpush1.bf16.msra.mxu0 %v315
    %3353 = vmatprep.subr.bf16.mxu0 0
    %3354 = vmatpush1.bf16.msra.mxu0 0
    %3355 = vmatprep.subr.bf16.mxu0 0
    %3356 = vmatpush1.bf16.msra.mxu0 0
    %3357 = vmatprep.subr.bf16.mxu0 0
    %3358 = vmatpush1.bf16.msra.mxu0 0
    %3359 = vmatprep.subr.bf16.mxu0 0
    %3360 = vmatpush1.bf16.msra.mxu0 0
    %3361 = vmatprep.subr.bf16.mxu0 0
    %3362 = vmatpush1.bf16.msra.mxu0 0
    %3363 = vmatprep.subr.bf16.mxu0 0
    %3364 = vmatpush1.bf16.msra.mxu0 0
    %3365 = vmatprep.subr.bf16.mxu0 0
    %3366 = vmatpush1.bf16.msra.mxu0 0
    %3367 = vmatprep.subr.bf16.mxu0 0
    %3368 = vmatpush1.bf16.msra.mxu0 0
    %3369 = vmatprep.subr.bf16.mxu0 0
    %3370 = vmatpush1.bf16.msra.mxu0 0
    %3371 = vmatprep.subr.bf16.mxu0 0
    %3372 = vmatpush1.bf16.msra.mxu0 0
    %3373 = vmatprep.subr.bf16.mxu0 0
    %3374 = vmatpush1.bf16.msra.mxu0 0
    %3375 = vmatprep.subr.bf16.mxu0 0
    %3376 = vmatpush1.bf16.msra.mxu0 0
    %3377 = vmatprep.subr.bf16.mxu0 0
    %3378 = vmatpush1.bf16.msra.mxu0 0
    %3379 = vmatprep.subr.bf16.mxu0 0
    %3380 = vmatpush1.bf16.msra.mxu0 0
    %3381 = vmatprep.mubr.bf16.mxu0 0
    %3382 = vmatmul.mubr.bf16.gmra.mrb[0].mxu0 %v3001
    %v3383 = vpop.f32.mrb[0].mxu0
    %v3384 = vadd.f32 %v304, %v3383
    %v3385 = vpop.f32.mrb[0].mxu0
    %v3386 = vpop.f32.mrb[0].mxu0
    %v3387 = vpop.f32.mrb[0].mxu0
    %3388 = vdwg.mxu0
    %s3389 = scalar_lea.vmem [#allocation7], 56
    %v3390 = vld [vmem:[%s3389] sm:$0xff]
    %v3391 = vadd.f32 %v3390, %v3304
    %v3392 = vxor.u32 %v3391, 2147483648
    %v3393 = vmul.f32 %v3392, 1.442695
    %v3394 = vpow.pop %v3393
    %v3395 = vadd.f32 %v3394, 1.0
    %v3396 = vrcp.pop %v3395
    %v3397 = vmul.f32 1.0, %v3396
    %s3398 = scalar_lea.vmem [#allocation9], 56
    %v3399 = vld [vmem:[%s3398] sm:$0xff]
    %v3400 = vadd.f32 %v3399, %v3344
    %v3401 = vxor.u32 %v3400, 2147483648
    %v3402 = vmul.f32 %v3401, 1.442695
    %v3403 = vpow.pop %v3402
    %v3404 = vadd.f32 %v3403, 1.0
    %v3405 = vrcp.pop %v3404
    %v3406 = vmul.f32 1.0, %v3405
    %s3407 = scalar_lea.vmem [#allocation11], 56
    %v3408 = vld [vmem:[%s3407] sm:$0xff]
    %v3409 = vmul.f32 %v3397, %v3384
    %v3410 = vadd.f32 %v3408, %v3409
    %v3411 = vtanh.pop %v3410
    %v3412 = vsub.f32 1.0, %v3406
    %v3413 = vmul.f32 %v3412, %v3411
    %v3414 = vmul.f32 %v3406, %v2997
    %v3415 = vadd.f32 %v3413, %v3414
    %v3416 = vpack.c.bf16 %v3415, %v3415
    %v3417 = vpack.c.bf16 %v3266, %v3266
    %v3419 = vsel %vm198, %v3416, 0
    %3421 = vmatprep.subr.bf16.mxu0 0
    %3422 = vmatpush1.bf16.msra.mxu0 %v398
    %3423 = vmatprep.subr.bf16.mxu0 0
    %3424 = vmatpush1.bf16.msra.mxu0 %v399
    %3425 = vmatprep.subr.bf16.mxu0 0
    %3426 = vmatpush1.bf16.msra.mxu0 0
    %3427 = vmatprep.subr.bf16.mxu0 0
    %3428 = vmatpush1.bf16.msra.mxu0 0
    %3429 = vmatprep.subr.bf16.mxu0 0
    %3430 = vmatpush1.bf16.msra.mxu0 0
    %3431 = vmatprep.subr.bf16.mxu0 0
    %3432 = vmatpush1.bf16.msra.mxu0 0
    %3433 = vmatprep.subr.bf16.mxu0 0
    %3434 = vmatpush1.bf16.msra.mxu0 0
    %3435 = vmatprep.subr.bf16.mxu0 0
    %3436 = vmatpush1.bf16.msra.mxu0 0
    %3437 = vmatprep.subr.bf16.mxu0 0
    %3438 = vmatpush1.bf16.msra.mxu0 0
    %3439 = vmatprep.subr.bf16.mxu0 0
    %3440 = vmatpush1.bf16.msra.mxu0 0
    %3441 = vmatprep.subr.bf16.mxu0 0
    %3442 = vmatpush1.bf16.msra.mxu0 0
    %3443 = vmatprep.subr.bf16.mxu0 0
    %3444 = vmatpush1.bf16.msra.mxu0 0
    %3445 = vmatprep.subr.bf16.mxu0 0
    %3446 = vmatpush1.bf16.msra.mxu0 0
    %3447 = vmatprep.subr.bf16.mxu0 0
    %3448 = vmatpush1.bf16.msra.mxu0 0
    %3449 = vmatprep.subr.bf16.mxu0 0
    %3450 = vmatpush1.bf16.msra.mxu0 0
    %3451 = vmatprep.subr.bf16.mxu0 0
    %3452 = vmatpush1.bf16.msra.mxu0 0
    %3453 = vmatprep.mubr.bf16.mxu0 0
    %3454 = vmatmul.mubr.bf16.gmra.mrb[0].mxu0 %v3419
    %v3455 = vpop.f32.mrb[0].mxu0
    %v3456 = vadd.f32 %v388, %v3455
    %v3457 = vpop.f32.mrb[0].mxu0
    %v3458 = vpop.f32.mrb[0].mxu0
    %v3459 = vpop.f32.mrb[0].mxu0
    %3460 = vdwg.mxu0
    %3461 = vmatprep.subr.bf16.mxu0 0
    %3462 = vmatpush1.bf16.msra.mxu0 %v459
    %3463 = vmatprep.subr.bf16.mxu0 0
    %3464 = vmatpush1.bf16.msra.mxu0 %v460
    %3465 = vmatprep.subr.bf16.mxu0 0
    %3466 = vmatpush1.bf16.msra.mxu0 0
    %3467 = vmatprep.subr.bf16.mxu0 0
    %3468 = vmatpush1.bf16.msra.mxu0 0
    %3469 = vmatprep.subr.bf16.mxu0 0
    %3470 = vmatpush1.bf16.msra.mxu0 0
    %3471 = vmatprep.subr.bf16.mxu0 0
    %3472 = vmatpush1.bf16.msra.mxu0 0
    %3473 = vmatprep.subr.bf16.mxu0 0
    %3474 = vmatpush1.bf16.msra.mxu0 0
    %3475 = vmatprep.subr.bf16.mxu0 0
    %3476 = vmatpush1.bf16.msra.mxu0 0
    %3477 = vmatprep.subr.bf16.mxu0 0
    %3478 = vmatpush1.bf16.msra.mxu0 0
    %3479 = vmatprep.subr.bf16.mxu0 0
    %3480 = vmatpush1.bf16.msra.mxu0 0
    %3481 = vmatprep.subr.bf16.mxu0 0
    %3482 = vmatpush1.bf16.msra.mxu0 0
    %3483 = vmatprep.subr.bf16.mxu0 0
    %3484 = vmatpush1.bf16.msra.mxu0 0
    %3485 = vmatprep.subr.bf16.mxu0 0
    %3486 = vmatpush1.bf16.msra.mxu0 0
    %3487 = vmatprep.subr.bf16.mxu0 0
    %3488 = vmatpush1.bf16.msra.mxu0 0
    %3489 = vmatprep.subr.bf16.mxu0 0
    %3490 = vmatpush1.bf16.msra.mxu0 0
    %3491 = vmatprep.subr.bf16.mxu0 0
    %3492 = vmatpush1.bf16.msra.mxu0 0
    %3493 = vmatprep.mubr.bf16.mxu0 0
    %3494 = vmatmul.mubr.bf16.gmra.mrb[0].mxu0 %v3419
    %v3495 = vpop.f32.mrb[0].mxu0
    %v3496 = vadd.f32 %v449, %v3495
    %v3497 = vpop.f32.mrb[0].mxu0
    %v3498 = vpop.f32.mrb[0].mxu0
    %v3499 = vpop.f32.mrb[0].mxu0
    %3500 = vdwg.mxu0
    %3501 = vmatprep.subr.bf16.mxu0 0
    %3502 = vmatpush1.bf16.msra.mxu0 %v517
    %3503 = vmatprep.subr.bf16.mxu0 0
    %3504 = vmatpush1.bf16.msra.mxu0 %v518
    %3505 = vmatprep.subr.bf16.mxu0 0
    %3506 = vmatpush1.bf16.msra.mxu0 0
    %3507 = vmatprep.subr.bf16.mxu0 0
    %3508 = vmatpush1.bf16.msra.mxu0 0
    %3509 = vmatprep.subr.bf16.mxu0 0
    %3510 = vmatpush1.bf16.msra.mxu0 0
    %3511 = vmatprep.subr.bf16.mxu0 0
    %3512 = vmatpush1.bf16.msra.mxu0 0
    %3513 = vmatprep.subr.bf16.mxu0 0
    %3514 = vmatpush1.bf16.msra.mxu0 0
    %3515 = vmatprep.subr.bf16.mxu0 0
    %3516 = vmatpush1.bf16.msra.mxu0 0
    %3517 = vmatprep.subr.bf16.mxu0 0
    %3518 = vmatpush1.bf16.msra.mxu0 0
    %3519 = vmatprep.subr.bf16.mxu0 0
    %3520 = vmatpush1.bf16.msra.mxu0 0
    %3521 = vmatprep.subr.bf16.mxu0 0
    %3522 = vmatpush1.bf16.msra.mxu0 0
    %3523 = vmatprep.subr.bf16.mxu0 0
    %3524 = vmatpush1.bf16.msra.mxu0 0
    %3525 = vmatprep.subr.bf16.mxu0 0
    %3526 = vmatpush1.bf16.msra.mxu0 0
    %3527 = vmatprep.subr.bf16.mxu0 0
    %3528 = vmatpush1.bf16.msra.mxu0 0
    %3529 = vmatprep.subr.bf16.mxu0 0
    %3530 = vmatpush1.bf16.msra.mxu0 0
    %3531 = vmatprep.subr.bf16.mxu0 0
    %3532 = vmatpush1.bf16.msra.mxu0 0
    %3533 = vmatprep.mubr.bf16.mxu0 0
    %3534 = vmatmul.mubr.bf16.gmra.mrb[0].mxu0 %v3419
    %v3535 = vpop.f32.mrb[0].mxu0
    %v3536 = vadd.f32 %v507, %v3535
    %v3537 = vpop.f32.mrb[0].mxu0
    %v3538 = vpop.f32.mrb[0].mxu0
    %v3539 = vpop.f32.mrb[0].mxu0
    %3540 = vdwg.mxu0
    %v3542 = vsel %vm198, %v3417, 0
    %3544 = vmatprep.subr.bf16.mxu0 0
    %3545 = vmatpush1.bf16.msra.mxu0 %v575
    %3546 = vmatprep.subr.bf16.mxu0 0
    %3547 = vmatpush1.bf16.msra.mxu0 %v576
    %3548 = vmatprep.subr.bf16.mxu0 0
    %3549 = vmatpush1.bf16.msra.mxu0 0
    %3550 = vmatprep.subr.bf16.mxu0 0
    %3551 = vmatpush1.bf16.msra.mxu0 0
    %3552 = vmatprep.subr.bf16.mxu0 0
    %3553 = vmatpush1.bf16.msra.mxu0 0
    %3554 = vmatprep.subr.bf16.mxu0 0
    %3555 = vmatpush1.bf16.msra.mxu0 0
    %3556 = vmatprep.subr.bf16.mxu0 0
    %3557 = vmatpush1.bf16.msra.mxu0 0
    %3558 = vmatprep.subr.bf16.mxu0 0
    %3559 = vmatpush1.bf16.msra.mxu0 0
    %3560 = vmatprep.subr.bf16.mxu0 0
    %3561 = vmatpush1.bf16.msra.mxu0 0
    %3562 = vmatprep.subr.bf16.mxu0 0
    %3563 = vmatpush1.bf16.msra.mxu0 0
    %3564 = vmatprep.subr.bf16.mxu0 0
    %3565 = vmatpush1.bf16.msra.mxu0 0
    %3566 = vmatprep.subr.bf16.mxu0 0
    %3567 = vmatpush1.bf16.msra.mxu0 0
    %3568 = vmatprep.subr.bf16.mxu0 0
    %3569 = vmatpush1.bf16.msra.mxu0 0
    %3570 = vmatprep.subr.bf16.mxu0 0
    %3571 = vmatpush1.bf16.msra.mxu0 0
    %3572 = vmatprep.subr.bf16.mxu0 0
    %3573 = vmatpush1.bf16.msra.mxu0 0
    %3574 = vmatprep.subr.bf16.mxu0 0
    %3575 = vmatpush1.bf16.msra.mxu0 0
    %3576 = vmatprep.mubr.bf16.mxu0 0
    %3577 = vmatmul.mubr.bf16.gmra.mrb[0].mxu0 %v3542
    %v3578 = vpop.f32.mrb[0].mxu0
    %v3579 = vadd.f32 %v565, %v3578
    %v3580 = vpop.f32.mrb[0].mxu0
    %v3581 = vpop.f32.mrb[0].mxu0
    %v3582 = vpop.f32.mrb[0].mxu0
    %3583 = vdwg.mxu0
    %3584 = vmatprep.subr.bf16.mxu0 0
    %3585 = vmatpush1.bf16.msra.mxu0 %v636
    %3586 = vmatprep.subr.bf16.mxu0 0
    %3587 = vmatpush1.bf16.msra.mxu0 %v637
    %3588 = vmatprep.subr.bf16.mxu0 0
    %3589 = vmatpush1.bf16.msra.mxu0 0
    %3590 = vmatprep.subr.bf16.mxu0 0
    %3591 = vmatpush1.bf16.msra.mxu0 0
    %3592 = vmatprep.subr.bf16.mxu0 0
    %3593 = vmatpush1.bf16.msra.mxu0 0
    %3594 = vmatprep.subr.bf16.mxu0 0
    %3595 = vmatpush1.bf16.msra.mxu0 0
    %3596 = vmatprep.subr.bf16.mxu0 0
    %3597 = vmatpush1.bf16.msra.mxu0 0
    %3598 = vmatprep.subr.bf16.mxu0 0
    %3599 = vmatpush1.bf16.msra.mxu0 0
    %3600 = vmatprep.subr.bf16.mxu0 0
    %3601 = vmatpush1.bf16.msra.mxu0 0
    %3602 = vmatprep.subr.bf16.mxu0 0
    %3603 = vmatpush1.bf16.msra.mxu0 0
    %3604 = vmatprep.subr.bf16.mxu0 0
    %3605 = vmatpush1.bf16.msra.mxu0 0
    %3606 = vmatprep.subr.bf16.mxu0 0
    %3607 = vmatpush1.bf16.msra.mxu0 0
    %3608 = vmatprep.subr.bf16.mxu0 0
    %3609 = vmatpush1.bf16.msra.mxu0 0
    %3610 = vmatprep.subr.bf16.mxu0 0
    %3611 = vmatpush1.bf16.msra.mxu0 0
    %3612 = vmatprep.subr.bf16.mxu0 0
    %3613 = vmatpush1.bf16.msra.mxu0 0
    %3614 = vmatprep.subr.bf16.mxu0 0
    %3615 = vmatpush1.bf16.msra.mxu0 0
    %3616 = vmatprep.mubr.bf16.mxu0 0
    %3617 = vmatmul.mubr.bf16.gmra.mrb[0].mxu0 %v3542
    %v3618 = vpop.f32.mrb[0].mxu0
    %v3619 = vadd.f32 %v626, %v3618
    %v3620 = vpop.f32.mrb[0].mxu0
    %v3621 = vpop.f32.mrb[0].mxu0
    %v3622 = vpop.f32.mrb[0].mxu0
    %3623 = vdwg.mxu0
    %3624 = vmatprep.subr.bf16.mxu0 0
    %3625 = vmatpush1.bf16.msra.mxu0 %v694
    %3626 = vmatprep.subr.bf16.mxu0 0
    %3627 = vmatpush1.bf16.msra.mxu0 %v695
    %3628 = vmatprep.subr.bf16.mxu0 0
    %3629 = vmatpush1.bf16.msra.mxu0 0
    %3630 = vmatprep.subr.bf16.mxu0 0
    %3631 = vmatpush1.bf16.msra.mxu0 0
    %3632 = vmatprep.subr.bf16.mxu0 0
    %3633 = vmatpush1.bf16.msra.mxu0 0
    %3634 = vmatprep.subr.bf16.mxu0 0
    %3635 = vmatpush1.bf16.msra.mxu0 0
    %3636 = vmatprep.subr.bf16.mxu0 0
    %3637 = vmatpush1.bf16.msra.mxu0 0
    %3638 = vmatprep.subr.bf16.mxu0 0
    %3639 = vmatpush1.bf16.msra.mxu0 0
    %3640 = vmatprep.subr.bf16.mxu0 0
    %3641 = vmatpush1.bf16.msra.mxu0 0
    %3642 = vmatprep.subr.bf16.mxu0 0
    %3643 = vmatpush1.bf16.msra.mxu0 0
    %3644 = vmatprep.subr.bf16.mxu0 0
    %3645 = vmatpush1.bf16.msra.mxu0 0
    %3646 = vmatprep.subr.bf16.mxu0 0
    %3647 = vmatpush1.bf16.msra.mxu0 0
    %3648 = vmatprep.subr.bf16.mxu0 0
    %3649 = vmatpush1.bf16.msra.mxu0 0
    %3650 = vmatprep.subr.bf16.mxu0 0
    %3651 = vmatpush1.bf16.msra.mxu0 0
    %3652 = vmatprep.subr.bf16.mxu0 0
    %3653 = vmatpush1.bf16.msra.mxu0 0
    %3654 = vmatprep.subr.bf16.mxu0 0
    %3655 = vmatpush1.bf16.msra.mxu0 0
    %3656 = vmatprep.mubr.bf16.mxu0 0
    %3657 = vmatmul.mubr.bf16.gmra.mrb[0].mxu0 %v3542
    %v3658 = vpop.f32.mrb[0].mxu0
    %v3659 = vadd.f32 %v684, %v3658
    %v3660 = vpop.f32.mrb[0].mxu0
    %v3661 = vpop.f32.mrb[0].mxu0
    %v3662 = vpop.f32.mrb[0].mxu0
    %3663 = vdwg.mxu0
    %v3664 = vadd.f32 %v3456, %v3579
    %v3665 = vxor.u32 %v3664, 2147483648
    %v3666 = vmul.f32 %v3665, 1.442695
    %v3667 = vpow.pop %v3666
    %v3668 = vadd.f32 %v3667, 1.0
    %v3669 = vrcp.pop %v3668
    %v3670 = vmul.f32 1.0, %v3669
    %v3671 = vadd.f32 %v3496, %v3619
    %v3672 = vxor.u32 %v3671, 2147483648
    %v3673 = vmul.f32 %v3672, 1.442695
    %v3674 = vpow.pop %v3673
    %v3675 = vadd.f32 %v3674, 1.0
    %v3676 = vrcp.pop %v3675
    %v3677 = vmul.f32 1.0, %v3676
    %v3678 = vmul.f32 %v3670, %v3659
    %v3679 = vadd.f32 %v3536, %v3678
    %v3680 = vtanh.pop %v3679
    %v3681 = vsub.f32 1.0, %v3677
    %v3682 = vmul.f32 %v3681, %v3680
    %v3683 = vmul.f32 %v3677, %v3266
    %v3684 = vadd.f32 %v3682, %v3683
    %v3685 = vmax.f32 %v3267, %v3684
    %v3686 = vadd.f32 %v3268, %v3684
    %3687 = vst.msk [vmem:[#allocation2] sm:$0xff] %vm198, %v3415
    %3688 = vst.msk [vmem:[#allocation3] sm:$0xff] %vm198, %v3684
    %3689 = vst.msk [vmem:[#allocation4] sm:$0xff] %vm198, %v3685
    %3690 = vst.msk [vmem:[#allocation5] sm:$0xff] %vm198, %v3686
    // Predicated region
    $region70: #{tpu_custom_call.1} parent=1 // pred_check
      %p3691 = pneg %p109
    $region71: #{tpu_custom_call.1} parent=1 // pred_check_branch
      %3693 = sbr.rel (%p3691) target = $region73
    $region72: #{tpu_custom_call.1} parent=1 // pred_region
      %v3694 = vmul.f32 %v3686, 0.125
      %v3695 = vpack.c.bf16 %v3685, %v3685
      %v3696 = vld [vmem:[%s9] sm:$0xf]
      %v3697 = vld [vmem:[%s9 + $0x4] sm:$0xf]
      %v3698 = vld [vmem:[%s9 + $0x8] sm:$0xf]
      %v3699 = vld [vmem:[%s9 + $0xc] sm:$0xf]
      %v3700 = vpack.c.bf16 %v3694, %v3694
      %s3701 = scalar_lea.vmem %s9, 16
      %v3702 = vld [vmem:[%s3701] sm:$0xf]
      %v3703 = vld [vmem:[%s3701 + $0x4] sm:$0xf]
      %v3704 = vld [vmem:[%s3701 + $0x8] sm:$0xf]
      %v3705 = vld [vmem:[%s3701 + $0xc] sm:$0xf]
      %v3710 = vunpack.c.l.b16 %v3702
      %v3711 = vunpack.c.l.b16 %v3703
      %v3712 = vunpack.c.l.b16 %v3704
      %v3713 = vunpack.c.l.b16 %v3705
      %v3714 = vpack.c.b16 %v3711, %v3710
      %v3715 = vpack.c.b16 %v3713, %v3712
      %v3719 = vsel %vm198, %v3700, 0
      %3721 = vmatprep.subr.bf16.mxu0 0
      %3722 = vmatpush1.bf16.msra.mxu0 %v3714
      %3723 = vmatprep.subr.bf16.mxu0 0
      %3724 = vmatpush1.bf16.msra.mxu0 %v3715
      %3725 = vmatprep.subr.bf16.mxu0 0
      %3726 = vmatpush1.bf16.msra.mxu0 0
      %3727 = vmatprep.subr.bf16.mxu0 0
      %3728 = vmatpush1.bf16.msra.mxu0 0
      %3729 = vmatprep.subr.bf16.mxu0 0
      %3730 = vmatpush1.bf16.msra.mxu0 0
      %3731 = vmatprep.subr.bf16.mxu0 0
      %3732 = vmatpush1.bf16.msra.mxu0 0
      %3733 = vmatprep.subr.bf16.mxu0 0
      %3734 = vmatpush1.bf16.msra.mxu0 0
      %3735 = vmatprep.subr.bf16.mxu0 0
      %3736 = vmatpush1.bf16.msra.mxu0 0
      %3737 = vmatprep.subr.bf16.mxu0 0
      %3738 = vmatpush1.bf16.msra.mxu0 0
      %3739 = vmatprep.subr.bf16.mxu0 0
      %3740 = vmatpush1.bf16.msra.mxu0 0
      %3741 = vmatprep.subr.bf16.mxu0 0
      %3742 = vmatpush1.bf16.msra.mxu0 0
      %3743 = vmatprep.subr.bf16.mxu0 0
      %3744 = vmatpush1.bf16.msra.mxu0 0
      %3745 = vmatprep.subr.bf16.mxu0 0
      %3746 = vmatpush1.bf16.msra.mxu0 0
      %3747 = vmatprep.subr.bf16.mxu0 0
      %3748 = vmatpush1.bf16.msra.mxu0 0
      %3749 = vmatprep.subr.bf16.mxu0 0
      %3750 = vmatpush1.bf16.msra.mxu0 0
      %3751 = vmatprep.subr.bf16.mxu0 0
      %3752 = vmatpush1.bf16.msra.mxu0 0
      %3753 = vmatprep.mubr.bf16.mxu0 0
      %3754 = vmatmul.mubr.bf16.gmra.mrb[0].mxu0 %v3719
      %v3755 = vpop.f32.mrb[0].mxu0
      %v3756 = vadd.f32 0.0, %v3755
      %v3757 = vpop.f32.mrb[0].mxu0
      %v3758 = vpop.f32.mrb[0].mxu0
      %v3759 = vpop.f32.mrb[0].mxu0
      %3760 = vdwg.mxu0
      %v3765 = vunpack.c.l.b16 %v3696
      %v3766 = vunpack.c.l.b16 %v3697
      %v3767 = vunpack.c.l.b16 %v3698
      %v3768 = vunpack.c.l.b16 %v3699
      %v3769 = vpack.c.b16 %v3766, %v3765
      %v3770 = vpack.c.b16 %v3768, %v3767
      %v3774 = vsel %vm198, %v3695, 0
      %3776 = vmatprep.subr.bf16.mxu0 0
      %3777 = vmatpush1.bf16.msra.mxu0 %v3769
      %3778 = vmatprep.subr.bf16.mxu0 0
      %3779 = vmatpush1.bf16.msra.mxu0 %v3770
      %3780 = vmatprep.subr.bf16.mxu0 0
      %3781 = vmatpush1.bf16.msra.mxu0 0
      %3782 = vmatprep.subr.bf16.mxu0 0
      %3783 = vmatpush1.bf16.msra.mxu0 0
      %3784 = vmatprep.subr.bf16.mxu0 0
      %3785 = vmatpush1.bf16.msra.mxu0 0
      %3786 = vmatprep.subr.bf16.mxu0 0
      %3787 = vmatpush1.bf16.msra.mxu0 0
      %3788 = vmatprep.subr.bf16.mxu0 0
      %3789 = vmatpush1.bf16.msra.mxu0 0
      %3790 = vmatprep.subr.bf16.mxu0 0
      %3791 = vmatpush1.bf16.msra.mxu0 0
      %3792 = vmatprep.subr.bf16.mxu0 0
      %3793 = vmatpush1.bf16.msra.mxu0 0
      %3794 = vmatprep.subr.bf16.mxu0 0
      %3795 = vmatpush1.bf16.msra.mxu0 0
      %3796 = vmatprep.subr.bf16.mxu0 0
      %3797 = vmatpush1.bf16.msra.mxu0 0
      %3798 = vmatprep.subr.bf16.mxu0 0
      %3799 = vmatpush1.bf16.msra.mxu0 0
      %3800 = vmatprep.subr.bf16.mxu0 0
      %3801 = vmatpush1.bf16.msra.mxu0 0
      %3802 = vmatprep.subr.bf16.mxu0 0
      %3803 = vmatpush1.bf16.msra.mxu0 0
      %3804 = vmatprep.subr.bf16.mxu0 0
      %3805 = vmatpush1.bf16.msra.mxu0 0
      %3806 = vmatprep.subr.bf16.mxu0 0
      %3807 = vmatpush1.bf16.msra.mxu0 0
      %3808 = vmatprep.mubr.bf16.mxu0 0
      %3809 = vmatmul.mubr.bf16.gmra.mrb[0].mxu0 %v3774
      %v3810 = vpop.f32.mrb[0].mxu0
      %v3811 = vadd.f32 %v3756, %v3810
      %v3812 = vpop.f32.mrb[0].mxu0
      %v3813 = vpop.f32.mrb[0].mxu0
      %v3814 = vpop.f32.mrb[0].mxu0
      %3815 = vdwg.mxu0
      %v3816 = vld [vmem:[#allocation6] sm:$0x1]
      %v3818 = vlaneseq
      %v3819 = vshrl.u32 %v3818, 7
      %v3820 = vsub.s32 0, %v3819
      %v3821 = vrot.slane %v3816, %v3820
      %v3823 = vadd.f32 %v3811, %v3821
      %v3824 = vxor.u32 %v3823, 2147483648
      %v3825 = vmul.f32 %v3824, 1.442695
      %v3826 = vpow.pop %v3825
      %v3827 = vadd.f32 %v3826, 1.0
      %v3828 = vrcp.pop %v3827
      %v3829 = vmul.f32 1.0, %v3828
      %vm3830 = vcmask 7168
      %3831 = vst.msk [vmem:[%s11] sm:$0xff] %vm3830, %v3829
    $region73: #{tpu_custom_call.1} parent=1 // pred_fallthru
      _
    // Predicated region
    $region74: #{tpu_custom_call.1} parent=1 // pred_check
      _
    $region75: #{tpu_custom_call.1} parent=1 // pred_check_branch
      %3833 = sbr.rel (0) target = $region77
    $region76: #{tpu_custom_call.1} parent=1 // pred_region
      _
    $region77: #{tpu_custom_call.1} parent=1 // pred_fallthru
      _
    // Predicated region
    $region78: #{tpu_custom_call.1} parent=1 // pred_check
      _
    $region79: #{tpu_custom_call.1} parent=1 // pred_check_branch
      %3835 = sbr.rel (0) target = $region81
    $region80: #{tpu_custom_call.1} parent=1 // pred_region
      _
    $region81: #{tpu_custom_call.1} parent=1 // pred_fallthru
      _
    %3836 = vsyncpa [#allocation8], 1
    %3837 = vsyncpa [#allocation10], 1
    %3838 = vsyncpa [#allocation13], 1

</llo_original>
